<compile_context>
chip_gen: v7x
topology: tpu7x:2x2x1
jax: 0.10.0
libtpu: 0.0.40
codegen_flags: <defaults>
</compile_context>

<pallas_src>
import jax
import jax.numpy as jnp
from jax import lax
from jax.experimental import pallas as pl
from jax.experimental.pallas import tpu as pltpu

_NEG = -1e30  # finite "-inf" for padded states: exp() underflows to 0, no NaNs.


# -----------------------------------------------------------------------------
# Pallas kernel: forward/backward recursions + expected-count scoring
# -----------------------------------------------------------------------------
def _iohmm_kernel(em_ref, expT_ref, expTt_ref, expOt_ref, out_ref, alpha_ref):
    # em_ref    : (L, S, TB)  log-emissions, time-major, batch on lanes
    # expT_ref  : (S, S)      exp(log_softmax(transition)); [i, j]: dest i <- src j
    # expTt_ref : (S, S)      expT.T (pre-transposed for the backward pass)
    # expOt_ref : (C+1, S)    rows 0..C-1 = exp(log_softmax(output)).T,
    #                         row C = 1 for valid states (normaliser ride-along)
    # out_ref   : (L, C, TB)  per-timestep label scores
    # alpha_ref : (L, S, TB)  scratch: forward messages
    L, _, TB = em_ref.shape
    C = out_ref.shape[1]

    expT = expT_ref[...]                          # loop-invariant, loaded once
    expTt = expTt_ref[...]
    expOt = expOt_ref[...]

    f32 = jnp.float32
    # TODO(synk): at production S (128-256) re-evaluate HIGHEST vs DEFAULT /
    # bf16-in-f32-acc; the multi-pass f32 dot can flip the kernel MXU-bound.
    prec = lax.Precision.HIGHEST
    DN = (((1,), (0,)), ((), ()))                 # standard (M,K)@(K,N) dot
    TINY = jnp.float32(1e-38)                     # keeps log() finite for
                                                  # all-zero padded rows

    # TODO(synk): sweep unroll 2/4/8 against the bundle dump (spill vld/vst).
    if L <= 16 and TB <= 512:
        unroll = True
    elif TB >= 1024:
        unroll = 2
    else:
        unroll = 4

    def emit(t, ec):
        # ec = alpha_t + beta_pre_t (the spec's `- em[t]` already cancelled).
        # score[c,b] = log(sum_s softmax_s(ec)[s,b] * expO[s,c])
        #            = log(num[c,b]) - log(z[b]); z is row C of the augmented
        # matmul, so a single log pass covers numerator and normaliser.
        m = jnp.max(ec, axis=0, keepdims=True)                         # (1, B)
        pc = jnp.exp(ec - m)                                           # (S, B)
        num = lax.dot_general(expOt, pc, DN, precision=prec,
                              preferred_element_type=f32)              # (C+1,B)
        la = jnp.log(jnp.maximum(num, TINY))
        out_ref[t] = la[:C] - la[C:C + 1]

    # ----------------------------- forward pass -----------------------------
    a0 = em_ref[0]
    alpha_ref[0] = a0

    def fwd_body(t, alpha_prev):
        # alpha[i,b] = log( sum_j expT[i,j] * exp(alpha_prev[j,b]-m[b]) ) + m + em
        m = jnp.max(alpha_prev, axis=0, keepdims=True)                 # (1, B)
        p = jnp.exp(alpha_prev - m)                                    # (S, B)
        acc = lax.dot_general(expT, p, DN, precision=prec,
                              preferred_element_type=f32)              # (S, B)
        alpha = jnp.log(jnp.maximum(acc, TINY)) + m + em_ref[t]
        alpha_ref[t] = alpha
        return alpha

    alpha_last = lax.fori_loop(1, L, fwd_body, a0, unroll=unroll)

    # ------------- backward pass fused with per-timestep scoring -------------
    # beta_pre[t] = beta[t] - em[t]; beta_pre[L-1] = 0.
    emit(L - 1, alpha_last)

    def bwd_body(r, beta_next):
        t = L - 1 - r
        m = jnp.max(beta_next, axis=0, keepdims=True)
        p = jnp.exp(beta_next - m)
        acc = lax.dot_general(expTt, p, DN, precision=prec,
                              preferred_element_type=f32)              # (S, B)
        beta_pre = jnp.log(jnp.maximum(acc, TINY)) + m
        emit(t, alpha_ref[t] + beta_pre)
        return beta_pre + em_ref[t]

    lax.fori_loop(1, L, bwd_body, em_ref[L - 1], unroll=unroll)


# -----------------------------------------------------------------------------
# Wrapper (glue: embedding gather + parameter log_softmax stays in plain XLA)
# -----------------------------------------------------------------------------
def _vmem_policy():
    """(tile_budget_bytes, vmem_limit_cap_bytes, prefer_split) per TPU gen."""
    try:
        phys = int(pltpu.get_tpu_info().vmem_capacity_bytes)
    except Exception:
        phys = 64 << 20          # conservative fallback (v7x-sized)
    if phys <= (96 << 20):       # v7x-class: 64 MiB per TC, 2 TensorCores/chip
        return phys - (16 << 20), phys - (8 << 20), True
    # v5e / v6e: 128 MiB VMEM, single TensorCore -> use it, keep big tiles.
    return 96 << 20, 112 << 20, False


def _pick_batch_tile(B_pad, L, S, C, budget_bytes, prefer_split):
    """Largest lane-aligned batch tile whose per-tile residency fits VMEM.

    Footprint matches the actual buffering below: single-buffered em block +
    alpha scratch + double-buffered out block (params are negligible).
    """
    def footprint(tb):
        return 4 * tb * L * (2 * S + 2 * C)

    cap = B_pad
    if prefer_split and B_pad >= 256:
        # >=2 grid programs so the "parallel" axis can feed both TensorCores;
        # prefer >=4 for load balance / pipelining when tb stays >= 128.
        cap = B_pad // 4 if (B_pad // 4) >= 128 else B_pad // 2

    tb = B_pad
    while tb >= 128:
        if B_pad % tb == 0 and tb <= cap and footprint(tb) <= budget_bytes:
            return tb
        tb -= 128
    # TODO(synk): for very large L even tb=128 overflows VMEM; stream em in
    # time-chunks (pltpu.emit_pipeline) instead of keeping (L, S, TB) resident.
    return 128


@jax.jit
def weight_iohmm_forward(sentences, w_input, w_transition, w_output):
    """sentences (B, L) int32 -> label scores (B, L, nlabel) float32."""
    B, L = sentences.shape
    S = w_input.shape[1]
    C = w_output.shape[1]
    f32 = jnp.float32

    # TODO(synk): embedding gather + parameter log_softmax stay in plain XLA;
    # an in-kernel gather (one-hot matmul / jnp.take) only pays for tiny
    # vocabularies and adds per-step work at production vocab sizes.
    norm_input = jax.nn.log_softmax(w_input.astype(f32), axis=0)
    logT = jax.nn.log_softmax(w_transition.astype(f32), axis=-1)
    logO = jax.nn.log_softmax(w_output.astype(f32), axis=-1)

    # Lane-dense batch: pad B up to a multiple of 128 (token 0 in padded
    # lanes), slice the result back at the end.
    B_pad = max(128, ((B + 127) // 128) * 128)
    sent = sentences if B_pad == B else jnp.pad(
        sentences, ((0, B_pad - B), (0, 0)))

    em = jnp.transpose(norm_input[sent], (1, 2, 0))          # (L, S, B_pad)
    expT = jnp.exp(logT)                                     # (S, S) dest<-src
    expO = jnp.exp(logO)                                     # (S, C)

    # Pad the state axis to a sublane multiple only (MXU pads sub-tile shapes
    # internally); padded states are inert (zero prob, ~-inf emission).
    S_pad = max(8, ((S + 7) // 8) * 8)
    if S_pad != S:
        em = jnp.pad(em, ((0, 0), (0, S_pad - S), (0, 0)), constant_values=_NEG)
        expT = jnp.pad(expT, ((0, S_pad - S), (0, S_pad - S)))
        expO = jnp.pad(expO, ((0, S_pad - S), (0, 0)))
    expTt = expT.T                                           # loop-invariant
    valid = (jnp.arange(S_pad) < S).astype(f32)
    expOt = jnp.concatenate([expO.T, valid[None, :]], axis=0)  # (C+1, S_pad)

    budget, limit_cap, prefer_split = _vmem_policy()
    TB = _pick_batch_tile(B_pad, L, S_pad, C, budget, prefer_split)
    nb = B_pad // TB

    # Actual per-tile residency: em x1 (Buffered(1)) + alpha scratch x1 +
    # out x2 (default double-buffer) + small loop-invariant params.
    block_bytes = 4 * (2 * L * S_pad * TB + 2 * L * C * TB) \
        + 4 * (4 * S_pad * S_pad + 2 * (C + 1) * S_pad)
    vmem_limit = int(min(limit_cap, max(block_bytes + (8 << 20), 24 << 20)))

    score_lcb = pl.pallas_call(
        _iohmm_kernel,
        out_shape=jax.ShapeDtypeStruct((L, C, B_pad), f32),
        grid=(nb,),
        in_specs=[
            pl.BlockSpec((L, S_pad, TB), lambda b: (0, 0, b),
                         pipeline_mode=pl.Buffered(1)),
            pl.BlockSpec((S_pad, S_pad), lambda b: (0, 0)),
            pl.BlockSpec((S_pad, S_pad), lambda b: (0, 0)),
            pl.BlockSpec((C + 1, S_pad), lambda b: (0, 0)),
        ],
        out_specs=pl.BlockSpec((L, C, TB), lambda b: (0, 0, b)),
        scratch_shapes=[pltpu.VMEM((L, S_pad, TB), f32)],
        compiler_params=pltpu.CompilerParams(
            dimension_semantics=("parallel",),
            vmem_limit_bytes=vmem_limit),
    )(em, expT, expTt, expOt)

    return jnp.transpose(score_lcb, (2, 0, 1))[:B]           # (B, L, C)


# -----------------------------------------------------------------------------
# Pure-JAX reference (mirrors the PyTorch forward exactly)
# -----------------------------------------------------------------------------
def ref_forward(sentences, w_input, w_transition, w_output):
    B, L = sentences.shape
    norm_input = jax.nn.log_softmax(w_input, axis=0)
    em = jnp.transpose(norm_input[sentences], (1, 0, 2))    # (L, B, S)
    logT = jax.nn.log_softmax(w_transition, axis=-1)
    logO = jax.nn.log_softmax(w_output, axis=-1)
    lse = jax.scipy.special.logsumexp

    def bmv(M, v):  # (S,S),(B,S)->(B,S)
        return lse(M[None, :, :] + v[:, None, :], axis=-1)

    fwd = [em[0]]
    for t in range(1, L):
        fwd.append(bmv(logT, fwd[-1]) + em[t])
    bwd = [em[L - 1]]
    for t in range(L - 2, -1, -1):
        bwd.append(bmv(logT.T, bwd[-1]) + em[t])
    bwd = bwd[::-1]
    fwd = jnp.stack(fwd)
    bwd = jnp.stack(bwd)
    ec = fwd + bwd - em
    ec = ec - lse(ec, axis=-1, keepdims=True)
    score = lse(ec[..., None] + logO[None, None, :, :], axis=-2)
    return jnp.transpose(score, (1, 0, 2))


if __name__ == "__main__":
    vocab_size, nlabel, num_state = 20, 5, 10
    batch, maxlen = 2, 8

    key = jax.random.PRNGKey(0)
    k_in, k_tr, k_out, k_sent = jax.random.split(key, 4)
    # Deterministic init matching nn.init.uniform_(a=-0.5, b=0.5)
    w_input = jax.random.uniform(k_in, (vocab_size, num_state),
                                 minval=-0.5, maxval=0.5, dtype=jnp.float32)
    w_transition = jax.random.uniform(k_tr, (num_state, num_state),
                                      minval=-0.5, maxval=0.5, dtype=jnp.float32)
    w_output = jax.random.uniform(k_out, (num_state, nlabel),
                                  minval=-0.5, maxval=0.5, dtype=jnp.float32)
    sentences = jax.random.randint(k_sent, (batch, maxlen), 0, vocab_size,
                                   dtype=jnp.int32)

    score = weight_iohmm_forward(sentences, w_input, w_transition, w_output)
    score = jax.block_until_ready(score)

    expected = ref_forward(sentences, w_input, w_transition, w_output)
    assert score.shape == (batch, maxlen, nlabel), score.shape
    assert bool(jnp.all(jnp.isfinite(score))), "non-finite scores"
    assert jnp.allclose(score, expected, rtol=1e-4, atol=1e-4), (
        "mismatch vs reference")

    print("KERNEL_OK")
</pallas_src>

<mosaic_0001>
module attributes {stable_mosaic.version = 11 : i64} {
  func.func @_iohmm_kernel(%arg0: i32, %arg1: memref<8x16x128xf32, #tpu.memory_space<vmem>>, %arg2: memref<16x16xf32, #tpu.memory_space<vmem>>, %arg3: memref<16x16xf32, #tpu.memory_space<vmem>>, %arg4: memref<6x16xf32, #tpu.memory_space<vmem>>, %arg5: memref<8x5x128xf32, #tpu.memory_space<vmem>>, %arg6: memref<8x16x128xf32, #tpu.memory_space<vmem>>) attributes {dimension_semantics = [#tpu.dimension_semantics<parallel>], iteration_bounds = array<i64: 1>, scalar_prefetch = 0 : i64, scratch_operands = 1 : i64, tpu.core_type = #tpu.core_type<tc>, window_params = [{pipeline_mode = #tpu.pipeline_mode<synchronous>, transform_indices = @transform_0, window_bounds = array<i64: 8, 16, 128>}, {pipeline_mode = #tpu.pipeline_mode<synchronous>, transform_indices = @transform_1, window_bounds = array<i64: 16, 16>}, {pipeline_mode = #tpu.pipeline_mode<synchronous>, transform_indices = @transform_2, window_bounds = array<i64: 16, 16>}, {pipeline_mode = #tpu.pipeline_mode<synchronous>, transform_indices = @transform_3, window_bounds = array<i64: 6, 16>}, {transform_indices = @transform_4, window_bounds = array<i64: 8, 5, 128>}]} {
    %c0 = arith.constant 0 : index
    %c0_0 = arith.constant 0 : index
    %0 = vector.load %arg2[%c0, %c0_0] : memref<16x16xf32, #tpu.memory_space<vmem>>, vector<16x16xf32>
    %c0_1 = arith.constant 0 : index
    %c0_2 = arith.constant 0 : index
    %1 = vector.load %arg3[%c0_1, %c0_2] : memref<16x16xf32, #tpu.memory_space<vmem>>, vector<16x16xf32>
    %c0_3 = arith.constant 0 : index
    %c0_4 = arith.constant 0 : index
    %2 = vector.load %arg4[%c0_3, %c0_4] : memref<6x16xf32, #tpu.memory_space<vmem>>, vector<6x16xf32>
    %c0_5 = arith.constant 0 : index
    %c0_6 = arith.constant 0 : index
    %c0_7 = arith.constant 0 : index
    %3 = vector.load %arg1[%c0_5, %c0_6, %c0_7] : memref<8x16x128xf32, #tpu.memory_space<vmem>>, vector<1x16x128xf32>
    %4 = vector.shape_cast %3 : vector<1x16x128xf32> to vector<16x128xf32>
    %c0_8 = arith.constant 0 : index
    %c0_9 = arith.constant 0 : index
    %c0_10 = arith.constant 0 : index
    %5 = vector.load %arg6[%c0_8, %c0_9, %c0_10] : memref<8x16x128xf32, #tpu.memory_space<vmem>>, vector<1x16x128xf32>
    %6 = vector.shape_cast %5 : vector<1x16x128xf32> to vector<16x128xf32>
    %7 = vector.shape_cast %4 : vector<16x128xf32> to vector<1x16x128xf32>
    tpu.vector_store %arg6[%c0_8, %c0_9, %c0_10], %7 {strides = array<i32>} : memref<8x16x128xf32, #tpu.memory_space<vmem>>, vector<1x16x128xf32>,
    %cst = arith.constant 9.99999935E-39 : f32
    %c1_i32 = arith.constant 1 : i32
    %cst_11 = arith.constant dense<0xFF800000> : vector<128xf32>
    %8 = vector.multi_reduction <maximumf>, %4, %cst_11 [0] : vector<16x128xf32> to vector<128xf32>
    %9 = vector.shape_cast %8 : vector<128xf32> to vector<1x128xf32>
    %10 = vector.broadcast %9 : vector<1x128xf32> to vector<16x128xf32>
    %11 = arith.subf %4, %10 : vector<16x128xf32>
    %12 = math.exp %11 : vector<16x128xf32>
    %cst_12 = arith.constant dense<0.000000e+00> : vector<16x128xf32>
    %13 = tpu.matmul %0, %12, %cst_12 {dimension_numbers = #tpu.dot_dimension_numbers<[1], [0], [0], [1], [0, 0, 1, 1], [], []>, precision = #tpu.contract_precision<fp32>} : vector<16x16xf32>, vector<16x128xf32>, vector<16x128xf32> -> vector<16x128xf32>
    %14 = vector.broadcast %cst : f32 to vector<16x128xf32>
    %15 = arith.maximumf %13, %14 : vector<16x128xf32>
    %16 = math.log %15 : vector<16x128xf32>
    %17 = vector.broadcast %9 : vector<1x128xf32> to vector<16x128xf32>
    %18 = arith.addf %16, %17 : vector<16x128xf32>
    %19 = arith.index_cast %c1_i32 : i32 to index
    %c0_13 = arith.constant 0 : index
    %c0_14 = arith.constant 0 : index
    %20 = vector.load %arg1[%19, %c0_13, %c0_14] : memref<8x16x128xf32, #tpu.memory_space<vmem>>, vector<1x16x128xf32>
    %21 = vector.shape_cast %20 : vector<1x16x128xf32> to vector<16x128xf32>
    %22 = arith.addf %18, %21 : vector<16x128xf32>
    %23 = arith.index_cast %c1_i32 : i32 to index
    %c0_15 = arith.constant 0 : index
    %c0_16 = arith.constant 0 : index
    %24 = vector.load %arg6[%23, %c0_15, %c0_16] : memref<8x16x128xf32, #tpu.memory_space<vmem>>, vector<1x16x128xf32>
    %25 = vector.shape_cast %24 : vector<1x16x128xf32> to vector<16x128xf32>
    %26 = vector.shape_cast %22 : vector<16x128xf32> to vector<1x16x128xf32>
    tpu.vector_store %arg6[%23, %c0_15, %c0_16], %26 {strides = array<i32>} : memref<8x16x128xf32, #tpu.memory_space<vmem>>, vector<1x16x128xf32>,
    %c2_i32 = arith.constant 2 : i32
    %cst_17 = arith.constant dense<0xFF800000> : vector<128xf32>
    %27 = vector.multi_reduction <maximumf>, %22, %cst_17 [0] : vector<16x128xf32> to vector<128xf32>
    %28 = vector.shape_cast %27 : vector<128xf32> to vector<1x128xf32>
    %29 = vector.broadcast %28 : vector<1x128xf32> to vector<16x128xf32>
    %30 = arith.subf %22, %29 : vector<16x128xf32>
    %31 = math.exp %30 : vector<16x128xf32>
    %cst_18 = arith.constant dense<0.000000e+00> : vector<16x128xf32>
    %32 = tpu.matmul %0, %31, %cst_18 {dimension_numbers = #tpu.dot_dimension_numbers<[1], [0], [0], [1], [0, 0, 1, 1], [], []>, precision = #tpu.contract_precision<fp32>} : vector<16x16xf32>, vector<16x128xf32>, vector<16x128xf32> -> vector<16x128xf32>
    %33 = vector.broadcast %cst : f32 to vector<16x128xf32>
    %34 = arith.maximumf %32, %33 : vector<16x128xf32>
    %35 = math.log %34 : vector<16x128xf32>
    %36 = vector.broadcast %28 : vector<1x128xf32> to vector<16x128xf32>
    %37 = arith.addf %35, %36 : vector<16x128xf32>
    %38 = arith.index_cast %c2_i32 : i32 to index
    %c0_19 = arith.constant 0 : index
    %c0_20 = arith.constant 0 : index
    %39 = vector.load %arg1[%38, %c0_19, %c0_20] : memref<8x16x128xf32, #tpu.memory_space<vmem>>, vector<1x16x128xf32>
    %40 = vector.shape_cast %39 : vector<1x16x128xf32> to vector<16x128xf32>
    %41 = arith.addf %37, %40 : vector<16x128xf32>
    %42 = arith.index_cast %c2_i32 : i32 to index
    %c0_21 = arith.constant 0 : index
    %c0_22 = arith.constant 0 : index
    %43 = vector.load %arg6[%42, %c0_21, %c0_22] : memref<8x16x128xf32, #tpu.memory_space<vmem>>, vector<1x16x128xf32>
    %44 = vector.shape_cast %43 : vector<1x16x128xf32> to vector<16x128xf32>
    %45 = vector.shape_cast %41 : vector<16x128xf32> to vector<1x16x128xf32>
    tpu.vector_store %arg6[%42, %c0_21, %c0_22], %45 {strides = array<i32>} : memref<8x16x128xf32, #tpu.memory_space<vmem>>, vector<1x16x128xf32>,
    %c3_i32 = arith.constant 3 : i32
    %cst_23 = arith.constant dense<0xFF800000> : vector<128xf32>
    %46 = vector.multi_reduction <maximumf>, %41, %cst_23 [0] : vector<16x128xf32> to vector<128xf32>
    %47 = vector.shape_cast %46 : vector<128xf32> to vector<1x128xf32>
    %48 = vector.broadcast %47 : vector<1x128xf32> to vector<16x128xf32>
    %49 = arith.subf %41, %48 : vector<16x128xf32>
    %50 = math.exp %49 : vector<16x128xf32>
    %cst_24 = arith.constant dense<0.000000e+00> : vector<16x128xf32>
    %51 = tpu.matmul %0, %50, %cst_24 {dimension_numbers = #tpu.dot_dimension_numbers<[1], [0], [0], [1], [0, 0, 1, 1], [], []>, precision = #tpu.contract_precision<fp32>} : vector<16x16xf32>, vector<16x128xf32>, vector<16x128xf32> -> vector<16x128xf32>
    %52 = vector.broadcast %cst : f32 to vector<16x128xf32>
    %53 = arith.maximumf %51, %52 : vector<16x128xf32>
    %54 = math.log %53 : vector<16x128xf32>
    %55 = vector.broadcast %47 : vector<1x128xf32> to vector<16x128xf32>
    %56 = arith.addf %54, %55 : vector<16x128xf32>
    %57 = arith.index_cast %c3_i32 : i32 to index
    %c0_25 = arith.constant 0 : index
    %c0_26 = arith.constant 0 : index
    %58 = vector.load %arg1[%57, %c0_25, %c0_26] : memref<8x16x128xf32, #tpu.memory_space<vmem>>, vector<1x16x128xf32>
    %59 = vector.shape_cast %58 : vector<1x16x128xf32> to vector<16x128xf32>
    %60 = arith.addf %56, %59 : vector<16x128xf32>
    %61 = arith.index_cast %c3_i32 : i32 to index
    %c0_27 = arith.constant 0 : index
    %c0_28 = arith.constant 0 : index
    %62 = vector.load %arg6[%61, %c0_27, %c0_28] : memref<8x16x128xf32, #tpu.memory_space<vmem>>, vector<1x16x128xf32>
    %63 = vector.shape_cast %62 : vector<1x16x128xf32> to vector<16x128xf32>
    %64 = vector.shape_cast %60 : vector<16x128xf32> to vector<1x16x128xf32>
    tpu.vector_store %arg6[%61, %c0_27, %c0_28], %64 {strides = array<i32>} : memref<8x16x128xf32, #tpu.memory_space<vmem>>, vector<1x16x128xf32>,
    %c4_i32 = arith.constant 4 : i32
    %cst_29 = arith.constant dense<0xFF800000> : vector<128xf32>
    %65 = vector.multi_reduction <maximumf>, %60, %cst_29 [0] : vector<16x128xf32> to vector<128xf32>
    %66 = vector.shape_cast %65 : vector<128xf32> to vector<1x128xf32>
    %67 = vector.broadcast %66 : vector<1x128xf32> to vector<16x128xf32>
    %68 = arith.subf %60, %67 : vector<16x128xf32>
    %69 = math.exp %68 : vector<16x128xf32>
    %cst_30 = arith.constant dense<0.000000e+00> : vector<16x128xf32>
    %70 = tpu.matmul %0, %69, %cst_30 {dimension_numbers = #tpu.dot_dimension_numbers<[1], [0], [0], [1], [0, 0, 1, 1], [], []>, precision = #tpu.contract_precision<fp32>} : vector<16x16xf32>, vector<16x128xf32>, vector<16x128xf32> -> vector<16x128xf32>
    %71 = vector.broadcast %cst : f32 to vector<16x128xf32>
    %72 = arith.maximumf %70, %71 : vector<16x128xf32>
    %73 = math.log %72 : vector<16x128xf32>
    %74 = vector.broadcast %66 : vector<1x128xf32> to vector<16x128xf32>
    %75 = arith.addf %73, %74 : vector<16x128xf32>
    %76 = arith.index_cast %c4_i32 : i32 to index
    %c0_31 = arith.constant 0 : index
    %c0_32 = arith.constant 0 : index
    %77 = vector.load %arg1[%76, %c0_31, %c0_32] : memref<8x16x128xf32, #tpu.memory_space<vmem>>, vector<1x16x128xf32>
    %78 = vector.shape_cast %77 : vector<1x16x128xf32> to vector<16x128xf32>
    %79 = arith.addf %75, %78 : vector<16x128xf32>
    %80 = arith.index_cast %c4_i32 : i32 to index
    %c0_33 = arith.constant 0 : index
    %c0_34 = arith.constant 0 : index
    %81 = vector.load %arg6[%80, %c0_33, %c0_34] : memref<8x16x128xf32, #tpu.memory_space<vmem>>, vector<1x16x128xf32>
    %82 = vector.shape_cast %81 : vector<1x16x128xf32> to vector<16x128xf32>
    %83 = vector.shape_cast %79 : vector<16x128xf32> to vector<1x16x128xf32>
    tpu.vector_store %arg6[%80, %c0_33, %c0_34], %83 {strides = array<i32>} : memref<8x16x128xf32, #tpu.memory_space<vmem>>, vector<1x16x128xf32>,
    %c5_i32 = arith.constant 5 : i32
    %cst_35 = arith.constant dense<0xFF800000> : vector<128xf32>
    %84 = vector.multi_reduction <maximumf>, %79, %cst_35 [0] : vector<16x128xf32> to vector<128xf32>
    %85 = vector.shape_cast %84 : vector<128xf32> to vector<1x128xf32>
    %86 = vector.broadcast %85 : vector<1x128xf32> to vector<16x128xf32>
    %87 = arith.subf %79, %86 : vector<16x128xf32>
    %88 = math.exp %87 : vector<16x128xf32>
    %cst_36 = arith.constant dense<0.000000e+00> : vector<16x128xf32>
    %89 = tpu.matmul %0, %88, %cst_36 {dimension_numbers = #tpu.dot_dimension_numbers<[1], [0], [0], [1], [0, 0, 1, 1], [], []>, precision = #tpu.contract_precision<fp32>} : vector<16x16xf32>, vector<16x128xf32>, vector<16x128xf32> -> vector<16x128xf32>
    %90 = vector.broadcast %cst : f32 to vector<16x128xf32>
    %91 = arith.maximumf %89, %90 : vector<16x128xf32>
    %92 = math.log %91 : vector<16x128xf32>
    %93 = vector.broadcast %85 : vector<1x128xf32> to vector<16x128xf32>
    %94 = arith.addf %92, %93 : vector<16x128xf32>
    %95 = arith.index_cast %c5_i32 : i32 to index
    %c0_37 = arith.constant 0 : index
    %c0_38 = arith.constant 0 : index
    %96 = vector.load %arg1[%95, %c0_37, %c0_38] : memref<8x16x128xf32, #tpu.memory_space<vmem>>, vector<1x16x128xf32>
    %97 = vector.shape_cast %96 : vector<1x16x128xf32> to vector<16x128xf32>
    %98 = arith.addf %94, %97 : vector<16x128xf32>
    %99 = arith.index_cast %c5_i32 : i32 to index
    %c0_39 = arith.constant 0 : index
    %c0_40 = arith.constant 0 : index
    %100 = vector.load %arg6[%99, %c0_39, %c0_40] : memref<8x16x128xf32, #tpu.memory_space<vmem>>, vector<1x16x128xf32>
    %101 = vector.shape_cast %100 : vector<1x16x128xf32> to vector<16x128xf32>
    %102 = vector.shape_cast %98 : vector<16x128xf32> to vector<1x16x128xf32>
    tpu.vector_store %arg6[%99, %c0_39, %c0_40], %102 {strides = array<i32>} : memref<8x16x128xf32, #tpu.memory_space<vmem>>, vector<1x16x128xf32>,
    %c6_i32 = arith.constant 6 : i32
    %cst_41 = arith.constant dense<0xFF800000> : vector<128xf32>
    %103 = vector.multi_reduction <maximumf>, %98, %cst_41 [0] : vector<16x128xf32> to vector<128xf32>
    %104 = vector.shape_cast %103 : vector<128xf32> to vector<1x128xf32>
    %105 = vector.broadcast %104 : vector<1x128xf32> to vector<16x128xf32>
    %106 = arith.subf %98, %105 : vector<16x128xf32>
    %107 = math.exp %106 : vector<16x128xf32>
    %cst_42 = arith.constant dense<0.000000e+00> : vector<16x128xf32>
    %108 = tpu.matmul %0, %107, %cst_42 {dimension_numbers = #tpu.dot_dimension_numbers<[1], [0], [0], [1], [0, 0, 1, 1], [], []>, precision = #tpu.contract_precision<fp32>} : vector<16x16xf32>, vector<16x128xf32>, vector<16x128xf32> -> vector<16x128xf32>
    %109 = vector.broadcast %cst : f32 to vector<16x128xf32>
    %110 = arith.maximumf %108, %109 : vector<16x128xf32>
    %111 = math.log %110 : vector<16x128xf32>
    %112 = vector.broadcast %104 : vector<1x128xf32> to vector<16x128xf32>
    %113 = arith.addf %111, %112 : vector<16x128xf32>
    %114 = arith.index_cast %c6_i32 : i32 to index
    %c0_43 = arith.constant 0 : index
    %c0_44 = arith.constant 0 : index
    %115 = vector.load %arg1[%114, %c0_43, %c0_44] : memref<8x16x128xf32, #tpu.memory_space<vmem>>, vector<1x16x128xf32>
    %116 = vector.shape_cast %115 : vector<1x16x128xf32> to vector<16x128xf32>
    %117 = arith.addf %113, %116 : vector<16x128xf32>
    %118 = arith.index_cast %c6_i32 : i32 to index
    %c0_45 = arith.constant 0 : index
    %c0_46 = arith.constant 0 : index
    %119 = vector.load %arg6[%118, %c0_45, %c0_46] : memref<8x16x128xf32, #tpu.memory_space<vmem>>, vector<1x16x128xf32>
    %120 = vector.shape_cast %119 : vector<1x16x128xf32> to vector<16x128xf32>
    %121 = vector.shape_cast %117 : vector<16x128xf32> to vector<1x16x128xf32>
    tpu.vector_store %arg6[%118, %c0_45, %c0_46], %121 {strides = array<i32>} : memref<8x16x128xf32, #tpu.memory_space<vmem>>, vector<1x16x128xf32>,
    %c7_i32 = arith.constant 7 : i32
    %cst_47 = arith.constant dense<0xFF800000> : vector<128xf32>
    %122 = vector.multi_reduction <maximumf>, %117, %cst_47 [0] : vector<16x128xf32> to vector<128xf32>
    %123 = vector.shape_cast %122 : vector<128xf32> to vector<1x128xf32>
    %124 = vector.broadcast %123 : vector<1x128xf32> to vector<16x128xf32>
    %125 = arith.subf %117, %124 : vector<16x128xf32>
    %126 = math.exp %125 : vector<16x128xf32>
    %cst_48 = arith.constant dense<0.000000e+00> : vector<16x128xf32>
    %127 = tpu.matmul %0, %126, %cst_48 {dimension_numbers = #tpu.dot_dimension_numbers<[1], [0], [0], [1], [0, 0, 1, 1], [], []>, precision = #tpu.contract_precision<fp32>} : vector<16x16xf32>, vector<16x128xf32>, vector<16x128xf32> -> vector<16x128xf32>
    %128 = vector.broadcast %cst : f32 to vector<16x128xf32>
    %129 = arith.maximumf %127, %128 : vector<16x128xf32>
    %130 = math.log %129 : vector<16x128xf32>
    %131 = vector.broadcast %123 : vector<1x128xf32> to vector<16x128xf32>
    %132 = arith.addf %130, %131 : vector<16x128xf32>
    %133 = arith.index_cast %c7_i32 : i32 to index
    %c0_49 = arith.constant 0 : index
    %c0_50 = arith.constant 0 : index
    %134 = vector.load %arg1[%133, %c0_49, %c0_50] : memref<8x16x128xf32, #tpu.memory_space<vmem>>, vector<1x16x128xf32>
    %135 = vector.shape_cast %134 : vector<1x16x128xf32> to vector<16x128xf32>
    %136 = arith.addf %132, %135 : vector<16x128xf32>
    %137 = arith.index_cast %c7_i32 : i32 to index
    %c0_51 = arith.constant 0 : index
    %c0_52 = arith.constant 0 : index
    %138 = vector.load %arg6[%137, %c0_51, %c0_52] : memref<8x16x128xf32, #tpu.memory_space<vmem>>, vector<1x16x128xf32>
    %139 = vector.shape_cast %138 : vector<1x16x128xf32> to vector<16x128xf32>
    %140 = vector.shape_cast %136 : vector<16x128xf32> to vector<1x16x128xf32>
    tpu.vector_store %arg6[%137, %c0_51, %c0_52], %140 {strides = array<i32>} : memref<8x16x128xf32, #tpu.memory_space<vmem>>, vector<1x16x128xf32>,
    %c7_i32_53 = arith.constant 7 : i32
    %cst_54 = arith.constant dense<0xFF800000> : vector<128xf32>
    %141 = vector.multi_reduction <maximumf>, %136, %cst_54 [0] : vector<16x128xf32> to vector<128xf32>
    %142 = vector.shape_cast %141 : vector<128xf32> to vector<1x128xf32>
    %143 = vector.broadcast %142 : vector<1x128xf32> to vector<16x128xf32>
    %144 = arith.subf %136, %143 : vector<16x128xf32>
    %145 = math.exp %144 : vector<16x128xf32>
    %cst_55 = arith.constant dense<0.000000e+00> : vector<6x128xf32>
    %146 = tpu.matmul %2, %145, %cst_55 {dimension_numbers = #tpu.dot_dimension_numbers<[1], [0], [0], [1], [0, 0, 1, 1], [], []>, precision = #tpu.contract_precision<fp32>} : vector<6x16xf32>, vector<16x128xf32>, vector<6x128xf32> -> vector<6x128xf32>
    %cst_56 = arith.constant 9.99999935E-39 : f32
    %147 = vector.broadcast %cst_56 : f32 to vector<6x128xf32>
    %148 = arith.maximumf %146, %147 : vector<6x128xf32>
    %149 = math.log %148 : vector<6x128xf32>
    %150 = vector.extract_strided_slice %149 {offsets = [0, 0], sizes = [5, 128], strides = [1, 1]} : vector<6x128xf32> to vector<5x128xf32>
    %151 = vector.extract_strided_slice %149 {offsets = [5, 0], sizes = [1, 128], strides = [1, 1]} : vector<6x128xf32> to vector<1x128xf32>
    %152 = vector.broadcast %151 : vector<1x128xf32> to vector<5x128xf32>
    %153 = arith.subf %150, %152 : vector<5x128xf32>
    %c7 = arith.constant 7 : index
    %c0_57 = arith.constant 0 : index
    %c0_58 = arith.constant 0 : index
    %154 = vector.load %arg5[%c7, %c0_57, %c0_58] : memref<8x5x128xf32, #tpu.memory_space<vmem>>, vector<1x5x128xf32>
    %155 = vector.shape_cast %154 : vector<1x5x128xf32> to vector<5x128xf32>
    %156 = vector.shape_cast %153 : vector<5x128xf32> to vector<1x5x128xf32>
    tpu.vector_store %arg5[%c7, %c0_57, %c0_58], %156 {strides = array<i32>} : memref<8x5x128xf32, #tpu.memory_space<vmem>>, vector<1x5x128xf32>,
    %c7_59 = arith.constant 7 : index
    %c0_60 = arith.constant 0 : index
    %c0_61 = arith.constant 0 : index
    %157 = vector.load %arg1[%c7_59, %c0_60, %c0_61] : memref<8x16x128xf32, #tpu.memory_space<vmem>>, vector<1x16x128xf32>
    %158 = vector.shape_cast %157 : vector<1x16x128xf32> to vector<16x128xf32>
    %cst_62 = arith.constant 9.99999935E-39 : f32
    %c1_i32_63 = arith.constant 1 : i32
    %c7_i32_64 = arith.constant 7 : i32
    %159 = arith.subi %c7_i32_64, %c1_i32_63 : i32
    %cst_65 = arith.constant dense<0xFF800000> : vector<128xf32>
    %160 = vector.multi_reduction <maximumf>, %158, %cst_65 [0] : vector<16x128xf32> to vector<128xf32>
    %161 = vector.shape_cast %160 : vector<128xf32> to vector<1x128xf32>
    %162 = vector.broadcast %161 : vector<1x128xf32> to vector<16x128xf32>
    %163 = arith.subf %158, %162 : vector<16x128xf32>
    %164 = math.exp %163 : vector<16x128xf32>
    %cst_66 = arith.constant dense<0.000000e+00> : vector<16x128xf32>
    %165 = tpu.matmul %1, %164, %cst_66 {dimension_numbers = #tpu.dot_dimension_numbers<[1], [0], [0], [1], [0, 0, 1, 1], [], []>, precision = #tpu.contract_precision<fp32>} : vector<16x16xf32>, vector<16x128xf32>, vector<16x128xf32> -> vector<16x128xf32>
    %166 = vector.broadcast %cst_62 : f32 to vector<16x128xf32>
    %167 = arith.maximumf %165, %166 : vector<16x128xf32>
    %168 = math.log %167 : vector<16x128xf32>
    %169 = vector.broadcast %161 : vector<1x128xf32> to vector<16x128xf32>
    %170 = arith.addf %168, %169 : vector<16x128xf32>
    %171 = arith.index_cast %159 : i32 to index
    %c0_67 = arith.constant 0 : index
    %c0_68 = arith.constant 0 : index
    %172 = vector.load %arg6[%171, %c0_67, %c0_68] : memref<8x16x128xf32, #tpu.memory_space<vmem>>, vector<1x16x128xf32>
    %173 = vector.shape_cast %172 : vector<1x16x128xf32> to vector<16x128xf32>
    %174 = arith.addf %173, %170 : vector<16x128xf32>
    %cst_69 = arith.constant dense<0xFF800000> : vector<128xf32>
    %175 = vector.multi_reduction <maximumf>, %174, %cst_69 [0] : vector<16x128xf32> to vector<128xf32>
    %176 = vector.shape_cast %175 : vector<128xf32> to vector<1x128xf32>
    %177 = vector.broadcast %176 : vector<1x128xf32> to vector<16x128xf32>
    %178 = arith.subf %174, %177 : vector<16x128xf32>
    %179 = math.exp %178 : vector<16x128xf32>
    %cst_70 = arith.constant dense<0.000000e+00> : vector<6x128xf32>
    %180 = tpu.matmul %2, %179, %cst_70 {dimension_numbers = #tpu.dot_dimension_numbers<[1], [0], [0], [1], [0, 0, 1, 1], [], []>, precision = #tpu.contract_precision<fp32>} : vector<6x16xf32>, vector<16x128xf32>, vector<6x128xf32> -> vector<6x128xf32>
    %181 = vector.broadcast %cst_62 : f32 to vector<6x128xf32>
    %182 = arith.maximumf %180, %181 : vector<6x128xf32>
    %183 = math.log %182 : vector<6x128xf32>
    %184 = vector.extract_strided_slice %183 {offsets = [0, 0], sizes = [5, 128], strides = [1, 1]} : vector<6x128xf32> to vector<5x128xf32>
    %185 = vector.extract_strided_slice %183 {offsets = [5, 0], sizes = [1, 128], strides = [1, 1]} : vector<6x128xf32> to vector<1x128xf32>
    %186 = vector.broadcast %185 : vector<1x128xf32> to vector<5x128xf32>
    %187 = arith.subf %184, %186 : vector<5x128xf32>
    %188 = arith.index_cast %159 : i32 to index
    %c0_71 = arith.constant 0 : index
    %c0_72 = arith.constant 0 : index
    %189 = vector.load %arg5[%188, %c0_71, %c0_72] : memref<8x5x128xf32, #tpu.memory_space<vmem>>, vector<1x5x128xf32>
    %190 = vector.shape_cast %189 : vector<1x5x128xf32> to vector<5x128xf32>
    %191 = vector.shape_cast %187 : vector<5x128xf32> to vector<1x5x128xf32>
    tpu.vector_store %arg5[%188, %c0_71, %c0_72], %191 {strides = array<i32>} : memref<8x5x128xf32, #tpu.memory_space<vmem>>, vector<1x5x128xf32>,
    %192 = arith.index_cast %159 : i32 to index
    %c0_73 = arith.constant 0 : index
    %c0_74 = arith.constant 0 : index
    %193 = vector.load %arg1[%192, %c0_73, %c0_74] : memref<8x16x128xf32, #tpu.memory_space<vmem>>, vector<1x16x128xf32>
    %194 = vector.shape_cast %193 : vector<1x16x128xf32> to vector<16x128xf32>
    %195 = arith.addf %170, %194 : vector<16x128xf32>
    %c2_i32_75 = arith.constant 2 : i32
    %c7_i32_76 = arith.constant 7 : i32
    %196 = arith.subi %c7_i32_76, %c2_i32_75 : i32
    %cst_77 = arith.constant dense<0xFF800000> : vector<128xf32>
    %197 = vector.multi_reduction <maximumf>, %195, %cst_77 [0] : vector<16x128xf32> to vector<128xf32>
    %198 = vector.shape_cast %197 : vector<128xf32> to vector<1x128xf32>
    %199 = vector.broadcast %198 : vector<1x128xf32> to vector<16x128xf32>
    %200 = arith.subf %195, %199 : vector<16x128xf32>
    %201 = math.exp %200 : vector<16x128xf32>
    %cst_78 = arith.constant dense<0.000000e+00> : vector<16x128xf32>
    %202 = tpu.matmul %1, %201, %cst_78 {dimension_numbers = #tpu.dot_dimension_numbers<[1], [0], [0], [1], [0, 0, 1, 1], [], []>, precision = #tpu.contract_precision<fp32>} : vector<16x16xf32>, vector<16x128xf32>, vector<16x128xf32> -> vector<16x128xf32>
    %203 = vector.broadcast %cst_62 : f32 to vector<16x128xf32>
    %204 = arith.maximumf %202, %203 : vector<16x128xf32>
    %205 = math.log %204 : vector<16x128xf32>
    %206 = vector.broadcast %198 : vector<1x128xf32> to vector<16x128xf32>
    %207 = arith.addf %205, %206 : vector<16x128xf32>
    %208 = arith.index_cast %196 : i32 to index
    %c0_79 = arith.constant 0 : index
    %c0_80 = arith.constant 0 : index
    %209 = vector.load %arg6[%208, %c0_79, %c0_80] : memref<8x16x128xf32, #tpu.memory_space<vmem>>, vector<1x16x128xf32>
    %210 = vector.shape_cast %209 : vector<1x16x128xf32> to vector<16x128xf32>
    %211 = arith.addf %210, %207 : vector<16x128xf32>
    %cst_81 = arith.constant dense<0xFF800000> : vector<128xf32>
    %212 = vector.multi_reduction <maximumf>, %211, %cst_81 [0] : vector<16x128xf32> to vector<128xf32>
    %213 = vector.shape_cast %212 : vector<128xf32> to vector<1x128xf32>
    %214 = vector.broadcast %213 : vector<1x128xf32> to vector<16x128xf32>
    %215 = arith.subf %211, %214 : vector<16x128xf32>
    %216 = math.exp %215 : vector<16x128xf32>
    %cst_82 = arith.constant dense<0.000000e+00> : vector<6x128xf32>
    %217 = tpu.matmul %2, %216, %cst_82 {dimension_numbers = #tpu.dot_dimension_numbers<[1], [0], [0], [1], [0, 0, 1, 1], [], []>, precision = #tpu.contract_precision<fp32>} : vector<6x16xf32>, vector<16x128xf32>, vector<6x128xf32> -> vector<6x128xf32>
    %218 = vector.broadcast %cst_62 : f32 to vector<6x128xf32>
    %219 = arith.maximumf %217, %218 : vector<6x128xf32>
    %220 = math.log %219 : vector<6x128xf32>
    %221 = vector.extract_strided_slice %220 {offsets = [0, 0], sizes = [5, 128], strides = [1, 1]} : vector<6x128xf32> to vector<5x128xf32>
    %222 = vector.extract_strided_slice %220 {offsets = [5, 0], sizes = [1, 128], strides = [1, 1]} : vector<6x128xf32> to vector<1x128xf32>
    %223 = vector.broadcast %222 : vector<1x128xf32> to vector<5x128xf32>
    %224 = arith.subf %221, %223 : vector<5x128xf32>
    %225 = arith.index_cast %196 : i32 to index
    %c0_83 = arith.constant 0 : index
    %c0_84 = arith.constant 0 : index
    %226 = vector.load %arg5[%225, %c0_83, %c0_84] : memref<8x5x128xf32, #tpu.memory_space<vmem>>, vector<1x5x128xf32>
    %227 = vector.shape_cast %226 : vector<1x5x128xf32> to vector<5x128xf32>
    %228 = vector.shape_cast %224 : vector<5x128xf32> to vector<1x5x128xf32>
    tpu.vector_store %arg5[%225, %c0_83, %c0_84], %228 {strides = array<i32>} : memref<8x5x128xf32, #tpu.memory_space<vmem>>, vector<1x5x128xf32>,
    %229 = arith.index_cast %196 : i32 to index
    %c0_85 = arith.constant 0 : index
    %c0_86 = arith.constant 0 : index
    %230 = vector.load %arg1[%229, %c0_85, %c0_86] : memref<8x16x128xf32, #tpu.memory_space<vmem>>, vector<1x16x128xf32>
    %231 = vector.shape_cast %230 : vector<1x16x128xf32> to vector<16x128xf32>
    %232 = arith.addf %207, %231 : vector<16x128xf32>
    %c3_i32_87 = arith.constant 3 : i32
    %c7_i32_88 = arith.constant 7 : i32
    %233 = arith.subi %c7_i32_88, %c3_i32_87 : i32
    %cst_89 = arith.constant dense<0xFF800000> : vector<128xf32>
    %234 = vector.multi_reduction <maximumf>, %232, %cst_89 [0] : vector<16x128xf32> to vector<128xf32>
    %235 = vector.shape_cast %234 : vector<128xf32> to vector<1x128xf32>
    %236 = vector.broadcast %235 : vector<1x128xf32> to vector<16x128xf32>
    %237 = arith.subf %232, %236 : vector<16x128xf32>
    %238 = math.exp %237 : vector<16x128xf32>
    %cst_90 = arith.constant dense<0.000000e+00> : vector<16x128xf32>
    %239 = tpu.matmul %1, %238, %cst_90 {dimension_numbers = #tpu.dot_dimension_numbers<[1], [0], [0], [1], [0, 0, 1, 1], [], []>, precision = #tpu.contract_precision<fp32>} : vector<16x16xf32>, vector<16x128xf32>, vector<16x128xf32> -> vector<16x128xf32>
    %240 = vector.broadcast %cst_62 : f32 to vector<16x128xf32>
    %241 = arith.maximumf %239, %240 : vector<16x128xf32>
    %242 = math.log %241 : vector<16x128xf32>
    %243 = vector.broadcast %235 : vector<1x128xf32> to vector<16x128xf32>
    %244 = arith.addf %242, %243 : vector<16x128xf32>
    %245 = arith.index_cast %233 : i32 to index
    %c0_91 = arith.constant 0 : index
    %c0_92 = arith.constant 0 : index
    %246 = vector.load %arg6[%245, %c0_91, %c0_92] : memref<8x16x128xf32, #tpu.memory_space<vmem>>, vector<1x16x128xf32>
    %247 = vector.shape_cast %246 : vector<1x16x128xf32> to vector<16x128xf32>
    %248 = arith.addf %247, %244 : vector<16x128xf32>
    %cst_93 = arith.constant dense<0xFF800000> : vector<128xf32>
    %249 = vector.multi_reduction <maximumf>, %248, %cst_93 [0] : vector<16x128xf32> to vector<128xf32>
    %250 = vector.shape_cast %249 : vector<128xf32> to vector<1x128xf32>
    %251 = vector.broadcast %250 : vector<1x128xf32> to vector<16x128xf32>
    %252 = arith.subf %248, %251 : vector<16x128xf32>
    %253 = math.exp %252 : vector<16x128xf32>
    %cst_94 = arith.constant dense<0.000000e+00> : vector<6x128xf32>
    %254 = tpu.matmul %2, %253, %cst_94 {dimension_numbers = #tpu.dot_dimension_numbers<[1], [0], [0], [1], [0, 0, 1, 1], [], []>, precision = #tpu.contract_precision<fp32>} : vector<6x16xf32>, vector<16x128xf32>, vector<6x128xf32> -> vector<6x128xf32>
    %255 = vector.broadcast %cst_62 : f32 to vector<6x128xf32>
    %256 = arith.maximumf %254, %255 : vector<6x128xf32>
    %257 = math.log %256 : vector<6x128xf32>
    %258 = vector.extract_strided_slice %257 {offsets = [0, 0], sizes = [5, 128], strides = [1, 1]} : vector<6x128xf32> to vector<5x128xf32>
    %259 = vector.extract_strided_slice %257 {offsets = [5, 0], sizes = [1, 128], strides = [1, 1]} : vector<6x128xf32> to vector<1x128xf32>
    %260 = vector.broadcast %259 : vector<1x128xf32> to vector<5x128xf32>
    %261 = arith.subf %258, %260 : vector<5x128xf32>
    %262 = arith.index_cast %233 : i32 to index
    %c0_95 = arith.constant 0 : index
    %c0_96 = arith.constant 0 : index
    %263 = vector.load %arg5[%262, %c0_95, %c0_96] : memref<8x5x128xf32, #tpu.memory_space<vmem>>, vector<1x5x128xf32>
    %264 = vector.shape_cast %263 : vector<1x5x128xf32> to vector<5x128xf32>
    %265 = vector.shape_cast %261 : vector<5x128xf32> to vector<1x5x128xf32>
    tpu.vector_store %arg5[%262, %c0_95, %c0_96], %265 {strides = array<i32>} : memref<8x5x128xf32, #tpu.memory_space<vmem>>, vector<1x5x128xf32>,
    %266 = arith.index_cast %233 : i32 to index
    %c0_97 = arith.constant 0 : index
    %c0_98 = arith.constant 0 : index
    %267 = vector.load %arg1[%266, %c0_97, %c0_98] : memref<8x16x128xf32, #tpu.memory_space<vmem>>, vector<1x16x128xf32>
    %268 = vector.shape_cast %267 : vector<1x16x128xf32> to vector<16x128xf32>
    %269 = arith.addf %244, %268 : vector<16x128xf32>
    %c4_i32_99 = arith.constant 4 : i32
    %c7_i32_100 = arith.constant 7 : i32
    %270 = arith.subi %c7_i32_100, %c4_i32_99 : i32
    %cst_101 = arith.constant dense<0xFF800000> : vector<128xf32>
    %271 = vector.multi_reduction <maximumf>, %269, %cst_101 [0] : vector<16x128xf32> to vector<128xf32>
    %272 = vector.shape_cast %271 : vector<128xf32> to vector<1x128xf32>
    %273 = vector.broadcast %272 : vector<1x128xf32> to vector<16x128xf32>
    %274 = arith.subf %269, %273 : vector<16x128xf32>
    %275 = math.exp %274 : vector<16x128xf32>
    %cst_102 = arith.constant dense<0.000000e+00> : vector<16x128xf32>
    %276 = tpu.matmul %1, %275, %cst_102 {dimension_numbers = #tpu.dot_dimension_numbers<[1], [0], [0], [1], [0, 0, 1, 1], [], []>, precision = #tpu.contract_precision<fp32>} : vector<16x16xf32>, vector<16x128xf32>, vector<16x128xf32> -> vector<16x128xf32>
    %277 = vector.broadcast %cst_62 : f32 to vector<16x128xf32>
    %278 = arith.maximumf %276, %277 : vector<16x128xf32>
    %279 = math.log %278 : vector<16x128xf32>
    %280 = vector.broadcast %272 : vector<1x128xf32> to vector<16x128xf32>
    %281 = arith.addf %279, %280 : vector<16x128xf32>
    %282 = arith.index_cast %270 : i32 to index
    %c0_103 = arith.constant 0 : index
    %c0_104 = arith.constant 0 : index
    %283 = vector.load %arg6[%282, %c0_103, %c0_104] : memref<8x16x128xf32, #tpu.memory_space<vmem>>, vector<1x16x128xf32>
    %284 = vector.shape_cast %283 : vector<1x16x128xf32> to vector<16x128xf32>
    %285 = arith.addf %284, %281 : vector<16x128xf32>
    %cst_105 = arith.constant dense<0xFF800000> : vector<128xf32>
    %286 = vector.multi_reduction <maximumf>, %285, %cst_105 [0] : vector<16x128xf32> to vector<128xf32>
    %287 = vector.shape_cast %286 : vector<128xf32> to vector<1x128xf32>
    %288 = vector.broadcast %287 : vector<1x128xf32> to vector<16x128xf32>
    %289 = arith.subf %285, %288 : vector<16x128xf32>
    %290 = math.exp %289 : vector<16x128xf32>
    %cst_106 = arith.constant dense<0.000000e+00> : vector<6x128xf32>
    %291 = tpu.matmul %2, %290, %cst_106 {dimension_numbers = #tpu.dot_dimension_numbers<[1], [0], [0], [1], [0, 0, 1, 1], [], []>, precision = #tpu.contract_precision<fp32>} : vector<6x16xf32>, vector<16x128xf32>, vector<6x128xf32> -> vector<6x128xf32>
    %292 = vector.broadcast %cst_62 : f32 to vector<6x128xf32>
    %293 = arith.maximumf %291, %292 : vector<6x128xf32>
    %294 = math.log %293 : vector<6x128xf32>
    %295 = vector.extract_strided_slice %294 {offsets = [0, 0], sizes = [5, 128], strides = [1, 1]} : vector<6x128xf32> to vector<5x128xf32>
    %296 = vector.extract_strided_slice %294 {offsets = [5, 0], sizes = [1, 128], strides = [1, 1]} : vector<6x128xf32> to vector<1x128xf32>
    %297 = vector.broadcast %296 : vector<1x128xf32> to vector<5x128xf32>
    %298 = arith.subf %295, %297 : vector<5x128xf32>
    %299 = arith.index_cast %270 : i32 to index
    %c0_107 = arith.constant 0 : index
    %c0_108 = arith.constant 0 : index
    %300 = vector.load %arg5[%299, %c0_107, %c0_108] : memref<8x5x128xf32, #tpu.memory_space<vmem>>, vector<1x5x128xf32>
    %301 = vector.shape_cast %300 : vector<1x5x128xf32> to vector<5x128xf32>
    %302 = vector.shape_cast %298 : vector<5x128xf32> to vector<1x5x128xf32>
    tpu.vector_store %arg5[%299, %c0_107, %c0_108], %302 {strides = array<i32>} : memref<8x5x128xf32, #tpu.memory_space<vmem>>, vector<1x5x128xf32>,
    %303 = arith.index_cast %270 : i32 to index
    %c0_109 = arith.constant 0 : index
    %c0_110 = arith.constant 0 : index
    %304 = vector.load %arg1[%303, %c0_109, %c0_110] : memref<8x16x128xf32, #tpu.memory_space<vmem>>, vector<1x16x128xf32>
    %305 = vector.shape_cast %304 : vector<1x16x128xf32> to vector<16x128xf32>
    %306 = arith.addf %281, %305 : vector<16x128xf32>
    %c5_i32_111 = arith.constant 5 : i32
    %c7_i32_112 = arith.constant 7 : i32
    %307 = arith.subi %c7_i32_112, %c5_i32_111 : i32
    %cst_113 = arith.constant dense<0xFF800000> : vector<128xf32>
    %308 = vector.multi_reduction <maximumf>, %306, %cst_113 [0] : vector<16x128xf32> to vector<128xf32>
    %309 = vector.shape_cast %308 : vector<128xf32> to vector<1x128xf32>
    %310 = vector.broadcast %309 : vector<1x128xf32> to vector<16x128xf32>
    %311 = arith.subf %306, %310 : vector<16x128xf32>
    %312 = math.exp %311 : vector<16x128xf32>
    %cst_114 = arith.constant dense<0.000000e+00> : vector<16x128xf32>
    %313 = tpu.matmul %1, %312, %cst_114 {dimension_numbers = #tpu.dot_dimension_numbers<[1], [0], [0], [1], [0, 0, 1, 1], [], []>, precision = #tpu.contract_precision<fp32>} : vector<16x16xf32>, vector<16x128xf32>, vector<16x128xf32> -> vector<16x128xf32>
    %314 = vector.broadcast %cst_62 : f32 to vector<16x128xf32>
    %315 = arith.maximumf %313, %314 : vector<16x128xf32>
    %316 = math.log %315 : vector<16x128xf32>
    %317 = vector.broadcast %309 : vector<1x128xf32> to vector<16x128xf32>
    %318 = arith.addf %316, %317 : vector<16x128xf32>
    %319 = arith.index_cast %307 : i32 to index
    %c0_115 = arith.constant 0 : index
    %c0_116 = arith.constant 0 : index
    %320 = vector.load %arg6[%319, %c0_115, %c0_116] : memref<8x16x128xf32, #tpu.memory_space<vmem>>, vector<1x16x128xf32>
    %321 = vector.shape_cast %320 : vector<1x16x128xf32> to vector<16x128xf32>
    %322 = arith.addf %321, %318 : vector<16x128xf32>
    %cst_117 = arith.constant dense<0xFF800000> : vector<128xf32>
    %323 = vector.multi_reduction <maximumf>, %322, %cst_117 [0] : vector<16x128xf32> to vector<128xf32>
    %324 = vector.shape_cast %323 : vector<128xf32> to vector<1x128xf32>
    %325 = vector.broadcast %324 : vector<1x128xf32> to vector<16x128xf32>
    %326 = arith.subf %322, %325 : vector<16x128xf32>
    %327 = math.exp %326 : vector<16x128xf32>
    %cst_118 = arith.constant dense<0.000000e+00> : vector<6x128xf32>
    %328 = tpu.matmul %2, %327, %cst_118 {dimension_numbers = #tpu.dot_dimension_numbers<[1], [0], [0], [1], [0, 0, 1, 1], [], []>, precision = #tpu.contract_precision<fp32>} : vector<6x16xf32>, vector<16x128xf32>, vector<6x128xf32> -> vector<6x128xf32>
    %329 = vector.broadcast %cst_62 : f32 to vector<6x128xf32>
    %330 = arith.maximumf %328, %329 : vector<6x128xf32>
    %331 = math.log %330 : vector<6x128xf32>
    %332 = vector.extract_strided_slice %331 {offsets = [0, 0], sizes = [5, 128], strides = [1, 1]} : vector<6x128xf32> to vector<5x128xf32>
    %333 = vector.extract_strided_slice %331 {offsets = [5, 0], sizes = [1, 128], strides = [1, 1]} : vector<6x128xf32> to vector<1x128xf32>
    %334 = vector.broadcast %333 : vector<1x128xf32> to vector<5x128xf32>
    %335 = arith.subf %332, %334 : vector<5x128xf32>
    %336 = arith.index_cast %307 : i32 to index
    %c0_119 = arith.constant 0 : index
    %c0_120 = arith.constant 0 : index
    %337 = vector.load %arg5[%336, %c0_119, %c0_120] : memref<8x5x128xf32, #tpu.memory_space<vmem>>, vector<1x5x128xf32>
    %338 = vector.shape_cast %337 : vector<1x5x128xf32> to vector<5x128xf32>
    %339 = vector.shape_cast %335 : vector<5x128xf32> to vector<1x5x128xf32>
    tpu.vector_store %arg5[%336, %c0_119, %c0_120], %339 {strides = array<i32>} : memref<8x5x128xf32, #tpu.memory_space<vmem>>, vector<1x5x128xf32>,
    %340 = arith.index_cast %307 : i32 to index
    %c0_121 = arith.constant 0 : index
    %c0_122 = arith.constant 0 : index
    %341 = vector.load %arg1[%340, %c0_121, %c0_122] : memref<8x16x128xf32, #tpu.memory_space<vmem>>, vector<1x16x128xf32>
    %342 = vector.shape_cast %341 : vector<1x16x128xf32> to vector<16x128xf32>
    %343 = arith.addf %318, %342 : vector<16x128xf32>
    %c6_i32_123 = arith.constant 6 : i32
    %c7_i32_124 = arith.constant 7 : i32
    %344 = arith.subi %c7_i32_124, %c6_i32_123 : i32
    %cst_125 = arith.constant dense<0xFF800000> : vector<128xf32>
    %345 = vector.multi_reduction <maximumf>, %343, %cst_125 [0] : vector<16x128xf32> to vector<128xf32>
    %346 = vector.shape_cast %345 : vector<128xf32> to vector<1x128xf32>
    %347 = vector.broadcast %346 : vector<1x128xf32> to vector<16x128xf32>
    %348 = arith.subf %343, %347 : vector<16x128xf32>
    %349 = math.exp %348 : vector<16x128xf32>
    %cst_126 = arith.constant dense<0.000000e+00> : vector<16x128xf32>
    %350 = tpu.matmul %1, %349, %cst_126 {dimension_numbers = #tpu.dot_dimension_numbers<[1], [0], [0], [1], [0, 0, 1, 1], [], []>, precision = #tpu.contract_precision<fp32>} : vector<16x16xf32>, vector<16x128xf32>, vector<16x128xf32> -> vector<16x128xf32>
    %351 = vector.broadcast %cst_62 : f32 to vector<16x128xf32>
    %352 = arith.maximumf %350, %351 : vector<16x128xf32>
    %353 = math.log %352 : vector<16x128xf32>
    %354 = vector.broadcast %346 : vector<1x128xf32> to vector<16x128xf32>
    %355 = arith.addf %353, %354 : vector<16x128xf32>
    %356 = arith.index_cast %344 : i32 to index
    %c0_127 = arith.constant 0 : index
    %c0_128 = arith.constant 0 : index
    %357 = vector.load %arg6[%356, %c0_127, %c0_128] : memref<8x16x128xf32, #tpu.memory_space<vmem>>, vector<1x16x128xf32>
    %358 = vector.shape_cast %357 : vector<1x16x128xf32> to vector<16x128xf32>
    %359 = arith.addf %358, %355 : vector<16x128xf32>
    %cst_129 = arith.constant dense<0xFF800000> : vector<128xf32>
    %360 = vector.multi_reduction <maximumf>, %359, %cst_129 [0] : vector<16x128xf32> to vector<128xf32>
    %361 = vector.shape_cast %360 : vector<128xf32> to vector<1x128xf32>
    %362 = vector.broadcast %361 : vector<1x128xf32> to vector<16x128xf32>
    %363 = arith.subf %359, %362 : vector<16x128xf32>
    %364 = math.exp %363 : vector<16x128xf32>
    %cst_130 = arith.constant dense<0.000000e+00> : vector<6x128xf32>
    %365 = tpu.matmul %2, %364, %cst_130 {dimension_numbers = #tpu.dot_dimension_numbers<[1], [0], [0], [1], [0, 0, 1, 1], [], []>, precision = #tpu.contract_precision<fp32>} : vector<6x16xf32>, vector<16x128xf32>, vector<6x128xf32> -> vector<6x128xf32>
    %366 = vector.broadcast %cst_62 : f32 to vector<6x128xf32>
    %367 = arith.maximumf %365, %366 : vector<6x128xf32>
    %368 = math.log %367 : vector<6x128xf32>
    %369 = vector.extract_strided_slice %368 {offsets = [0, 0], sizes = [5, 128], strides = [1, 1]} : vector<6x128xf32> to vector<5x128xf32>
    %370 = vector.extract_strided_slice %368 {offsets = [5, 0], sizes = [1, 128], strides = [1, 1]} : vector<6x128xf32> to vector<1x128xf32>
    %371 = vector.broadcast %370 : vector<1x128xf32> to vector<5x128xf32>
    %372 = arith.subf %369, %371 : vector<5x128xf32>
    %373 = arith.index_cast %344 : i32 to index
    %c0_131 = arith.constant 0 : index
    %c0_132 = arith.constant 0 : index
    %374 = vector.load %arg5[%373, %c0_131, %c0_132] : memref<8x5x128xf32, #tpu.memory_space<vmem>>, vector<1x5x128xf32>
    %375 = vector.shape_cast %374 : vector<1x5x128xf32> to vector<5x128xf32>
    %376 = vector.shape_cast %372 : vector<5x128xf32> to vector<1x5x128xf32>
    tpu.vector_store %arg5[%373, %c0_131, %c0_132], %376 {strides = array<i32>} : memref<8x5x128xf32, #tpu.memory_space<vmem>>, vector<1x5x128xf32>,
    %377 = arith.index_cast %344 : i32 to index
    %c0_133 = arith.constant 0 : index
    %c0_134 = arith.constant 0 : index
    %378 = vector.load %arg1[%377, %c0_133, %c0_134] : memref<8x16x128xf32, #tpu.memory_space<vmem>>, vector<1x16x128xf32>
    %379 = vector.shape_cast %378 : vector<1x16x128xf32> to vector<16x128xf32>
    %380 = arith.addf %355, %379 : vector<16x128xf32>
    %c7_i32_135 = arith.constant 7 : i32
    %c7_i32_136 = arith.constant 7 : i32
    %381 = arith.subi %c7_i32_136, %c7_i32_135 : i32
    %cst_137 = arith.constant dense<0xFF800000> : vector<128xf32>
    %382 = vector.multi_reduction <maximumf>, %380, %cst_137 [0] : vector<16x128xf32> to vector<128xf32>
    %383 = vector.shape_cast %382 : vector<128xf32> to vector<1x128xf32>
    %384 = vector.broadcast %383 : vector<1x128xf32> to vector<16x128xf32>
    %385 = arith.subf %380, %384 : vector<16x128xf32>
    %386 = math.exp %385 : vector<16x128xf32>
    %cst_138 = arith.constant dense<0.000000e+00> : vector<16x128xf32>
    %387 = tpu.matmul %1, %386, %cst_138 {dimension_numbers = #tpu.dot_dimension_numbers<[1], [0], [0], [1], [0, 0, 1, 1], [], []>, precision = #tpu.contract_precision<fp32>} : vector<16x16xf32>, vector<16x128xf32>, vector<16x128xf32> -> vector<16x128xf32>
    %388 = vector.broadcast %cst_62 : f32 to vector<16x128xf32>
    %389 = arith.maximumf %387, %388 : vector<16x128xf32>
    %390 = math.log %389 : vector<16x128xf32>
    %391 = vector.broadcast %383 : vector<1x128xf32> to vector<16x128xf32>
    %392 = arith.addf %390, %391 : vector<16x128xf32>
    %393 = arith.index_cast %381 : i32 to index
    %c0_139 = arith.constant 0 : index
    %c0_140 = arith.constant 0 : index
    %394 = vector.load %arg6[%393, %c0_139, %c0_140] : memref<8x16x128xf32, #tpu.memory_space<vmem>>, vector<1x16x128xf32>
    %395 = vector.shape_cast %394 : vector<1x16x128xf32> to vector<16x128xf32>
    %396 = arith.addf %395, %392 : vector<16x128xf32>
    %cst_141 = arith.constant dense<0xFF800000> : vector<128xf32>
    %397 = vector.multi_reduction <maximumf>, %396, %cst_141 [0] : vector<16x128xf32> to vector<128xf32>
    %398 = vector.shape_cast %397 : vector<128xf32> to vector<1x128xf32>
    %399 = vector.broadcast %398 : vector<1x128xf32> to vector<16x128xf32>
    %400 = arith.subf %396, %399 : vector<16x128xf32>
    %401 = math.exp %400 : vector<16x128xf32>
    %cst_142 = arith.constant dense<0.000000e+00> : vector<6x128xf32>
    %402 = tpu.matmul %2, %401, %cst_142 {dimension_numbers = #tpu.dot_dimension_numbers<[1], [0], [0], [1], [0, 0, 1, 1], [], []>, precision = #tpu.contract_precision<fp32>} : vector<6x16xf32>, vector<16x128xf32>, vector<6x128xf32> -> vector<6x128xf32>
    %403 = vector.broadcast %cst_62 : f32 to vector<6x128xf32>
    %404 = arith.maximumf %402, %403 : vector<6x128xf32>
    %405 = math.log %404 : vector<6x128xf32>
    %406 = vector.extract_strided_slice %405 {offsets = [0, 0], sizes = [5, 128], strides = [1, 1]} : vector<6x128xf32> to vector<5x128xf32>
    %407 = vector.extract_strided_slice %405 {offsets = [5, 0], sizes = [1, 128], strides = [1, 1]} : vector<6x128xf32> to vector<1x128xf32>
    %408 = vector.broadcast %407 : vector<1x128xf32> to vector<5x128xf32>
    %409 = arith.subf %406, %408 : vector<5x128xf32>
    %410 = arith.index_cast %381 : i32 to index
    %c0_143 = arith.constant 0 : index
    %c0_144 = arith.constant 0 : index
    %411 = vector.load %arg5[%410, %c0_143, %c0_144] : memref<8x5x128xf32, #tpu.memory_space<vmem>>, vector<1x5x128xf32>
    %412 = vector.shape_cast %411 : vector<1x5x128xf32> to vector<5x128xf32>
    %413 = vector.shape_cast %409 : vector<5x128xf32> to vector<1x5x128xf32>
    tpu.vector_store %arg5[%410, %c0_143, %c0_144], %413 {strides = array<i32>} : memref<8x5x128xf32, #tpu.memory_space<vmem>>, vector<1x5x128xf32>,
    %414 = arith.index_cast %381 : i32 to index
    %c0_145 = arith.constant 0 : index
    %c0_146 = arith.constant 0 : index
    %415 = vector.load %arg1[%414, %c0_145, %c0_146] : memref<8x16x128xf32, #tpu.memory_space<vmem>>, vector<1x16x128xf32>
    %416 = vector.shape_cast %415 : vector<1x16x128xf32> to vector<16x128xf32>
    %417 = arith.addf %392, %416 : vector<16x128xf32>
    %c7_i32_147 = arith.constant 7 : i32
    return
  }
  func.func @transform_0(%arg0: i32) -> (i32, i32, i32) {
    %c0_i32 = arith.constant 0 : i32
    %c0_i32_0 = arith.constant 0 : i32
    %c0_i32_1 = arith.constant 0 : i32
    return %c0_i32, %c0_i32_0, %arg0 : i32, i32, i32
  }
  func.func @transform_1(%arg0: i32) -> (i32, i32) {
    %c0_i32 = arith.constant 0 : i32
    %c0_i32_0 = arith.constant 0 : i32
    %c0_i32_1 = arith.constant 0 : i32
    return %c0_i32, %c0_i32_0 : i32, i32
  }
  func.func @transform_2(%arg0: i32) -> (i32, i32) {
    %c0_i32 = arith.constant 0 : i32
    %c0_i32_0 = arith.constant 0 : i32
    %c0_i32_1 = arith.constant 0 : i32
    return %c0_i32, %c0_i32_0 : i32, i32
  }
  func.func @transform_3(%arg0: i32) -> (i32, i32) {
    %c0_i32 = arith.constant 0 : i32
    %c0_i32_0 = arith.constant 0 : i32
    %c0_i32_1 = arith.constant 0 : i32
    return %c0_i32, %c0_i32_0 : i32, i32
  }
  func.func @transform_4(%arg0: i32) -> (i32, i32, i32) {
    %c0_i32 = arith.constant 0 : i32
    %c0_i32_0 = arith.constant 0 : i32
    %c0_i32_1 = arith.constant 0 : i32
    return %c0_i32, %c0_i32_0, %arg0 : i32, i32, i32
  }
}

</mosaic_0001>

<llo_original>
// kernel: weight_iohmm_forward.1
$region0: #{weight_iohmm_forward.1}
  #allocation0 [shape = 'u32[]', space=smem, size = 0x4, offset = 0x4, fixed_abs, tag = 'smem constant byte address 0x4 - core index']
  #allocation1 [shape = 'u32[144,128]{1,0:T(1,128)}', space=vmem, size = 0x12000, scoped, tag = 'internal scratch']
  #allocation2 [shape = 'f32[8,16,128]{2,1,0:T(8,128)}', space=vmem, size = 0x10000, scoped, tag = 'scratch operand']
  %s0 = inlined_call_operand.vmem [shape: f32[8,16,128], index: 0, kind: input, shape index: {}]
  %s1 = inlined_call_operand.vmem [shape: f32[16,16], index: 1, kind: input, shape index: {}]
  %s2 = inlined_call_operand.vmem [shape: f32[16,16], index: 2, kind: input, shape index: {}]
  %s3 = inlined_call_operand.vmem [shape: f32[6,16], index: 3, kind: input, shape index: {}]
  %s4 = inlined_call_operand.vmem [shape: f32[8,5,128], index: 4, kind: output, shape index: {}]
  %s5 = sld [smem:[#allocation0]]
  $region26: #{weight_iohmm_forward.1} parent=0
    _
  %s7 = ssub.s32 1, %s5
  %s8 = scalar_select 0, %s7, %s5
  // Predicated region
  $region2: #{weight_iohmm_forward.1} parent=0 // pred_check
    _
  $region3: #{weight_iohmm_forward.1} parent=0 // pred_check_branch
    %10 = sbr.rel (0) target = $region5
  $region4: #{weight_iohmm_forward.1} parent=0 // pred_region
    _
  $region5: #{weight_iohmm_forward.1} parent=0 // pred_fallthru
    _
  // Predicated region
  $region6: #{weight_iohmm_forward.1} parent=0 // pred_check
    _
  $region7: #{weight_iohmm_forward.1} parent=0 // pred_check_branch
    %12 = sbr.rel (0) target = $region9
  $region8: #{weight_iohmm_forward.1} parent=0 // pred_region
    _
  $region9: #{weight_iohmm_forward.1} parent=0 // pred_fallthru
    _
  // Predicated region
  $region10: #{weight_iohmm_forward.1} parent=0 // pred_check
    _
  $region11: #{weight_iohmm_forward.1} parent=0 // pred_check_branch
    %14 = sbr.rel (0) target = $region13
  $region12: #{weight_iohmm_forward.1} parent=0 // pred_region
    _
  $region13: #{weight_iohmm_forward.1} parent=0 // pred_fallthru
    _
  // Predicated region
  $region14: #{weight_iohmm_forward.1} parent=0 // pred_check
    _
  $region15: #{weight_iohmm_forward.1} parent=0 // pred_check_branch
    %16 = sbr.rel (0) target = $region17
  $region16: #{weight_iohmm_forward.1} parent=0 // pred_region
    _
  $region17: #{weight_iohmm_forward.1} parent=0 // pred_fallthru
    _
  %v17 = vld [vmem:[%s1] sm:$0xff]
  %v18 = vld [vmem:[%s1 + $0x8] sm:$0xff]
  %v19 = vld [vmem:[%s2] sm:$0xff]
  %v20 = vld [vmem:[%s2 + $0x8] sm:$0xff]
  %v21 = vld [vmem:[%s3] sm:$0x3f]
  %v22 = vld [vmem:[%s0] sm:$0xff]
  %v23 = vld [vmem:[%s0 + $0x8] sm:$0xff]
  %24 = vst [vmem:[#allocation2] sm:$0xff] %v22
  %25 = vst [vmem:[#allocation2 + $0x8] sm:$0xff] %v23
  %v26 = vmax.f32 %v22, %v23
  %v27 = vrot.slane %v26, 4
  %v28 = vmax.f32 %v26, %v27
  %v29 = vrot.slane %v28, 2
  %v30 = vmax.f32 %v28, %v29
  %v31 = vrot.slane %v30, 1
  %v32 = vmax.f32 %v30, %v31
  %v33 = vsub.f32 %v22, %v32
  %v34 = vsub.f32 %v23, %v32
  %v35 = vmul.f32 %v33, 1.442695
  %v36 = vpow.pop %v35
  %v37 = vmul.f32 %v34, 1.442695
  %v38 = vpow.pop %v37
  %vm39 = vcmask 130048
  %v41 = vsel %vm39, %v17, 0
  %v44 = vsel %vm39, %v18, 0
  %46 = vmatprep.subr.mxu0 0.0
  %v47 = vand.u32 %v36, 4294901760
  %48 = vmatpush1.msra.mxu0 %v47
  %49 = vmatprep.subr.mxu0 0.0
  %v50 = vand.u32 %v38, 4294901760
  %51 = vmatpush1.msra.mxu0 %v50
  %52 = vmatprep.subr.mxu0 0.0
  %53 = vmatpush1.msra.mxu0 0.0
  %54 = vmatprep.subr.mxu0 0.0
  %55 = vmatpush1.msra.mxu0 0.0
  %56 = vmatprep.subr.mxu0 0.0
  %57 = vmatpush1.msra.mxu0 0.0
  %58 = vmatprep.subr.mxu0 0.0
  %59 = vmatpush1.msra.mxu0 0.0
  %60 = vmatprep.subr.mxu0 0.0
  %61 = vmatpush1.msra.mxu0 0.0
  %62 = vmatprep.subr.mxu0 0.0
  %63 = vmatpush1.msra.mxu0 0.0
  %64 = vmatprep.subr.mxu0 0.0
  %65 = vmatpush1.msra.mxu0 0.0
  %66 = vmatprep.subr.mxu0 0.0
  %67 = vmatpush1.msra.mxu0 0.0
  %68 = vmatprep.subr.mxu0 0.0
  %69 = vmatpush1.msra.mxu0 0.0
  %70 = vmatprep.subr.mxu0 0.0
  %71 = vmatpush1.msra.mxu0 0.0
  %72 = vmatprep.subr.mxu0 0.0
  %73 = vmatpush1.msra.mxu0 0.0
  %74 = vmatprep.subr.mxu0 0.0
  %75 = vmatpush1.msra.mxu0 0.0
  %76 = vmatprep.subr.mxu0 0.0
  %77 = vmatpush1.msra.mxu0 0.0
  %78 = vmatprep.subr.mxu0 0.0
  %79 = vmatpush1.msra.mxu0 0.0
  %80 = vmatprep.subr.mxu0 0.0
  %81 = vmatpush1.msra.mxu0 0.0
  %82 = vmatprep.subr.mxu0 0.0
  %83 = vmatpush1.msra.mxu0 0.0
  %84 = vmatprep.subr.mxu0 0.0
  %85 = vmatpush1.msra.mxu0 0.0
  %86 = vmatprep.subr.mxu0 0.0
  %87 = vmatpush1.msra.mxu0 0.0
  %88 = vmatprep.subr.mxu0 0.0
  %89 = vmatpush1.msra.mxu0 0.0
  %90 = vmatprep.subr.mxu0 0.0
  %91 = vmatpush1.msra.mxu0 0.0
  %92 = vmatprep.subr.mxu0 0.0
  %93 = vmatpush1.msra.mxu0 0.0
  %94 = vmatprep.subr.mxu0 0.0
  %95 = vmatpush1.msra.mxu0 0.0
  %96 = vmatprep.subr.mxu0 0.0
  %97 = vmatpush1.msra.mxu0 0.0
  %98 = vmatprep.subr.mxu0 0.0
  %99 = vmatpush1.msra.mxu0 0.0
  %100 = vmatprep.subr.mxu0 0.0
  %101 = vmatpush1.msra.mxu0 0.0
  %102 = vmatprep.subr.mxu0 0.0
  %103 = vmatpush1.msra.mxu0 0.0
  %104 = vmatprep.subr.mxu0 0.0
  %105 = vmatpush1.msra.mxu0 0.0
  %106 = vmatprep.subr.mxu0 0.0
  %107 = vmatpush1.msra.mxu0 0.0
  %108 = vmatprep.subr.mxu0 0.0
  %109 = vmatpush1.msra.mxu0 0.0
  %110 = vmatprep.subr.mxu0 0.0
  %111 = vmatpush1.msra.mxu0 0.0
  %112 = vmatprep.mubr.f32.mxu0 0.0
  %v113 = vand.u32 %v41, 4294901760
  %v114 = vsub.f32 %v41, %v113
  %v115 = vand.u32 %v114, 4294901760
  %v116 = vsub.f32 %v114, %v115
  %v117 = vand.u32 %v116, 4294901760
  %118 = vmatmul.mubr.f32.gmra.mrb[0].mxu0 %v117
  %v119 = vpop.f32.mrb[0].mxu0
  %v120 = vadd.f32 0.0, %v119
  %v121 = vpop.f32.mrb[0].mxu0
  %122 = vmatprep.mubr.f32.mxu0 0.0
  %v123 = vand.u32 %v44, 4294901760
  %v124 = vsub.f32 %v44, %v123
  %v125 = vand.u32 %v124, 4294901760
  %v126 = vsub.f32 %v124, %v125
  %v127 = vand.u32 %v126, 4294901760
  %128 = vmatmul.mubr.f32.gmra.mrb[0].mxu0 %v127
  %v129 = vpop.f32.mrb[0].mxu0
  %v130 = vadd.f32 0.0, %v129
  %v131 = vpop.f32.mrb[0].mxu0
  %132 = vdwg.mxu0
  %133 = vmatprep.subr.mxu0 0.0
  %v134 = vand.u32 %v36, 4294901760
  %v135 = vsub.f32 %v36, %v134
  %v136 = vand.u32 %v135, 4294901760
  %v137 = vsub.f32 %v135, %v136
  %v138 = vand.u32 %v137, 4294901760
  %139 = vmatpush1.msra.mxu0 %v138
  %140 = vmatprep.subr.mxu0 0.0
  %v141 = vand.u32 %v38, 4294901760
  %v142 = vsub.f32 %v38, %v141
  %v143 = vand.u32 %v142, 4294901760
  %v144 = vsub.f32 %v142, %v143
  %v145 = vand.u32 %v144, 4294901760
  %146 = vmatpush1.msra.mxu0 %v145
  %147 = vmatprep.subr.mxu0 0.0
  %148 = vmatpush1.msra.mxu0 0.0
  %149 = vmatprep.subr.mxu0 0.0
  %150 = vmatpush1.msra.mxu0 0.0
  %151 = vmatprep.subr.mxu0 0.0
  %152 = vmatpush1.msra.mxu0 0.0
  %153 = vmatprep.subr.mxu0 0.0
  %154 = vmatpush1.msra.mxu0 0.0
  %155 = vmatprep.subr.mxu0 0.0
  %156 = vmatpush1.msra.mxu0 0.0
  %157 = vmatprep.subr.mxu0 0.0
  %158 = vmatpush1.msra.mxu0 0.0
  %159 = vmatprep.subr.mxu0 0.0
  %160 = vmatpush1.msra.mxu0 0.0
  %161 = vmatprep.subr.mxu0 0.0
  %162 = vmatpush1.msra.mxu0 0.0
  %163 = vmatprep.subr.mxu0 0.0
  %164 = vmatpush1.msra.mxu0 0.0
  %165 = vmatprep.subr.mxu0 0.0
  %166 = vmatpush1.msra.mxu0 0.0
  %167 = vmatprep.subr.mxu0 0.0
  %168 = vmatpush1.msra.mxu0 0.0
  %169 = vmatprep.subr.mxu0 0.0
  %170 = vmatpush1.msra.mxu0 0.0
  %171 = vmatprep.subr.mxu0 0.0
  %172 = vmatpush1.msra.mxu0 0.0
  %173 = vmatprep.subr.mxu0 0.0
  %174 = vmatpush1.msra.mxu0 0.0
  %175 = vmatprep.subr.mxu0 0.0
  %176 = vmatpush1.msra.mxu0 0.0
  %177 = vmatprep.subr.mxu0 0.0
  %178 = vmatpush1.msra.mxu0 0.0
  %179 = vmatprep.subr.mxu0 0.0
  %180 = vmatpush1.msra.mxu0 0.0
  %181 = vmatprep.subr.mxu0 0.0
  %182 = vmatpush1.msra.mxu0 0.0
  %183 = vmatprep.subr.mxu0 0.0
  %184 = vmatpush1.msra.mxu0 0.0
  %185 = vmatprep.subr.mxu0 0.0
  %186 = vmatpush1.msra.mxu0 0.0
  %187 = vmatprep.subr.mxu0 0.0
  %188 = vmatpush1.msra.mxu0 0.0
  %189 = vmatprep.subr.mxu0 0.0
  %190 = vmatpush1.msra.mxu0 0.0
  %191 = vmatprep.subr.mxu0 0.0
  %192 = vmatpush1.msra.mxu0 0.0
  %193 = vmatprep.subr.mxu0 0.0
  %194 = vmatpush1.msra.mxu0 0.0
  %195 = vmatprep.subr.mxu0 0.0
  %196 = vmatpush1.msra.mxu0 0.0
  %197 = vmatprep.subr.mxu0 0.0
  %198 = vmatpush1.msra.mxu0 0.0
  %199 = vmatprep.subr.mxu0 0.0
  %200 = vmatpush1.msra.mxu0 0.0
  %201 = vmatprep.subr.mxu0 0.0
  %202 = vmatpush1.msra.mxu0 0.0
  %203 = vmatprep.subr.mxu0 0.0
  %204 = vmatpush1.msra.mxu0 0.0
  %205 = vmatprep.subr.mxu0 0.0
  %206 = vmatpush1.msra.mxu0 0.0
  %207 = vmatprep.mubr.f32.mxu0 0.0
  %v208 = vand.u32 %v41, 4294901760
  %209 = vmatmul.mubr.f32.gmra.mrb[0].mxu0 %v208
  %v210 = vpop.f32.mrb[0].mxu0
  %v211 = vadd.f32 %v120, %v210
  %v212 = vpop.f32.mrb[0].mxu0
  %213 = vmatprep.mubr.f32.mxu0 0.0
  %v214 = vand.u32 %v44, 4294901760
  %215 = vmatmul.mubr.f32.gmra.mrb[0].mxu0 %v214
  %v216 = vpop.f32.mrb[0].mxu0
  %v217 = vadd.f32 %v130, %v216
  %v218 = vpop.f32.mrb[0].mxu0
  %219 = vdwg.mxu0
  %220 = vmatprep.subr.mxu0 0.0
  %v221 = vand.u32 %v36, 4294901760
  %v222 = vsub.f32 %v36, %v221
  %223 = vmatpush1.msra.mxu0 %v222
  %224 = vmatprep.subr.mxu0 0.0
  %v225 = vand.u32 %v38, 4294901760
  %v226 = vsub.f32 %v38, %v225
  %227 = vmatpush1.msra.mxu0 %v226
  %228 = vmatprep.subr.mxu0 0.0
  %229 = vmatpush1.msra.mxu0 0.0
  %230 = vmatprep.subr.mxu0 0.0
  %231 = vmatpush1.msra.mxu0 0.0
  %232 = vmatprep.subr.mxu0 0.0
  %233 = vmatpush1.msra.mxu0 0.0
  %234 = vmatprep.subr.mxu0 0.0
  %235 = vmatpush1.msra.mxu0 0.0
  %236 = vmatprep.subr.mxu0 0.0
  %237 = vmatpush1.msra.mxu0 0.0
  %238 = vmatprep.subr.mxu0 0.0
  %239 = vmatpush1.msra.mxu0 0.0
  %240 = vmatprep.subr.mxu0 0.0
  %241 = vmatpush1.msra.mxu0 0.0
  %242 = vmatprep.subr.mxu0 0.0
  %243 = vmatpush1.msra.mxu0 0.0
  %244 = vmatprep.subr.mxu0 0.0
  %245 = vmatpush1.msra.mxu0 0.0
  %246 = vmatprep.subr.mxu0 0.0
  %247 = vmatpush1.msra.mxu0 0.0
  %248 = vmatprep.subr.mxu0 0.0
  %249 = vmatpush1.msra.mxu0 0.0
  %250 = vmatprep.subr.mxu0 0.0
  %251 = vmatpush1.msra.mxu0 0.0
  %252 = vmatprep.subr.mxu0 0.0
  %253 = vmatpush1.msra.mxu0 0.0
  %254 = vmatprep.subr.mxu0 0.0
  %255 = vmatpush1.msra.mxu0 0.0
  %256 = vmatprep.subr.mxu0 0.0
  %257 = vmatpush1.msra.mxu0 0.0
  %258 = vmatprep.subr.mxu0 0.0
  %259 = vmatpush1.msra.mxu0 0.0
  %260 = vmatprep.subr.mxu0 0.0
  %261 = vmatpush1.msra.mxu0 0.0
  %262 = vmatprep.subr.mxu0 0.0
  %263 = vmatpush1.msra.mxu0 0.0
  %264 = vmatprep.subr.mxu0 0.0
  %265 = vmatpush1.msra.mxu0 0.0
  %266 = vmatprep.subr.mxu0 0.0
  %267 = vmatpush1.msra.mxu0 0.0
  %268 = vmatprep.subr.mxu0 0.0
  %269 = vmatpush1.msra.mxu0 0.0
  %270 = vmatprep.subr.mxu0 0.0
  %271 = vmatpush1.msra.mxu0 0.0
  %272 = vmatprep.subr.mxu0 0.0
  %273 = vmatpush1.msra.mxu0 0.0
  %274 = vmatprep.subr.mxu0 0.0
  %275 = vmatpush1.msra.mxu0 0.0
  %276 = vmatprep.subr.mxu0 0.0
  %277 = vmatpush1.msra.mxu0 0.0
  %278 = vmatprep.subr.mxu0 0.0
  %279 = vmatpush1.msra.mxu0 0.0
  %280 = vmatprep.subr.mxu0 0.0
  %281 = vmatpush1.msra.mxu0 0.0
  %282 = vmatprep.subr.mxu0 0.0
  %283 = vmatpush1.msra.mxu0 0.0
  %284 = vmatprep.subr.mxu0 0.0
  %285 = vmatpush1.msra.mxu0 0.0
  %286 = vmatprep.subr.mxu0 0.0
  %287 = vmatpush1.msra.mxu0 0.0
  %288 = vmatprep.mubr.f32.mxu0 0.0
  %v289 = vand.u32 %v41, 4294901760
  %v290 = vsub.f32 %v41, %v289
  %291 = vmatmul.mubr.f32.gmra.mrb[0].mxu0 %v290
  %v292 = vpop.f32.mrb[0].mxu0
  %v293 = vadd.f32 %v211, %v292
  %v294 = vpop.f32.mrb[0].mxu0
  %295 = vmatprep.mubr.f32.mxu0 0.0
  %v296 = vand.u32 %v44, 4294901760
  %v297 = vsub.f32 %v44, %v296
  %298 = vmatmul.mubr.f32.gmra.mrb[0].mxu0 %v297
  %v299 = vpop.f32.mrb[0].mxu0
  %v300 = vadd.f32 %v217, %v299
  %v301 = vpop.f32.mrb[0].mxu0
  %302 = vdwg.mxu0
  %303 = vmatprep.subr.mxu0 0.0
  %v304 = vand.u32 %v36, 4294901760
  %305 = vmatpush1.msra.mxu0 %v304
  %306 = vmatprep.subr.mxu0 0.0
  %v307 = vand.u32 %v38, 4294901760
  %308 = vmatpush1.msra.mxu0 %v307
  %309 = vmatprep.subr.mxu0 0.0
  %310 = vmatpush1.msra.mxu0 0.0
  %311 = vmatprep.subr.mxu0 0.0
  %312 = vmatpush1.msra.mxu0 0.0
  %313 = vmatprep.subr.mxu0 0.0
  %314 = vmatpush1.msra.mxu0 0.0
  %315 = vmatprep.subr.mxu0 0.0
  %316 = vmatpush1.msra.mxu0 0.0
  %317 = vmatprep.subr.mxu0 0.0
  %318 = vmatpush1.msra.mxu0 0.0
  %319 = vmatprep.subr.mxu0 0.0
  %320 = vmatpush1.msra.mxu0 0.0
  %321 = vmatprep.subr.mxu0 0.0
  %322 = vmatpush1.msra.mxu0 0.0
  %323 = vmatprep.subr.mxu0 0.0
  %324 = vmatpush1.msra.mxu0 0.0
  %325 = vmatprep.subr.mxu0 0.0
  %326 = vmatpush1.msra.mxu0 0.0
  %327 = vmatprep.subr.mxu0 0.0
  %328 = vmatpush1.msra.mxu0 0.0
  %329 = vmatprep.subr.mxu0 0.0
  %330 = vmatpush1.msra.mxu0 0.0
  %331 = vmatprep.subr.mxu0 0.0
  %332 = vmatpush1.msra.mxu0 0.0
  %333 = vmatprep.subr.mxu0 0.0
  %334 = vmatpush1.msra.mxu0 0.0
  %335 = vmatprep.subr.mxu0 0.0
  %336 = vmatpush1.msra.mxu0 0.0
  %337 = vmatprep.subr.mxu0 0.0
  %338 = vmatpush1.msra.mxu0 0.0
  %339 = vmatprep.subr.mxu0 0.0
  %340 = vmatpush1.msra.mxu0 0.0
  %341 = vmatprep.subr.mxu0 0.0
  %342 = vmatpush1.msra.mxu0 0.0
  %343 = vmatprep.subr.mxu0 0.0
  %344 = vmatpush1.msra.mxu0 0.0
  %345 = vmatprep.subr.mxu0 0.0
  %346 = vmatpush1.msra.mxu0 0.0
  %347 = vmatprep.subr.mxu0 0.0
  %348 = vmatpush1.msra.mxu0 0.0
  %349 = vmatprep.subr.mxu0 0.0
  %350 = vmatpush1.msra.mxu0 0.0
  %351 = vmatprep.subr.mxu0 0.0
  %352 = vmatpush1.msra.mxu0 0.0
  %353 = vmatprep.subr.mxu0 0.0
  %354 = vmatpush1.msra.mxu0 0.0
  %355 = vmatprep.subr.mxu0 0.0
  %356 = vmatpush1.msra.mxu0 0.0
  %357 = vmatprep.subr.mxu0 0.0
  %358 = vmatpush1.msra.mxu0 0.0
  %359 = vmatprep.subr.mxu0 0.0
  %360 = vmatpush1.msra.mxu0 0.0
  %361 = vmatprep.subr.mxu0 0.0
  %362 = vmatpush1.msra.mxu0 0.0
  %363 = vmatprep.subr.mxu0 0.0
  %364 = vmatpush1.msra.mxu0 0.0
  %365 = vmatprep.subr.mxu0 0.0
  %366 = vmatpush1.msra.mxu0 0.0
  %367 = vmatprep.subr.mxu0 0.0
  %368 = vmatpush1.msra.mxu0 0.0
  %369 = vmatprep.mubr.f32.mxu0 0.0
  %v370 = vand.u32 %v41, 4294901760
  %v371 = vsub.f32 %v41, %v370
  %v372 = vand.u32 %v371, 4294901760
  %373 = vmatmul.mubr.f32.gmra.mrb[0].mxu0 %v372
  %v374 = vpop.f32.mrb[0].mxu0
  %v375 = vadd.f32 %v293, %v374
  %v376 = vpop.f32.mrb[0].mxu0
  %377 = vmatprep.mubr.f32.mxu0 0.0
  %v378 = vand.u32 %v44, 4294901760
  %v379 = vsub.f32 %v44, %v378
  %v380 = vand.u32 %v379, 4294901760
  %381 = vmatmul.mubr.f32.gmra.mrb[0].mxu0 %v380
  %v382 = vpop.f32.mrb[0].mxu0
  %v383 = vadd.f32 %v300, %v382
  %v384 = vpop.f32.mrb[0].mxu0
  %385 = vdwg.mxu0
  %386 = vmatprep.subr.mxu0 0.0
  %v387 = vand.u32 %v36, 4294901760
  %v388 = vsub.f32 %v36, %v387
  %v389 = vand.u32 %v388, 4294901760
  %390 = vmatpush1.msra.mxu0 %v389
  %391 = vmatprep.subr.mxu0 0.0
  %v392 = vand.u32 %v38, 4294901760
  %v393 = vsub.f32 %v38, %v392
  %v394 = vand.u32 %v393, 4294901760
  %395 = vmatpush1.msra.mxu0 %v394
  %396 = vmatprep.subr.mxu0 0.0
  %397 = vmatpush1.msra.mxu0 0.0
  %398 = vmatprep.subr.mxu0 0.0
  %399 = vmatpush1.msra.mxu0 0.0
  %400 = vmatprep.subr.mxu0 0.0
  %401 = vmatpush1.msra.mxu0 0.0
  %402 = vmatprep.subr.mxu0 0.0
  %403 = vmatpush1.msra.mxu0 0.0
  %404 = vmatprep.subr.mxu0 0.0
  %405 = vmatpush1.msra.mxu0 0.0
  %406 = vmatprep.subr.mxu0 0.0
  %407 = vmatpush1.msra.mxu0 0.0
  %408 = vmatprep.subr.mxu0 0.0
  %409 = vmatpush1.msra.mxu0 0.0
  %410 = vmatprep.subr.mxu0 0.0
  %411 = vmatpush1.msra.mxu0 0.0
  %412 = vmatprep.subr.mxu0 0.0
  %413 = vmatpush1.msra.mxu0 0.0
  %414 = vmatprep.subr.mxu0 0.0
  %415 = vmatpush1.msra.mxu0 0.0
  %416 = vmatprep.subr.mxu0 0.0
  %417 = vmatpush1.msra.mxu0 0.0
  %418 = vmatprep.subr.mxu0 0.0
  %419 = vmatpush1.msra.mxu0 0.0
  %420 = vmatprep.subr.mxu0 0.0
  %421 = vmatpush1.msra.mxu0 0.0
  %422 = vmatprep.subr.mxu0 0.0
  %423 = vmatpush1.msra.mxu0 0.0
  %424 = vmatprep.subr.mxu0 0.0
  %425 = vmatpush1.msra.mxu0 0.0
  %426 = vmatprep.subr.mxu0 0.0
  %427 = vmatpush1.msra.mxu0 0.0
  %428 = vmatprep.subr.mxu0 0.0
  %429 = vmatpush1.msra.mxu0 0.0
  %430 = vmatprep.subr.mxu0 0.0
  %431 = vmatpush1.msra.mxu0 0.0
  %432 = vmatprep.subr.mxu0 0.0
  %433 = vmatpush1.msra.mxu0 0.0
  %434 = vmatprep.subr.mxu0 0.0
  %435 = vmatpush1.msra.mxu0 0.0
  %436 = vmatprep.subr.mxu0 0.0
  %437 = vmatpush1.msra.mxu0 0.0
  %438 = vmatprep.subr.mxu0 0.0
  %439 = vmatpush1.msra.mxu0 0.0
  %440 = vmatprep.subr.mxu0 0.0
  %441 = vmatpush1.msra.mxu0 0.0
  %442 = vmatprep.subr.mxu0 0.0
  %443 = vmatpush1.msra.mxu0 0.0
  %444 = vmatprep.subr.mxu0 0.0
  %445 = vmatpush1.msra.mxu0 0.0
  %446 = vmatprep.subr.mxu0 0.0
  %447 = vmatpush1.msra.mxu0 0.0
  %448 = vmatprep.subr.mxu0 0.0
  %449 = vmatpush1.msra.mxu0 0.0
  %450 = vmatprep.subr.mxu0 0.0
  %451 = vmatpush1.msra.mxu0 0.0
  %452 = vmatprep.subr.mxu0 0.0
  %453 = vmatpush1.msra.mxu0 0.0
  %454 = vmatprep.subr.mxu0 0.0
  %455 = vmatpush1.msra.mxu0 0.0
  %456 = vmatprep.mubr.f32.mxu0 0.0
  %v457 = vand.u32 %v41, 4294901760
  %458 = vmatmul.mubr.f32.gmra.mrb[0].mxu0 %v457
  %v459 = vpop.f32.mrb[0].mxu0
  %v460 = vadd.f32 %v375, %v459
  %v461 = vpop.f32.mrb[0].mxu0
  %462 = vmatprep.mubr.f32.mxu0 0.0
  %v463 = vand.u32 %v44, 4294901760
  %464 = vmatmul.mubr.f32.gmra.mrb[0].mxu0 %v463
  %v465 = vpop.f32.mrb[0].mxu0
  %v466 = vadd.f32 %v383, %v465
  %v467 = vpop.f32.mrb[0].mxu0
  %468 = vdwg.mxu0
  %469 = vmatprep.subr.mxu0 0.0
  %v470 = vand.u32 %v36, 4294901760
  %471 = vmatpush1.msra.mxu0 %v470
  %472 = vmatprep.subr.mxu0 0.0
  %v473 = vand.u32 %v38, 4294901760
  %474 = vmatpush1.msra.mxu0 %v473
  %475 = vmatprep.subr.mxu0 0.0
  %476 = vmatpush1.msra.mxu0 0.0
  %477 = vmatprep.subr.mxu0 0.0
  %478 = vmatpush1.msra.mxu0 0.0
  %479 = vmatprep.subr.mxu0 0.0
  %480 = vmatpush1.msra.mxu0 0.0
  %481 = vmatprep.subr.mxu0 0.0
  %482 = vmatpush1.msra.mxu0 0.0
  %483 = vmatprep.subr.mxu0 0.0
  %484 = vmatpush1.msra.mxu0 0.0
  %485 = vmatprep.subr.mxu0 0.0
  %486 = vmatpush1.msra.mxu0 0.0
  %487 = vmatprep.subr.mxu0 0.0
  %488 = vmatpush1.msra.mxu0 0.0
  %489 = vmatprep.subr.mxu0 0.0
  %490 = vmatpush1.msra.mxu0 0.0
  %491 = vmatprep.subr.mxu0 0.0
  %492 = vmatpush1.msra.mxu0 0.0
  %493 = vmatprep.subr.mxu0 0.0
  %494 = vmatpush1.msra.mxu0 0.0
  %495 = vmatprep.subr.mxu0 0.0
  %496 = vmatpush1.msra.mxu0 0.0
  %497 = vmatprep.subr.mxu0 0.0
  %498 = vmatpush1.msra.mxu0 0.0
  %499 = vmatprep.subr.mxu0 0.0
  %500 = vmatpush1.msra.mxu0 0.0
  %501 = vmatprep.subr.mxu0 0.0
  %502 = vmatpush1.msra.mxu0 0.0
  %503 = vmatprep.subr.mxu0 0.0
  %504 = vmatpush1.msra.mxu0 0.0
  %505 = vmatprep.subr.mxu0 0.0
  %506 = vmatpush1.msra.mxu0 0.0
  %507 = vmatprep.subr.mxu0 0.0
  %508 = vmatpush1.msra.mxu0 0.0
  %509 = vmatprep.subr.mxu0 0.0
  %510 = vmatpush1.msra.mxu0 0.0
  %511 = vmatprep.subr.mxu0 0.0
  %512 = vmatpush1.msra.mxu0 0.0
  %513 = vmatprep.subr.mxu0 0.0
  %514 = vmatpush1.msra.mxu0 0.0
  %515 = vmatprep.subr.mxu0 0.0
  %516 = vmatpush1.msra.mxu0 0.0
  %517 = vmatprep.subr.mxu0 0.0
  %518 = vmatpush1.msra.mxu0 0.0
  %519 = vmatprep.subr.mxu0 0.0
  %520 = vmatpush1.msra.mxu0 0.0
  %521 = vmatprep.subr.mxu0 0.0
  %522 = vmatpush1.msra.mxu0 0.0
  %523 = vmatprep.subr.mxu0 0.0
  %524 = vmatpush1.msra.mxu0 0.0
  %525 = vmatprep.subr.mxu0 0.0
  %526 = vmatpush1.msra.mxu0 0.0
  %527 = vmatprep.subr.mxu0 0.0
  %528 = vmatpush1.msra.mxu0 0.0
  %529 = vmatprep.subr.mxu0 0.0
  %530 = vmatpush1.msra.mxu0 0.0
  %531 = vmatprep.subr.mxu0 0.0
  %532 = vmatpush1.msra.mxu0 0.0
  %533 = vmatprep.subr.mxu0 0.0
  %534 = vmatpush1.msra.mxu0 0.0
  %535 = vmatprep.mubr.f32.mxu0 0.0
  %v536 = vand.u32 %v41, 4294901760
  %537 = vmatmul.mubr.f32.gmra.mrb[0].mxu0 %v536
  %v538 = vpop.f32.mrb[0].mxu0
  %v539 = vadd.f32 %v460, %v538
  %v540 = vpop.f32.mrb[0].mxu0
  %541 = vmatprep.mubr.f32.mxu0 0.0
  %v542 = vand.u32 %v44, 4294901760
  %543 = vmatmul.mubr.f32.gmra.mrb[0].mxu0 %v542
  %v544 = vpop.f32.mrb[0].mxu0
  %v545 = vadd.f32 %v466, %v544
  %v546 = vpop.f32.mrb[0].mxu0
  %547 = vdwg.mxu0
  %v548 = vmax.f32 %v539, 1e-38
  %v549 = vmax.f32 %v545, 1e-38
  %v550 = vlog2.pop %v548
  %v551 = vmul.f32 %v550, 0.6931472
  %v552 = vlog2.pop %v549
  %v553 = vmul.f32 %v552, 0.6931472
  %v554 = vadd.f32 %v551, %v32
  %v555 = vadd.f32 %v553, %v32
  %s556 = scalar_lea.vmem %s0, 16
  %v557 = vld [vmem:[%s556] sm:$0xff]
  %v558 = vld [vmem:[%s556 + $0x8] sm:$0xff]
  %v559 = vadd.f32 %v554, %v557
  %v560 = vadd.f32 %v555, %v558
  %s561 = scalar_lea.vmem [#allocation2], 16
  %562 = vst [vmem:[%s561] sm:$0xff] %v559
  %563 = vst [vmem:[%s561 + $0x8] sm:$0xff] %v560
  %v564 = vmax.f32 %v559, %v560
  %v565 = vrot.slane %v564, 4
  %v566 = vmax.f32 %v564, %v565
  %v567 = vrot.slane %v566, 2
  %v568 = vmax.f32 %v566, %v567
  %v569 = vrot.slane %v568, 1
  %v570 = vmax.f32 %v568, %v569
  %v571 = vsub.f32 %v559, %v570
  %v572 = vsub.f32 %v560, %v570
  %v573 = vmul.f32 %v571, 1.442695
  %v574 = vpow.pop %v573
  %v575 = vmul.f32 %v572, 1.442695
  %v576 = vpow.pop %v575
  %577 = vmatprep.subr.mxu0 0.0
  %v578 = vand.u32 %v574, 4294901760
  %579 = vmatpush1.msra.mxu0 %v578
  %580 = vmatprep.subr.mxu0 0.0
  %v581 = vand.u32 %v576, 4294901760
  %582 = vmatpush1.msra.mxu0 %v581
  %583 = vmatprep.subr.mxu0 0.0
  %584 = vmatpush1.msra.mxu0 0.0
  %585 = vmatprep.subr.mxu0 0.0
  %586 = vmatpush1.msra.mxu0 0.0
  %587 = vmatprep.subr.mxu0 0.0
  %588 = vmatpush1.msra.mxu0 0.0
  %589 = vmatprep.subr.mxu0 0.0
  %590 = vmatpush1.msra.mxu0 0.0
  %591 = vmatprep.subr.mxu0 0.0
  %592 = vmatpush1.msra.mxu0 0.0
  %593 = vmatprep.subr.mxu0 0.0
  %594 = vmatpush1.msra.mxu0 0.0
  %595 = vmatprep.subr.mxu0 0.0
  %596 = vmatpush1.msra.mxu0 0.0
  %597 = vmatprep.subr.mxu0 0.0
  %598 = vmatpush1.msra.mxu0 0.0
  %599 = vmatprep.subr.mxu0 0.0
  %600 = vmatpush1.msra.mxu0 0.0
  %601 = vmatprep.subr.mxu0 0.0
  %602 = vmatpush1.msra.mxu0 0.0
  %603 = vmatprep.subr.mxu0 0.0
  %604 = vmatpush1.msra.mxu0 0.0
  %605 = vmatprep.subr.mxu0 0.0
  %606 = vmatpush1.msra.mxu0 0.0
  %607 = vmatprep.subr.mxu0 0.0
  %608 = vmatpush1.msra.mxu0 0.0
  %609 = vmatprep.subr.mxu0 0.0
  %610 = vmatpush1.msra.mxu0 0.0
  %611 = vmatprep.subr.mxu0 0.0
  %612 = vmatpush1.msra.mxu0 0.0
  %613 = vmatprep.subr.mxu0 0.0
  %614 = vmatpush1.msra.mxu0 0.0
  %615 = vmatprep.subr.mxu0 0.0
  %616 = vmatpush1.msra.mxu0 0.0
  %617 = vmatprep.subr.mxu0 0.0
  %618 = vmatpush1.msra.mxu0 0.0
  %619 = vmatprep.subr.mxu0 0.0
  %620 = vmatpush1.msra.mxu0 0.0
  %621 = vmatprep.subr.mxu0 0.0
  %622 = vmatpush1.msra.mxu0 0.0
  %623 = vmatprep.subr.mxu0 0.0
  %624 = vmatpush1.msra.mxu0 0.0
  %625 = vmatprep.subr.mxu0 0.0
  %626 = vmatpush1.msra.mxu0 0.0
  %627 = vmatprep.subr.mxu0 0.0
  %628 = vmatpush1.msra.mxu0 0.0
  %629 = vmatprep.subr.mxu0 0.0
  %630 = vmatpush1.msra.mxu0 0.0
  %631 = vmatprep.subr.mxu0 0.0
  %632 = vmatpush1.msra.mxu0 0.0
  %633 = vmatprep.subr.mxu0 0.0
  %634 = vmatpush1.msra.mxu0 0.0
  %635 = vmatprep.subr.mxu0 0.0
  %636 = vmatpush1.msra.mxu0 0.0
  %637 = vmatprep.subr.mxu0 0.0
  %638 = vmatpush1.msra.mxu0 0.0
  %639 = vmatprep.subr.mxu0 0.0
  %640 = vmatpush1.msra.mxu0 0.0
  %641 = vmatprep.subr.mxu0 0.0
  %642 = vmatpush1.msra.mxu0 0.0
  %643 = vmatprep.mubr.f32.mxu0 0.0
  %v644 = vand.u32 %v41, 4294901760
  %v645 = vsub.f32 %v41, %v644
  %v646 = vand.u32 %v645, 4294901760
  %v647 = vsub.f32 %v645, %v646
  %v648 = vand.u32 %v647, 4294901760
  %649 = vmatmul.mubr.f32.gmra.mrb[0].mxu0 %v648
  %v650 = vpop.f32.mrb[0].mxu0
  %v651 = vadd.f32 0.0, %v650
  %v652 = vpop.f32.mrb[0].mxu0
  %653 = vmatprep.mubr.f32.mxu0 0.0
  %v654 = vand.u32 %v44, 4294901760
  %v655 = vsub.f32 %v44, %v654
  %v656 = vand.u32 %v655, 4294901760
  %v657 = vsub.f32 %v655, %v656
  %v658 = vand.u32 %v657, 4294901760
  %659 = vmatmul.mubr.f32.gmra.mrb[0].mxu0 %v658
  %v660 = vpop.f32.mrb[0].mxu0
  %v661 = vadd.f32 0.0, %v660
  %v662 = vpop.f32.mrb[0].mxu0
  %663 = vdwg.mxu0
  %664 = vmatprep.subr.mxu0 0.0
  %v665 = vand.u32 %v574, 4294901760
  %v666 = vsub.f32 %v574, %v665
  %v667 = vand.u32 %v666, 4294901760
  %v668 = vsub.f32 %v666, %v667
  %v669 = vand.u32 %v668, 4294901760
  %670 = vmatpush1.msra.mxu0 %v669
  %671 = vmatprep.subr.mxu0 0.0
  %v672 = vand.u32 %v576, 4294901760
  %v673 = vsub.f32 %v576, %v672
  %v674 = vand.u32 %v673, 4294901760
  %v675 = vsub.f32 %v673, %v674
  %v676 = vand.u32 %v675, 4294901760
  %677 = vmatpush1.msra.mxu0 %v676
  %678 = vmatprep.subr.mxu0 0.0
  %679 = vmatpush1.msra.mxu0 0.0
  %680 = vmatprep.subr.mxu0 0.0
  %681 = vmatpush1.msra.mxu0 0.0
  %682 = vmatprep.subr.mxu0 0.0
  %683 = vmatpush1.msra.mxu0 0.0
  %684 = vmatprep.subr.mxu0 0.0
  %685 = vmatpush1.msra.mxu0 0.0
  %686 = vmatprep.subr.mxu0 0.0
  %687 = vmatpush1.msra.mxu0 0.0
  %688 = vmatprep.subr.mxu0 0.0
  %689 = vmatpush1.msra.mxu0 0.0
  %690 = vmatprep.subr.mxu0 0.0
  %691 = vmatpush1.msra.mxu0 0.0
  %692 = vmatprep.subr.mxu0 0.0
  %693 = vmatpush1.msra.mxu0 0.0
  %694 = vmatprep.subr.mxu0 0.0
  %695 = vmatpush1.msra.mxu0 0.0
  %696 = vmatprep.subr.mxu0 0.0
  %697 = vmatpush1.msra.mxu0 0.0
  %698 = vmatprep.subr.mxu0 0.0
  %699 = vmatpush1.msra.mxu0 0.0
  %700 = vmatprep.subr.mxu0 0.0
  %701 = vmatpush1.msra.mxu0 0.0
  %702 = vmatprep.subr.mxu0 0.0
  %703 = vmatpush1.msra.mxu0 0.0
  %704 = vmatprep.subr.mxu0 0.0
  %705 = vmatpush1.msra.mxu0 0.0
  %706 = vmatprep.subr.mxu0 0.0
  %707 = vmatpush1.msra.mxu0 0.0
  %708 = vmatprep.subr.mxu0 0.0
  %709 = vmatpush1.msra.mxu0 0.0
  %710 = vmatprep.subr.mxu0 0.0
  %711 = vmatpush1.msra.mxu0 0.0
  %712 = vmatprep.subr.mxu0 0.0
  %713 = vmatpush1.msra.mxu0 0.0
  %714 = vmatprep.subr.mxu0 0.0
  %715 = vmatpush1.msra.mxu0 0.0
  %716 = vmatprep.subr.mxu0 0.0
  %717 = vmatpush1.msra.mxu0 0.0
  %718 = vmatprep.subr.mxu0 0.0
  %719 = vmatpush1.msra.mxu0 0.0
  %720 = vmatprep.subr.mxu0 0.0
  %721 = vmatpush1.msra.mxu0 0.0
  %722 = vmatprep.subr.mxu0 0.0
  %723 = vmatpush1.msra.mxu0 0.0
  %724 = vmatprep.subr.mxu0 0.0
  %725 = vmatpush1.msra.mxu0 0.0
  %726 = vmatprep.subr.mxu0 0.0
  %727 = vmatpush1.msra.mxu0 0.0
  %728 = vmatprep.subr.mxu0 0.0
  %729 = vmatpush1.msra.mxu0 0.0
  %730 = vmatprep.subr.mxu0 0.0
  %731 = vmatpush1.msra.mxu0 0.0
  %732 = vmatprep.subr.mxu0 0.0
  %733 = vmatpush1.msra.mxu0 0.0
  %734 = vmatprep.subr.mxu0 0.0
  %735 = vmatpush1.msra.mxu0 0.0
  %736 = vmatprep.subr.mxu0 0.0
  %737 = vmatpush1.msra.mxu0 0.0
  %738 = vmatprep.mubr.f32.mxu0 0.0
  %v739 = vand.u32 %v41, 4294901760
  %740 = vmatmul.mubr.f32.gmra.mrb[0].mxu0 %v739
  %v741 = vpop.f32.mrb[0].mxu0
  %v742 = vadd.f32 %v651, %v741
  %v743 = vpop.f32.mrb[0].mxu0
  %744 = vmatprep.mubr.f32.mxu0 0.0
  %v745 = vand.u32 %v44, 4294901760
  %746 = vmatmul.mubr.f32.gmra.mrb[0].mxu0 %v745
  %v747 = vpop.f32.mrb[0].mxu0
  %v748 = vadd.f32 %v661, %v747
  %v749 = vpop.f32.mrb[0].mxu0
  %750 = vdwg.mxu0
  %751 = vmatprep.subr.mxu0 0.0
  %v752 = vand.u32 %v574, 4294901760
  %v753 = vsub.f32 %v574, %v752
  %754 = vmatpush1.msra.mxu0 %v753
  %755 = vmatprep.subr.mxu0 0.0
  %v756 = vand.u32 %v576, 4294901760
  %v757 = vsub.f32 %v576, %v756
  %758 = vmatpush1.msra.mxu0 %v757
  %759 = vmatprep.subr.mxu0 0.0
  %760 = vmatpush1.msra.mxu0 0.0
  %761 = vmatprep.subr.mxu0 0.0
  %762 = vmatpush1.msra.mxu0 0.0
  %763 = vmatprep.subr.mxu0 0.0
  %764 = vmatpush1.msra.mxu0 0.0
  %765 = vmatprep.subr.mxu0 0.0
  %766 = vmatpush1.msra.mxu0 0.0
  %767 = vmatprep.subr.mxu0 0.0
  %768 = vmatpush1.msra.mxu0 0.0
  %769 = vmatprep.subr.mxu0 0.0
  %770 = vmatpush1.msra.mxu0 0.0
  %771 = vmatprep.subr.mxu0 0.0
  %772 = vmatpush1.msra.mxu0 0.0
  %773 = vmatprep.subr.mxu0 0.0
  %774 = vmatpush1.msra.mxu0 0.0
  %775 = vmatprep.subr.mxu0 0.0
  %776 = vmatpush1.msra.mxu0 0.0
  %777 = vmatprep.subr.mxu0 0.0
  %778 = vmatpush1.msra.mxu0 0.0
  %779 = vmatprep.subr.mxu0 0.0
  %780 = vmatpush1.msra.mxu0 0.0
  %781 = vmatprep.subr.mxu0 0.0
  %782 = vmatpush1.msra.mxu0 0.0
  %783 = vmatprep.subr.mxu0 0.0
  %784 = vmatpush1.msra.mxu0 0.0
  %785 = vmatprep.subr.mxu0 0.0
  %786 = vmatpush1.msra.mxu0 0.0
  %787 = vmatprep.subr.mxu0 0.0
  %788 = vmatpush1.msra.mxu0 0.0
  %789 = vmatprep.subr.mxu0 0.0
  %790 = vmatpush1.msra.mxu0 0.0
  %791 = vmatprep.subr.mxu0 0.0
  %792 = vmatpush1.msra.mxu0 0.0
  %793 = vmatprep.subr.mxu0 0.0
  %794 = vmatpush1.msra.mxu0 0.0
  %795 = vmatprep.subr.mxu0 0.0
  %796 = vmatpush1.msra.mxu0 0.0
  %797 = vmatprep.subr.mxu0 0.0
  %798 = vmatpush1.msra.mxu0 0.0
  %799 = vmatprep.subr.mxu0 0.0
  %800 = vmatpush1.msra.mxu0 0.0
  %801 = vmatprep.subr.mxu0 0.0
  %802 = vmatpush1.msra.mxu0 0.0
  %803 = vmatprep.subr.mxu0 0.0
  %804 = vmatpush1.msra.mxu0 0.0
  %805 = vmatprep.subr.mxu0 0.0
  %806 = vmatpush1.msra.mxu0 0.0
  %807 = vmatprep.subr.mxu0 0.0
  %808 = vmatpush1.msra.mxu0 0.0
  %809 = vmatprep.subr.mxu0 0.0
  %810 = vmatpush1.msra.mxu0 0.0
  %811 = vmatprep.subr.mxu0 0.0
  %812 = vmatpush1.msra.mxu0 0.0
  %813 = vmatprep.subr.mxu0 0.0
  %814 = vmatpush1.msra.mxu0 0.0
  %815 = vmatprep.subr.mxu0 0.0
  %816 = vmatpush1.msra.mxu0 0.0
  %817 = vmatprep.subr.mxu0 0.0
  %818 = vmatpush1.msra.mxu0 0.0
  %819 = vmatprep.mubr.f32.mxu0 0.0
  %v820 = vand.u32 %v41, 4294901760
  %v821 = vsub.f32 %v41, %v820
  %822 = vmatmul.mubr.f32.gmra.mrb[0].mxu0 %v821
  %v823 = vpop.f32.mrb[0].mxu0
  %v824 = vadd.f32 %v742, %v823
  %v825 = vpop.f32.mrb[0].mxu0
  %826 = vmatprep.mubr.f32.mxu0 0.0
  %v827 = vand.u32 %v44, 4294901760
  %v828 = vsub.f32 %v44, %v827
  %829 = vmatmul.mubr.f32.gmra.mrb[0].mxu0 %v828
  %v830 = vpop.f32.mrb[0].mxu0
  %v831 = vadd.f32 %v748, %v830
  %v832 = vpop.f32.mrb[0].mxu0
  %833 = vdwg.mxu0
  %834 = vmatprep.subr.mxu0 0.0
  %v835 = vand.u32 %v574, 4294901760
  %836 = vmatpush1.msra.mxu0 %v835
  %837 = vmatprep.subr.mxu0 0.0
  %v838 = vand.u32 %v576, 4294901760
  %839 = vmatpush1.msra.mxu0 %v838
  %840 = vmatprep.subr.mxu0 0.0
  %841 = vmatpush1.msra.mxu0 0.0
  %842 = vmatprep.subr.mxu0 0.0
  %843 = vmatpush1.msra.mxu0 0.0
  %844 = vmatprep.subr.mxu0 0.0
  %845 = vmatpush1.msra.mxu0 0.0
  %846 = vmatprep.subr.mxu0 0.0
  %847 = vmatpush1.msra.mxu0 0.0
  %848 = vmatprep.subr.mxu0 0.0
  %849 = vmatpush1.msra.mxu0 0.0
  %850 = vmatprep.subr.mxu0 0.0
  %851 = vmatpush1.msra.mxu0 0.0
  %852 = vmatprep.subr.mxu0 0.0
  %853 = vmatpush1.msra.mxu0 0.0
  %854 = vmatprep.subr.mxu0 0.0
  %855 = vmatpush1.msra.mxu0 0.0
  %856 = vmatprep.subr.mxu0 0.0
  %857 = vmatpush1.msra.mxu0 0.0
  %858 = vmatprep.subr.mxu0 0.0
  %859 = vmatpush1.msra.mxu0 0.0
  %860 = vmatprep.subr.mxu0 0.0
  %861 = vmatpush1.msra.mxu0 0.0
  %862 = vmatprep.subr.mxu0 0.0
  %863 = vmatpush1.msra.mxu0 0.0
  %864 = vmatprep.subr.mxu0 0.0
  %865 = vmatpush1.msra.mxu0 0.0
  %866 = vmatprep.subr.mxu0 0.0
  %867 = vmatpush1.msra.mxu0 0.0
  %868 = vmatprep.subr.mxu0 0.0
  %869 = vmatpush1.msra.mxu0 0.0
  %870 = vmatprep.subr.mxu0 0.0
  %871 = vmatpush1.msra.mxu0 0.0
  %872 = vmatprep.subr.mxu0 0.0
  %873 = vmatpush1.msra.mxu0 0.0
  %874 = vmatprep.subr.mxu0 0.0
  %875 = vmatpush1.msra.mxu0 0.0
  %876 = vmatprep.subr.mxu0 0.0
  %877 = vmatpush1.msra.mxu0 0.0
  %878 = vmatprep.subr.mxu0 0.0
  %879 = vmatpush1.msra.mxu0 0.0
  %880 = vmatprep.subr.mxu0 0.0
  %881 = vmatpush1.msra.mxu0 0.0
  %882 = vmatprep.subr.mxu0 0.0
  %883 = vmatpush1.msra.mxu0 0.0
  %884 = vmatprep.subr.mxu0 0.0
  %885 = vmatpush1.msra.mxu0 0.0
  %886 = vmatprep.subr.mxu0 0.0
  %887 = vmatpush1.msra.mxu0 0.0
  %888 = vmatprep.subr.mxu0 0.0
  %889 = vmatpush1.msra.mxu0 0.0
  %890 = vmatprep.subr.mxu0 0.0
  %891 = vmatpush1.msra.mxu0 0.0
  %892 = vmatprep.subr.mxu0 0.0
  %893 = vmatpush1.msra.mxu0 0.0
  %894 = vmatprep.subr.mxu0 0.0
  %895 = vmatpush1.msra.mxu0 0.0
  %896 = vmatprep.subr.mxu0 0.0
  %897 = vmatpush1.msra.mxu0 0.0
  %898 = vmatprep.subr.mxu0 0.0
  %899 = vmatpush1.msra.mxu0 0.0
  %900 = vmatprep.mubr.f32.mxu0 0.0
  %v901 = vand.u32 %v41, 4294901760
  %v902 = vsub.f32 %v41, %v901
  %v903 = vand.u32 %v902, 4294901760
  %904 = vmatmul.mubr.f32.gmra.mrb[0].mxu0 %v903
  %v905 = vpop.f32.mrb[0].mxu0
  %v906 = vadd.f32 %v824, %v905
  %v907 = vpop.f32.mrb[0].mxu0
  %908 = vmatprep.mubr.f32.mxu0 0.0
  %v909 = vand.u32 %v44, 4294901760
  %v910 = vsub.f32 %v44, %v909
  %v911 = vand.u32 %v910, 4294901760
  %912 = vmatmul.mubr.f32.gmra.mrb[0].mxu0 %v911
  %v913 = vpop.f32.mrb[0].mxu0
  %v914 = vadd.f32 %v831, %v913
  %v915 = vpop.f32.mrb[0].mxu0
  %916 = vdwg.mxu0
  %917 = vmatprep.subr.mxu0 0.0
  %v918 = vand.u32 %v574, 4294901760
  %v919 = vsub.f32 %v574, %v918
  %v920 = vand.u32 %v919, 4294901760
  %921 = vmatpush1.msra.mxu0 %v920
  %922 = vmatprep.subr.mxu0 0.0
  %v923 = vand.u32 %v576, 4294901760
  %v924 = vsub.f32 %v576, %v923
  %v925 = vand.u32 %v924, 4294901760
  %926 = vmatpush1.msra.mxu0 %v925
  %927 = vmatprep.subr.mxu0 0.0
  %928 = vmatpush1.msra.mxu0 0.0
  %929 = vmatprep.subr.mxu0 0.0
  %930 = vmatpush1.msra.mxu0 0.0
  %931 = vmatprep.subr.mxu0 0.0
  %932 = vmatpush1.msra.mxu0 0.0
  %933 = vmatprep.subr.mxu0 0.0
  %934 = vmatpush1.msra.mxu0 0.0
  %935 = vmatprep.subr.mxu0 0.0
  %936 = vmatpush1.msra.mxu0 0.0
  %937 = vmatprep.subr.mxu0 0.0
  %938 = vmatpush1.msra.mxu0 0.0
  %939 = vmatprep.subr.mxu0 0.0
  %940 = vmatpush1.msra.mxu0 0.0
  %941 = vmatprep.subr.mxu0 0.0
  %942 = vmatpush1.msra.mxu0 0.0
  %943 = vmatprep.subr.mxu0 0.0
  %944 = vmatpush1.msra.mxu0 0.0
  %945 = vmatprep.subr.mxu0 0.0
  %946 = vmatpush1.msra.mxu0 0.0
  %947 = vmatprep.subr.mxu0 0.0
  %948 = vmatpush1.msra.mxu0 0.0
  %949 = vmatprep.subr.mxu0 0.0
  %950 = vmatpush1.msra.mxu0 0.0
  %951 = vmatprep.subr.mxu0 0.0
  %952 = vmatpush1.msra.mxu0 0.0
  %953 = vmatprep.subr.mxu0 0.0
  %954 = vmatpush1.msra.mxu0 0.0
  %955 = vmatprep.subr.mxu0 0.0
  %956 = vmatpush1.msra.mxu0 0.0
  %957 = vmatprep.subr.mxu0 0.0
  %958 = vmatpush1.msra.mxu0 0.0
  %959 = vmatprep.subr.mxu0 0.0
  %960 = vmatpush1.msra.mxu0 0.0
  %961 = vmatprep.subr.mxu0 0.0
  %962 = vmatpush1.msra.mxu0 0.0
  %963 = vmatprep.subr.mxu0 0.0
  %964 = vmatpush1.msra.mxu0 0.0
  %965 = vmatprep.subr.mxu0 0.0
  %966 = vmatpush1.msra.mxu0 0.0
  %967 = vmatprep.subr.mxu0 0.0
  %968 = vmatpush1.msra.mxu0 0.0
  %969 = vmatprep.subr.mxu0 0.0
  %970 = vmatpush1.msra.mxu0 0.0
  %971 = vmatprep.subr.mxu0 0.0
  %972 = vmatpush1.msra.mxu0 0.0
  %973 = vmatprep.subr.mxu0 0.0
  %974 = vmatpush1.msra.mxu0 0.0
  %975 = vmatprep.subr.mxu0 0.0
  %976 = vmatpush1.msra.mxu0 0.0
  %977 = vmatprep.subr.mxu0 0.0
  %978 = vmatpush1.msra.mxu0 0.0
  %979 = vmatprep.subr.mxu0 0.0
  %980 = vmatpush1.msra.mxu0 0.0
  %981 = vmatprep.subr.mxu0 0.0
  %982 = vmatpush1.msra.mxu0 0.0
  %983 = vmatprep.subr.mxu0 0.0
  %984 = vmatpush1.msra.mxu0 0.0
  %985 = vmatprep.subr.mxu0 0.0
  %986 = vmatpush1.msra.mxu0 0.0
  %987 = vmatprep.mubr.f32.mxu0 0.0
  %v988 = vand.u32 %v41, 4294901760
  %989 = vmatmul.mubr.f32.gmra.mrb[0].mxu0 %v988
  %v990 = vpop.f32.mrb[0].mxu0
  %v991 = vadd.f32 %v906, %v990
  %v992 = vpop.f32.mrb[0].mxu0
  %993 = vmatprep.mubr.f32.mxu0 0.0
  %v994 = vand.u32 %v44, 4294901760
  %995 = vmatmul.mubr.f32.gmra.mrb[0].mxu0 %v994
  %v996 = vpop.f32.mrb[0].mxu0
  %v997 = vadd.f32 %v914, %v996
  %v998 = vpop.f32.mrb[0].mxu0
  %999 = vdwg.mxu0
  %1000 = vmatprep.subr.mxu0 0.0
  %v1001 = vand.u32 %v574, 4294901760
  %1002 = vmatpush1.msra.mxu0 %v1001
  %1003 = vmatprep.subr.mxu0 0.0
  %v1004 = vand.u32 %v576, 4294901760
  %1005 = vmatpush1.msra.mxu0 %v1004
  %1006 = vmatprep.subr.mxu0 0.0
  %1007 = vmatpush1.msra.mxu0 0.0
  %1008 = vmatprep.subr.mxu0 0.0
  %1009 = vmatpush1.msra.mxu0 0.0
  %1010 = vmatprep.subr.mxu0 0.0
  %1011 = vmatpush1.msra.mxu0 0.0
  %1012 = vmatprep.subr.mxu0 0.0
  %1013 = vmatpush1.msra.mxu0 0.0
  %1014 = vmatprep.subr.mxu0 0.0
  %1015 = vmatpush1.msra.mxu0 0.0
  %1016 = vmatprep.subr.mxu0 0.0
  %1017 = vmatpush1.msra.mxu0 0.0
  %1018 = vmatprep.subr.mxu0 0.0
  %1019 = vmatpush1.msra.mxu0 0.0
  %1020 = vmatprep.subr.mxu0 0.0
  %1021 = vmatpush1.msra.mxu0 0.0
  %1022 = vmatprep.subr.mxu0 0.0
  %1023 = vmatpush1.msra.mxu0 0.0
  %1024 = vmatprep.subr.mxu0 0.0
  %1025 = vmatpush1.msra.mxu0 0.0
  %1026 = vmatprep.subr.mxu0 0.0
  %1027 = vmatpush1.msra.mxu0 0.0
  %1028 = vmatprep.subr.mxu0 0.0
  %1029 = vmatpush1.msra.mxu0 0.0
  %1030 = vmatprep.subr.mxu0 0.0
  %1031 = vmatpush1.msra.mxu0 0.0
  %1032 = vmatprep.subr.mxu0 0.0
  %1033 = vmatpush1.msra.mxu0 0.0
  %1034 = vmatprep.subr.mxu0 0.0
  %1035 = vmatpush1.msra.mxu0 0.0
  %1036 = vmatprep.subr.mxu0 0.0
  %1037 = vmatpush1.msra.mxu0 0.0
  %1038 = vmatprep.subr.mxu0 0.0
  %1039 = vmatpush1.msra.mxu0 0.0
  %1040 = vmatprep.subr.mxu0 0.0
  %1041 = vmatpush1.msra.mxu0 0.0
  %1042 = vmatprep.subr.mxu0 0.0
  %1043 = vmatpush1.msra.mxu0 0.0
  %1044 = vmatprep.subr.mxu0 0.0
  %1045 = vmatpush1.msra.mxu0 0.0
  %1046 = vmatprep.subr.mxu0 0.0
  %1047 = vmatpush1.msra.mxu0 0.0
  %1048 = vmatprep.subr.mxu0 0.0
  %1049 = vmatpush1.msra.mxu0 0.0
  %1050 = vmatprep.subr.mxu0 0.0
  %1051 = vmatpush1.msra.mxu0 0.0
  %1052 = vmatprep.subr.mxu0 0.0
  %1053 = vmatpush1.msra.mxu0 0.0
  %1054 = vmatprep.subr.mxu0 0.0
  %1055 = vmatpush1.msra.mxu0 0.0
  %1056 = vmatprep.subr.mxu0 0.0
  %1057 = vmatpush1.msra.mxu0 0.0
  %1058 = vmatprep.subr.mxu0 0.0
  %1059 = vmatpush1.msra.mxu0 0.0
  %1060 = vmatprep.subr.mxu0 0.0
  %1061 = vmatpush1.msra.mxu0 0.0
  %1062 = vmatprep.subr.mxu0 0.0
  %1063 = vmatpush1.msra.mxu0 0.0
  %1064 = vmatprep.subr.mxu0 0.0
  %1065 = vmatpush1.msra.mxu0 0.0
  %1066 = vmatprep.mubr.f32.mxu0 0.0
  %v1067 = vand.u32 %v41, 4294901760
  %1068 = vmatmul.mubr.f32.gmra.mrb[0].mxu0 %v1067
  %v1069 = vpop.f32.mrb[0].mxu0
  %v1070 = vadd.f32 %v991, %v1069
  %v1071 = vpop.f32.mrb[0].mxu0
  %1072 = vmatprep.mubr.f32.mxu0 0.0
  %v1073 = vand.u32 %v44, 4294901760
  %1074 = vmatmul.mubr.f32.gmra.mrb[0].mxu0 %v1073
  %v1075 = vpop.f32.mrb[0].mxu0
  %v1076 = vadd.f32 %v997, %v1075
  %v1077 = vpop.f32.mrb[0].mxu0
  %1078 = vdwg.mxu0
  %v1079 = vmax.f32 %v1070, 1e-38
  %v1080 = vmax.f32 %v1076, 1e-38
  %v1081 = vlog2.pop %v1079
  %v1082 = vmul.f32 %v1081, 0.6931472
  %v1083 = vlog2.pop %v1080
  %v1084 = vmul.f32 %v1083, 0.6931472
  %v1085 = vadd.f32 %v1082, %v570
  %v1086 = vadd.f32 %v1084, %v570
  %s1087 = scalar_lea.vmem %s0, 32
  %v1088 = vld [vmem:[%s1087] sm:$0xff]
  %v1089 = vld [vmem:[%s1087 + $0x8] sm:$0xff]
  %v1090 = vadd.f32 %v1085, %v1088
  %v1091 = vadd.f32 %v1086, %v1089
  %s1092 = scalar_lea.vmem [#allocation2], 32
  %1093 = vst [vmem:[%s1092] sm:$0xff] %v1090
  %1094 = vst [vmem:[%s1092 + $0x8] sm:$0xff] %v1091
  %v1095 = vmax.f32 %v1090, %v1091
  %v1096 = vrot.slane %v1095, 4
  %v1097 = vmax.f32 %v1095, %v1096
  %v1098 = vrot.slane %v1097, 2
  %v1099 = vmax.f32 %v1097, %v1098
  %v1100 = vrot.slane %v1099, 1
  %v1101 = vmax.f32 %v1099, %v1100
  %v1102 = vsub.f32 %v1090, %v1101
  %v1103 = vsub.f32 %v1091, %v1101
  %v1104 = vmul.f32 %v1102, 1.442695
  %v1105 = vpow.pop %v1104
  %v1106 = vmul.f32 %v1103, 1.442695
  %v1107 = vpow.pop %v1106
  %1108 = vmatprep.subr.mxu0 0.0
  %v1109 = vand.u32 %v1105, 4294901760
  %1110 = vmatpush1.msra.mxu0 %v1109
  %1111 = vmatprep.subr.mxu0 0.0
  %v1112 = vand.u32 %v1107, 4294901760
  %1113 = vmatpush1.msra.mxu0 %v1112
  %1114 = vmatprep.subr.mxu0 0.0
  %1115 = vmatpush1.msra.mxu0 0.0
  %1116 = vmatprep.subr.mxu0 0.0
  %1117 = vmatpush1.msra.mxu0 0.0
  %1118 = vmatprep.subr.mxu0 0.0
  %1119 = vmatpush1.msra.mxu0 0.0
  %1120 = vmatprep.subr.mxu0 0.0
  %1121 = vmatpush1.msra.mxu0 0.0
  %1122 = vmatprep.subr.mxu0 0.0
  %1123 = vmatpush1.msra.mxu0 0.0
  %1124 = vmatprep.subr.mxu0 0.0
  %1125 = vmatpush1.msra.mxu0 0.0
  %1126 = vmatprep.subr.mxu0 0.0
  %1127 = vmatpush1.msra.mxu0 0.0
  %1128 = vmatprep.subr.mxu0 0.0
  %1129 = vmatpush1.msra.mxu0 0.0
  %1130 = vmatprep.subr.mxu0 0.0
  %1131 = vmatpush1.msra.mxu0 0.0
  %1132 = vmatprep.subr.mxu0 0.0
  %1133 = vmatpush1.msra.mxu0 0.0
  %1134 = vmatprep.subr.mxu0 0.0
  %1135 = vmatpush1.msra.mxu0 0.0
  %1136 = vmatprep.subr.mxu0 0.0
  %1137 = vmatpush1.msra.mxu0 0.0
  %1138 = vmatprep.subr.mxu0 0.0
  %1139 = vmatpush1.msra.mxu0 0.0
  %1140 = vmatprep.subr.mxu0 0.0
  %1141 = vmatpush1.msra.mxu0 0.0
  %1142 = vmatprep.subr.mxu0 0.0
  %1143 = vmatpush1.msra.mxu0 0.0
  %1144 = vmatprep.subr.mxu0 0.0
  %1145 = vmatpush1.msra.mxu0 0.0
  %1146 = vmatprep.subr.mxu0 0.0
  %1147 = vmatpush1.msra.mxu0 0.0
  %1148 = vmatprep.subr.mxu0 0.0
  %1149 = vmatpush1.msra.mxu0 0.0
  %1150 = vmatprep.subr.mxu0 0.0
  %1151 = vmatpush1.msra.mxu0 0.0
  %1152 = vmatprep.subr.mxu0 0.0
  %1153 = vmatpush1.msra.mxu0 0.0
  %1154 = vmatprep.subr.mxu0 0.0
  %1155 = vmatpush1.msra.mxu0 0.0
  %1156 = vmatprep.subr.mxu0 0.0
  %1157 = vmatpush1.msra.mxu0 0.0
  %1158 = vmatprep.subr.mxu0 0.0
  %1159 = vmatpush1.msra.mxu0 0.0
  %1160 = vmatprep.subr.mxu0 0.0
  %1161 = vmatpush1.msra.mxu0 0.0
  %1162 = vmatprep.subr.mxu0 0.0
  %1163 = vmatpush1.msra.mxu0 0.0
  %1164 = vmatprep.subr.mxu0 0.0
  %1165 = vmatpush1.msra.mxu0 0.0
  %1166 = vmatprep.subr.mxu0 0.0
  %1167 = vmatpush1.msra.mxu0 0.0
  %1168 = vmatprep.subr.mxu0 0.0
  %1169 = vmatpush1.msra.mxu0 0.0
  %1170 = vmatprep.subr.mxu0 0.0
  %1171 = vmatpush1.msra.mxu0 0.0
  %1172 = vmatprep.subr.mxu0 0.0
  %1173 = vmatpush1.msra.mxu0 0.0
  %1174 = vmatprep.mubr.f32.mxu0 0.0
  %v1175 = vand.u32 %v41, 4294901760
  %v1176 = vsub.f32 %v41, %v1175
  %v1177 = vand.u32 %v1176, 4294901760
  %v1178 = vsub.f32 %v1176, %v1177
  %v1179 = vand.u32 %v1178, 4294901760
  %1180 = vmatmul.mubr.f32.gmra.mrb[0].mxu0 %v1179
  %v1181 = vpop.f32.mrb[0].mxu0
  %v1182 = vadd.f32 0.0, %v1181
  %v1183 = vpop.f32.mrb[0].mxu0
  %1184 = vmatprep.mubr.f32.mxu0 0.0
  %v1185 = vand.u32 %v44, 4294901760
  %v1186 = vsub.f32 %v44, %v1185
  %v1187 = vand.u32 %v1186, 4294901760
  %v1188 = vsub.f32 %v1186, %v1187
  %v1189 = vand.u32 %v1188, 4294901760
  %1190 = vmatmul.mubr.f32.gmra.mrb[0].mxu0 %v1189
  %v1191 = vpop.f32.mrb[0].mxu0
  %v1192 = vadd.f32 0.0, %v1191
  %v1193 = vpop.f32.mrb[0].mxu0
  %1194 = vdwg.mxu0
  %1195 = vmatprep.subr.mxu0 0.0
  %v1196 = vand.u32 %v1105, 4294901760
  %v1197 = vsub.f32 %v1105, %v1196
  %v1198 = vand.u32 %v1197, 4294901760
  %v1199 = vsub.f32 %v1197, %v1198
  %v1200 = vand.u32 %v1199, 4294901760
  %1201 = vmatpush1.msra.mxu0 %v1200
  %1202 = vmatprep.subr.mxu0 0.0
  %v1203 = vand.u32 %v1107, 4294901760
  %v1204 = vsub.f32 %v1107, %v1203
  %v1205 = vand.u32 %v1204, 4294901760
  %v1206 = vsub.f32 %v1204, %v1205
  %v1207 = vand.u32 %v1206, 4294901760
  %1208 = vmatpush1.msra.mxu0 %v1207
  %1209 = vmatprep.subr.mxu0 0.0
  %1210 = vmatpush1.msra.mxu0 0.0
  %1211 = vmatprep.subr.mxu0 0.0
  %1212 = vmatpush1.msra.mxu0 0.0
  %1213 = vmatprep.subr.mxu0 0.0
  %1214 = vmatpush1.msra.mxu0 0.0
  %1215 = vmatprep.subr.mxu0 0.0
  %1216 = vmatpush1.msra.mxu0 0.0
  %1217 = vmatprep.subr.mxu0 0.0
  %1218 = vmatpush1.msra.mxu0 0.0
  %1219 = vmatprep.subr.mxu0 0.0
  %1220 = vmatpush1.msra.mxu0 0.0
  %1221 = vmatprep.subr.mxu0 0.0
  %1222 = vmatpush1.msra.mxu0 0.0
  %1223 = vmatprep.subr.mxu0 0.0
  %1224 = vmatpush1.msra.mxu0 0.0
  %1225 = vmatprep.subr.mxu0 0.0
  %1226 = vmatpush1.msra.mxu0 0.0
  %1227 = vmatprep.subr.mxu0 0.0
  %1228 = vmatpush1.msra.mxu0 0.0
  %1229 = vmatprep.subr.mxu0 0.0
  %1230 = vmatpush1.msra.mxu0 0.0
  %1231 = vmatprep.subr.mxu0 0.0
  %1232 = vmatpush1.msra.mxu0 0.0
  %1233 = vmatprep.subr.mxu0 0.0
  %1234 = vmatpush1.msra.mxu0 0.0
  %1235 = vmatprep.subr.mxu0 0.0
  %1236 = vmatpush1.msra.mxu0 0.0
  %1237 = vmatprep.subr.mxu0 0.0
  %1238 = vmatpush1.msra.mxu0 0.0
  %1239 = vmatprep.subr.mxu0 0.0
  %1240 = vmatpush1.msra.mxu0 0.0
  %1241 = vmatprep.subr.mxu0 0.0
  %1242 = vmatpush1.msra.mxu0 0.0
  %1243 = vmatprep.subr.mxu0 0.0
  %1244 = vmatpush1.msra.mxu0 0.0
  %1245 = vmatprep.subr.mxu0 0.0
  %1246 = vmatpush1.msra.mxu0 0.0
  %1247 = vmatprep.subr.mxu0 0.0
  %1248 = vmatpush1.msra.mxu0 0.0
  %1249 = vmatprep.subr.mxu0 0.0
  %1250 = vmatpush1.msra.mxu0 0.0
  %1251 = vmatprep.subr.mxu0 0.0
  %1252 = vmatpush1.msra.mxu0 0.0
  %1253 = vmatprep.subr.mxu0 0.0
  %1254 = vmatpush1.msra.mxu0 0.0
  %1255 = vmatprep.subr.mxu0 0.0
  %1256 = vmatpush1.msra.mxu0 0.0
  %1257 = vmatprep.subr.mxu0 0.0
  %1258 = vmatpush1.msra.mxu0 0.0
  %1259 = vmatprep.subr.mxu0 0.0
  %1260 = vmatpush1.msra.mxu0 0.0
  %1261 = vmatprep.subr.mxu0 0.0
  %1262 = vmatpush1.msra.mxu0 0.0
  %1263 = vmatprep.subr.mxu0 0.0
  %1264 = vmatpush1.msra.mxu0 0.0
  %1265 = vmatprep.subr.mxu0 0.0
  %1266 = vmatpush1.msra.mxu0 0.0
  %1267 = vmatprep.subr.mxu0 0.0
  %1268 = vmatpush1.msra.mxu0 0.0
  %1269 = vmatprep.mubr.f32.mxu0 0.0
  %v1270 = vand.u32 %v41, 4294901760
  %1271 = vmatmul.mubr.f32.gmra.mrb[0].mxu0 %v1270
  %v1272 = vpop.f32.mrb[0].mxu0
  %v1273 = vadd.f32 %v1182, %v1272
  %v1274 = vpop.f32.mrb[0].mxu0
  %1275 = vmatprep.mubr.f32.mxu0 0.0
  %v1276 = vand.u32 %v44, 4294901760
  %1277 = vmatmul.mubr.f32.gmra.mrb[0].mxu0 %v1276
  %v1278 = vpop.f32.mrb[0].mxu0
  %v1279 = vadd.f32 %v1192, %v1278
  %v1280 = vpop.f32.mrb[0].mxu0
  %1281 = vdwg.mxu0
  %1282 = vmatprep.subr.mxu0 0.0
  %v1283 = vand.u32 %v1105, 4294901760
  %v1284 = vsub.f32 %v1105, %v1283
  %1285 = vmatpush1.msra.mxu0 %v1284
  %1286 = vmatprep.subr.mxu0 0.0
  %v1287 = vand.u32 %v1107, 4294901760
  %v1288 = vsub.f32 %v1107, %v1287
  %1289 = vmatpush1.msra.mxu0 %v1288
  %1290 = vmatprep.subr.mxu0 0.0
  %1291 = vmatpush1.msra.mxu0 0.0
  %1292 = vmatprep.subr.mxu0 0.0
  %1293 = vmatpush1.msra.mxu0 0.0
  %1294 = vmatprep.subr.mxu0 0.0
  %1295 = vmatpush1.msra.mxu0 0.0
  %1296 = vmatprep.subr.mxu0 0.0
  %1297 = vmatpush1.msra.mxu0 0.0
  %1298 = vmatprep.subr.mxu0 0.0
  %1299 = vmatpush1.msra.mxu0 0.0
  %1300 = vmatprep.subr.mxu0 0.0
  %1301 = vmatpush1.msra.mxu0 0.0
  %1302 = vmatprep.subr.mxu0 0.0
  %1303 = vmatpush1.msra.mxu0 0.0
  %1304 = vmatprep.subr.mxu0 0.0
  %1305 = vmatpush1.msra.mxu0 0.0
  %1306 = vmatprep.subr.mxu0 0.0
  %1307 = vmatpush1.msra.mxu0 0.0
  %1308 = vmatprep.subr.mxu0 0.0
  %1309 = vmatpush1.msra.mxu0 0.0
  %1310 = vmatprep.subr.mxu0 0.0
  %1311 = vmatpush1.msra.mxu0 0.0
  %1312 = vmatprep.subr.mxu0 0.0
  %1313 = vmatpush1.msra.mxu0 0.0
  %1314 = vmatprep.subr.mxu0 0.0
  %1315 = vmatpush1.msra.mxu0 0.0
  %1316 = vmatprep.subr.mxu0 0.0
  %1317 = vmatpush1.msra.mxu0 0.0
  %1318 = vmatprep.subr.mxu0 0.0
  %1319 = vmatpush1.msra.mxu0 0.0
  %1320 = vmatprep.subr.mxu0 0.0
  %1321 = vmatpush1.msra.mxu0 0.0
  %1322 = vmatprep.subr.mxu0 0.0
  %1323 = vmatpush1.msra.mxu0 0.0
  %1324 = vmatprep.subr.mxu0 0.0
  %1325 = vmatpush1.msra.mxu0 0.0
  %1326 = vmatprep.subr.mxu0 0.0
  %1327 = vmatpush1.msra.mxu0 0.0
  %1328 = vmatprep.subr.mxu0 0.0
  %1329 = vmatpush1.msra.mxu0 0.0
  %1330 = vmatprep.subr.mxu0 0.0
  %1331 = vmatpush1.msra.mxu0 0.0
  %1332 = vmatprep.subr.mxu0 0.0
  %1333 = vmatpush1.msra.mxu0 0.0
  %1334 = vmatprep.subr.mxu0 0.0
  %1335 = vmatpush1.msra.mxu0 0.0
  %1336 = vmatprep.subr.mxu0 0.0
  %1337 = vmatpush1.msra.mxu0 0.0
  %1338 = vmatprep.subr.mxu0 0.0
  %1339 = vmatpush1.msra.mxu0 0.0
  %1340 = vmatprep.subr.mxu0 0.0
  %1341 = vmatpush1.msra.mxu0 0.0
  %1342 = vmatprep.subr.mxu0 0.0
  %1343 = vmatpush1.msra.mxu0 0.0
  %1344 = vmatprep.subr.mxu0 0.0
  %1345 = vmatpush1.msra.mxu0 0.0
  %1346 = vmatprep.subr.mxu0 0.0
  %1347 = vmatpush1.msra.mxu0 0.0
  %1348 = vmatprep.subr.mxu0 0.0
  %1349 = vmatpush1.msra.mxu0 0.0
  %1350 = vmatprep.mubr.f32.mxu0 0.0
  %v1351 = vand.u32 %v41, 4294901760
  %v1352 = vsub.f32 %v41, %v1351
  %1353 = vmatmul.mubr.f32.gmra.mrb[0].mxu0 %v1352
  %v1354 = vpop.f32.mrb[0].mxu0
  %v1355 = vadd.f32 %v1273, %v1354
  %v1356 = vpop.f32.mrb[0].mxu0
  %1357 = vmatprep.mubr.f32.mxu0 0.0
  %v1358 = vand.u32 %v44, 4294901760
  %v1359 = vsub.f32 %v44, %v1358
  %1360 = vmatmul.mubr.f32.gmra.mrb[0].mxu0 %v1359
  %v1361 = vpop.f32.mrb[0].mxu0
  %v1362 = vadd.f32 %v1279, %v1361
  %v1363 = vpop.f32.mrb[0].mxu0
  %1364 = vdwg.mxu0
  %1365 = vmatprep.subr.mxu0 0.0
  %v1366 = vand.u32 %v1105, 4294901760
  %1367 = vmatpush1.msra.mxu0 %v1366
  %1368 = vmatprep.subr.mxu0 0.0
  %v1369 = vand.u32 %v1107, 4294901760
  %1370 = vmatpush1.msra.mxu0 %v1369
  %1371 = vmatprep.subr.mxu0 0.0
  %1372 = vmatpush1.msra.mxu0 0.0
  %1373 = vmatprep.subr.mxu0 0.0
  %1374 = vmatpush1.msra.mxu0 0.0
  %1375 = vmatprep.subr.mxu0 0.0
  %1376 = vmatpush1.msra.mxu0 0.0
  %1377 = vmatprep.subr.mxu0 0.0
  %1378 = vmatpush1.msra.mxu0 0.0
  %1379 = vmatprep.subr.mxu0 0.0
  %1380 = vmatpush1.msra.mxu0 0.0
  %1381 = vmatprep.subr.mxu0 0.0
  %1382 = vmatpush1.msra.mxu0 0.0
  %1383 = vmatprep.subr.mxu0 0.0
  %1384 = vmatpush1.msra.mxu0 0.0
  %1385 = vmatprep.subr.mxu0 0.0
  %1386 = vmatpush1.msra.mxu0 0.0
  %1387 = vmatprep.subr.mxu0 0.0
  %1388 = vmatpush1.msra.mxu0 0.0
  %1389 = vmatprep.subr.mxu0 0.0
  %1390 = vmatpush1.msra.mxu0 0.0
  %1391 = vmatprep.subr.mxu0 0.0
  %1392 = vmatpush1.msra.mxu0 0.0
  %1393 = vmatprep.subr.mxu0 0.0
  %1394 = vmatpush1.msra.mxu0 0.0
  %1395 = vmatprep.subr.mxu0 0.0
  %1396 = vmatpush1.msra.mxu0 0.0
  %1397 = vmatprep.subr.mxu0 0.0
  %1398 = vmatpush1.msra.mxu0 0.0
  %1399 = vmatprep.subr.mxu0 0.0
  %1400 = vmatpush1.msra.mxu0 0.0
  %1401 = vmatprep.subr.mxu0 0.0
  %1402 = vmatpush1.msra.mxu0 0.0
  %1403 = vmatprep.subr.mxu0 0.0
  %1404 = vmatpush1.msra.mxu0 0.0
  %1405 = vmatprep.subr.mxu0 0.0
  %1406 = vmatpush1.msra.mxu0 0.0
  %1407 = vmatprep.subr.mxu0 0.0
  %1408 = vmatpush1.msra.mxu0 0.0
  %1409 = vmatprep.subr.mxu0 0.0
  %1410 = vmatpush1.msra.mxu0 0.0
  %1411 = vmatprep.subr.mxu0 0.0
  %1412 = vmatpush1.msra.mxu0 0.0
  %1413 = vmatprep.subr.mxu0 0.0
  %1414 = vmatpush1.msra.mxu0 0.0
  %1415 = vmatprep.subr.mxu0 0.0
  %1416 = vmatpush1.msra.mxu0 0.0
  %1417 = vmatprep.subr.mxu0 0.0
  %1418 = vmatpush1.msra.mxu0 0.0
  %1419 = vmatprep.subr.mxu0 0.0
  %1420 = vmatpush1.msra.mxu0 0.0
  %1421 = vmatprep.subr.mxu0 0.0
  %1422 = vmatpush1.msra.mxu0 0.0
  %1423 = vmatprep.subr.mxu0 0.0
  %1424 = vmatpush1.msra.mxu0 0.0
  %1425 = vmatprep.subr.mxu0 0.0
  %1426 = vmatpush1.msra.mxu0 0.0
  %1427 = vmatprep.subr.mxu0 0.0
  %1428 = vmatpush1.msra.mxu0 0.0
  %1429 = vmatprep.subr.mxu0 0.0
  %1430 = vmatpush1.msra.mxu0 0.0
  %1431 = vmatprep.mubr.f32.mxu0 0.0
  %v1432 = vand.u32 %v41, 4294901760
  %v1433 = vsub.f32 %v41, %v1432
  %v1434 = vand.u32 %v1433, 4294901760
  %1435 = vmatmul.mubr.f32.gmra.mrb[0].mxu0 %v1434
  %v1436 = vpop.f32.mrb[0].mxu0
  %v1437 = vadd.f32 %v1355, %v1436
  %v1438 = vpop.f32.mrb[0].mxu0
  %1439 = vmatprep.mubr.f32.mxu0 0.0
  %v1440 = vand.u32 %v44, 4294901760
  %v1441 = vsub.f32 %v44, %v1440
  %v1442 = vand.u32 %v1441, 4294901760
  %1443 = vmatmul.mubr.f32.gmra.mrb[0].mxu0 %v1442
  %v1444 = vpop.f32.mrb[0].mxu0
  %v1445 = vadd.f32 %v1362, %v1444
  %v1446 = vpop.f32.mrb[0].mxu0
  %1447 = vdwg.mxu0
  %1448 = vmatprep.subr.mxu0 0.0
  %v1449 = vand.u32 %v1105, 4294901760
  %v1450 = vsub.f32 %v1105, %v1449
  %v1451 = vand.u32 %v1450, 4294901760
  %1452 = vmatpush1.msra.mxu0 %v1451
  %1453 = vmatprep.subr.mxu0 0.0
  %v1454 = vand.u32 %v1107, 4294901760
  %v1455 = vsub.f32 %v1107, %v1454
  %v1456 = vand.u32 %v1455, 4294901760
  %1457 = vmatpush1.msra.mxu0 %v1456
  %1458 = vmatprep.subr.mxu0 0.0
  %1459 = vmatpush1.msra.mxu0 0.0
  %1460 = vmatprep.subr.mxu0 0.0
  %1461 = vmatpush1.msra.mxu0 0.0
  %1462 = vmatprep.subr.mxu0 0.0
  %1463 = vmatpush1.msra.mxu0 0.0
  %1464 = vmatprep.subr.mxu0 0.0
  %1465 = vmatpush1.msra.mxu0 0.0
  %1466 = vmatprep.subr.mxu0 0.0
  %1467 = vmatpush1.msra.mxu0 0.0
  %1468 = vmatprep.subr.mxu0 0.0
  %1469 = vmatpush1.msra.mxu0 0.0
  %1470 = vmatprep.subr.mxu0 0.0
  %1471 = vmatpush1.msra.mxu0 0.0
  %1472 = vmatprep.subr.mxu0 0.0
  %1473 = vmatpush1.msra.mxu0 0.0
  %1474 = vmatprep.subr.mxu0 0.0
  %1475 = vmatpush1.msra.mxu0 0.0
  %1476 = vmatprep.subr.mxu0 0.0
  %1477 = vmatpush1.msra.mxu0 0.0
  %1478 = vmatprep.subr.mxu0 0.0
  %1479 = vmatpush1.msra.mxu0 0.0
  %1480 = vmatprep.subr.mxu0 0.0
  %1481 = vmatpush1.msra.mxu0 0.0
  %1482 = vmatprep.subr.mxu0 0.0
  %1483 = vmatpush1.msra.mxu0 0.0
  %1484 = vmatprep.subr.mxu0 0.0
  %1485 = vmatpush1.msra.mxu0 0.0
  %1486 = vmatprep.subr.mxu0 0.0
  %1487 = vmatpush1.msra.mxu0 0.0
  %1488 = vmatprep.subr.mxu0 0.0
  %1489 = vmatpush1.msra.mxu0 0.0
  %1490 = vmatprep.subr.mxu0 0.0
  %1491 = vmatpush1.msra.mxu0 0.0
  %1492 = vmatprep.subr.mxu0 0.0
  %1493 = vmatpush1.msra.mxu0 0.0
  %1494 = vmatprep.subr.mxu0 0.0
  %1495 = vmatpush1.msra.mxu0 0.0
  %1496 = vmatprep.subr.mxu0 0.0
  %1497 = vmatpush1.msra.mxu0 0.0
  %1498 = vmatprep.subr.mxu0 0.0
  %1499 = vmatpush1.msra.mxu0 0.0
  %1500 = vmatprep.subr.mxu0 0.0
  %1501 = vmatpush1.msra.mxu0 0.0
  %1502 = vmatprep.subr.mxu0 0.0
  %1503 = vmatpush1.msra.mxu0 0.0
  %1504 = vmatprep.subr.mxu0 0.0
  %1505 = vmatpush1.msra.mxu0 0.0
  %1506 = vmatprep.subr.mxu0 0.0
  %1507 = vmatpush1.msra.mxu0 0.0
  %1508 = vmatprep.subr.mxu0 0.0
  %1509 = vmatpush1.msra.mxu0 0.0
  %1510 = vmatprep.subr.mxu0 0.0
  %1511 = vmatpush1.msra.mxu0 0.0
  %1512 = vmatprep.subr.mxu0 0.0
  %1513 = vmatpush1.msra.mxu0 0.0
  %1514 = vmatprep.subr.mxu0 0.0
  %1515 = vmatpush1.msra.mxu0 0.0
  %1516 = vmatprep.subr.mxu0 0.0
  %1517 = vmatpush1.msra.mxu0 0.0
  %1518 = vmatprep.mubr.f32.mxu0 0.0
  %v1519 = vand.u32 %v41, 4294901760
  %1520 = vmatmul.mubr.f32.gmra.mrb[0].mxu0 %v1519
  %v1521 = vpop.f32.mrb[0].mxu0
  %v1522 = vadd.f32 %v1437, %v1521
  %v1523 = vpop.f32.mrb[0].mxu0
  %1524 = vmatprep.mubr.f32.mxu0 0.0
  %v1525 = vand.u32 %v44, 4294901760
  %1526 = vmatmul.mubr.f32.gmra.mrb[0].mxu0 %v1525
  %v1527 = vpop.f32.mrb[0].mxu0
  %v1528 = vadd.f32 %v1445, %v1527
  %v1529 = vpop.f32.mrb[0].mxu0
  %1530 = vdwg.mxu0
  %1531 = vmatprep.subr.mxu0 0.0
  %v1532 = vand.u32 %v1105, 4294901760
  %1533 = vmatpush1.msra.mxu0 %v1532
  %1534 = vmatprep.subr.mxu0 0.0
  %v1535 = vand.u32 %v1107, 4294901760
  %1536 = vmatpush1.msra.mxu0 %v1535
  %1537 = vmatprep.subr.mxu0 0.0
  %1538 = vmatpush1.msra.mxu0 0.0
  %1539 = vmatprep.subr.mxu0 0.0
  %1540 = vmatpush1.msra.mxu0 0.0
  %1541 = vmatprep.subr.mxu0 0.0
  %1542 = vmatpush1.msra.mxu0 0.0
  %1543 = vmatprep.subr.mxu0 0.0
  %1544 = vmatpush1.msra.mxu0 0.0
  %1545 = vmatprep.subr.mxu0 0.0
  %1546 = vmatpush1.msra.mxu0 0.0
  %1547 = vmatprep.subr.mxu0 0.0
  %1548 = vmatpush1.msra.mxu0 0.0
  %1549 = vmatprep.subr.mxu0 0.0
  %1550 = vmatpush1.msra.mxu0 0.0
  %1551 = vmatprep.subr.mxu0 0.0
  %1552 = vmatpush1.msra.mxu0 0.0
  %1553 = vmatprep.subr.mxu0 0.0
  %1554 = vmatpush1.msra.mxu0 0.0
  %1555 = vmatprep.subr.mxu0 0.0
  %1556 = vmatpush1.msra.mxu0 0.0
  %1557 = vmatprep.subr.mxu0 0.0
  %1558 = vmatpush1.msra.mxu0 0.0
  %1559 = vmatprep.subr.mxu0 0.0
  %1560 = vmatpush1.msra.mxu0 0.0
  %1561 = vmatprep.subr.mxu0 0.0
  %1562 = vmatpush1.msra.mxu0 0.0
  %1563 = vmatprep.subr.mxu0 0.0
  %1564 = vmatpush1.msra.mxu0 0.0
  %1565 = vmatprep.subr.mxu0 0.0
  %1566 = vmatpush1.msra.mxu0 0.0
  %1567 = vmatprep.subr.mxu0 0.0
  %1568 = vmatpush1.msra.mxu0 0.0
  %1569 = vmatprep.subr.mxu0 0.0
  %1570 = vmatpush1.msra.mxu0 0.0
  %1571 = vmatprep.subr.mxu0 0.0
  %1572 = vmatpush1.msra.mxu0 0.0
  %1573 = vmatprep.subr.mxu0 0.0
  %1574 = vmatpush1.msra.mxu0 0.0
  %1575 = vmatprep.subr.mxu0 0.0
  %1576 = vmatpush1.msra.mxu0 0.0
  %1577 = vmatprep.subr.mxu0 0.0
  %1578 = vmatpush1.msra.mxu0 0.0
  %1579 = vmatprep.subr.mxu0 0.0
  %1580 = vmatpush1.msra.mxu0 0.0
  %1581 = vmatprep.subr.mxu0 0.0
  %1582 = vmatpush1.msra.mxu0 0.0
  %1583 = vmatprep.subr.mxu0 0.0
  %1584 = vmatpush1.msra.mxu0 0.0
  %1585 = vmatprep.subr.mxu0 0.0
  %1586 = vmatpush1.msra.mxu0 0.0
  %1587 = vmatprep.subr.mxu0 0.0
  %1588 = vmatpush1.msra.mxu0 0.0
  %1589 = vmatprep.subr.mxu0 0.0
  %1590 = vmatpush1.msra.mxu0 0.0
  %1591 = vmatprep.subr.mxu0 0.0
  %1592 = vmatpush1.msra.mxu0 0.0
  %1593 = vmatprep.subr.mxu0 0.0
  %1594 = vmatpush1.msra.mxu0 0.0
  %1595 = vmatprep.subr.mxu0 0.0
  %1596 = vmatpush1.msra.mxu0 0.0
  %1597 = vmatprep.mubr.f32.mxu0 0.0
  %v1598 = vand.u32 %v41, 4294901760
  %1599 = vmatmul.mubr.f32.gmra.mrb[0].mxu0 %v1598
  %v1600 = vpop.f32.mrb[0].mxu0
  %v1601 = vadd.f32 %v1522, %v1600
  %v1602 = vpop.f32.mrb[0].mxu0
  %1603 = vmatprep.mubr.f32.mxu0 0.0
  %v1604 = vand.u32 %v44, 4294901760
  %1605 = vmatmul.mubr.f32.gmra.mrb[0].mxu0 %v1604
  %v1606 = vpop.f32.mrb[0].mxu0
  %v1607 = vadd.f32 %v1528, %v1606
  %v1608 = vpop.f32.mrb[0].mxu0
  %1609 = vdwg.mxu0
  %v1610 = vmax.f32 %v1601, 1e-38
  %v1611 = vmax.f32 %v1607, 1e-38
  %v1612 = vlog2.pop %v1610
  %v1613 = vmul.f32 %v1612, 0.6931472
  %v1614 = vlog2.pop %v1611
  %v1615 = vmul.f32 %v1614, 0.6931472
  %v1616 = vadd.f32 %v1613, %v1101
  %v1617 = vadd.f32 %v1615, %v1101
  %s1618 = scalar_lea.vmem %s0, 48
  %v1619 = vld [vmem:[%s1618] sm:$0xff]
  %v1620 = vld [vmem:[%s1618 + $0x8] sm:$0xff]
  %v1621 = vadd.f32 %v1616, %v1619
  %v1622 = vadd.f32 %v1617, %v1620
  %s1623 = scalar_lea.vmem [#allocation2], 48
  %1624 = vst [vmem:[%s1623] sm:$0xff] %v1621
  %1625 = vst [vmem:[%s1623 + $0x8] sm:$0xff] %v1622
  %v1626 = vmax.f32 %v1621, %v1622
  %v1627 = vrot.slane %v1626, 4
  %v1628 = vmax.f32 %v1626, %v1627
  %v1629 = vrot.slane %v1628, 2
  %v1630 = vmax.f32 %v1628, %v1629
  %v1631 = vrot.slane %v1630, 1
  %v1632 = vmax.f32 %v1630, %v1631
  %v1633 = vsub.f32 %v1621, %v1632
  %v1634 = vsub.f32 %v1622, %v1632
  %v1635 = vmul.f32 %v1633, 1.442695
  %v1636 = vpow.pop %v1635
  %v1637 = vmul.f32 %v1634, 1.442695
  %v1638 = vpow.pop %v1637
  %1639 = vmatprep.subr.mxu0 0.0
  %v1640 = vand.u32 %v1636, 4294901760
  %1641 = vmatpush1.msra.mxu0 %v1640
  %1642 = vmatprep.subr.mxu0 0.0
  %v1643 = vand.u32 %v1638, 4294901760
  %1644 = vmatpush1.msra.mxu0 %v1643
  %1645 = vmatprep.subr.mxu0 0.0
  %1646 = vmatpush1.msra.mxu0 0.0
  %1647 = vmatprep.subr.mxu0 0.0
  %1648 = vmatpush1.msra.mxu0 0.0
  %1649 = vmatprep.subr.mxu0 0.0
  %1650 = vmatpush1.msra.mxu0 0.0
  %1651 = vmatprep.subr.mxu0 0.0
  %1652 = vmatpush1.msra.mxu0 0.0
  %1653 = vmatprep.subr.mxu0 0.0
  %1654 = vmatpush1.msra.mxu0 0.0
  %1655 = vmatprep.subr.mxu0 0.0
  %1656 = vmatpush1.msra.mxu0 0.0
  %1657 = vmatprep.subr.mxu0 0.0
  %1658 = vmatpush1.msra.mxu0 0.0
  %1659 = vmatprep.subr.mxu0 0.0
  %1660 = vmatpush1.msra.mxu0 0.0
  %1661 = vmatprep.subr.mxu0 0.0
  %1662 = vmatpush1.msra.mxu0 0.0
  %1663 = vmatprep.subr.mxu0 0.0
  %1664 = vmatpush1.msra.mxu0 0.0
  %1665 = vmatprep.subr.mxu0 0.0
  %1666 = vmatpush1.msra.mxu0 0.0
  %1667 = vmatprep.subr.mxu0 0.0
  %1668 = vmatpush1.msra.mxu0 0.0
  %1669 = vmatprep.subr.mxu0 0.0
  %1670 = vmatpush1.msra.mxu0 0.0
  %1671 = vmatprep.subr.mxu0 0.0
  %1672 = vmatpush1.msra.mxu0 0.0
  %1673 = vmatprep.subr.mxu0 0.0
  %1674 = vmatpush1.msra.mxu0 0.0
  %1675 = vmatprep.subr.mxu0 0.0
  %1676 = vmatpush1.msra.mxu0 0.0
  %1677 = vmatprep.subr.mxu0 0.0
  %1678 = vmatpush1.msra.mxu0 0.0
  %1679 = vmatprep.subr.mxu0 0.0
  %1680 = vmatpush1.msra.mxu0 0.0
  %1681 = vmatprep.subr.mxu0 0.0
  %1682 = vmatpush1.msra.mxu0 0.0
  %1683 = vmatprep.subr.mxu0 0.0
  %1684 = vmatpush1.msra.mxu0 0.0
  %1685 = vmatprep.subr.mxu0 0.0
  %1686 = vmatpush1.msra.mxu0 0.0
  %1687 = vmatprep.subr.mxu0 0.0
  %1688 = vmatpush1.msra.mxu0 0.0
  %1689 = vmatprep.subr.mxu0 0.0
  %1690 = vmatpush1.msra.mxu0 0.0
  %1691 = vmatprep.subr.mxu0 0.0
  %1692 = vmatpush1.msra.mxu0 0.0
  %1693 = vmatprep.subr.mxu0 0.0
  %1694 = vmatpush1.msra.mxu0 0.0
  %1695 = vmatprep.subr.mxu0 0.0
  %1696 = vmatpush1.msra.mxu0 0.0
  %1697 = vmatprep.subr.mxu0 0.0
  %1698 = vmatpush1.msra.mxu0 0.0
  %1699 = vmatprep.subr.mxu0 0.0
  %1700 = vmatpush1.msra.mxu0 0.0
  %1701 = vmatprep.subr.mxu0 0.0
  %1702 = vmatpush1.msra.mxu0 0.0
  %1703 = vmatprep.subr.mxu0 0.0
  %1704 = vmatpush1.msra.mxu0 0.0
  %1705 = vmatprep.mubr.f32.mxu0 0.0
  %v1706 = vand.u32 %v41, 4294901760
  %v1707 = vsub.f32 %v41, %v1706
  %v1708 = vand.u32 %v1707, 4294901760
  %v1709 = vsub.f32 %v1707, %v1708
  %v1710 = vand.u32 %v1709, 4294901760
  %1711 = vmatmul.mubr.f32.gmra.mrb[0].mxu0 %v1710
  %v1712 = vpop.f32.mrb[0].mxu0
  %v1713 = vadd.f32 0.0, %v1712
  %v1714 = vpop.f32.mrb[0].mxu0
  %1715 = vmatprep.mubr.f32.mxu0 0.0
  %v1716 = vand.u32 %v44, 4294901760
  %v1717 = vsub.f32 %v44, %v1716
  %v1718 = vand.u32 %v1717, 4294901760
  %v1719 = vsub.f32 %v1717, %v1718
  %v1720 = vand.u32 %v1719, 4294901760
  %1721 = vmatmul.mubr.f32.gmra.mrb[0].mxu0 %v1720
  %v1722 = vpop.f32.mrb[0].mxu0
  %v1723 = vadd.f32 0.0, %v1722
  %v1724 = vpop.f32.mrb[0].mxu0
  %1725 = vdwg.mxu0
  %1726 = vmatprep.subr.mxu0 0.0
  %v1727 = vand.u32 %v1636, 4294901760
  %v1728 = vsub.f32 %v1636, %v1727
  %v1729 = vand.u32 %v1728, 4294901760
  %v1730 = vsub.f32 %v1728, %v1729
  %v1731 = vand.u32 %v1730, 4294901760
  %1732 = vmatpush1.msra.mxu0 %v1731
  %1733 = vmatprep.subr.mxu0 0.0
  %v1734 = vand.u32 %v1638, 4294901760
  %v1735 = vsub.f32 %v1638, %v1734
  %v1736 = vand.u32 %v1735, 4294901760
  %v1737 = vsub.f32 %v1735, %v1736
  %v1738 = vand.u32 %v1737, 4294901760
  %1739 = vmatpush1.msra.mxu0 %v1738
  %1740 = vmatprep.subr.mxu0 0.0
  %1741 = vmatpush1.msra.mxu0 0.0
  %1742 = vmatprep.subr.mxu0 0.0
  %1743 = vmatpush1.msra.mxu0 0.0
  %1744 = vmatprep.subr.mxu0 0.0
  %1745 = vmatpush1.msra.mxu0 0.0
  %1746 = vmatprep.subr.mxu0 0.0
  %1747 = vmatpush1.msra.mxu0 0.0
  %1748 = vmatprep.subr.mxu0 0.0
  %1749 = vmatpush1.msra.mxu0 0.0
  %1750 = vmatprep.subr.mxu0 0.0
  %1751 = vmatpush1.msra.mxu0 0.0
  %1752 = vmatprep.subr.mxu0 0.0
  %1753 = vmatpush1.msra.mxu0 0.0
  %1754 = vmatprep.subr.mxu0 0.0
  %1755 = vmatpush1.msra.mxu0 0.0
  %1756 = vmatprep.subr.mxu0 0.0
  %1757 = vmatpush1.msra.mxu0 0.0
  %1758 = vmatprep.subr.mxu0 0.0
  %1759 = vmatpush1.msra.mxu0 0.0
  %1760 = vmatprep.subr.mxu0 0.0
  %1761 = vmatpush1.msra.mxu0 0.0
  %1762 = vmatprep.subr.mxu0 0.0
  %1763 = vmatpush1.msra.mxu0 0.0
  %1764 = vmatprep.subr.mxu0 0.0
  %1765 = vmatpush1.msra.mxu0 0.0
  %1766 = vmatprep.subr.mxu0 0.0
  %1767 = vmatpush1.msra.mxu0 0.0
  %1768 = vmatprep.subr.mxu0 0.0
  %1769 = vmatpush1.msra.mxu0 0.0
  %1770 = vmatprep.subr.mxu0 0.0
  %1771 = vmatpush1.msra.mxu0 0.0
  %1772 = vmatprep.subr.mxu0 0.0
  %1773 = vmatpush1.msra.mxu0 0.0
  %1774 = vmatprep.subr.mxu0 0.0
  %1775 = vmatpush1.msra.mxu0 0.0
  %1776 = vmatprep.subr.mxu0 0.0
  %1777 = vmatpush1.msra.mxu0 0.0
  %1778 = vmatprep.subr.mxu0 0.0
  %1779 = vmatpush1.msra.mxu0 0.0
  %1780 = vmatprep.subr.mxu0 0.0
  %1781 = vmatpush1.msra.mxu0 0.0
  %1782 = vmatprep.subr.mxu0 0.0
  %1783 = vmatpush1.msra.mxu0 0.0
  %1784 = vmatprep.subr.mxu0 0.0
  %1785 = vmatpush1.msra.mxu0 0.0
  %1786 = vmatprep.subr.mxu0 0.0
  %1787 = vmatpush1.msra.mxu0 0.0
  %1788 = vmatprep.subr.mxu0 0.0
  %1789 = vmatpush1.msra.mxu0 0.0
  %1790 = vmatprep.subr.mxu0 0.0
  %1791 = vmatpush1.msra.mxu0 0.0
  %1792 = vmatprep.subr.mxu0 0.0
  %1793 = vmatpush1.msra.mxu0 0.0
  %1794 = vmatprep.subr.mxu0 0.0
  %1795 = vmatpush1.msra.mxu0 0.0
  %1796 = vmatprep.subr.mxu0 0.0
  %1797 = vmatpush1.msra.mxu0 0.0
  %1798 = vmatprep.subr.mxu0 0.0
  %1799 = vmatpush1.msra.mxu0 0.0
  %1800 = vmatprep.mubr.f32.mxu0 0.0
  %v1801 = vand.u32 %v41, 4294901760
  %1802 = vmatmul.mubr.f32.gmra.mrb[0].mxu0 %v1801
  %v1803 = vpop.f32.mrb[0].mxu0
  %v1804 = vadd.f32 %v1713, %v1803
  %v1805 = vpop.f32.mrb[0].mxu0
  %1806 = vmatprep.mubr.f32.mxu0 0.0
  %v1807 = vand.u32 %v44, 4294901760
  %1808 = vmatmul.mubr.f32.gmra.mrb[0].mxu0 %v1807
  %v1809 = vpop.f32.mrb[0].mxu0
  %v1810 = vadd.f32 %v1723, %v1809
  %v1811 = vpop.f32.mrb[0].mxu0
  %1812 = vdwg.mxu0
  %1813 = vmatprep.subr.mxu0 0.0
  %v1814 = vand.u32 %v1636, 4294901760
  %v1815 = vsub.f32 %v1636, %v1814
  %1816 = vmatpush1.msra.mxu0 %v1815
  %1817 = vmatprep.subr.mxu0 0.0
  %v1818 = vand.u32 %v1638, 4294901760
  %v1819 = vsub.f32 %v1638, %v1818
  %1820 = vmatpush1.msra.mxu0 %v1819
  %1821 = vmatprep.subr.mxu0 0.0
  %1822 = vmatpush1.msra.mxu0 0.0
  %1823 = vmatprep.subr.mxu0 0.0
  %1824 = vmatpush1.msra.mxu0 0.0
  %1825 = vmatprep.subr.mxu0 0.0
  %1826 = vmatpush1.msra.mxu0 0.0
  %1827 = vmatprep.subr.mxu0 0.0
  %1828 = vmatpush1.msra.mxu0 0.0
  %1829 = vmatprep.subr.mxu0 0.0
  %1830 = vmatpush1.msra.mxu0 0.0
  %1831 = vmatprep.subr.mxu0 0.0
  %1832 = vmatpush1.msra.mxu0 0.0
  %1833 = vmatprep.subr.mxu0 0.0
  %1834 = vmatpush1.msra.mxu0 0.0
  %1835 = vmatprep.subr.mxu0 0.0
  %1836 = vmatpush1.msra.mxu0 0.0
  %1837 = vmatprep.subr.mxu0 0.0
  %1838 = vmatpush1.msra.mxu0 0.0
  %1839 = vmatprep.subr.mxu0 0.0
  %1840 = vmatpush1.msra.mxu0 0.0
  %1841 = vmatprep.subr.mxu0 0.0
  %1842 = vmatpush1.msra.mxu0 0.0
  %1843 = vmatprep.subr.mxu0 0.0
  %1844 = vmatpush1.msra.mxu0 0.0
  %1845 = vmatprep.subr.mxu0 0.0
  %1846 = vmatpush1.msra.mxu0 0.0
  %1847 = vmatprep.subr.mxu0 0.0
  %1848 = vmatpush1.msra.mxu0 0.0
  %1849 = vmatprep.subr.mxu0 0.0
  %1850 = vmatpush1.msra.mxu0 0.0
  %1851 = vmatprep.subr.mxu0 0.0
  %1852 = vmatpush1.msra.mxu0 0.0
  %1853 = vmatprep.subr.mxu0 0.0
  %1854 = vmatpush1.msra.mxu0 0.0
  %1855 = vmatprep.subr.mxu0 0.0
  %1856 = vmatpush1.msra.mxu0 0.0
  %1857 = vmatprep.subr.mxu0 0.0
  %1858 = vmatpush1.msra.mxu0 0.0
  %1859 = vmatprep.subr.mxu0 0.0
  %1860 = vmatpush1.msra.mxu0 0.0
  %1861 = vmatprep.subr.mxu0 0.0
  %1862 = vmatpush1.msra.mxu0 0.0
  %1863 = vmatprep.subr.mxu0 0.0
  %1864 = vmatpush1.msra.mxu0 0.0
  %1865 = vmatprep.subr.mxu0 0.0
  %1866 = vmatpush1.msra.mxu0 0.0
  %1867 = vmatprep.subr.mxu0 0.0
  %1868 = vmatpush1.msra.mxu0 0.0
  %1869 = vmatprep.subr.mxu0 0.0
  %1870 = vmatpush1.msra.mxu0 0.0
  %1871 = vmatprep.subr.mxu0 0.0
  %1872 = vmatpush1.msra.mxu0 0.0
  %1873 = vmatprep.subr.mxu0 0.0
  %1874 = vmatpush1.msra.mxu0 0.0
  %1875 = vmatprep.subr.mxu0 0.0
  %1876 = vmatpush1.msra.mxu0 0.0
  %1877 = vmatprep.subr.mxu0 0.0
  %1878 = vmatpush1.msra.mxu0 0.0
  %1879 = vmatprep.subr.mxu0 0.0
  %1880 = vmatpush1.msra.mxu0 0.0
  %1881 = vmatprep.mubr.f32.mxu0 0.0
  %v1882 = vand.u32 %v41, 4294901760
  %v1883 = vsub.f32 %v41, %v1882
  %1884 = vmatmul.mubr.f32.gmra.mrb[0].mxu0 %v1883
  %v1885 = vpop.f32.mrb[0].mxu0
  %v1886 = vadd.f32 %v1804, %v1885
  %v1887 = vpop.f32.mrb[0].mxu0
  %1888 = vmatprep.mubr.f32.mxu0 0.0
  %v1889 = vand.u32 %v44, 4294901760
  %v1890 = vsub.f32 %v44, %v1889
  %1891 = vmatmul.mubr.f32.gmra.mrb[0].mxu0 %v1890
  %v1892 = vpop.f32.mrb[0].mxu0
  %v1893 = vadd.f32 %v1810, %v1892
  %v1894 = vpop.f32.mrb[0].mxu0
  %1895 = vdwg.mxu0
  %1896 = vmatprep.subr.mxu0 0.0
  %v1897 = vand.u32 %v1636, 4294901760
  %1898 = vmatpush1.msra.mxu0 %v1897
  %1899 = vmatprep.subr.mxu0 0.0
  %v1900 = vand.u32 %v1638, 4294901760
  %1901 = vmatpush1.msra.mxu0 %v1900
  %1902 = vmatprep.subr.mxu0 0.0
  %1903 = vmatpush1.msra.mxu0 0.0
  %1904 = vmatprep.subr.mxu0 0.0
  %1905 = vmatpush1.msra.mxu0 0.0
  %1906 = vmatprep.subr.mxu0 0.0
  %1907 = vmatpush1.msra.mxu0 0.0
  %1908 = vmatprep.subr.mxu0 0.0
  %1909 = vmatpush1.msra.mxu0 0.0
  %1910 = vmatprep.subr.mxu0 0.0
  %1911 = vmatpush1.msra.mxu0 0.0
  %1912 = vmatprep.subr.mxu0 0.0
  %1913 = vmatpush1.msra.mxu0 0.0
  %1914 = vmatprep.subr.mxu0 0.0
  %1915 = vmatpush1.msra.mxu0 0.0
  %1916 = vmatprep.subr.mxu0 0.0
  %1917 = vmatpush1.msra.mxu0 0.0
  %1918 = vmatprep.subr.mxu0 0.0
  %1919 = vmatpush1.msra.mxu0 0.0
  %1920 = vmatprep.subr.mxu0 0.0
  %1921 = vmatpush1.msra.mxu0 0.0
  %1922 = vmatprep.subr.mxu0 0.0
  %1923 = vmatpush1.msra.mxu0 0.0
  %1924 = vmatprep.subr.mxu0 0.0
  %1925 = vmatpush1.msra.mxu0 0.0
  %1926 = vmatprep.subr.mxu0 0.0
  %1927 = vmatpush1.msra.mxu0 0.0
  %1928 = vmatprep.subr.mxu0 0.0
  %1929 = vmatpush1.msra.mxu0 0.0
  %1930 = vmatprep.subr.mxu0 0.0
  %1931 = vmatpush1.msra.mxu0 0.0
  %1932 = vmatprep.subr.mxu0 0.0
  %1933 = vmatpush1.msra.mxu0 0.0
  %1934 = vmatprep.subr.mxu0 0.0
  %1935 = vmatpush1.msra.mxu0 0.0
  %1936 = vmatprep.subr.mxu0 0.0
  %1937 = vmatpush1.msra.mxu0 0.0
  %1938 = vmatprep.subr.mxu0 0.0
  %1939 = vmatpush1.msra.mxu0 0.0
  %1940 = vmatprep.subr.mxu0 0.0
  %1941 = vmatpush1.msra.mxu0 0.0
  %1942 = vmatprep.subr.mxu0 0.0
  %1943 = vmatpush1.msra.mxu0 0.0
  %1944 = vmatprep.subr.mxu0 0.0
  %1945 = vmatpush1.msra.mxu0 0.0
  %1946 = vmatprep.subr.mxu0 0.0
  %1947 = vmatpush1.msra.mxu0 0.0
  %1948 = vmatprep.subr.mxu0 0.0
  %1949 = vmatpush1.msra.mxu0 0.0
  %1950 = vmatprep.subr.mxu0 0.0
  %1951 = vmatpush1.msra.mxu0 0.0
  %1952 = vmatprep.subr.mxu0 0.0
  %1953 = vmatpush1.msra.mxu0 0.0
  %1954 = vmatprep.subr.mxu0 0.0
  %1955 = vmatpush1.msra.mxu0 0.0
  %1956 = vmatprep.subr.mxu0 0.0
  %1957 = vmatpush1.msra.mxu0 0.0
  %1958 = vmatprep.subr.mxu0 0.0
  %1959 = vmatpush1.msra.mxu0 0.0
  %1960 = vmatprep.subr.mxu0 0.0
  %1961 = vmatpush1.msra.mxu0 0.0
  %1962 = vmatprep.mubr.f32.mxu0 0.0
  %v1963 = vand.u32 %v41, 4294901760
  %v1964 = vsub.f32 %v41, %v1963
  %v1965 = vand.u32 %v1964, 4294901760
  %1966 = vmatmul.mubr.f32.gmra.mrb[0].mxu0 %v1965
  %v1967 = vpop.f32.mrb[0].mxu0
  %v1968 = vadd.f32 %v1886, %v1967
  %v1969 = vpop.f32.mrb[0].mxu0
  %1970 = vmatprep.mubr.f32.mxu0 0.0
  %v1971 = vand.u32 %v44, 4294901760
  %v1972 = vsub.f32 %v44, %v1971
  %v1973 = vand.u32 %v1972, 4294901760
  %1974 = vmatmul.mubr.f32.gmra.mrb[0].mxu0 %v1973
  %v1975 = vpop.f32.mrb[0].mxu0
  %v1976 = vadd.f32 %v1893, %v1975
  %v1977 = vpop.f32.mrb[0].mxu0
  %1978 = vdwg.mxu0
  %1979 = vmatprep.subr.mxu0 0.0
  %v1980 = vand.u32 %v1636, 4294901760
  %v1981 = vsub.f32 %v1636, %v1980
  %v1982 = vand.u32 %v1981, 4294901760
  %1983 = vmatpush1.msra.mxu0 %v1982
  %1984 = vmatprep.subr.mxu0 0.0
  %v1985 = vand.u32 %v1638, 4294901760
  %v1986 = vsub.f32 %v1638, %v1985
  %v1987 = vand.u32 %v1986, 4294901760
  %1988 = vmatpush1.msra.mxu0 %v1987
  %1989 = vmatprep.subr.mxu0 0.0
  %1990 = vmatpush1.msra.mxu0 0.0
  %1991 = vmatprep.subr.mxu0 0.0
  %1992 = vmatpush1.msra.mxu0 0.0
  %1993 = vmatprep.subr.mxu0 0.0
  %1994 = vmatpush1.msra.mxu0 0.0
  %1995 = vmatprep.subr.mxu0 0.0
  %1996 = vmatpush1.msra.mxu0 0.0
  %1997 = vmatprep.subr.mxu0 0.0
  %1998 = vmatpush1.msra.mxu0 0.0
  %1999 = vmatprep.subr.mxu0 0.0
  %2000 = vmatpush1.msra.mxu0 0.0
  %2001 = vmatprep.subr.mxu0 0.0
  %2002 = vmatpush1.msra.mxu0 0.0
  %2003 = vmatprep.subr.mxu0 0.0
  %2004 = vmatpush1.msra.mxu0 0.0
  %2005 = vmatprep.subr.mxu0 0.0
  %2006 = vmatpush1.msra.mxu0 0.0
  %2007 = vmatprep.subr.mxu0 0.0
  %2008 = vmatpush1.msra.mxu0 0.0
  %2009 = vmatprep.subr.mxu0 0.0
  %2010 = vmatpush1.msra.mxu0 0.0
  %2011 = vmatprep.subr.mxu0 0.0
  %2012 = vmatpush1.msra.mxu0 0.0
  %2013 = vmatprep.subr.mxu0 0.0
  %2014 = vmatpush1.msra.mxu0 0.0
  %2015 = vmatprep.subr.mxu0 0.0
  %2016 = vmatpush1.msra.mxu0 0.0
  %2017 = vmatprep.subr.mxu0 0.0
  %2018 = vmatpush1.msra.mxu0 0.0
  %2019 = vmatprep.subr.mxu0 0.0
  %2020 = vmatpush1.msra.mxu0 0.0
  %2021 = vmatprep.subr.mxu0 0.0
  %2022 = vmatpush1.msra.mxu0 0.0
  %2023 = vmatprep.subr.mxu0 0.0
  %2024 = vmatpush1.msra.mxu0 0.0
  %2025 = vmatprep.subr.mxu0 0.0
  %2026 = vmatpush1.msra.mxu0 0.0
  %2027 = vmatprep.subr.mxu0 0.0
  %2028 = vmatpush1.msra.mxu0 0.0
  %2029 = vmatprep.subr.mxu0 0.0
  %2030 = vmatpush1.msra.mxu0 0.0
  %2031 = vmatprep.subr.mxu0 0.0
  %2032 = vmatpush1.msra.mxu0 0.0
  %2033 = vmatprep.subr.mxu0 0.0
  %2034 = vmatpush1.msra.mxu0 0.0
  %2035 = vmatprep.subr.mxu0 0.0
  %2036 = vmatpush1.msra.mxu0 0.0
  %2037 = vmatprep.subr.mxu0 0.0
  %2038 = vmatpush1.msra.mxu0 0.0
  %2039 = vmatprep.subr.mxu0 0.0
  %2040 = vmatpush1.msra.mxu0 0.0
  %2041 = vmatprep.subr.mxu0 0.0
  %2042 = vmatpush1.msra.mxu0 0.0
  %2043 = vmatprep.subr.mxu0 0.0
  %2044 = vmatpush1.msra.mxu0 0.0
  %2045 = vmatprep.subr.mxu0 0.0
  %2046 = vmatpush1.msra.mxu0 0.0
  %2047 = vmatprep.subr.mxu0 0.0
  %2048 = vmatpush1.msra.mxu0 0.0
  %2049 = vmatprep.mubr.f32.mxu0 0.0
  %v2050 = vand.u32 %v41, 4294901760
  %2051 = vmatmul.mubr.f32.gmra.mrb[0].mxu0 %v2050
  %v2052 = vpop.f32.mrb[0].mxu0
  %v2053 = vadd.f32 %v1968, %v2052
  %v2054 = vpop.f32.mrb[0].mxu0
  %2055 = vmatprep.mubr.f32.mxu0 0.0
  %v2056 = vand.u32 %v44, 4294901760
  %2057 = vmatmul.mubr.f32.gmra.mrb[0].mxu0 %v2056
  %v2058 = vpop.f32.mrb[0].mxu0
  %v2059 = vadd.f32 %v1976, %v2058
  %v2060 = vpop.f32.mrb[0].mxu0
  %2061 = vdwg.mxu0
  %2062 = vmatprep.subr.mxu0 0.0
  %v2063 = vand.u32 %v1636, 4294901760
  %2064 = vmatpush1.msra.mxu0 %v2063
  %2065 = vmatprep.subr.mxu0 0.0
  %v2066 = vand.u32 %v1638, 4294901760
  %2067 = vmatpush1.msra.mxu0 %v2066
  %2068 = vmatprep.subr.mxu0 0.0
  %2069 = vmatpush1.msra.mxu0 0.0
  %2070 = vmatprep.subr.mxu0 0.0
  %2071 = vmatpush1.msra.mxu0 0.0
  %2072 = vmatprep.subr.mxu0 0.0
  %2073 = vmatpush1.msra.mxu0 0.0
  %2074 = vmatprep.subr.mxu0 0.0
  %2075 = vmatpush1.msra.mxu0 0.0
  %2076 = vmatprep.subr.mxu0 0.0
  %2077 = vmatpush1.msra.mxu0 0.0
  %2078 = vmatprep.subr.mxu0 0.0
  %2079 = vmatpush1.msra.mxu0 0.0
  %2080 = vmatprep.subr.mxu0 0.0
  %2081 = vmatpush1.msra.mxu0 0.0
  %2082 = vmatprep.subr.mxu0 0.0
  %2083 = vmatpush1.msra.mxu0 0.0
  %2084 = vmatprep.subr.mxu0 0.0
  %2085 = vmatpush1.msra.mxu0 0.0
  %2086 = vmatprep.subr.mxu0 0.0
  %2087 = vmatpush1.msra.mxu0 0.0
  %2088 = vmatprep.subr.mxu0 0.0
  %2089 = vmatpush1.msra.mxu0 0.0
  %2090 = vmatprep.subr.mxu0 0.0
  %2091 = vmatpush1.msra.mxu0 0.0
  %2092 = vmatprep.subr.mxu0 0.0
  %2093 = vmatpush1.msra.mxu0 0.0
  %2094 = vmatprep.subr.mxu0 0.0
  %2095 = vmatpush1.msra.mxu0 0.0
  %2096 = vmatprep.subr.mxu0 0.0
  %2097 = vmatpush1.msra.mxu0 0.0
  %2098 = vmatprep.subr.mxu0 0.0
  %2099 = vmatpush1.msra.mxu0 0.0
  %2100 = vmatprep.subr.mxu0 0.0
  %2101 = vmatpush1.msra.mxu0 0.0
  %2102 = vmatprep.subr.mxu0 0.0
  %2103 = vmatpush1.msra.mxu0 0.0
  %2104 = vmatprep.subr.mxu0 0.0
  %2105 = vmatpush1.msra.mxu0 0.0
  %2106 = vmatprep.subr.mxu0 0.0
  %2107 = vmatpush1.msra.mxu0 0.0
  %2108 = vmatprep.subr.mxu0 0.0
  %2109 = vmatpush1.msra.mxu0 0.0
  %2110 = vmatprep.subr.mxu0 0.0
  %2111 = vmatpush1.msra.mxu0 0.0
  %2112 = vmatprep.subr.mxu0 0.0
  %2113 = vmatpush1.msra.mxu0 0.0
  %2114 = vmatprep.subr.mxu0 0.0
  %2115 = vmatpush1.msra.mxu0 0.0
  %2116 = vmatprep.subr.mxu0 0.0
  %2117 = vmatpush1.msra.mxu0 0.0
  %2118 = vmatprep.subr.mxu0 0.0
  %2119 = vmatpush1.msra.mxu0 0.0
  %2120 = vmatprep.subr.mxu0 0.0
  %2121 = vmatpush1.msra.mxu0 0.0
  %2122 = vmatprep.subr.mxu0 0.0
  %2123 = vmatpush1.msra.mxu0 0.0
  %2124 = vmatprep.subr.mxu0 0.0
  %2125 = vmatpush1.msra.mxu0 0.0
  %2126 = vmatprep.subr.mxu0 0.0
  %2127 = vmatpush1.msra.mxu0 0.0
  %2128 = vmatprep.mubr.f32.mxu0 0.0
  %v2129 = vand.u32 %v41, 4294901760
  %2130 = vmatmul.mubr.f32.gmra.mrb[0].mxu0 %v2129
  %v2131 = vpop.f32.mrb[0].mxu0
  %v2132 = vadd.f32 %v2053, %v2131
  %v2133 = vpop.f32.mrb[0].mxu0
  %2134 = vmatprep.mubr.f32.mxu0 0.0
  %v2135 = vand.u32 %v44, 4294901760
  %2136 = vmatmul.mubr.f32.gmra.mrb[0].mxu0 %v2135
  %v2137 = vpop.f32.mrb[0].mxu0
  %v2138 = vadd.f32 %v2059, %v2137
  %v2139 = vpop.f32.mrb[0].mxu0
  %2140 = vdwg.mxu0
  %v2141 = vmax.f32 %v2132, 1e-38
  %v2142 = vmax.f32 %v2138, 1e-38
  %v2143 = vlog2.pop %v2141
  %v2144 = vmul.f32 %v2143, 0.6931472
  %v2145 = vlog2.pop %v2142
  %v2146 = vmul.f32 %v2145, 0.6931472
  %v2147 = vadd.f32 %v2144, %v1632
  %v2148 = vadd.f32 %v2146, %v1632
  %s2149 = scalar_lea.vmem %s0, 64
  %v2150 = vld [vmem:[%s2149] sm:$0xff]
  %v2151 = vld [vmem:[%s2149 + $0x8] sm:$0xff]
  %v2152 = vadd.f32 %v2147, %v2150
  %v2153 = vadd.f32 %v2148, %v2151
  %s2154 = scalar_lea.vmem [#allocation2], 64
  %2155 = vst [vmem:[%s2154] sm:$0xff] %v2152
  %2156 = vst [vmem:[%s2154 + $0x8] sm:$0xff] %v2153
  %v2157 = vmax.f32 %v2152, %v2153
  %v2158 = vrot.slane %v2157, 4
  %v2159 = vmax.f32 %v2157, %v2158
  %v2160 = vrot.slane %v2159, 2
  %v2161 = vmax.f32 %v2159, %v2160
  %v2162 = vrot.slane %v2161, 1
  %v2163 = vmax.f32 %v2161, %v2162
  %v2164 = vsub.f32 %v2152, %v2163
  %v2165 = vsub.f32 %v2153, %v2163
  %v2166 = vmul.f32 %v2164, 1.442695
  %v2167 = vpow.pop %v2166
  %v2168 = vmul.f32 %v2165, 1.442695
  %v2169 = vpow.pop %v2168
  %2170 = vmatprep.subr.mxu0 0.0
  %v2171 = vand.u32 %v2167, 4294901760
  %2172 = vmatpush1.msra.mxu0 %v2171
  %2173 = vmatprep.subr.mxu0 0.0
  %v2174 = vand.u32 %v2169, 4294901760
  %2175 = vmatpush1.msra.mxu0 %v2174
  %2176 = vmatprep.subr.mxu0 0.0
  %2177 = vmatpush1.msra.mxu0 0.0
  %2178 = vmatprep.subr.mxu0 0.0
  %2179 = vmatpush1.msra.mxu0 0.0
  %2180 = vmatprep.subr.mxu0 0.0
  %2181 = vmatpush1.msra.mxu0 0.0
  %2182 = vmatprep.subr.mxu0 0.0
  %2183 = vmatpush1.msra.mxu0 0.0
  %2184 = vmatprep.subr.mxu0 0.0
  %2185 = vmatpush1.msra.mxu0 0.0
  %2186 = vmatprep.subr.mxu0 0.0
  %2187 = vmatpush1.msra.mxu0 0.0
  %2188 = vmatprep.subr.mxu0 0.0
  %2189 = vmatpush1.msra.mxu0 0.0
  %2190 = vmatprep.subr.mxu0 0.0
  %2191 = vmatpush1.msra.mxu0 0.0
  %2192 = vmatprep.subr.mxu0 0.0
  %2193 = vmatpush1.msra.mxu0 0.0
  %2194 = vmatprep.subr.mxu0 0.0
  %2195 = vmatpush1.msra.mxu0 0.0
  %2196 = vmatprep.subr.mxu0 0.0
  %2197 = vmatpush1.msra.mxu0 0.0
  %2198 = vmatprep.subr.mxu0 0.0
  %2199 = vmatpush1.msra.mxu0 0.0
  %2200 = vmatprep.subr.mxu0 0.0
  %2201 = vmatpush1.msra.mxu0 0.0
  %2202 = vmatprep.subr.mxu0 0.0
  %2203 = vmatpush1.msra.mxu0 0.0
  %2204 = vmatprep.subr.mxu0 0.0
  %2205 = vmatpush1.msra.mxu0 0.0
  %2206 = vmatprep.subr.mxu0 0.0
  %2207 = vmatpush1.msra.mxu0 0.0
  %2208 = vmatprep.subr.mxu0 0.0
  %2209 = vmatpush1.msra.mxu0 0.0
  %2210 = vmatprep.subr.mxu0 0.0
  %2211 = vmatpush1.msra.mxu0 0.0
  %2212 = vmatprep.subr.mxu0 0.0
  %2213 = vmatpush1.msra.mxu0 0.0
  %2214 = vmatprep.subr.mxu0 0.0
  %2215 = vmatpush1.msra.mxu0 0.0
  %2216 = vmatprep.subr.mxu0 0.0
  %2217 = vmatpush1.msra.mxu0 0.0
  %2218 = vmatprep.subr.mxu0 0.0
  %2219 = vmatpush1.msra.mxu0 0.0
  %2220 = vmatprep.subr.mxu0 0.0
  %2221 = vmatpush1.msra.mxu0 0.0
  %2222 = vmatprep.subr.mxu0 0.0
  %2223 = vmatpush1.msra.mxu0 0.0
  %2224 = vmatprep.subr.mxu0 0.0
  %2225 = vmatpush1.msra.mxu0 0.0
  %2226 = vmatprep.subr.mxu0 0.0
  %2227 = vmatpush1.msra.mxu0 0.0
  %2228 = vmatprep.subr.mxu0 0.0
  %2229 = vmatpush1.msra.mxu0 0.0
  %2230 = vmatprep.subr.mxu0 0.0
  %2231 = vmatpush1.msra.mxu0 0.0
  %2232 = vmatprep.subr.mxu0 0.0
  %2233 = vmatpush1.msra.mxu0 0.0
  %2234 = vmatprep.subr.mxu0 0.0
  %2235 = vmatpush1.msra.mxu0 0.0
  %2236 = vmatprep.mubr.f32.mxu0 0.0
  %v2237 = vand.u32 %v41, 4294901760
  %v2238 = vsub.f32 %v41, %v2237
  %v2239 = vand.u32 %v2238, 4294901760
  %v2240 = vsub.f32 %v2238, %v2239
  %v2241 = vand.u32 %v2240, 4294901760
  %2242 = vmatmul.mubr.f32.gmra.mrb[0].mxu0 %v2241
  %v2243 = vpop.f32.mrb[0].mxu0
  %v2244 = vadd.f32 0.0, %v2243
  %v2245 = vpop.f32.mrb[0].mxu0
  %2246 = vmatprep.mubr.f32.mxu0 0.0
  %v2247 = vand.u32 %v44, 4294901760
  %v2248 = vsub.f32 %v44, %v2247
  %v2249 = vand.u32 %v2248, 4294901760
  %v2250 = vsub.f32 %v2248, %v2249
  %v2251 = vand.u32 %v2250, 4294901760
  %2252 = vmatmul.mubr.f32.gmra.mrb[0].mxu0 %v2251
  %v2253 = vpop.f32.mrb[0].mxu0
  %v2254 = vadd.f32 0.0, %v2253
  %v2255 = vpop.f32.mrb[0].mxu0
  %2256 = vdwg.mxu0
  %2257 = vmatprep.subr.mxu0 0.0
  %v2258 = vand.u32 %v2167, 4294901760
  %v2259 = vsub.f32 %v2167, %v2258
  %v2260 = vand.u32 %v2259, 4294901760
  %v2261 = vsub.f32 %v2259, %v2260
  %v2262 = vand.u32 %v2261, 4294901760
  %2263 = vmatpush1.msra.mxu0 %v2262
  %2264 = vmatprep.subr.mxu0 0.0
  %v2265 = vand.u32 %v2169, 4294901760
  %v2266 = vsub.f32 %v2169, %v2265
  %v2267 = vand.u32 %v2266, 4294901760
  %v2268 = vsub.f32 %v2266, %v2267
  %v2269 = vand.u32 %v2268, 4294901760
  %2270 = vmatpush1.msra.mxu0 %v2269
  %2271 = vmatprep.subr.mxu0 0.0
  %2272 = vmatpush1.msra.mxu0 0.0
  %2273 = vmatprep.subr.mxu0 0.0
  %2274 = vmatpush1.msra.mxu0 0.0
  %2275 = vmatprep.subr.mxu0 0.0
  %2276 = vmatpush1.msra.mxu0 0.0
  %2277 = vmatprep.subr.mxu0 0.0
  %2278 = vmatpush1.msra.mxu0 0.0
  %2279 = vmatprep.subr.mxu0 0.0
  %2280 = vmatpush1.msra.mxu0 0.0
  %2281 = vmatprep.subr.mxu0 0.0
  %2282 = vmatpush1.msra.mxu0 0.0
  %2283 = vmatprep.subr.mxu0 0.0
  %2284 = vmatpush1.msra.mxu0 0.0
  %2285 = vmatprep.subr.mxu0 0.0
  %2286 = vmatpush1.msra.mxu0 0.0
  %2287 = vmatprep.subr.mxu0 0.0
  %2288 = vmatpush1.msra.mxu0 0.0
  %2289 = vmatprep.subr.mxu0 0.0
  %2290 = vmatpush1.msra.mxu0 0.0
  %2291 = vmatprep.subr.mxu0 0.0
  %2292 = vmatpush1.msra.mxu0 0.0
  %2293 = vmatprep.subr.mxu0 0.0
  %2294 = vmatpush1.msra.mxu0 0.0
  %2295 = vmatprep.subr.mxu0 0.0
  %2296 = vmatpush1.msra.mxu0 0.0
  %2297 = vmatprep.subr.mxu0 0.0
  %2298 = vmatpush1.msra.mxu0 0.0
  %2299 = vmatprep.subr.mxu0 0.0
  %2300 = vmatpush1.msra.mxu0 0.0
  %2301 = vmatprep.subr.mxu0 0.0
  %2302 = vmatpush1.msra.mxu0 0.0
  %2303 = vmatprep.subr.mxu0 0.0
  %2304 = vmatpush1.msra.mxu0 0.0
  %2305 = vmatprep.subr.mxu0 0.0
  %2306 = vmatpush1.msra.mxu0 0.0
  %2307 = vmatprep.subr.mxu0 0.0
  %2308 = vmatpush1.msra.mxu0 0.0
  %2309 = vmatprep.subr.mxu0 0.0
  %2310 = vmatpush1.msra.mxu0 0.0
  %2311 = vmatprep.subr.mxu0 0.0
  %2312 = vmatpush1.msra.mxu0 0.0
  %2313 = vmatprep.subr.mxu0 0.0
  %2314 = vmatpush1.msra.mxu0 0.0
  %2315 = vmatprep.subr.mxu0 0.0
  %2316 = vmatpush1.msra.mxu0 0.0
  %2317 = vmatprep.subr.mxu0 0.0
  %2318 = vmatpush1.msra.mxu0 0.0
  %2319 = vmatprep.subr.mxu0 0.0
  %2320 = vmatpush1.msra.mxu0 0.0
  %2321 = vmatprep.subr.mxu0 0.0
  %2322 = vmatpush1.msra.mxu0 0.0
  %2323 = vmatprep.subr.mxu0 0.0
  %2324 = vmatpush1.msra.mxu0 0.0
  %2325 = vmatprep.subr.mxu0 0.0
  %2326 = vmatpush1.msra.mxu0 0.0
  %2327 = vmatprep.subr.mxu0 0.0
  %2328 = vmatpush1.msra.mxu0 0.0
  %2329 = vmatprep.subr.mxu0 0.0
  %2330 = vmatpush1.msra.mxu0 0.0
  %2331 = vmatprep.mubr.f32.mxu0 0.0
  %v2332 = vand.u32 %v41, 4294901760
  %2333 = vmatmul.mubr.f32.gmra.mrb[0].mxu0 %v2332
  %v2334 = vpop.f32.mrb[0].mxu0
  %v2335 = vadd.f32 %v2244, %v2334
  %v2336 = vpop.f32.mrb[0].mxu0
  %2337 = vmatprep.mubr.f32.mxu0 0.0
  %v2338 = vand.u32 %v44, 4294901760
  %2339 = vmatmul.mubr.f32.gmra.mrb[0].mxu0 %v2338
  %v2340 = vpop.f32.mrb[0].mxu0
  %v2341 = vadd.f32 %v2254, %v2340
  %v2342 = vpop.f32.mrb[0].mxu0
  %2343 = vdwg.mxu0
  %2344 = vmatprep.subr.mxu0 0.0
  %v2345 = vand.u32 %v2167, 4294901760
  %v2346 = vsub.f32 %v2167, %v2345
  %2347 = vmatpush1.msra.mxu0 %v2346
  %2348 = vmatprep.subr.mxu0 0.0
  %v2349 = vand.u32 %v2169, 4294901760
  %v2350 = vsub.f32 %v2169, %v2349
  %2351 = vmatpush1.msra.mxu0 %v2350
  %2352 = vmatprep.subr.mxu0 0.0
  %2353 = vmatpush1.msra.mxu0 0.0
  %2354 = vmatprep.subr.mxu0 0.0
  %2355 = vmatpush1.msra.mxu0 0.0
  %2356 = vmatprep.subr.mxu0 0.0
  %2357 = vmatpush1.msra.mxu0 0.0
  %2358 = vmatprep.subr.mxu0 0.0
  %2359 = vmatpush1.msra.mxu0 0.0
  %2360 = vmatprep.subr.mxu0 0.0
  %2361 = vmatpush1.msra.mxu0 0.0
  %2362 = vmatprep.subr.mxu0 0.0
  %2363 = vmatpush1.msra.mxu0 0.0
  %2364 = vmatprep.subr.mxu0 0.0
  %2365 = vmatpush1.msra.mxu0 0.0
  %2366 = vmatprep.subr.mxu0 0.0
  %2367 = vmatpush1.msra.mxu0 0.0
  %2368 = vmatprep.subr.mxu0 0.0
  %2369 = vmatpush1.msra.mxu0 0.0
  %2370 = vmatprep.subr.mxu0 0.0
  %2371 = vmatpush1.msra.mxu0 0.0
  %2372 = vmatprep.subr.mxu0 0.0
  %2373 = vmatpush1.msra.mxu0 0.0
  %2374 = vmatprep.subr.mxu0 0.0
  %2375 = vmatpush1.msra.mxu0 0.0
  %2376 = vmatprep.subr.mxu0 0.0
  %2377 = vmatpush1.msra.mxu0 0.0
  %2378 = vmatprep.subr.mxu0 0.0
  %2379 = vmatpush1.msra.mxu0 0.0
  %2380 = vmatprep.subr.mxu0 0.0
  %2381 = vmatpush1.msra.mxu0 0.0
  %2382 = vmatprep.subr.mxu0 0.0
  %2383 = vmatpush1.msra.mxu0 0.0
  %2384 = vmatprep.subr.mxu0 0.0
  %2385 = vmatpush1.msra.mxu0 0.0
  %2386 = vmatprep.subr.mxu0 0.0
  %2387 = vmatpush1.msra.mxu0 0.0
  %2388 = vmatprep.subr.mxu0 0.0
  %2389 = vmatpush1.msra.mxu0 0.0
  %2390 = vmatprep.subr.mxu0 0.0
  %2391 = vmatpush1.msra.mxu0 0.0
  %2392 = vmatprep.subr.mxu0 0.0
  %2393 = vmatpush1.msra.mxu0 0.0
  %2394 = vmatprep.subr.mxu0 0.0
  %2395 = vmatpush1.msra.mxu0 0.0
  %2396 = vmatprep.subr.mxu0 0.0
  %2397 = vmatpush1.msra.mxu0 0.0
  %2398 = vmatprep.subr.mxu0 0.0
  %2399 = vmatpush1.msra.mxu0 0.0
  %2400 = vmatprep.subr.mxu0 0.0
  %2401 = vmatpush1.msra.mxu0 0.0
  %2402 = vmatprep.subr.mxu0 0.0
  %2403 = vmatpush1.msra.mxu0 0.0
  %2404 = vmatprep.subr.mxu0 0.0
  %2405 = vmatpush1.msra.mxu0 0.0
  %2406 = vmatprep.subr.mxu0 0.0
  %2407 = vmatpush1.msra.mxu0 0.0
  %2408 = vmatprep.subr.mxu0 0.0
  %2409 = vmatpush1.msra.mxu0 0.0
  %2410 = vmatprep.subr.mxu0 0.0
  %2411 = vmatpush1.msra.mxu0 0.0
  %2412 = vmatprep.mubr.f32.mxu0 0.0
  %v2413 = vand.u32 %v41, 4294901760
  %v2414 = vsub.f32 %v41, %v2413
  %2415 = vmatmul.mubr.f32.gmra.mrb[0].mxu0 %v2414
  %v2416 = vpop.f32.mrb[0].mxu0
  %v2417 = vadd.f32 %v2335, %v2416
  %v2418 = vpop.f32.mrb[0].mxu0
  %2419 = vmatprep.mubr.f32.mxu0 0.0
  %v2420 = vand.u32 %v44, 4294901760
  %v2421 = vsub.f32 %v44, %v2420
  %2422 = vmatmul.mubr.f32.gmra.mrb[0].mxu0 %v2421
  %v2423 = vpop.f32.mrb[0].mxu0
  %v2424 = vadd.f32 %v2341, %v2423
  %v2425 = vpop.f32.mrb[0].mxu0
  %2426 = vdwg.mxu0
  %2427 = vmatprep.subr.mxu0 0.0
  %v2428 = vand.u32 %v2167, 4294901760
  %2429 = vmatpush1.msra.mxu0 %v2428
  %2430 = vmatprep.subr.mxu0 0.0
  %v2431 = vand.u32 %v2169, 4294901760
  %2432 = vmatpush1.msra.mxu0 %v2431
  %2433 = vmatprep.subr.mxu0 0.0
  %2434 = vmatpush1.msra.mxu0 0.0
  %2435 = vmatprep.subr.mxu0 0.0
  %2436 = vmatpush1.msra.mxu0 0.0
  %2437 = vmatprep.subr.mxu0 0.0
  %2438 = vmatpush1.msra.mxu0 0.0
  %2439 = vmatprep.subr.mxu0 0.0
  %2440 = vmatpush1.msra.mxu0 0.0
  %2441 = vmatprep.subr.mxu0 0.0
  %2442 = vmatpush1.msra.mxu0 0.0
  %2443 = vmatprep.subr.mxu0 0.0
  %2444 = vmatpush1.msra.mxu0 0.0
  %2445 = vmatprep.subr.mxu0 0.0
  %2446 = vmatpush1.msra.mxu0 0.0
  %2447 = vmatprep.subr.mxu0 0.0
  %2448 = vmatpush1.msra.mxu0 0.0
  %2449 = vmatprep.subr.mxu0 0.0
  %2450 = vmatpush1.msra.mxu0 0.0
  %2451 = vmatprep.subr.mxu0 0.0
  %2452 = vmatpush1.msra.mxu0 0.0
  %2453 = vmatprep.subr.mxu0 0.0
  %2454 = vmatpush1.msra.mxu0 0.0
  %2455 = vmatprep.subr.mxu0 0.0
  %2456 = vmatpush1.msra.mxu0 0.0
  %2457 = vmatprep.subr.mxu0 0.0
  %2458 = vmatpush1.msra.mxu0 0.0
  %2459 = vmatprep.subr.mxu0 0.0
  %2460 = vmatpush1.msra.mxu0 0.0
  %2461 = vmatprep.subr.mxu0 0.0
  %2462 = vmatpush1.msra.mxu0 0.0
  %2463 = vmatprep.subr.mxu0 0.0
  %2464 = vmatpush1.msra.mxu0 0.0
  %2465 = vmatprep.subr.mxu0 0.0
  %2466 = vmatpush1.msra.mxu0 0.0
  %2467 = vmatprep.subr.mxu0 0.0
  %2468 = vmatpush1.msra.mxu0 0.0
  %2469 = vmatprep.subr.mxu0 0.0
  %2470 = vmatpush1.msra.mxu0 0.0
  %2471 = vmatprep.subr.mxu0 0.0
  %2472 = vmatpush1.msra.mxu0 0.0
  %2473 = vmatprep.subr.mxu0 0.0
  %2474 = vmatpush1.msra.mxu0 0.0
  %2475 = vmatprep.subr.mxu0 0.0
  %2476 = vmatpush1.msra.mxu0 0.0
  %2477 = vmatprep.subr.mxu0 0.0
  %2478 = vmatpush1.msra.mxu0 0.0
  %2479 = vmatprep.subr.mxu0 0.0
  %2480 = vmatpush1.msra.mxu0 0.0
  %2481 = vmatprep.subr.mxu0 0.0
  %2482 = vmatpush1.msra.mxu0 0.0
  %2483 = vmatprep.subr.mxu0 0.0
  %2484 = vmatpush1.msra.mxu0 0.0
  %2485 = vmatprep.subr.mxu0 0.0
  %2486 = vmatpush1.msra.mxu0 0.0
  %2487 = vmatprep.subr.mxu0 0.0
  %2488 = vmatpush1.msra.mxu0 0.0
  %2489 = vmatprep.subr.mxu0 0.0
  %2490 = vmatpush1.msra.mxu0 0.0
  %2491 = vmatprep.subr.mxu0 0.0
  %2492 = vmatpush1.msra.mxu0 0.0
  %2493 = vmatprep.mubr.f32.mxu0 0.0
  %v2494 = vand.u32 %v41, 4294901760
  %v2495 = vsub.f32 %v41, %v2494
  %v2496 = vand.u32 %v2495, 4294901760
  %2497 = vmatmul.mubr.f32.gmra.mrb[0].mxu0 %v2496
  %v2498 = vpop.f32.mrb[0].mxu0
  %v2499 = vadd.f32 %v2417, %v2498
  %v2500 = vpop.f32.mrb[0].mxu0
  %2501 = vmatprep.mubr.f32.mxu0 0.0
  %v2502 = vand.u32 %v44, 4294901760
  %v2503 = vsub.f32 %v44, %v2502
  %v2504 = vand.u32 %v2503, 4294901760
  %2505 = vmatmul.mubr.f32.gmra.mrb[0].mxu0 %v2504
  %v2506 = vpop.f32.mrb[0].mxu0
  %v2507 = vadd.f32 %v2424, %v2506
  %v2508 = vpop.f32.mrb[0].mxu0
  %2509 = vdwg.mxu0
  %2510 = vmatprep.subr.mxu0 0.0
  %v2511 = vand.u32 %v2167, 4294901760
  %v2512 = vsub.f32 %v2167, %v2511
  %v2513 = vand.u32 %v2512, 4294901760
  %2514 = vmatpush1.msra.mxu0 %v2513
  %2515 = vmatprep.subr.mxu0 0.0
  %v2516 = vand.u32 %v2169, 4294901760
  %v2517 = vsub.f32 %v2169, %v2516
  %v2518 = vand.u32 %v2517, 4294901760
  %2519 = vmatpush1.msra.mxu0 %v2518
  %2520 = vmatprep.subr.mxu0 0.0
  %2521 = vmatpush1.msra.mxu0 0.0
  %2522 = vmatprep.subr.mxu0 0.0
  %2523 = vmatpush1.msra.mxu0 0.0
  %2524 = vmatprep.subr.mxu0 0.0
  %2525 = vmatpush1.msra.mxu0 0.0
  %2526 = vmatprep.subr.mxu0 0.0
  %2527 = vmatpush1.msra.mxu0 0.0
  %2528 = vmatprep.subr.mxu0 0.0
  %2529 = vmatpush1.msra.mxu0 0.0
  %2530 = vmatprep.subr.mxu0 0.0
  %2531 = vmatpush1.msra.mxu0 0.0
  %2532 = vmatprep.subr.mxu0 0.0
  %2533 = vmatpush1.msra.mxu0 0.0
  %2534 = vmatprep.subr.mxu0 0.0
  %2535 = vmatpush1.msra.mxu0 0.0
  %2536 = vmatprep.subr.mxu0 0.0
  %2537 = vmatpush1.msra.mxu0 0.0
  %2538 = vmatprep.subr.mxu0 0.0
  %2539 = vmatpush1.msra.mxu0 0.0
  %2540 = vmatprep.subr.mxu0 0.0
  %2541 = vmatpush1.msra.mxu0 0.0
  %2542 = vmatprep.subr.mxu0 0.0
  %2543 = vmatpush1.msra.mxu0 0.0
  %2544 = vmatprep.subr.mxu0 0.0
  %2545 = vmatpush1.msra.mxu0 0.0
  %2546 = vmatprep.subr.mxu0 0.0
  %2547 = vmatpush1.msra.mxu0 0.0
  %2548 = vmatprep.subr.mxu0 0.0
  %2549 = vmatpush1.msra.mxu0 0.0
  %2550 = vmatprep.subr.mxu0 0.0
  %2551 = vmatpush1.msra.mxu0 0.0
  %2552 = vmatprep.subr.mxu0 0.0
  %2553 = vmatpush1.msra.mxu0 0.0
  %2554 = vmatprep.subr.mxu0 0.0
  %2555 = vmatpush1.msra.mxu0 0.0
  %2556 = vmatprep.subr.mxu0 0.0
  %2557 = vmatpush1.msra.mxu0 0.0
  %2558 = vmatprep.subr.mxu0 0.0
  %2559 = vmatpush1.msra.mxu0 0.0
  %2560 = vmatprep.subr.mxu0 0.0
  %2561 = vmatpush1.msra.mxu0 0.0
  %2562 = vmatprep.subr.mxu0 0.0
  %2563 = vmatpush1.msra.mxu0 0.0
  %2564 = vmatprep.subr.mxu0 0.0
  %2565 = vmatpush1.msra.mxu0 0.0
  %2566 = vmatprep.subr.mxu0 0.0
  %2567 = vmatpush1.msra.mxu0 0.0
  %2568 = vmatprep.subr.mxu0 0.0
  %2569 = vmatpush1.msra.mxu0 0.0
  %2570 = vmatprep.subr.mxu0 0.0
  %2571 = vmatpush1.msra.mxu0 0.0
  %2572 = vmatprep.subr.mxu0 0.0
  %2573 = vmatpush1.msra.mxu0 0.0
  %2574 = vmatprep.subr.mxu0 0.0
  %2575 = vmatpush1.msra.mxu0 0.0
  %2576 = vmatprep.subr.mxu0 0.0
  %2577 = vmatpush1.msra.mxu0 0.0
  %2578 = vmatprep.subr.mxu0 0.0
  %2579 = vmatpush1.msra.mxu0 0.0
  %2580 = vmatprep.mubr.f32.mxu0 0.0
  %v2581 = vand.u32 %v41, 4294901760
  %2582 = vmatmul.mubr.f32.gmra.mrb[0].mxu0 %v2581
  %v2583 = vpop.f32.mrb[0].mxu0
  %v2584 = vadd.f32 %v2499, %v2583
  %v2585 = vpop.f32.mrb[0].mxu0
  %2586 = vmatprep.mubr.f32.mxu0 0.0
  %v2587 = vand.u32 %v44, 4294901760
  %2588 = vmatmul.mubr.f32.gmra.mrb[0].mxu0 %v2587
  %v2589 = vpop.f32.mrb[0].mxu0
  %v2590 = vadd.f32 %v2507, %v2589
  %v2591 = vpop.f32.mrb[0].mxu0
  %2592 = vdwg.mxu0
  %2593 = vmatprep.subr.mxu0 0.0
  %v2594 = vand.u32 %v2167, 4294901760
  %2595 = vmatpush1.msra.mxu0 %v2594
  %2596 = vmatprep.subr.mxu0 0.0
  %v2597 = vand.u32 %v2169, 4294901760
  %2598 = vmatpush1.msra.mxu0 %v2597
  %2599 = vmatprep.subr.mxu0 0.0
  %2600 = vmatpush1.msra.mxu0 0.0
  %2601 = vmatprep.subr.mxu0 0.0
  %2602 = vmatpush1.msra.mxu0 0.0
  %2603 = vmatprep.subr.mxu0 0.0
  %2604 = vmatpush1.msra.mxu0 0.0
  %2605 = vmatprep.subr.mxu0 0.0
  %2606 = vmatpush1.msra.mxu0 0.0
  %2607 = vmatprep.subr.mxu0 0.0
  %2608 = vmatpush1.msra.mxu0 0.0
  %2609 = vmatprep.subr.mxu0 0.0
  %2610 = vmatpush1.msra.mxu0 0.0
  %2611 = vmatprep.subr.mxu0 0.0
  %2612 = vmatpush1.msra.mxu0 0.0
  %2613 = vmatprep.subr.mxu0 0.0
  %2614 = vmatpush1.msra.mxu0 0.0
  %2615 = vmatprep.subr.mxu0 0.0
  %2616 = vmatpush1.msra.mxu0 0.0
  %2617 = vmatprep.subr.mxu0 0.0
  %2618 = vmatpush1.msra.mxu0 0.0
  %2619 = vmatprep.subr.mxu0 0.0
  %2620 = vmatpush1.msra.mxu0 0.0
  %2621 = vmatprep.subr.mxu0 0.0
  %2622 = vmatpush1.msra.mxu0 0.0
  %2623 = vmatprep.subr.mxu0 0.0
  %2624 = vmatpush1.msra.mxu0 0.0
  %2625 = vmatprep.subr.mxu0 0.0
  %2626 = vmatpush1.msra.mxu0 0.0
  %2627 = vmatprep.subr.mxu0 0.0
  %2628 = vmatpush1.msra.mxu0 0.0
  %2629 = vmatprep.subr.mxu0 0.0
  %2630 = vmatpush1.msra.mxu0 0.0
  %2631 = vmatprep.subr.mxu0 0.0
  %2632 = vmatpush1.msra.mxu0 0.0
  %2633 = vmatprep.subr.mxu0 0.0
  %2634 = vmatpush1.msra.mxu0 0.0
  %2635 = vmatprep.subr.mxu0 0.0
  %2636 = vmatpush1.msra.mxu0 0.0
  %2637 = vmatprep.subr.mxu0 0.0
  %2638 = vmatpush1.msra.mxu0 0.0
  %2639 = vmatprep.subr.mxu0 0.0
  %2640 = vmatpush1.msra.mxu0 0.0
  %2641 = vmatprep.subr.mxu0 0.0
  %2642 = vmatpush1.msra.mxu0 0.0
  %2643 = vmatprep.subr.mxu0 0.0
  %2644 = vmatpush1.msra.mxu0 0.0
  %2645 = vmatprep.subr.mxu0 0.0
  %2646 = vmatpush1.msra.mxu0 0.0
  %2647 = vmatprep.subr.mxu0 0.0
  %2648 = vmatpush1.msra.mxu0 0.0
  %2649 = vmatprep.subr.mxu0 0.0
  %2650 = vmatpush1.msra.mxu0 0.0
  %2651 = vmatprep.subr.mxu0 0.0
  %2652 = vmatpush1.msra.mxu0 0.0
  %2653 = vmatprep.subr.mxu0 0.0
  %2654 = vmatpush1.msra.mxu0 0.0
  %2655 = vmatprep.subr.mxu0 0.0
  %2656 = vmatpush1.msra.mxu0 0.0
  %2657 = vmatprep.subr.mxu0 0.0
  %2658 = vmatpush1.msra.mxu0 0.0
  %2659 = vmatprep.mubr.f32.mxu0 0.0
  %v2660 = vand.u32 %v41, 4294901760
  %2661 = vmatmul.mubr.f32.gmra.mrb[0].mxu0 %v2660
  %v2662 = vpop.f32.mrb[0].mxu0
  %v2663 = vadd.f32 %v2584, %v2662
  %v2664 = vpop.f32.mrb[0].mxu0
  %2665 = vmatprep.mubr.f32.mxu0 0.0
  %v2666 = vand.u32 %v44, 4294901760
  %2667 = vmatmul.mubr.f32.gmra.mrb[0].mxu0 %v2666
  %v2668 = vpop.f32.mrb[0].mxu0
  %v2669 = vadd.f32 %v2590, %v2668
  %v2670 = vpop.f32.mrb[0].mxu0
  %2671 = vdwg.mxu0
  %v2672 = vmax.f32 %v2663, 1e-38
  %v2673 = vmax.f32 %v2669, 1e-38
  %v2674 = vlog2.pop %v2672
  %v2675 = vmul.f32 %v2674, 0.6931472
  %v2676 = vlog2.pop %v2673
  %v2677 = vmul.f32 %v2676, 0.6931472
  %v2678 = vadd.f32 %v2675, %v2163
  %v2679 = vadd.f32 %v2677, %v2163
  %s2680 = scalar_lea.vmem %s0, 80
  %v2681 = vld [vmem:[%s2680] sm:$0xff]
  %v2682 = vld [vmem:[%s2680 + $0x8] sm:$0xff]
  %v2683 = vadd.f32 %v2678, %v2681
  %v2684 = vadd.f32 %v2679, %v2682
  %s2685 = scalar_lea.vmem [#allocation2], 80
  %2686 = vst [vmem:[%s2685] sm:$0xff] %v2683
  %2687 = vst [vmem:[%s2685 + $0x8] sm:$0xff] %v2684
  %v2688 = vmax.f32 %v2683, %v2684
  %v2689 = vrot.slane %v2688, 4
  %v2690 = vmax.f32 %v2688, %v2689
  %v2691 = vrot.slane %v2690, 2
  %v2692 = vmax.f32 %v2690, %v2691
  %v2693 = vrot.slane %v2692, 1
  %v2694 = vmax.f32 %v2692, %v2693
  %v2695 = vsub.f32 %v2683, %v2694
  %v2696 = vsub.f32 %v2684, %v2694
  %v2697 = vmul.f32 %v2695, 1.442695
  %v2698 = vpow.pop %v2697
  %v2699 = vmul.f32 %v2696, 1.442695
  %v2700 = vpow.pop %v2699
  %2701 = vmatprep.subr.mxu0 0.0
  %v2702 = vand.u32 %v2698, 4294901760
  %2703 = vmatpush1.msra.mxu0 %v2702
  %2704 = vmatprep.subr.mxu0 0.0
  %v2705 = vand.u32 %v2700, 4294901760
  %2706 = vmatpush1.msra.mxu0 %v2705
  %2707 = vmatprep.subr.mxu0 0.0
  %2708 = vmatpush1.msra.mxu0 0.0
  %2709 = vmatprep.subr.mxu0 0.0
  %2710 = vmatpush1.msra.mxu0 0.0
  %2711 = vmatprep.subr.mxu0 0.0
  %2712 = vmatpush1.msra.mxu0 0.0
  %2713 = vmatprep.subr.mxu0 0.0
  %2714 = vmatpush1.msra.mxu0 0.0
  %2715 = vmatprep.subr.mxu0 0.0
  %2716 = vmatpush1.msra.mxu0 0.0
  %2717 = vmatprep.subr.mxu0 0.0
  %2718 = vmatpush1.msra.mxu0 0.0
  %2719 = vmatprep.subr.mxu0 0.0
  %2720 = vmatpush1.msra.mxu0 0.0
  %2721 = vmatprep.subr.mxu0 0.0
  %2722 = vmatpush1.msra.mxu0 0.0
  %2723 = vmatprep.subr.mxu0 0.0
  %2724 = vmatpush1.msra.mxu0 0.0
  %2725 = vmatprep.subr.mxu0 0.0
  %2726 = vmatpush1.msra.mxu0 0.0
  %2727 = vmatprep.subr.mxu0 0.0
  %2728 = vmatpush1.msra.mxu0 0.0
  %2729 = vmatprep.subr.mxu0 0.0
  %2730 = vmatpush1.msra.mxu0 0.0
  %2731 = vmatprep.subr.mxu0 0.0
  %2732 = vmatpush1.msra.mxu0 0.0
  %2733 = vmatprep.subr.mxu0 0.0
  %2734 = vmatpush1.msra.mxu0 0.0
  %2735 = vmatprep.subr.mxu0 0.0
  %2736 = vmatpush1.msra.mxu0 0.0
  %2737 = vmatprep.subr.mxu0 0.0
  %2738 = vmatpush1.msra.mxu0 0.0
  %2739 = vmatprep.subr.mxu0 0.0
  %2740 = vmatpush1.msra.mxu0 0.0
  %2741 = vmatprep.subr.mxu0 0.0
  %2742 = vmatpush1.msra.mxu0 0.0
  %2743 = vmatprep.subr.mxu0 0.0
  %2744 = vmatpush1.msra.mxu0 0.0
  %2745 = vmatprep.subr.mxu0 0.0
  %2746 = vmatpush1.msra.mxu0 0.0
  %2747 = vmatprep.subr.mxu0 0.0
  %2748 = vmatpush1.msra.mxu0 0.0
  %2749 = vmatprep.subr.mxu0 0.0
  %2750 = vmatpush1.msra.mxu0 0.0
  %2751 = vmatprep.subr.mxu0 0.0
  %2752 = vmatpush1.msra.mxu0 0.0
  %2753 = vmatprep.subr.mxu0 0.0
  %2754 = vmatpush1.msra.mxu0 0.0
  %2755 = vmatprep.subr.mxu0 0.0
  %2756 = vmatpush1.msra.mxu0 0.0
  %2757 = vmatprep.subr.mxu0 0.0
  %2758 = vmatpush1.msra.mxu0 0.0
  %2759 = vmatprep.subr.mxu0 0.0
  %2760 = vmatpush1.msra.mxu0 0.0
  %2761 = vmatprep.subr.mxu0 0.0
  %2762 = vmatpush1.msra.mxu0 0.0
  %2763 = vmatprep.subr.mxu0 0.0
  %2764 = vmatpush1.msra.mxu0 0.0
  %2765 = vmatprep.subr.mxu0 0.0
  %2766 = vmatpush1.msra.mxu0 0.0
  %2767 = vmatprep.mubr.f32.mxu0 0.0
  %v2768 = vand.u32 %v41, 4294901760
  %v2769 = vsub.f32 %v41, %v2768
  %v2770 = vand.u32 %v2769, 4294901760
  %v2771 = vsub.f32 %v2769, %v2770
  %v2772 = vand.u32 %v2771, 4294901760
  %2773 = vmatmul.mubr.f32.gmra.mrb[0].mxu0 %v2772
  %v2774 = vpop.f32.mrb[0].mxu0
  %v2775 = vadd.f32 0.0, %v2774
  %v2776 = vpop.f32.mrb[0].mxu0
  %2777 = vmatprep.mubr.f32.mxu0 0.0
  %v2778 = vand.u32 %v44, 4294901760
  %v2779 = vsub.f32 %v44, %v2778
  %v2780 = vand.u32 %v2779, 4294901760
  %v2781 = vsub.f32 %v2779, %v2780
  %v2782 = vand.u32 %v2781, 4294901760
  %2783 = vmatmul.mubr.f32.gmra.mrb[0].mxu0 %v2782
  %v2784 = vpop.f32.mrb[0].mxu0
  %v2785 = vadd.f32 0.0, %v2784
  %v2786 = vpop.f32.mrb[0].mxu0
  %2787 = vdwg.mxu0
  %2788 = vmatprep.subr.mxu0 0.0
  %v2789 = vand.u32 %v2698, 4294901760
  %v2790 = vsub.f32 %v2698, %v2789
  %v2791 = vand.u32 %v2790, 4294901760
  %v2792 = vsub.f32 %v2790, %v2791
  %v2793 = vand.u32 %v2792, 4294901760
  %2794 = vmatpush1.msra.mxu0 %v2793
  %2795 = vmatprep.subr.mxu0 0.0
  %v2796 = vand.u32 %v2700, 4294901760
  %v2797 = vsub.f32 %v2700, %v2796
  %v2798 = vand.u32 %v2797, 4294901760
  %v2799 = vsub.f32 %v2797, %v2798
  %v2800 = vand.u32 %v2799, 4294901760
  %2801 = vmatpush1.msra.mxu0 %v2800
  %2802 = vmatprep.subr.mxu0 0.0
  %2803 = vmatpush1.msra.mxu0 0.0
  %2804 = vmatprep.subr.mxu0 0.0
  %2805 = vmatpush1.msra.mxu0 0.0
  %2806 = vmatprep.subr.mxu0 0.0
  %2807 = vmatpush1.msra.mxu0 0.0
  %2808 = vmatprep.subr.mxu0 0.0
  %2809 = vmatpush1.msra.mxu0 0.0
  %2810 = vmatprep.subr.mxu0 0.0
  %2811 = vmatpush1.msra.mxu0 0.0
  %2812 = vmatprep.subr.mxu0 0.0
  %2813 = vmatpush1.msra.mxu0 0.0
  %2814 = vmatprep.subr.mxu0 0.0
  %2815 = vmatpush1.msra.mxu0 0.0
  %2816 = vmatprep.subr.mxu0 0.0
  %2817 = vmatpush1.msra.mxu0 0.0
  %2818 = vmatprep.subr.mxu0 0.0
  %2819 = vmatpush1.msra.mxu0 0.0
  %2820 = vmatprep.subr.mxu0 0.0
  %2821 = vmatpush1.msra.mxu0 0.0
  %2822 = vmatprep.subr.mxu0 0.0
  %2823 = vmatpush1.msra.mxu0 0.0
  %2824 = vmatprep.subr.mxu0 0.0
  %2825 = vmatpush1.msra.mxu0 0.0
  %2826 = vmatprep.subr.mxu0 0.0
  %2827 = vmatpush1.msra.mxu0 0.0
  %2828 = vmatprep.subr.mxu0 0.0
  %2829 = vmatpush1.msra.mxu0 0.0
  %2830 = vmatprep.subr.mxu0 0.0
  %2831 = vmatpush1.msra.mxu0 0.0
  %2832 = vmatprep.subr.mxu0 0.0
  %2833 = vmatpush1.msra.mxu0 0.0
  %2834 = vmatprep.subr.mxu0 0.0
  %2835 = vmatpush1.msra.mxu0 0.0
  %2836 = vmatprep.subr.mxu0 0.0
  %2837 = vmatpush1.msra.mxu0 0.0
  %2838 = vmatprep.subr.mxu0 0.0
  %2839 = vmatpush1.msra.mxu0 0.0
  %2840 = vmatprep.subr.mxu0 0.0
  %2841 = vmatpush1.msra.mxu0 0.0
  %2842 = vmatprep.subr.mxu0 0.0
  %2843 = vmatpush1.msra.mxu0 0.0
  %2844 = vmatprep.subr.mxu0 0.0
  %2845 = vmatpush1.msra.mxu0 0.0
  %2846 = vmatprep.subr.mxu0 0.0
  %2847 = vmatpush1.msra.mxu0 0.0
  %2848 = vmatprep.subr.mxu0 0.0
  %2849 = vmatpush1.msra.mxu0 0.0
  %2850 = vmatprep.subr.mxu0 0.0
  %2851 = vmatpush1.msra.mxu0 0.0
  %2852 = vmatprep.subr.mxu0 0.0
  %2853 = vmatpush1.msra.mxu0 0.0
  %2854 = vmatprep.subr.mxu0 0.0
  %2855 = vmatpush1.msra.mxu0 0.0
  %2856 = vmatprep.subr.mxu0 0.0
  %2857 = vmatpush1.msra.mxu0 0.0
  %2858 = vmatprep.subr.mxu0 0.0
  %2859 = vmatpush1.msra.mxu0 0.0
  %2860 = vmatprep.subr.mxu0 0.0
  %2861 = vmatpush1.msra.mxu0 0.0
  %2862 = vmatprep.mubr.f32.mxu0 0.0
  %v2863 = vand.u32 %v41, 4294901760
  %2864 = vmatmul.mubr.f32.gmra.mrb[0].mxu0 %v2863
  %v2865 = vpop.f32.mrb[0].mxu0
  %v2866 = vadd.f32 %v2775, %v2865
  %v2867 = vpop.f32.mrb[0].mxu0
  %2868 = vmatprep.mubr.f32.mxu0 0.0
  %v2869 = vand.u32 %v44, 4294901760
  %2870 = vmatmul.mubr.f32.gmra.mrb[0].mxu0 %v2869
  %v2871 = vpop.f32.mrb[0].mxu0
  %v2872 = vadd.f32 %v2785, %v2871
  %v2873 = vpop.f32.mrb[0].mxu0
  %2874 = vdwg.mxu0
  %2875 = vmatprep.subr.mxu0 0.0
  %v2876 = vand.u32 %v2698, 4294901760
  %v2877 = vsub.f32 %v2698, %v2876
  %2878 = vmatpush1.msra.mxu0 %v2877
  %2879 = vmatprep.subr.mxu0 0.0
  %v2880 = vand.u32 %v2700, 4294901760
  %v2881 = vsub.f32 %v2700, %v2880
  %2882 = vmatpush1.msra.mxu0 %v2881
  %2883 = vmatprep.subr.mxu0 0.0
  %2884 = vmatpush1.msra.mxu0 0.0
  %2885 = vmatprep.subr.mxu0 0.0
  %2886 = vmatpush1.msra.mxu0 0.0
  %2887 = vmatprep.subr.mxu0 0.0
  %2888 = vmatpush1.msra.mxu0 0.0
  %2889 = vmatprep.subr.mxu0 0.0
  %2890 = vmatpush1.msra.mxu0 0.0
  %2891 = vmatprep.subr.mxu0 0.0
  %2892 = vmatpush1.msra.mxu0 0.0
  %2893 = vmatprep.subr.mxu0 0.0
  %2894 = vmatpush1.msra.mxu0 0.0
  %2895 = vmatprep.subr.mxu0 0.0
  %2896 = vmatpush1.msra.mxu0 0.0
  %2897 = vmatprep.subr.mxu0 0.0
  %2898 = vmatpush1.msra.mxu0 0.0
  %2899 = vmatprep.subr.mxu0 0.0
  %2900 = vmatpush1.msra.mxu0 0.0
  %2901 = vmatprep.subr.mxu0 0.0
  %2902 = vmatpush1.msra.mxu0 0.0
  %2903 = vmatprep.subr.mxu0 0.0
  %2904 = vmatpush1.msra.mxu0 0.0
  %2905 = vmatprep.subr.mxu0 0.0
  %2906 = vmatpush1.msra.mxu0 0.0
  %2907 = vmatprep.subr.mxu0 0.0
  %2908 = vmatpush1.msra.mxu0 0.0
  %2909 = vmatprep.subr.mxu0 0.0
  %2910 = vmatpush1.msra.mxu0 0.0
  %2911 = vmatprep.subr.mxu0 0.0
  %2912 = vmatpush1.msra.mxu0 0.0
  %2913 = vmatprep.subr.mxu0 0.0
  %2914 = vmatpush1.msra.mxu0 0.0
  %2915 = vmatprep.subr.mxu0 0.0
  %2916 = vmatpush1.msra.mxu0 0.0
  %2917 = vmatprep.subr.mxu0 0.0
  %2918 = vmatpush1.msra.mxu0 0.0
  %2919 = vmatprep.subr.mxu0 0.0
  %2920 = vmatpush1.msra.mxu0 0.0
  %2921 = vmatprep.subr.mxu0 0.0
  %2922 = vmatpush1.msra.mxu0 0.0
  %2923 = vmatprep.subr.mxu0 0.0
  %2924 = vmatpush1.msra.mxu0 0.0
  %2925 = vmatprep.subr.mxu0 0.0
  %2926 = vmatpush1.msra.mxu0 0.0
  %2927 = vmatprep.subr.mxu0 0.0
  %2928 = vmatpush1.msra.mxu0 0.0
  %2929 = vmatprep.subr.mxu0 0.0
  %2930 = vmatpush1.msra.mxu0 0.0
  %2931 = vmatprep.subr.mxu0 0.0
  %2932 = vmatpush1.msra.mxu0 0.0
  %2933 = vmatprep.subr.mxu0 0.0
  %2934 = vmatpush1.msra.mxu0 0.0
  %2935 = vmatprep.subr.mxu0 0.0
  %2936 = vmatpush1.msra.mxu0 0.0
  %2937 = vmatprep.subr.mxu0 0.0
  %2938 = vmatpush1.msra.mxu0 0.0
  %2939 = vmatprep.subr.mxu0 0.0
  %2940 = vmatpush1.msra.mxu0 0.0
  %2941 = vmatprep.subr.mxu0 0.0
  %2942 = vmatpush1.msra.mxu0 0.0
  %2943 = vmatprep.mubr.f32.mxu0 0.0
  %v2944 = vand.u32 %v41, 4294901760
  %v2945 = vsub.f32 %v41, %v2944
  %2946 = vmatmul.mubr.f32.gmra.mrb[0].mxu0 %v2945
  %v2947 = vpop.f32.mrb[0].mxu0
  %v2948 = vadd.f32 %v2866, %v2947
  %v2949 = vpop.f32.mrb[0].mxu0
  %2950 = vmatprep.mubr.f32.mxu0 0.0
  %v2951 = vand.u32 %v44, 4294901760
  %v2952 = vsub.f32 %v44, %v2951
  %2953 = vmatmul.mubr.f32.gmra.mrb[0].mxu0 %v2952
  %v2954 = vpop.f32.mrb[0].mxu0
  %v2955 = vadd.f32 %v2872, %v2954
  %v2956 = vpop.f32.mrb[0].mxu0
  %2957 = vdwg.mxu0
  %2958 = vmatprep.subr.mxu0 0.0
  %v2959 = vand.u32 %v2698, 4294901760
  %2960 = vmatpush1.msra.mxu0 %v2959
  %2961 = vmatprep.subr.mxu0 0.0
  %v2962 = vand.u32 %v2700, 4294901760
  %2963 = vmatpush1.msra.mxu0 %v2962
  %2964 = vmatprep.subr.mxu0 0.0
  %2965 = vmatpush1.msra.mxu0 0.0
  %2966 = vmatprep.subr.mxu0 0.0
  %2967 = vmatpush1.msra.mxu0 0.0
  %2968 = vmatprep.subr.mxu0 0.0
  %2969 = vmatpush1.msra.mxu0 0.0
  %2970 = vmatprep.subr.mxu0 0.0
  %2971 = vmatpush1.msra.mxu0 0.0
  %2972 = vmatprep.subr.mxu0 0.0
  %2973 = vmatpush1.msra.mxu0 0.0
  %2974 = vmatprep.subr.mxu0 0.0
  %2975 = vmatpush1.msra.mxu0 0.0
  %2976 = vmatprep.subr.mxu0 0.0
  %2977 = vmatpush1.msra.mxu0 0.0
  %2978 = vmatprep.subr.mxu0 0.0
  %2979 = vmatpush1.msra.mxu0 0.0
  %2980 = vmatprep.subr.mxu0 0.0
  %2981 = vmatpush1.msra.mxu0 0.0
  %2982 = vmatprep.subr.mxu0 0.0
  %2983 = vmatpush1.msra.mxu0 0.0
  %2984 = vmatprep.subr.mxu0 0.0
  %2985 = vmatpush1.msra.mxu0 0.0
  %2986 = vmatprep.subr.mxu0 0.0
  %2987 = vmatpush1.msra.mxu0 0.0
  %2988 = vmatprep.subr.mxu0 0.0
  %2989 = vmatpush1.msra.mxu0 0.0
  %2990 = vmatprep.subr.mxu0 0.0
  %2991 = vmatpush1.msra.mxu0 0.0
  %2992 = vmatprep.subr.mxu0 0.0
  %2993 = vmatpush1.msra.mxu0 0.0
  %2994 = vmatprep.subr.mxu0 0.0
  %2995 = vmatpush1.msra.mxu0 0.0
  %2996 = vmatprep.subr.mxu0 0.0
  %2997 = vmatpush1.msra.mxu0 0.0
  %2998 = vmatprep.subr.mxu0 0.0
  %2999 = vmatpush1.msra.mxu0 0.0
  %3000 = vmatprep.subr.mxu0 0.0
  %3001 = vmatpush1.msra.mxu0 0.0
  %3002 = vmatprep.subr.mxu0 0.0
  %3003 = vmatpush1.msra.mxu0 0.0
  %3004 = vmatprep.subr.mxu0 0.0
  %3005 = vmatpush1.msra.mxu0 0.0
  %3006 = vmatprep.subr.mxu0 0.0
  %3007 = vmatpush1.msra.mxu0 0.0
  %3008 = vmatprep.subr.mxu0 0.0
  %3009 = vmatpush1.msra.mxu0 0.0
  %3010 = vmatprep.subr.mxu0 0.0
  %3011 = vmatpush1.msra.mxu0 0.0
  %3012 = vmatprep.subr.mxu0 0.0
  %3013 = vmatpush1.msra.mxu0 0.0
  %3014 = vmatprep.subr.mxu0 0.0
  %3015 = vmatpush1.msra.mxu0 0.0
  %3016 = vmatprep.subr.mxu0 0.0
  %3017 = vmatpush1.msra.mxu0 0.0
  %3018 = vmatprep.subr.mxu0 0.0
  %3019 = vmatpush1.msra.mxu0 0.0
  %3020 = vmatprep.subr.mxu0 0.0
  %3021 = vmatpush1.msra.mxu0 0.0
  %3022 = vmatprep.subr.mxu0 0.0
  %3023 = vmatpush1.msra.mxu0 0.0
  %3024 = vmatprep.mubr.f32.mxu0 0.0
  %v3025 = vand.u32 %v41, 4294901760
  %v3026 = vsub.f32 %v41, %v3025
  %v3027 = vand.u32 %v3026, 4294901760
  %3028 = vmatmul.mubr.f32.gmra.mrb[0].mxu0 %v3027
  %v3029 = vpop.f32.mrb[0].mxu0
  %v3030 = vadd.f32 %v2948, %v3029
  %v3031 = vpop.f32.mrb[0].mxu0
  %3032 = vmatprep.mubr.f32.mxu0 0.0
  %v3033 = vand.u32 %v44, 4294901760
  %v3034 = vsub.f32 %v44, %v3033
  %v3035 = vand.u32 %v3034, 4294901760
  %3036 = vmatmul.mubr.f32.gmra.mrb[0].mxu0 %v3035
  %v3037 = vpop.f32.mrb[0].mxu0
  %v3038 = vadd.f32 %v2955, %v3037
  %v3039 = vpop.f32.mrb[0].mxu0
  %3040 = vdwg.mxu0
  %3041 = vmatprep.subr.mxu0 0.0
  %v3042 = vand.u32 %v2698, 4294901760
  %v3043 = vsub.f32 %v2698, %v3042
  %v3044 = vand.u32 %v3043, 4294901760
  %3045 = vmatpush1.msra.mxu0 %v3044
  %3046 = vmatprep.subr.mxu0 0.0
  %v3047 = vand.u32 %v2700, 4294901760
  %v3048 = vsub.f32 %v2700, %v3047
  %v3049 = vand.u32 %v3048, 4294901760
  %3050 = vmatpush1.msra.mxu0 %v3049
  %3051 = vmatprep.subr.mxu0 0.0
  %3052 = vmatpush1.msra.mxu0 0.0
  %3053 = vmatprep.subr.mxu0 0.0
  %3054 = vmatpush1.msra.mxu0 0.0
  %3055 = vmatprep.subr.mxu0 0.0
  %3056 = vmatpush1.msra.mxu0 0.0
  %3057 = vmatprep.subr.mxu0 0.0
  %3058 = vmatpush1.msra.mxu0 0.0
  %3059 = vmatprep.subr.mxu0 0.0
  %3060 = vmatpush1.msra.mxu0 0.0
  %3061 = vmatprep.subr.mxu0 0.0
  %3062 = vmatpush1.msra.mxu0 0.0
  %3063 = vmatprep.subr.mxu0 0.0
  %3064 = vmatpush1.msra.mxu0 0.0
  %3065 = vmatprep.subr.mxu0 0.0
  %3066 = vmatpush1.msra.mxu0 0.0
  %3067 = vmatprep.subr.mxu0 0.0
  %3068 = vmatpush1.msra.mxu0 0.0
  %3069 = vmatprep.subr.mxu0 0.0
  %3070 = vmatpush1.msra.mxu0 0.0
  %3071 = vmatprep.subr.mxu0 0.0
  %3072 = vmatpush1.msra.mxu0 0.0
  %3073 = vmatprep.subr.mxu0 0.0
  %3074 = vmatpush1.msra.mxu0 0.0
  %3075 = vmatprep.subr.mxu0 0.0
  %3076 = vmatpush1.msra.mxu0 0.0
  %3077 = vmatprep.subr.mxu0 0.0
  %3078 = vmatpush1.msra.mxu0 0.0
  %3079 = vmatprep.subr.mxu0 0.0
  %3080 = vmatpush1.msra.mxu0 0.0
  %3081 = vmatprep.subr.mxu0 0.0
  %3082 = vmatpush1.msra.mxu0 0.0
  %3083 = vmatprep.subr.mxu0 0.0
  %3084 = vmatpush1.msra.mxu0 0.0
  %3085 = vmatprep.subr.mxu0 0.0
  %3086 = vmatpush1.msra.mxu0 0.0
  %3087 = vmatprep.subr.mxu0 0.0
  %3088 = vmatpush1.msra.mxu0 0.0
  %3089 = vmatprep.subr.mxu0 0.0
  %3090 = vmatpush1.msra.mxu0 0.0
  %3091 = vmatprep.subr.mxu0 0.0
  %3092 = vmatpush1.msra.mxu0 0.0
  %3093 = vmatprep.subr.mxu0 0.0
  %3094 = vmatpush1.msra.mxu0 0.0
  %3095 = vmatprep.subr.mxu0 0.0
  %3096 = vmatpush1.msra.mxu0 0.0
  %3097 = vmatprep.subr.mxu0 0.0
  %3098 = vmatpush1.msra.mxu0 0.0
  %3099 = vmatprep.subr.mxu0 0.0
  %3100 = vmatpush1.msra.mxu0 0.0
  %3101 = vmatprep.subr.mxu0 0.0
  %3102 = vmatpush1.msra.mxu0 0.0
  %3103 = vmatprep.subr.mxu0 0.0
  %3104 = vmatpush1.msra.mxu0 0.0
  %3105 = vmatprep.subr.mxu0 0.0
  %3106 = vmatpush1.msra.mxu0 0.0
  %3107 = vmatprep.subr.mxu0 0.0
  %3108 = vmatpush1.msra.mxu0 0.0
  %3109 = vmatprep.subr.mxu0 0.0
  %3110 = vmatpush1.msra.mxu0 0.0
  %3111 = vmatprep.mubr.f32.mxu0 0.0
  %v3112 = vand.u32 %v41, 4294901760
  %3113 = vmatmul.mubr.f32.gmra.mrb[0].mxu0 %v3112
  %v3114 = vpop.f32.mrb[0].mxu0
  %v3115 = vadd.f32 %v3030, %v3114
  %v3116 = vpop.f32.mrb[0].mxu0
  %3117 = vmatprep.mubr.f32.mxu0 0.0
  %v3118 = vand.u32 %v44, 4294901760
  %3119 = vmatmul.mubr.f32.gmra.mrb[0].mxu0 %v3118
  %v3120 = vpop.f32.mrb[0].mxu0
  %v3121 = vadd.f32 %v3038, %v3120
  %v3122 = vpop.f32.mrb[0].mxu0
  %3123 = vdwg.mxu0
  %3124 = vmatprep.subr.mxu0 0.0
  %v3125 = vand.u32 %v2698, 4294901760
  %3126 = vmatpush1.msra.mxu0 %v3125
  %3127 = vmatprep.subr.mxu0 0.0
  %v3128 = vand.u32 %v2700, 4294901760
  %3129 = vmatpush1.msra.mxu0 %v3128
  %3130 = vmatprep.subr.mxu0 0.0
  %3131 = vmatpush1.msra.mxu0 0.0
  %3132 = vmatprep.subr.mxu0 0.0
  %3133 = vmatpush1.msra.mxu0 0.0
  %3134 = vmatprep.subr.mxu0 0.0
  %3135 = vmatpush1.msra.mxu0 0.0
  %3136 = vmatprep.subr.mxu0 0.0
  %3137 = vmatpush1.msra.mxu0 0.0
  %3138 = vmatprep.subr.mxu0 0.0
  %3139 = vmatpush1.msra.mxu0 0.0
  %3140 = vmatprep.subr.mxu0 0.0
  %3141 = vmatpush1.msra.mxu0 0.0
  %3142 = vmatprep.subr.mxu0 0.0
  %3143 = vmatpush1.msra.mxu0 0.0
  %3144 = vmatprep.subr.mxu0 0.0
  %3145 = vmatpush1.msra.mxu0 0.0
  %3146 = vmatprep.subr.mxu0 0.0
  %3147 = vmatpush1.msra.mxu0 0.0
  %3148 = vmatprep.subr.mxu0 0.0
  %3149 = vmatpush1.msra.mxu0 0.0
  %3150 = vmatprep.subr.mxu0 0.0
  %3151 = vmatpush1.msra.mxu0 0.0
  %3152 = vmatprep.subr.mxu0 0.0
  %3153 = vmatpush1.msra.mxu0 0.0
  %3154 = vmatprep.subr.mxu0 0.0
  %3155 = vmatpush1.msra.mxu0 0.0
  %3156 = vmatprep.subr.mxu0 0.0
  %3157 = vmatpush1.msra.mxu0 0.0
  %3158 = vmatprep.subr.mxu0 0.0
  %3159 = vmatpush1.msra.mxu0 0.0
  %3160 = vmatprep.subr.mxu0 0.0
  %3161 = vmatpush1.msra.mxu0 0.0
  %3162 = vmatprep.subr.mxu0 0.0
  %3163 = vmatpush1.msra.mxu0 0.0
  %3164 = vmatprep.subr.mxu0 0.0
  %3165 = vmatpush1.msra.mxu0 0.0
  %3166 = vmatprep.subr.mxu0 0.0
  %3167 = vmatpush1.msra.mxu0 0.0
  %3168 = vmatprep.subr.mxu0 0.0
  %3169 = vmatpush1.msra.mxu0 0.0
  %3170 = vmatprep.subr.mxu0 0.0
  %3171 = vmatpush1.msra.mxu0 0.0
  %3172 = vmatprep.subr.mxu0 0.0
  %3173 = vmatpush1.msra.mxu0 0.0
  %3174 = vmatprep.subr.mxu0 0.0
  %3175 = vmatpush1.msra.mxu0 0.0
  %3176 = vmatprep.subr.mxu0 0.0
  %3177 = vmatpush1.msra.mxu0 0.0
  %3178 = vmatprep.subr.mxu0 0.0
  %3179 = vmatpush1.msra.mxu0 0.0
  %3180 = vmatprep.subr.mxu0 0.0
  %3181 = vmatpush1.msra.mxu0 0.0
  %3182 = vmatprep.subr.mxu0 0.0
  %3183 = vmatpush1.msra.mxu0 0.0
  %3184 = vmatprep.subr.mxu0 0.0
  %3185 = vmatpush1.msra.mxu0 0.0
  %3186 = vmatprep.subr.mxu0 0.0
  %3187 = vmatpush1.msra.mxu0 0.0
  %3188 = vmatprep.subr.mxu0 0.0
  %3189 = vmatpush1.msra.mxu0 0.0
  %3190 = vmatprep.mubr.f32.mxu0 0.0
  %v3191 = vand.u32 %v41, 4294901760
  %3192 = vmatmul.mubr.f32.gmra.mrb[0].mxu0 %v3191
  %v3193 = vpop.f32.mrb[0].mxu0
  %v3194 = vadd.f32 %v3115, %v3193
  %v3195 = vpop.f32.mrb[0].mxu0
  %3196 = vmatprep.mubr.f32.mxu0 0.0
  %v3197 = vand.u32 %v44, 4294901760
  %3198 = vmatmul.mubr.f32.gmra.mrb[0].mxu0 %v3197
  %v3199 = vpop.f32.mrb[0].mxu0
  %v3200 = vadd.f32 %v3121, %v3199
  %v3201 = vpop.f32.mrb[0].mxu0
  %3202 = vdwg.mxu0
  %v3203 = vmax.f32 %v3194, 1e-38
  %v3204 = vmax.f32 %v3200, 1e-38
  %v3205 = vlog2.pop %v3203
  %v3206 = vmul.f32 %v3205, 0.6931472
  %v3207 = vlog2.pop %v3204
  %v3208 = vmul.f32 %v3207, 0.6931472
  %v3209 = vadd.f32 %v3206, %v2694
  %v3210 = vadd.f32 %v3208, %v2694
  %s3211 = scalar_lea.vmem %s0, 96
  %v3212 = vld [vmem:[%s3211] sm:$0xff]
  %v3213 = vld [vmem:[%s3211 + $0x8] sm:$0xff]
  %v3214 = vadd.f32 %v3209, %v3212
  %v3215 = vadd.f32 %v3210, %v3213
  %s3216 = scalar_lea.vmem [#allocation2], 96
  %3217 = vst [vmem:[%s3216] sm:$0xff] %v3214
  %3218 = vst [vmem:[%s3216 + $0x8] sm:$0xff] %v3215
  %v3219 = vmax.f32 %v3214, %v3215
  %v3220 = vrot.slane %v3219, 4
  %v3221 = vmax.f32 %v3219, %v3220
  %v3222 = vrot.slane %v3221, 2
  %v3223 = vmax.f32 %v3221, %v3222
  %v3224 = vrot.slane %v3223, 1
  %v3225 = vmax.f32 %v3223, %v3224
  %v3226 = vsub.f32 %v3214, %v3225
  %v3227 = vsub.f32 %v3215, %v3225
  %v3228 = vmul.f32 %v3226, 1.442695
  %v3229 = vpow.pop %v3228
  %v3230 = vmul.f32 %v3227, 1.442695
  %v3231 = vpow.pop %v3230
  %3232 = vmatprep.subr.mxu0 0.0
  %v3233 = vand.u32 %v3229, 4294901760
  %3234 = vmatpush1.msra.mxu0 %v3233
  %3235 = vmatprep.subr.mxu0 0.0
  %v3236 = vand.u32 %v3231, 4294901760
  %3237 = vmatpush1.msra.mxu0 %v3236
  %3238 = vmatprep.subr.mxu0 0.0
  %3239 = vmatpush1.msra.mxu0 0.0
  %3240 = vmatprep.subr.mxu0 0.0
  %3241 = vmatpush1.msra.mxu0 0.0
  %3242 = vmatprep.subr.mxu0 0.0
  %3243 = vmatpush1.msra.mxu0 0.0
  %3244 = vmatprep.subr.mxu0 0.0
  %3245 = vmatpush1.msra.mxu0 0.0
  %3246 = vmatprep.subr.mxu0 0.0
  %3247 = vmatpush1.msra.mxu0 0.0
  %3248 = vmatprep.subr.mxu0 0.0
  %3249 = vmatpush1.msra.mxu0 0.0
  %3250 = vmatprep.subr.mxu0 0.0
  %3251 = vmatpush1.msra.mxu0 0.0
  %3252 = vmatprep.subr.mxu0 0.0
  %3253 = vmatpush1.msra.mxu0 0.0
  %3254 = vmatprep.subr.mxu0 0.0
  %3255 = vmatpush1.msra.mxu0 0.0
  %3256 = vmatprep.subr.mxu0 0.0
  %3257 = vmatpush1.msra.mxu0 0.0
  %3258 = vmatprep.subr.mxu0 0.0
  %3259 = vmatpush1.msra.mxu0 0.0
  %3260 = vmatprep.subr.mxu0 0.0
  %3261 = vmatpush1.msra.mxu0 0.0
  %3262 = vmatprep.subr.mxu0 0.0
  %3263 = vmatpush1.msra.mxu0 0.0
  %3264 = vmatprep.subr.mxu0 0.0
  %3265 = vmatpush1.msra.mxu0 0.0
  %3266 = vmatprep.subr.mxu0 0.0
  %3267 = vmatpush1.msra.mxu0 0.0
  %3268 = vmatprep.subr.mxu0 0.0
  %3269 = vmatpush1.msra.mxu0 0.0
  %3270 = vmatprep.subr.mxu0 0.0
  %3271 = vmatpush1.msra.mxu0 0.0
  %3272 = vmatprep.subr.mxu0 0.0
  %3273 = vmatpush1.msra.mxu0 0.0
  %3274 = vmatprep.subr.mxu0 0.0
  %3275 = vmatpush1.msra.mxu0 0.0
  %3276 = vmatprep.subr.mxu0 0.0
  %3277 = vmatpush1.msra.mxu0 0.0
  %3278 = vmatprep.subr.mxu0 0.0
  %3279 = vmatpush1.msra.mxu0 0.0
  %3280 = vmatprep.subr.mxu0 0.0
  %3281 = vmatpush1.msra.mxu0 0.0
  %3282 = vmatprep.subr.mxu0 0.0
  %3283 = vmatpush1.msra.mxu0 0.0
  %3284 = vmatprep.subr.mxu0 0.0
  %3285 = vmatpush1.msra.mxu0 0.0
  %3286 = vmatprep.subr.mxu0 0.0
  %3287 = vmatpush1.msra.mxu0 0.0
  %3288 = vmatprep.subr.mxu0 0.0
  %3289 = vmatpush1.msra.mxu0 0.0
  %3290 = vmatprep.subr.mxu0 0.0
  %3291 = vmatpush1.msra.mxu0 0.0
  %3292 = vmatprep.subr.mxu0 0.0
  %3293 = vmatpush1.msra.mxu0 0.0
  %3294 = vmatprep.subr.mxu0 0.0
  %3295 = vmatpush1.msra.mxu0 0.0
  %3296 = vmatprep.subr.mxu0 0.0
  %3297 = vmatpush1.msra.mxu0 0.0
  %3298 = vmatprep.mubr.f32.mxu0 0.0
  %v3299 = vand.u32 %v41, 4294901760
  %v3300 = vsub.f32 %v41, %v3299
  %v3301 = vand.u32 %v3300, 4294901760
  %v3302 = vsub.f32 %v3300, %v3301
  %v3303 = vand.u32 %v3302, 4294901760
  %3304 = vmatmul.mubr.f32.gmra.mrb[0].mxu0 %v3303
  %v3305 = vpop.f32.mrb[0].mxu0
  %v3306 = vadd.f32 0.0, %v3305
  %v3307 = vpop.f32.mrb[0].mxu0
  %3308 = vmatprep.mubr.f32.mxu0 0.0
  %v3309 = vand.u32 %v44, 4294901760
  %v3310 = vsub.f32 %v44, %v3309
  %v3311 = vand.u32 %v3310, 4294901760
  %v3312 = vsub.f32 %v3310, %v3311
  %v3313 = vand.u32 %v3312, 4294901760
  %3314 = vmatmul.mubr.f32.gmra.mrb[0].mxu0 %v3313
  %v3315 = vpop.f32.mrb[0].mxu0
  %v3316 = vadd.f32 0.0, %v3315
  %v3317 = vpop.f32.mrb[0].mxu0
  %3318 = vdwg.mxu0
  %3319 = vmatprep.subr.mxu0 0.0
  %v3320 = vand.u32 %v3229, 4294901760
  %v3321 = vsub.f32 %v3229, %v3320
  %v3322 = vand.u32 %v3321, 4294901760
  %v3323 = vsub.f32 %v3321, %v3322
  %v3324 = vand.u32 %v3323, 4294901760
  %3325 = vmatpush1.msra.mxu0 %v3324
  %3326 = vmatprep.subr.mxu0 0.0
  %v3327 = vand.u32 %v3231, 4294901760
  %v3328 = vsub.f32 %v3231, %v3327
  %v3329 = vand.u32 %v3328, 4294901760
  %v3330 = vsub.f32 %v3328, %v3329
  %v3331 = vand.u32 %v3330, 4294901760
  %3332 = vmatpush1.msra.mxu0 %v3331
  %3333 = vmatprep.subr.mxu0 0.0
  %3334 = vmatpush1.msra.mxu0 0.0
  %3335 = vmatprep.subr.mxu0 0.0
  %3336 = vmatpush1.msra.mxu0 0.0
  %3337 = vmatprep.subr.mxu0 0.0
  %3338 = vmatpush1.msra.mxu0 0.0
  %3339 = vmatprep.subr.mxu0 0.0
  %3340 = vmatpush1.msra.mxu0 0.0
  %3341 = vmatprep.subr.mxu0 0.0
  %3342 = vmatpush1.msra.mxu0 0.0
  %3343 = vmatprep.subr.mxu0 0.0
  %3344 = vmatpush1.msra.mxu0 0.0
  %3345 = vmatprep.subr.mxu0 0.0
  %3346 = vmatpush1.msra.mxu0 0.0
  %3347 = vmatprep.subr.mxu0 0.0
  %3348 = vmatpush1.msra.mxu0 0.0
  %3349 = vmatprep.subr.mxu0 0.0
  %3350 = vmatpush1.msra.mxu0 0.0
  %3351 = vmatprep.subr.mxu0 0.0
  %3352 = vmatpush1.msra.mxu0 0.0
  %3353 = vmatprep.subr.mxu0 0.0
  %3354 = vmatpush1.msra.mxu0 0.0
  %3355 = vmatprep.subr.mxu0 0.0
  %3356 = vmatpush1.msra.mxu0 0.0
  %3357 = vmatprep.subr.mxu0 0.0
  %3358 = vmatpush1.msra.mxu0 0.0
  %3359 = vmatprep.subr.mxu0 0.0
  %3360 = vmatpush1.msra.mxu0 0.0
  %3361 = vmatprep.subr.mxu0 0.0
  %3362 = vmatpush1.msra.mxu0 0.0
  %3363 = vmatprep.subr.mxu0 0.0
  %3364 = vmatpush1.msra.mxu0 0.0
  %3365 = vmatprep.subr.mxu0 0.0
  %3366 = vmatpush1.msra.mxu0 0.0
  %3367 = vmatprep.subr.mxu0 0.0
  %3368 = vmatpush1.msra.mxu0 0.0
  %3369 = vmatprep.subr.mxu0 0.0
  %3370 = vmatpush1.msra.mxu0 0.0
  %3371 = vmatprep.subr.mxu0 0.0
  %3372 = vmatpush1.msra.mxu0 0.0
  %3373 = vmatprep.subr.mxu0 0.0
  %3374 = vmatpush1.msra.mxu0 0.0
  %3375 = vmatprep.subr.mxu0 0.0
  %3376 = vmatpush1.msra.mxu0 0.0
  %3377 = vmatprep.subr.mxu0 0.0
  %3378 = vmatpush1.msra.mxu0 0.0
  %3379 = vmatprep.subr.mxu0 0.0
  %3380 = vmatpush1.msra.mxu0 0.0
  %3381 = vmatprep.subr.mxu0 0.0
  %3382 = vmatpush1.msra.mxu0 0.0
  %3383 = vmatprep.subr.mxu0 0.0
  %3384 = vmatpush1.msra.mxu0 0.0
  %3385 = vmatprep.subr.mxu0 0.0
  %3386 = vmatpush1.msra.mxu0 0.0
  %3387 = vmatprep.subr.mxu0 0.0
  %3388 = vmatpush1.msra.mxu0 0.0
  %3389 = vmatprep.subr.mxu0 0.0
  %3390 = vmatpush1.msra.mxu0 0.0
  %3391 = vmatprep.subr.mxu0 0.0
  %3392 = vmatpush1.msra.mxu0 0.0
  %3393 = vmatprep.mubr.f32.mxu0 0.0
  %v3394 = vand.u32 %v41, 4294901760
  %3395 = vmatmul.mubr.f32.gmra.mrb[0].mxu0 %v3394
  %v3396 = vpop.f32.mrb[0].mxu0
  %v3397 = vadd.f32 %v3306, %v3396
  %v3398 = vpop.f32.mrb[0].mxu0
  %3399 = vmatprep.mubr.f32.mxu0 0.0
  %v3400 = vand.u32 %v44, 4294901760
  %3401 = vmatmul.mubr.f32.gmra.mrb[0].mxu0 %v3400
  %v3402 = vpop.f32.mrb[0].mxu0
  %v3403 = vadd.f32 %v3316, %v3402
  %v3404 = vpop.f32.mrb[0].mxu0
  %3405 = vdwg.mxu0
  %3406 = vmatprep.subr.mxu0 0.0
  %v3407 = vand.u32 %v3229, 4294901760
  %v3408 = vsub.f32 %v3229, %v3407
  %3409 = vmatpush1.msra.mxu0 %v3408
  %3410 = vmatprep.subr.mxu0 0.0
  %v3411 = vand.u32 %v3231, 4294901760
  %v3412 = vsub.f32 %v3231, %v3411
  %3413 = vmatpush1.msra.mxu0 %v3412
  %3414 = vmatprep.subr.mxu0 0.0
  %3415 = vmatpush1.msra.mxu0 0.0
  %3416 = vmatprep.subr.mxu0 0.0
  %3417 = vmatpush1.msra.mxu0 0.0
  %3418 = vmatprep.subr.mxu0 0.0
  %3419 = vmatpush1.msra.mxu0 0.0
  %3420 = vmatprep.subr.mxu0 0.0
  %3421 = vmatpush1.msra.mxu0 0.0
  %3422 = vmatprep.subr.mxu0 0.0
  %3423 = vmatpush1.msra.mxu0 0.0
  %3424 = vmatprep.subr.mxu0 0.0
  %3425 = vmatpush1.msra.mxu0 0.0
  %3426 = vmatprep.subr.mxu0 0.0
  %3427 = vmatpush1.msra.mxu0 0.0
  %3428 = vmatprep.subr.mxu0 0.0
  %3429 = vmatpush1.msra.mxu0 0.0
  %3430 = vmatprep.subr.mxu0 0.0
  %3431 = vmatpush1.msra.mxu0 0.0
  %3432 = vmatprep.subr.mxu0 0.0
  %3433 = vmatpush1.msra.mxu0 0.0
  %3434 = vmatprep.subr.mxu0 0.0
  %3435 = vmatpush1.msra.mxu0 0.0
  %3436 = vmatprep.subr.mxu0 0.0
  %3437 = vmatpush1.msra.mxu0 0.0
  %3438 = vmatprep.subr.mxu0 0.0
  %3439 = vmatpush1.msra.mxu0 0.0
  %3440 = vmatprep.subr.mxu0 0.0
  %3441 = vmatpush1.msra.mxu0 0.0
  %3442 = vmatprep.subr.mxu0 0.0
  %3443 = vmatpush1.msra.mxu0 0.0
  %3444 = vmatprep.subr.mxu0 0.0
  %3445 = vmatpush1.msra.mxu0 0.0
  %3446 = vmatprep.subr.mxu0 0.0
  %3447 = vmatpush1.msra.mxu0 0.0
  %3448 = vmatprep.subr.mxu0 0.0
  %3449 = vmatpush1.msra.mxu0 0.0
  %3450 = vmatprep.subr.mxu0 0.0
  %3451 = vmatpush1.msra.mxu0 0.0
  %3452 = vmatprep.subr.mxu0 0.0
  %3453 = vmatpush1.msra.mxu0 0.0
  %3454 = vmatprep.subr.mxu0 0.0
  %3455 = vmatpush1.msra.mxu0 0.0
  %3456 = vmatprep.subr.mxu0 0.0
  %3457 = vmatpush1.msra.mxu0 0.0
  %3458 = vmatprep.subr.mxu0 0.0
  %3459 = vmatpush1.msra.mxu0 0.0
  %3460 = vmatprep.subr.mxu0 0.0
  %3461 = vmatpush1.msra.mxu0 0.0
  %3462 = vmatprep.subr.mxu0 0.0
  %3463 = vmatpush1.msra.mxu0 0.0
  %3464 = vmatprep.subr.mxu0 0.0
  %3465 = vmatpush1.msra.mxu0 0.0
  %3466 = vmatprep.subr.mxu0 0.0
  %3467 = vmatpush1.msra.mxu0 0.0
  %3468 = vmatprep.subr.mxu0 0.0
  %3469 = vmatpush1.msra.mxu0 0.0
  %3470 = vmatprep.subr.mxu0 0.0
  %3471 = vmatpush1.msra.mxu0 0.0
  %3472 = vmatprep.subr.mxu0 0.0
  %3473 = vmatpush1.msra.mxu0 0.0
  %3474 = vmatprep.mubr.f32.mxu0 0.0
  %v3475 = vand.u32 %v41, 4294901760
  %v3476 = vsub.f32 %v41, %v3475
  %3477 = vmatmul.mubr.f32.gmra.mrb[0].mxu0 %v3476
  %v3478 = vpop.f32.mrb[0].mxu0
  %v3479 = vadd.f32 %v3397, %v3478
  %v3480 = vpop.f32.mrb[0].mxu0
  %3481 = vmatprep.mubr.f32.mxu0 0.0
  %v3482 = vand.u32 %v44, 4294901760
  %v3483 = vsub.f32 %v44, %v3482
  %3484 = vmatmul.mubr.f32.gmra.mrb[0].mxu0 %v3483
  %v3485 = vpop.f32.mrb[0].mxu0
  %v3486 = vadd.f32 %v3403, %v3485
  %v3487 = vpop.f32.mrb[0].mxu0
  %3488 = vdwg.mxu0
  %3489 = vmatprep.subr.mxu0 0.0
  %v3490 = vand.u32 %v3229, 4294901760
  %3491 = vmatpush1.msra.mxu0 %v3490
  %3492 = vmatprep.subr.mxu0 0.0
  %v3493 = vand.u32 %v3231, 4294901760
  %3494 = vmatpush1.msra.mxu0 %v3493
  %3495 = vmatprep.subr.mxu0 0.0
  %3496 = vmatpush1.msra.mxu0 0.0
  %3497 = vmatprep.subr.mxu0 0.0
  %3498 = vmatpush1.msra.mxu0 0.0
  %3499 = vmatprep.subr.mxu0 0.0
  %3500 = vmatpush1.msra.mxu0 0.0
  %3501 = vmatprep.subr.mxu0 0.0
  %3502 = vmatpush1.msra.mxu0 0.0
  %3503 = vmatprep.subr.mxu0 0.0
  %3504 = vmatpush1.msra.mxu0 0.0
  %3505 = vmatprep.subr.mxu0 0.0
  %3506 = vmatpush1.msra.mxu0 0.0
  %3507 = vmatprep.subr.mxu0 0.0
  %3508 = vmatpush1.msra.mxu0 0.0
  %3509 = vmatprep.subr.mxu0 0.0
  %3510 = vmatpush1.msra.mxu0 0.0
  %3511 = vmatprep.subr.mxu0 0.0
  %3512 = vmatpush1.msra.mxu0 0.0
  %3513 = vmatprep.subr.mxu0 0.0
  %3514 = vmatpush1.msra.mxu0 0.0
  %3515 = vmatprep.subr.mxu0 0.0
  %3516 = vmatpush1.msra.mxu0 0.0
  %3517 = vmatprep.subr.mxu0 0.0
  %3518 = vmatpush1.msra.mxu0 0.0
  %3519 = vmatprep.subr.mxu0 0.0
  %3520 = vmatpush1.msra.mxu0 0.0
  %3521 = vmatprep.subr.mxu0 0.0
  %3522 = vmatpush1.msra.mxu0 0.0
  %3523 = vmatprep.subr.mxu0 0.0
  %3524 = vmatpush1.msra.mxu0 0.0
  %3525 = vmatprep.subr.mxu0 0.0
  %3526 = vmatpush1.msra.mxu0 0.0
  %3527 = vmatprep.subr.mxu0 0.0
  %3528 = vmatpush1.msra.mxu0 0.0
  %3529 = vmatprep.subr.mxu0 0.0
  %3530 = vmatpush1.msra.mxu0 0.0
  %3531 = vmatprep.subr.mxu0 0.0
  %3532 = vmatpush1.msra.mxu0 0.0
  %3533 = vmatprep.subr.mxu0 0.0
  %3534 = vmatpush1.msra.mxu0 0.0
  %3535 = vmatprep.subr.mxu0 0.0
  %3536 = vmatpush1.msra.mxu0 0.0
  %3537 = vmatprep.subr.mxu0 0.0
  %3538 = vmatpush1.msra.mxu0 0.0
  %3539 = vmatprep.subr.mxu0 0.0
  %3540 = vmatpush1.msra.mxu0 0.0
  %3541 = vmatprep.subr.mxu0 0.0
  %3542 = vmatpush1.msra.mxu0 0.0
  %3543 = vmatprep.subr.mxu0 0.0
  %3544 = vmatpush1.msra.mxu0 0.0
  %3545 = vmatprep.subr.mxu0 0.0
  %3546 = vmatpush1.msra.mxu0 0.0
  %3547 = vmatprep.subr.mxu0 0.0
  %3548 = vmatpush1.msra.mxu0 0.0
  %3549 = vmatprep.subr.mxu0 0.0
  %3550 = vmatpush1.msra.mxu0 0.0
  %3551 = vmatprep.subr.mxu0 0.0
  %3552 = vmatpush1.msra.mxu0 0.0
  %3553 = vmatprep.subr.mxu0 0.0
  %3554 = vmatpush1.msra.mxu0 0.0
  %3555 = vmatprep.mubr.f32.mxu0 0.0
  %v3556 = vand.u32 %v41, 4294901760
  %v3557 = vsub.f32 %v41, %v3556
  %v3558 = vand.u32 %v3557, 4294901760
  %3559 = vmatmul.mubr.f32.gmra.mrb[0].mxu0 %v3558
  %v3560 = vpop.f32.mrb[0].mxu0
  %v3561 = vadd.f32 %v3479, %v3560
  %v3562 = vpop.f32.mrb[0].mxu0
  %3563 = vmatprep.mubr.f32.mxu0 0.0
  %v3564 = vand.u32 %v44, 4294901760
  %v3565 = vsub.f32 %v44, %v3564
  %v3566 = vand.u32 %v3565, 4294901760
  %3567 = vmatmul.mubr.f32.gmra.mrb[0].mxu0 %v3566
  %v3568 = vpop.f32.mrb[0].mxu0
  %v3569 = vadd.f32 %v3486, %v3568
  %v3570 = vpop.f32.mrb[0].mxu0
  %3571 = vdwg.mxu0
  %3572 = vmatprep.subr.mxu0 0.0
  %v3573 = vand.u32 %v3229, 4294901760
  %v3574 = vsub.f32 %v3229, %v3573
  %v3575 = vand.u32 %v3574, 4294901760
  %3576 = vmatpush1.msra.mxu0 %v3575
  %3577 = vmatprep.subr.mxu0 0.0
  %v3578 = vand.u32 %v3231, 4294901760
  %v3579 = vsub.f32 %v3231, %v3578
  %v3580 = vand.u32 %v3579, 4294901760
  %3581 = vmatpush1.msra.mxu0 %v3580
  %3582 = vmatprep.subr.mxu0 0.0
  %3583 = vmatpush1.msra.mxu0 0.0
  %3584 = vmatprep.subr.mxu0 0.0
  %3585 = vmatpush1.msra.mxu0 0.0
  %3586 = vmatprep.subr.mxu0 0.0
  %3587 = vmatpush1.msra.mxu0 0.0
  %3588 = vmatprep.subr.mxu0 0.0
  %3589 = vmatpush1.msra.mxu0 0.0
  %3590 = vmatprep.subr.mxu0 0.0
  %3591 = vmatpush1.msra.mxu0 0.0
  %3592 = vmatprep.subr.mxu0 0.0
  %3593 = vmatpush1.msra.mxu0 0.0
  %3594 = vmatprep.subr.mxu0 0.0
  %3595 = vmatpush1.msra.mxu0 0.0
  %3596 = vmatprep.subr.mxu0 0.0
  %3597 = vmatpush1.msra.mxu0 0.0
  %3598 = vmatprep.subr.mxu0 0.0
  %3599 = vmatpush1.msra.mxu0 0.0
  %3600 = vmatprep.subr.mxu0 0.0
  %3601 = vmatpush1.msra.mxu0 0.0
  %3602 = vmatprep.subr.mxu0 0.0
  %3603 = vmatpush1.msra.mxu0 0.0
  %3604 = vmatprep.subr.mxu0 0.0
  %3605 = vmatpush1.msra.mxu0 0.0
  %3606 = vmatprep.subr.mxu0 0.0
  %3607 = vmatpush1.msra.mxu0 0.0
  %3608 = vmatprep.subr.mxu0 0.0
  %3609 = vmatpush1.msra.mxu0 0.0
  %3610 = vmatprep.subr.mxu0 0.0
  %3611 = vmatpush1.msra.mxu0 0.0
  %3612 = vmatprep.subr.mxu0 0.0
  %3613 = vmatpush1.msra.mxu0 0.0
  %3614 = vmatprep.subr.mxu0 0.0
  %3615 = vmatpush1.msra.mxu0 0.0
  %3616 = vmatprep.subr.mxu0 0.0
  %3617 = vmatpush1.msra.mxu0 0.0
  %3618 = vmatprep.subr.mxu0 0.0
  %3619 = vmatpush1.msra.mxu0 0.0
  %3620 = vmatprep.subr.mxu0 0.0
  %3621 = vmatpush1.msra.mxu0 0.0
  %3622 = vmatprep.subr.mxu0 0.0
  %3623 = vmatpush1.msra.mxu0 0.0
  %3624 = vmatprep.subr.mxu0 0.0
  %3625 = vmatpush1.msra.mxu0 0.0
  %3626 = vmatprep.subr.mxu0 0.0
  %3627 = vmatpush1.msra.mxu0 0.0
  %3628 = vmatprep.subr.mxu0 0.0
  %3629 = vmatpush1.msra.mxu0 0.0
  %3630 = vmatprep.subr.mxu0 0.0
  %3631 = vmatpush1.msra.mxu0 0.0
  %3632 = vmatprep.subr.mxu0 0.0
  %3633 = vmatpush1.msra.mxu0 0.0
  %3634 = vmatprep.subr.mxu0 0.0
  %3635 = vmatpush1.msra.mxu0 0.0
  %3636 = vmatprep.subr.mxu0 0.0
  %3637 = vmatpush1.msra.mxu0 0.0
  %3638 = vmatprep.subr.mxu0 0.0
  %3639 = vmatpush1.msra.mxu0 0.0
  %3640 = vmatprep.subr.mxu0 0.0
  %3641 = vmatpush1.msra.mxu0 0.0
  %3642 = vmatprep.mubr.f32.mxu0 0.0
  %v3643 = vand.u32 %v41, 4294901760
  %3644 = vmatmul.mubr.f32.gmra.mrb[0].mxu0 %v3643
  %v3645 = vpop.f32.mrb[0].mxu0
  %v3646 = vadd.f32 %v3561, %v3645
  %v3647 = vpop.f32.mrb[0].mxu0
  %3648 = vmatprep.mubr.f32.mxu0 0.0
  %v3649 = vand.u32 %v44, 4294901760
  %3650 = vmatmul.mubr.f32.gmra.mrb[0].mxu0 %v3649
  %v3651 = vpop.f32.mrb[0].mxu0
  %v3652 = vadd.f32 %v3569, %v3651
  %v3653 = vpop.f32.mrb[0].mxu0
  %3654 = vdwg.mxu0
  %3655 = vmatprep.subr.mxu0 0.0
  %v3656 = vand.u32 %v3229, 4294901760
  %3657 = vmatpush1.msra.mxu0 %v3656
  %3658 = vmatprep.subr.mxu0 0.0
  %v3659 = vand.u32 %v3231, 4294901760
  %3660 = vmatpush1.msra.mxu0 %v3659
  %3661 = vmatprep.subr.mxu0 0.0
  %3662 = vmatpush1.msra.mxu0 0.0
  %3663 = vmatprep.subr.mxu0 0.0
  %3664 = vmatpush1.msra.mxu0 0.0
  %3665 = vmatprep.subr.mxu0 0.0
  %3666 = vmatpush1.msra.mxu0 0.0
  %3667 = vmatprep.subr.mxu0 0.0
  %3668 = vmatpush1.msra.mxu0 0.0
  %3669 = vmatprep.subr.mxu0 0.0
  %3670 = vmatpush1.msra.mxu0 0.0
  %3671 = vmatprep.subr.mxu0 0.0
  %3672 = vmatpush1.msra.mxu0 0.0
  %3673 = vmatprep.subr.mxu0 0.0
  %3674 = vmatpush1.msra.mxu0 0.0
  %3675 = vmatprep.subr.mxu0 0.0
  %3676 = vmatpush1.msra.mxu0 0.0
  %3677 = vmatprep.subr.mxu0 0.0
  %3678 = vmatpush1.msra.mxu0 0.0
  %3679 = vmatprep.subr.mxu0 0.0
  %3680 = vmatpush1.msra.mxu0 0.0
  %3681 = vmatprep.subr.mxu0 0.0
  %3682 = vmatpush1.msra.mxu0 0.0
  %3683 = vmatprep.subr.mxu0 0.0
  %3684 = vmatpush1.msra.mxu0 0.0
  %3685 = vmatprep.subr.mxu0 0.0
  %3686 = vmatpush1.msra.mxu0 0.0
  %3687 = vmatprep.subr.mxu0 0.0
  %3688 = vmatpush1.msra.mxu0 0.0
  %3689 = vmatprep.subr.mxu0 0.0
  %3690 = vmatpush1.msra.mxu0 0.0
  %3691 = vmatprep.subr.mxu0 0.0
  %3692 = vmatpush1.msra.mxu0 0.0
  %3693 = vmatprep.subr.mxu0 0.0
  %3694 = vmatpush1.msra.mxu0 0.0
  %3695 = vmatprep.subr.mxu0 0.0
  %3696 = vmatpush1.msra.mxu0 0.0
  %3697 = vmatprep.subr.mxu0 0.0
  %3698 = vmatpush1.msra.mxu0 0.0
  %3699 = vmatprep.subr.mxu0 0.0
  %3700 = vmatpush1.msra.mxu0 0.0
  %3701 = vmatprep.subr.mxu0 0.0
  %3702 = vmatpush1.msra.mxu0 0.0
  %3703 = vmatprep.subr.mxu0 0.0
  %3704 = vmatpush1.msra.mxu0 0.0
  %3705 = vmatprep.subr.mxu0 0.0
  %3706 = vmatpush1.msra.mxu0 0.0
  %3707 = vmatprep.subr.mxu0 0.0
  %3708 = vmatpush1.msra.mxu0 0.0
  %3709 = vmatprep.subr.mxu0 0.0
  %3710 = vmatpush1.msra.mxu0 0.0
  %3711 = vmatprep.subr.mxu0 0.0
  %3712 = vmatpush1.msra.mxu0 0.0
  %3713 = vmatprep.subr.mxu0 0.0
  %3714 = vmatpush1.msra.mxu0 0.0
  %3715 = vmatprep.subr.mxu0 0.0
  %3716 = vmatpush1.msra.mxu0 0.0
  %3717 = vmatprep.subr.mxu0 0.0
  %3718 = vmatpush1.msra.mxu0 0.0
  %3719 = vmatprep.subr.mxu0 0.0
  %3720 = vmatpush1.msra.mxu0 0.0
  %3721 = vmatprep.mubr.f32.mxu0 0.0
  %v3722 = vand.u32 %v41, 4294901760
  %3723 = vmatmul.mubr.f32.gmra.mrb[0].mxu0 %v3722
  %v3724 = vpop.f32.mrb[0].mxu0
  %v3725 = vadd.f32 %v3646, %v3724
  %v3726 = vpop.f32.mrb[0].mxu0
  %3727 = vmatprep.mubr.f32.mxu0 0.0
  %v3728 = vand.u32 %v44, 4294901760
  %3729 = vmatmul.mubr.f32.gmra.mrb[0].mxu0 %v3728
  %v3730 = vpop.f32.mrb[0].mxu0
  %v3731 = vadd.f32 %v3652, %v3730
  %v3732 = vpop.f32.mrb[0].mxu0
  %3733 = vdwg.mxu0
  %v3734 = vmax.f32 %v3725, 1e-38
  %v3735 = vmax.f32 %v3731, 1e-38
  %v3736 = vlog2.pop %v3734
  %v3737 = vmul.f32 %v3736, 0.6931472
  %v3738 = vlog2.pop %v3735
  %v3739 = vmul.f32 %v3738, 0.6931472
  %v3740 = vadd.f32 %v3737, %v3225
  %v3741 = vadd.f32 %v3739, %v3225
  %s3742 = scalar_lea.vmem %s0, 112
  %v3743 = vld [vmem:[%s3742] sm:$0xff]
  %v3744 = vld [vmem:[%s3742 + $0x8] sm:$0xff]
  %v3745 = vadd.f32 %v3740, %v3743
  %v3746 = vadd.f32 %v3741, %v3744
  %s3747 = scalar_lea.vmem [#allocation2], 112
  %3748 = vst [vmem:[%s3747] sm:$0xff] %v3745
  %3749 = vst [vmem:[%s3747 + $0x8] sm:$0xff] %v3746
  %v3750 = vmax.f32 %v3745, %v3746
  %v3751 = vrot.slane %v3750, 4
  %v3752 = vmax.f32 %v3750, %v3751
  %v3753 = vrot.slane %v3752, 2
  %v3754 = vmax.f32 %v3752, %v3753
  %v3755 = vrot.slane %v3754, 1
  %v3756 = vmax.f32 %v3754, %v3755
  %v3757 = vsub.f32 %v3745, %v3756
  %v3758 = vsub.f32 %v3746, %v3756
  %v3759 = vmul.f32 %v3757, 1.442695
  %v3760 = vpow.pop %v3759
  %v3761 = vmul.f32 %v3758, 1.442695
  %v3762 = vpow.pop %v3761
  %v3764 = vsel %vm39, %v21, 0
  %3766 = vmatprep.subr.mxu0 0.0
  %v3767 = vand.u32 %v3760, 4294901760
  %3768 = vmatpush1.msra.mxu0 %v3767
  %3769 = vmatprep.subr.mxu0 0.0
  %v3770 = vand.u32 %v3762, 4294901760
  %3771 = vmatpush1.msra.mxu0 %v3770
  %3772 = vmatprep.subr.mxu0 0.0
  %3773 = vmatpush1.msra.mxu0 0.0
  %3774 = vmatprep.subr.mxu0 0.0
  %3775 = vmatpush1.msra.mxu0 0.0
  %3776 = vmatprep.subr.mxu0 0.0
  %3777 = vmatpush1.msra.mxu0 0.0
  %3778 = vmatprep.subr.mxu0 0.0
  %3779 = vmatpush1.msra.mxu0 0.0
  %3780 = vmatprep.subr.mxu0 0.0
  %3781 = vmatpush1.msra.mxu0 0.0
  %3782 = vmatprep.subr.mxu0 0.0
  %3783 = vmatpush1.msra.mxu0 0.0
  %3784 = vmatprep.subr.mxu0 0.0
  %3785 = vmatpush1.msra.mxu0 0.0
  %3786 = vmatprep.subr.mxu0 0.0
  %3787 = vmatpush1.msra.mxu0 0.0
  %3788 = vmatprep.subr.mxu0 0.0
  %3789 = vmatpush1.msra.mxu0 0.0
  %3790 = vmatprep.subr.mxu0 0.0
  %3791 = vmatpush1.msra.mxu0 0.0
  %3792 = vmatprep.subr.mxu0 0.0
  %3793 = vmatpush1.msra.mxu0 0.0
  %3794 = vmatprep.subr.mxu0 0.0
  %3795 = vmatpush1.msra.mxu0 0.0
  %3796 = vmatprep.subr.mxu0 0.0
  %3797 = vmatpush1.msra.mxu0 0.0
  %3798 = vmatprep.subr.mxu0 0.0
  %3799 = vmatpush1.msra.mxu0 0.0
  %3800 = vmatprep.subr.mxu0 0.0
  %3801 = vmatpush1.msra.mxu0 0.0
  %3802 = vmatprep.subr.mxu0 0.0
  %3803 = vmatpush1.msra.mxu0 0.0
  %3804 = vmatprep.subr.mxu0 0.0
  %3805 = vmatpush1.msra.mxu0 0.0
  %3806 = vmatprep.subr.mxu0 0.0
  %3807 = vmatpush1.msra.mxu0 0.0
  %3808 = vmatprep.subr.mxu0 0.0
  %3809 = vmatpush1.msra.mxu0 0.0
  %3810 = vmatprep.subr.mxu0 0.0
  %3811 = vmatpush1.msra.mxu0 0.0
  %3812 = vmatprep.subr.mxu0 0.0
  %3813 = vmatpush1.msra.mxu0 0.0
  %3814 = vmatprep.subr.mxu0 0.0
  %3815 = vmatpush1.msra.mxu0 0.0
  %3816 = vmatprep.subr.mxu0 0.0
  %3817 = vmatpush1.msra.mxu0 0.0
  %3818 = vmatprep.subr.mxu0 0.0
  %3819 = vmatpush1.msra.mxu0 0.0
  %3820 = vmatprep.subr.mxu0 0.0
  %3821 = vmatpush1.msra.mxu0 0.0
  %3822 = vmatprep.subr.mxu0 0.0
  %3823 = vmatpush1.msra.mxu0 0.0
  %3824 = vmatprep.subr.mxu0 0.0
  %3825 = vmatpush1.msra.mxu0 0.0
  %3826 = vmatprep.subr.mxu0 0.0
  %3827 = vmatpush1.msra.mxu0 0.0
  %3828 = vmatprep.subr.mxu0 0.0
  %3829 = vmatpush1.msra.mxu0 0.0
  %3830 = vmatprep.subr.mxu0 0.0
  %3831 = vmatpush1.msra.mxu0 0.0
  %3832 = vmatprep.mubr.f32.mxu0 0.0
  %v3833 = vand.u32 %v3764, 4294901760
  %v3834 = vsub.f32 %v3764, %v3833
  %v3835 = vand.u32 %v3834, 4294901760
  %v3836 = vsub.f32 %v3834, %v3835
  %v3837 = vand.u32 %v3836, 4294901760
  %3838 = vmatmul.mubr.f32.gmra.mrb[0].mxu0 %v3837
  %v3839 = vpop.f32.mrb[0].mxu0
  %v3840 = vadd.f32 0.0, %v3839
  %v3841 = vpop.f32.mrb[0].mxu0
  %3842 = vdwg.mxu0
  %3843 = vmatprep.subr.mxu0 0.0
  %v3844 = vand.u32 %v3760, 4294901760
  %v3845 = vsub.f32 %v3760, %v3844
  %v3846 = vand.u32 %v3845, 4294901760
  %v3847 = vsub.f32 %v3845, %v3846
  %v3848 = vand.u32 %v3847, 4294901760
  %3849 = vmatpush1.msra.mxu0 %v3848
  %3850 = vmatprep.subr.mxu0 0.0
  %v3851 = vand.u32 %v3762, 4294901760
  %v3852 = vsub.f32 %v3762, %v3851
  %v3853 = vand.u32 %v3852, 4294901760
  %v3854 = vsub.f32 %v3852, %v3853
  %v3855 = vand.u32 %v3854, 4294901760
  %3856 = vmatpush1.msra.mxu0 %v3855
  %3857 = vmatprep.subr.mxu0 0.0
  %3858 = vmatpush1.msra.mxu0 0.0
  %3859 = vmatprep.subr.mxu0 0.0
  %3860 = vmatpush1.msra.mxu0 0.0
  %3861 = vmatprep.subr.mxu0 0.0
  %3862 = vmatpush1.msra.mxu0 0.0
  %3863 = vmatprep.subr.mxu0 0.0
  %3864 = vmatpush1.msra.mxu0 0.0
  %3865 = vmatprep.subr.mxu0 0.0
  %3866 = vmatpush1.msra.mxu0 0.0
  %3867 = vmatprep.subr.mxu0 0.0
  %3868 = vmatpush1.msra.mxu0 0.0
  %3869 = vmatprep.subr.mxu0 0.0
  %3870 = vmatpush1.msra.mxu0 0.0
  %3871 = vmatprep.subr.mxu0 0.0
  %3872 = vmatpush1.msra.mxu0 0.0
  %3873 = vmatprep.subr.mxu0 0.0
  %3874 = vmatpush1.msra.mxu0 0.0
  %3875 = vmatprep.subr.mxu0 0.0
  %3876 = vmatpush1.msra.mxu0 0.0
  %3877 = vmatprep.subr.mxu0 0.0
  %3878 = vmatpush1.msra.mxu0 0.0
  %3879 = vmatprep.subr.mxu0 0.0
  %3880 = vmatpush1.msra.mxu0 0.0
  %3881 = vmatprep.subr.mxu0 0.0
  %3882 = vmatpush1.msra.mxu0 0.0
  %3883 = vmatprep.subr.mxu0 0.0
  %3884 = vmatpush1.msra.mxu0 0.0
  %3885 = vmatprep.subr.mxu0 0.0
  %3886 = vmatpush1.msra.mxu0 0.0
  %3887 = vmatprep.subr.mxu0 0.0
  %3888 = vmatpush1.msra.mxu0 0.0
  %3889 = vmatprep.subr.mxu0 0.0
  %3890 = vmatpush1.msra.mxu0 0.0
  %3891 = vmatprep.subr.mxu0 0.0
  %3892 = vmatpush1.msra.mxu0 0.0
  %3893 = vmatprep.subr.mxu0 0.0
  %3894 = vmatpush1.msra.mxu0 0.0
  %3895 = vmatprep.subr.mxu0 0.0
  %3896 = vmatpush1.msra.mxu0 0.0
  %3897 = vmatprep.subr.mxu0 0.0
  %3898 = vmatpush1.msra.mxu0 0.0
  %3899 = vmatprep.subr.mxu0 0.0
  %3900 = vmatpush1.msra.mxu0 0.0
  %3901 = vmatprep.subr.mxu0 0.0
  %3902 = vmatpush1.msra.mxu0 0.0
  %3903 = vmatprep.subr.mxu0 0.0
  %3904 = vmatpush1.msra.mxu0 0.0
  %3905 = vmatprep.subr.mxu0 0.0
  %3906 = vmatpush1.msra.mxu0 0.0
  %3907 = vmatprep.subr.mxu0 0.0
  %3908 = vmatpush1.msra.mxu0 0.0
  %3909 = vmatprep.subr.mxu0 0.0
  %3910 = vmatpush1.msra.mxu0 0.0
  %3911 = vmatprep.subr.mxu0 0.0
  %3912 = vmatpush1.msra.mxu0 0.0
  %3913 = vmatprep.subr.mxu0 0.0
  %3914 = vmatpush1.msra.mxu0 0.0
  %3915 = vmatprep.subr.mxu0 0.0
  %3916 = vmatpush1.msra.mxu0 0.0
  %3917 = vmatprep.mubr.f32.mxu0 0.0
  %v3918 = vand.u32 %v3764, 4294901760
  %3919 = vmatmul.mubr.f32.gmra.mrb[0].mxu0 %v3918
  %v3920 = vpop.f32.mrb[0].mxu0
  %v3921 = vadd.f32 %v3840, %v3920
  %v3922 = vpop.f32.mrb[0].mxu0
  %3923 = vdwg.mxu0
  %3924 = vmatprep.subr.mxu0 0.0
  %v3925 = vand.u32 %v3760, 4294901760
  %v3926 = vsub.f32 %v3760, %v3925
  %3927 = vmatpush1.msra.mxu0 %v3926
  %3928 = vmatprep.subr.mxu0 0.0
  %v3929 = vand.u32 %v3762, 4294901760
  %v3930 = vsub.f32 %v3762, %v3929
  %3931 = vmatpush1.msra.mxu0 %v3930
  %3932 = vmatprep.subr.mxu0 0.0
  %3933 = vmatpush1.msra.mxu0 0.0
  %3934 = vmatprep.subr.mxu0 0.0
  %3935 = vmatpush1.msra.mxu0 0.0
  %3936 = vmatprep.subr.mxu0 0.0
  %3937 = vmatpush1.msra.mxu0 0.0
  %3938 = vmatprep.subr.mxu0 0.0
  %3939 = vmatpush1.msra.mxu0 0.0
  %3940 = vmatprep.subr.mxu0 0.0
  %3941 = vmatpush1.msra.mxu0 0.0
  %3942 = vmatprep.subr.mxu0 0.0
  %3943 = vmatpush1.msra.mxu0 0.0
  %3944 = vmatprep.subr.mxu0 0.0
  %3945 = vmatpush1.msra.mxu0 0.0
  %3946 = vmatprep.subr.mxu0 0.0
  %3947 = vmatpush1.msra.mxu0 0.0
  %3948 = vmatprep.subr.mxu0 0.0
  %3949 = vmatpush1.msra.mxu0 0.0
  %3950 = vmatprep.subr.mxu0 0.0
  %3951 = vmatpush1.msra.mxu0 0.0
  %3952 = vmatprep.subr.mxu0 0.0
  %3953 = vmatpush1.msra.mxu0 0.0
  %3954 = vmatprep.subr.mxu0 0.0
  %3955 = vmatpush1.msra.mxu0 0.0
  %3956 = vmatprep.subr.mxu0 0.0
  %3957 = vmatpush1.msra.mxu0 0.0
  %3958 = vmatprep.subr.mxu0 0.0
  %3959 = vmatpush1.msra.mxu0 0.0
  %3960 = vmatprep.subr.mxu0 0.0
  %3961 = vmatpush1.msra.mxu0 0.0
  %3962 = vmatprep.subr.mxu0 0.0
  %3963 = vmatpush1.msra.mxu0 0.0
  %3964 = vmatprep.subr.mxu0 0.0
  %3965 = vmatpush1.msra.mxu0 0.0
  %3966 = vmatprep.subr.mxu0 0.0
  %3967 = vmatpush1.msra.mxu0 0.0
  %3968 = vmatprep.subr.mxu0 0.0
  %3969 = vmatpush1.msra.mxu0 0.0
  %3970 = vmatprep.subr.mxu0 0.0
  %3971 = vmatpush1.msra.mxu0 0.0
  %3972 = vmatprep.subr.mxu0 0.0
  %3973 = vmatpush1.msra.mxu0 0.0
  %3974 = vmatprep.subr.mxu0 0.0
  %3975 = vmatpush1.msra.mxu0 0.0
  %3976 = vmatprep.subr.mxu0 0.0
  %3977 = vmatpush1.msra.mxu0 0.0
  %3978 = vmatprep.subr.mxu0 0.0
  %3979 = vmatpush1.msra.mxu0 0.0
  %3980 = vmatprep.subr.mxu0 0.0
  %3981 = vmatpush1.msra.mxu0 0.0
  %3982 = vmatprep.subr.mxu0 0.0
  %3983 = vmatpush1.msra.mxu0 0.0
  %3984 = vmatprep.subr.mxu0 0.0
  %3985 = vmatpush1.msra.mxu0 0.0
  %3986 = vmatprep.subr.mxu0 0.0
  %3987 = vmatpush1.msra.mxu0 0.0
  %3988 = vmatprep.subr.mxu0 0.0
  %3989 = vmatpush1.msra.mxu0 0.0
  %3990 = vmatprep.subr.mxu0 0.0
  %3991 = vmatpush1.msra.mxu0 0.0
  %3992 = vmatprep.mubr.f32.mxu0 0.0
  %v3993 = vand.u32 %v3764, 4294901760
  %v3994 = vsub.f32 %v3764, %v3993
  %3995 = vmatmul.mubr.f32.gmra.mrb[0].mxu0 %v3994
  %v3996 = vpop.f32.mrb[0].mxu0
  %v3997 = vadd.f32 %v3921, %v3996
  %v3998 = vpop.f32.mrb[0].mxu0
  %3999 = vdwg.mxu0
  %4000 = vmatprep.subr.mxu0 0.0
  %v4001 = vand.u32 %v3760, 4294901760
  %4002 = vmatpush1.msra.mxu0 %v4001
  %4003 = vmatprep.subr.mxu0 0.0
  %v4004 = vand.u32 %v3762, 4294901760
  %4005 = vmatpush1.msra.mxu0 %v4004
  %4006 = vmatprep.subr.mxu0 0.0
  %4007 = vmatpush1.msra.mxu0 0.0
  %4008 = vmatprep.subr.mxu0 0.0
  %4009 = vmatpush1.msra.mxu0 0.0
  %4010 = vmatprep.subr.mxu0 0.0
  %4011 = vmatpush1.msra.mxu0 0.0
  %4012 = vmatprep.subr.mxu0 0.0
  %4013 = vmatpush1.msra.mxu0 0.0
  %4014 = vmatprep.subr.mxu0 0.0
  %4015 = vmatpush1.msra.mxu0 0.0
  %4016 = vmatprep.subr.mxu0 0.0
  %4017 = vmatpush1.msra.mxu0 0.0
  %4018 = vmatprep.subr.mxu0 0.0
  %4019 = vmatpush1.msra.mxu0 0.0
  %4020 = vmatprep.subr.mxu0 0.0
  %4021 = vmatpush1.msra.mxu0 0.0
  %4022 = vmatprep.subr.mxu0 0.0
  %4023 = vmatpush1.msra.mxu0 0.0
  %4024 = vmatprep.subr.mxu0 0.0
  %4025 = vmatpush1.msra.mxu0 0.0
  %4026 = vmatprep.subr.mxu0 0.0
  %4027 = vmatpush1.msra.mxu0 0.0
  %4028 = vmatprep.subr.mxu0 0.0
  %4029 = vmatpush1.msra.mxu0 0.0
  %4030 = vmatprep.subr.mxu0 0.0
  %4031 = vmatpush1.msra.mxu0 0.0
  %4032 = vmatprep.subr.mxu0 0.0
  %4033 = vmatpush1.msra.mxu0 0.0
  %4034 = vmatprep.subr.mxu0 0.0
  %4035 = vmatpush1.msra.mxu0 0.0
  %4036 = vmatprep.subr.mxu0 0.0
  %4037 = vmatpush1.msra.mxu0 0.0
  %4038 = vmatprep.subr.mxu0 0.0
  %4039 = vmatpush1.msra.mxu0 0.0
  %4040 = vmatprep.subr.mxu0 0.0
  %4041 = vmatpush1.msra.mxu0 0.0
  %4042 = vmatprep.subr.mxu0 0.0
  %4043 = vmatpush1.msra.mxu0 0.0
  %4044 = vmatprep.subr.mxu0 0.0
  %4045 = vmatpush1.msra.mxu0 0.0
  %4046 = vmatprep.subr.mxu0 0.0
  %4047 = vmatpush1.msra.mxu0 0.0
  %4048 = vmatprep.subr.mxu0 0.0
  %4049 = vmatpush1.msra.mxu0 0.0
  %4050 = vmatprep.subr.mxu0 0.0
  %4051 = vmatpush1.msra.mxu0 0.0
  %4052 = vmatprep.subr.mxu0 0.0
  %4053 = vmatpush1.msra.mxu0 0.0
  %4054 = vmatprep.subr.mxu0 0.0
  %4055 = vmatpush1.msra.mxu0 0.0
  %4056 = vmatprep.subr.mxu0 0.0
  %4057 = vmatpush1.msra.mxu0 0.0
  %4058 = vmatprep.subr.mxu0 0.0
  %4059 = vmatpush1.msra.mxu0 0.0
  %4060 = vmatprep.subr.mxu0 0.0
  %4061 = vmatpush1.msra.mxu0 0.0
  %4062 = vmatprep.subr.mxu0 0.0
  %4063 = vmatpush1.msra.mxu0 0.0
  %4064 = vmatprep.subr.mxu0 0.0
  %4065 = vmatpush1.msra.mxu0 0.0
  %4066 = vmatprep.mubr.f32.mxu0 0.0
  %v4067 = vand.u32 %v3764, 4294901760
  %v4068 = vsub.f32 %v3764, %v4067
  %v4069 = vand.u32 %v4068, 4294901760
  %4070 = vmatmul.mubr.f32.gmra.mrb[0].mxu0 %v4069
  %v4071 = vpop.f32.mrb[0].mxu0
  %v4072 = vadd.f32 %v3997, %v4071
  %v4073 = vpop.f32.mrb[0].mxu0
  %4074 = vdwg.mxu0
  %4075 = vmatprep.subr.mxu0 0.0
  %v4076 = vand.u32 %v3760, 4294901760
  %v4077 = vsub.f32 %v3760, %v4076
  %v4078 = vand.u32 %v4077, 4294901760
  %4079 = vmatpush1.msra.mxu0 %v4078
  %4080 = vmatprep.subr.mxu0 0.0
  %v4081 = vand.u32 %v3762, 4294901760
  %v4082 = vsub.f32 %v3762, %v4081
  %v4083 = vand.u32 %v4082, 4294901760
  %4084 = vmatpush1.msra.mxu0 %v4083
  %4085 = vmatprep.subr.mxu0 0.0
  %4086 = vmatpush1.msra.mxu0 0.0
  %4087 = vmatprep.subr.mxu0 0.0
  %4088 = vmatpush1.msra.mxu0 0.0
  %4089 = vmatprep.subr.mxu0 0.0
  %4090 = vmatpush1.msra.mxu0 0.0
  %4091 = vmatprep.subr.mxu0 0.0
  %4092 = vmatpush1.msra.mxu0 0.0
  %4093 = vmatprep.subr.mxu0 0.0
  %4094 = vmatpush1.msra.mxu0 0.0
  %4095 = vmatprep.subr.mxu0 0.0
  %4096 = vmatpush1.msra.mxu0 0.0
  %4097 = vmatprep.subr.mxu0 0.0
  %4098 = vmatpush1.msra.mxu0 0.0
  %4099 = vmatprep.subr.mxu0 0.0
  %4100 = vmatpush1.msra.mxu0 0.0
  %4101 = vmatprep.subr.mxu0 0.0
  %4102 = vmatpush1.msra.mxu0 0.0
  %4103 = vmatprep.subr.mxu0 0.0
  %4104 = vmatpush1.msra.mxu0 0.0
  %4105 = vmatprep.subr.mxu0 0.0
  %4106 = vmatpush1.msra.mxu0 0.0
  %4107 = vmatprep.subr.mxu0 0.0
  %4108 = vmatpush1.msra.mxu0 0.0
  %4109 = vmatprep.subr.mxu0 0.0
  %4110 = vmatpush1.msra.mxu0 0.0
  %4111 = vmatprep.subr.mxu0 0.0
  %4112 = vmatpush1.msra.mxu0 0.0
  %4113 = vmatprep.subr.mxu0 0.0
  %4114 = vmatpush1.msra.mxu0 0.0
  %4115 = vmatprep.subr.mxu0 0.0
  %4116 = vmatpush1.msra.mxu0 0.0
  %4117 = vmatprep.subr.mxu0 0.0
  %4118 = vmatpush1.msra.mxu0 0.0
  %4119 = vmatprep.subr.mxu0 0.0
  %4120 = vmatpush1.msra.mxu0 0.0
  %4121 = vmatprep.subr.mxu0 0.0
  %4122 = vmatpush1.msra.mxu0 0.0
  %4123 = vmatprep.subr.mxu0 0.0
  %4124 = vmatpush1.msra.mxu0 0.0
  %4125 = vmatprep.subr.mxu0 0.0
  %4126 = vmatpush1.msra.mxu0 0.0
  %4127 = vmatprep.subr.mxu0 0.0
  %4128 = vmatpush1.msra.mxu0 0.0
  %4129 = vmatprep.subr.mxu0 0.0
  %4130 = vmatpush1.msra.mxu0 0.0
  %4131 = vmatprep.subr.mxu0 0.0
  %4132 = vmatpush1.msra.mxu0 0.0
  %4133 = vmatprep.subr.mxu0 0.0
  %4134 = vmatpush1.msra.mxu0 0.0
  %4135 = vmatprep.subr.mxu0 0.0
  %4136 = vmatpush1.msra.mxu0 0.0
  %4137 = vmatprep.subr.mxu0 0.0
  %4138 = vmatpush1.msra.mxu0 0.0
  %4139 = vmatprep.subr.mxu0 0.0
  %4140 = vmatpush1.msra.mxu0 0.0
  %4141 = vmatprep.subr.mxu0 0.0
  %4142 = vmatpush1.msra.mxu0 0.0
  %4143 = vmatprep.subr.mxu0 0.0
  %4144 = vmatpush1.msra.mxu0 0.0
  %4145 = vmatprep.mubr.f32.mxu0 0.0
  %v4146 = vand.u32 %v3764, 4294901760
  %4147 = vmatmul.mubr.f32.gmra.mrb[0].mxu0 %v4146
  %v4148 = vpop.f32.mrb[0].mxu0
  %v4149 = vadd.f32 %v4072, %v4148
  %v4150 = vpop.f32.mrb[0].mxu0
  %4151 = vdwg.mxu0
  %4152 = vmatprep.subr.mxu0 0.0
  %v4153 = vand.u32 %v3760, 4294901760
  %4154 = vmatpush1.msra.mxu0 %v4153
  %4155 = vmatprep.subr.mxu0 0.0
  %v4156 = vand.u32 %v3762, 4294901760
  %4157 = vmatpush1.msra.mxu0 %v4156
  %4158 = vmatprep.subr.mxu0 0.0
  %4159 = vmatpush1.msra.mxu0 0.0
  %4160 = vmatprep.subr.mxu0 0.0
  %4161 = vmatpush1.msra.mxu0 0.0
  %4162 = vmatprep.subr.mxu0 0.0
  %4163 = vmatpush1.msra.mxu0 0.0
  %4164 = vmatprep.subr.mxu0 0.0
  %4165 = vmatpush1.msra.mxu0 0.0
  %4166 = vmatprep.subr.mxu0 0.0
  %4167 = vmatpush1.msra.mxu0 0.0
  %4168 = vmatprep.subr.mxu0 0.0
  %4169 = vmatpush1.msra.mxu0 0.0
  %4170 = vmatprep.subr.mxu0 0.0
  %4171 = vmatpush1.msra.mxu0 0.0
  %4172 = vmatprep.subr.mxu0 0.0
  %4173 = vmatpush1.msra.mxu0 0.0
  %4174 = vmatprep.subr.mxu0 0.0
  %4175 = vmatpush1.msra.mxu0 0.0
  %4176 = vmatprep.subr.mxu0 0.0
  %4177 = vmatpush1.msra.mxu0 0.0
  %4178 = vmatprep.subr.mxu0 0.0
  %4179 = vmatpush1.msra.mxu0 0.0
  %4180 = vmatprep.subr.mxu0 0.0
  %4181 = vmatpush1.msra.mxu0 0.0
  %4182 = vmatprep.subr.mxu0 0.0
  %4183 = vmatpush1.msra.mxu0 0.0
  %4184 = vmatprep.subr.mxu0 0.0
  %4185 = vmatpush1.msra.mxu0 0.0
  %4186 = vmatprep.subr.mxu0 0.0
  %4187 = vmatpush1.msra.mxu0 0.0
  %4188 = vmatprep.subr.mxu0 0.0
  %4189 = vmatpush1.msra.mxu0 0.0
  %4190 = vmatprep.subr.mxu0 0.0
  %4191 = vmatpush1.msra.mxu0 0.0
  %4192 = vmatprep.subr.mxu0 0.0
  %4193 = vmatpush1.msra.mxu0 0.0
  %4194 = vmatprep.subr.mxu0 0.0
  %4195 = vmatpush1.msra.mxu0 0.0
  %4196 = vmatprep.subr.mxu0 0.0
  %4197 = vmatpush1.msra.mxu0 0.0
  %4198 = vmatprep.subr.mxu0 0.0
  %4199 = vmatpush1.msra.mxu0 0.0
  %4200 = vmatprep.subr.mxu0 0.0
  %4201 = vmatpush1.msra.mxu0 0.0
  %4202 = vmatprep.subr.mxu0 0.0
  %4203 = vmatpush1.msra.mxu0 0.0
  %4204 = vmatprep.subr.mxu0 0.0
  %4205 = vmatpush1.msra.mxu0 0.0
  %4206 = vmatprep.subr.mxu0 0.0
  %4207 = vmatpush1.msra.mxu0 0.0
  %4208 = vmatprep.subr.mxu0 0.0
  %4209 = vmatpush1.msra.mxu0 0.0
  %4210 = vmatprep.subr.mxu0 0.0
  %4211 = vmatpush1.msra.mxu0 0.0
  %4212 = vmatprep.subr.mxu0 0.0
  %4213 = vmatpush1.msra.mxu0 0.0
  %4214 = vmatprep.subr.mxu0 0.0
  %4215 = vmatpush1.msra.mxu0 0.0
  %4216 = vmatprep.subr.mxu0 0.0
  %4217 = vmatpush1.msra.mxu0 0.0
  %4218 = vmatprep.mubr.f32.mxu0 0.0
  %v4219 = vand.u32 %v3764, 4294901760
  %4220 = vmatmul.mubr.f32.gmra.mrb[0].mxu0 %v4219
  %v4221 = vpop.f32.mrb[0].mxu0
  %v4222 = vadd.f32 %v4149, %v4221
  %v4223 = vpop.f32.mrb[0].mxu0
  %4224 = vdwg.mxu0
  %v4225 = vmax.f32 %v4222, 1e-38
  %v4226 = vlog2.pop %v4225
  %v4227 = vmul.f32 %v4226, 0.6931472
  %v4228 = vlaneseq
  %v4229 = vshrl.u32 %v4228, 7
  %v4230 = vsub.s32 5, %v4229
  %v4231 = vrot.slane %v4227, %v4230
  %v4232 = vsub.f32 %v4227, %v4231
  %s4233 = scalar_lea.vmem %s4, 56
  %4234 = vst [vmem:[%s4233] sm:$0x1f] %v4232
  %v4235 = vld [vmem:[%s3742] sm:$0xff]
  %v4236 = vld [vmem:[%s3742 + $0x8] sm:$0xff]
  %v4237 = vmax.f32 %v4235, %v4236
  %v4238 = vrot.slane %v4237, 4
  %v4239 = vmax.f32 %v4237, %v4238
  %v4240 = vrot.slane %v4239, 2
  %v4241 = vmax.f32 %v4239, %v4240
  %v4242 = vrot.slane %v4241, 1
  %v4243 = vmax.f32 %v4241, %v4242
  %v4244 = vsub.f32 %v4235, %v4243
  %v4245 = vsub.f32 %v4236, %v4243
  %v4246 = vmul.f32 %v4244, 1.442695
  %v4247 = vpow.pop %v4246
  %v4248 = vmul.f32 %v4245, 1.442695
  %v4249 = vpow.pop %v4248
  %v4251 = vsel %vm39, %v19, 0
  %v4254 = vsel %vm39, %v20, 0
  %4256 = vmatprep.subr.mxu0 0.0
  %v4257 = vand.u32 %v4247, 4294901760
  %4258 = vmatpush1.msra.mxu0 %v4257
  %4259 = vmatprep.subr.mxu0 0.0
  %v4260 = vand.u32 %v4249, 4294901760
  %4261 = vmatpush1.msra.mxu0 %v4260
  %4262 = vmatprep.subr.mxu0 0.0
  %4263 = vmatpush1.msra.mxu0 0.0
  %4264 = vmatprep.subr.mxu0 0.0
  %4265 = vmatpush1.msra.mxu0 0.0
  %4266 = vmatprep.subr.mxu0 0.0
  %4267 = vmatpush1.msra.mxu0 0.0
  %4268 = vmatprep.subr.mxu0 0.0
  %4269 = vmatpush1.msra.mxu0 0.0
  %4270 = vmatprep.subr.mxu0 0.0
  %4271 = vmatpush1.msra.mxu0 0.0
  %4272 = vmatprep.subr.mxu0 0.0
  %4273 = vmatpush1.msra.mxu0 0.0
  %4274 = vmatprep.subr.mxu0 0.0
  %4275 = vmatpush1.msra.mxu0 0.0
  %4276 = vmatprep.subr.mxu0 0.0
  %4277 = vmatpush1.msra.mxu0 0.0
  %4278 = vmatprep.subr.mxu0 0.0
  %4279 = vmatpush1.msra.mxu0 0.0
  %4280 = vmatprep.subr.mxu0 0.0
  %4281 = vmatpush1.msra.mxu0 0.0
  %4282 = vmatprep.subr.mxu0 0.0
  %4283 = vmatpush1.msra.mxu0 0.0
  %4284 = vmatprep.subr.mxu0 0.0
  %4285 = vmatpush1.msra.mxu0 0.0
  %4286 = vmatprep.subr.mxu0 0.0
  %4287 = vmatpush1.msra.mxu0 0.0
  %4288 = vmatprep.subr.mxu0 0.0
  %4289 = vmatpush1.msra.mxu0 0.0
  %4290 = vmatprep.subr.mxu0 0.0
  %4291 = vmatpush1.msra.mxu0 0.0
  %4292 = vmatprep.subr.mxu0 0.0
  %4293 = vmatpush1.msra.mxu0 0.0
  %4294 = vmatprep.subr.mxu0 0.0
  %4295 = vmatpush1.msra.mxu0 0.0
  %4296 = vmatprep.subr.mxu0 0.0
  %4297 = vmatpush1.msra.mxu0 0.0
  %4298 = vmatprep.subr.mxu0 0.0
  %4299 = vmatpush1.msra.mxu0 0.0
  %4300 = vmatprep.subr.mxu0 0.0
  %4301 = vmatpush1.msra.mxu0 0.0
  %4302 = vmatprep.subr.mxu0 0.0
  %4303 = vmatpush1.msra.mxu0 0.0
  %4304 = vmatprep.subr.mxu0 0.0
  %4305 = vmatpush1.msra.mxu0 0.0
  %4306 = vmatprep.subr.mxu0 0.0
  %4307 = vmatpush1.msra.mxu0 0.0
  %4308 = vmatprep.subr.mxu0 0.0
  %4309 = vmatpush1.msra.mxu0 0.0
  %4310 = vmatprep.subr.mxu0 0.0
  %4311 = vmatpush1.msra.mxu0 0.0
  %4312 = vmatprep.subr.mxu0 0.0
  %4313 = vmatpush1.msra.mxu0 0.0
  %4314 = vmatprep.subr.mxu0 0.0
  %4315 = vmatpush1.msra.mxu0 0.0
  %4316 = vmatprep.subr.mxu0 0.0
  %4317 = vmatpush1.msra.mxu0 0.0
  %4318 = vmatprep.subr.mxu0 0.0
  %4319 = vmatpush1.msra.mxu0 0.0
  %4320 = vmatprep.subr.mxu0 0.0
  %4321 = vmatpush1.msra.mxu0 0.0
  %4322 = vmatprep.mubr.f32.mxu0 0.0
  %v4323 = vand.u32 %v4251, 4294901760
  %v4324 = vsub.f32 %v4251, %v4323
  %v4325 = vand.u32 %v4324, 4294901760
  %v4326 = vsub.f32 %v4324, %v4325
  %v4327 = vand.u32 %v4326, 4294901760
  %4328 = vmatmul.mubr.f32.gmra.mrb[0].mxu0 %v4327
  %v4329 = vpop.f32.mrb[0].mxu0
  %v4330 = vadd.f32 0.0, %v4329
  %v4331 = vpop.f32.mrb[0].mxu0
  %4332 = vmatprep.mubr.f32.mxu0 0.0
  %v4333 = vand.u32 %v4254, 4294901760
  %v4334 = vsub.f32 %v4254, %v4333
  %v4335 = vand.u32 %v4334, 4294901760
  %v4336 = vsub.f32 %v4334, %v4335
  %v4337 = vand.u32 %v4336, 4294901760
  %4338 = vmatmul.mubr.f32.gmra.mrb[0].mxu0 %v4337
  %v4339 = vpop.f32.mrb[0].mxu0
  %v4340 = vadd.f32 0.0, %v4339
  %v4341 = vpop.f32.mrb[0].mxu0
  %4342 = vdwg.mxu0
  %4343 = vmatprep.subr.mxu0 0.0
  %v4344 = vand.u32 %v4247, 4294901760
  %v4345 = vsub.f32 %v4247, %v4344
  %v4346 = vand.u32 %v4345, 4294901760
  %v4347 = vsub.f32 %v4345, %v4346
  %v4348 = vand.u32 %v4347, 4294901760
  %4349 = vmatpush1.msra.mxu0 %v4348
  %4350 = vmatprep.subr.mxu0 0.0
  %v4351 = vand.u32 %v4249, 4294901760
  %v4352 = vsub.f32 %v4249, %v4351
  %v4353 = vand.u32 %v4352, 4294901760
  %v4354 = vsub.f32 %v4352, %v4353
  %v4355 = vand.u32 %v4354, 4294901760
  %4356 = vmatpush1.msra.mxu0 %v4355
  %4357 = vmatprep.subr.mxu0 0.0
  %4358 = vmatpush1.msra.mxu0 0.0
  %4359 = vmatprep.subr.mxu0 0.0
  %4360 = vmatpush1.msra.mxu0 0.0
  %4361 = vmatprep.subr.mxu0 0.0
  %4362 = vmatpush1.msra.mxu0 0.0
  %4363 = vmatprep.subr.mxu0 0.0
  %4364 = vmatpush1.msra.mxu0 0.0
  %4365 = vmatprep.subr.mxu0 0.0
  %4366 = vmatpush1.msra.mxu0 0.0
  %4367 = vmatprep.subr.mxu0 0.0
  %4368 = vmatpush1.msra.mxu0 0.0
  %4369 = vmatprep.subr.mxu0 0.0
  %4370 = vmatpush1.msra.mxu0 0.0
  %4371 = vmatprep.subr.mxu0 0.0
  %4372 = vmatpush1.msra.mxu0 0.0
  %4373 = vmatprep.subr.mxu0 0.0
  %4374 = vmatpush1.msra.mxu0 0.0
  %4375 = vmatprep.subr.mxu0 0.0
  %4376 = vmatpush1.msra.mxu0 0.0
  %4377 = vmatprep.subr.mxu0 0.0
  %4378 = vmatpush1.msra.mxu0 0.0
  %4379 = vmatprep.subr.mxu0 0.0
  %4380 = vmatpush1.msra.mxu0 0.0
  %4381 = vmatprep.subr.mxu0 0.0
  %4382 = vmatpush1.msra.mxu0 0.0
  %4383 = vmatprep.subr.mxu0 0.0
  %4384 = vmatpush1.msra.mxu0 0.0
  %4385 = vmatprep.subr.mxu0 0.0
  %4386 = vmatpush1.msra.mxu0 0.0
  %4387 = vmatprep.subr.mxu0 0.0
  %4388 = vmatpush1.msra.mxu0 0.0
  %4389 = vmatprep.subr.mxu0 0.0
  %4390 = vmatpush1.msra.mxu0 0.0
  %4391 = vmatprep.subr.mxu0 0.0
  %4392 = vmatpush1.msra.mxu0 0.0
  %4393 = vmatprep.subr.mxu0 0.0
  %4394 = vmatpush1.msra.mxu0 0.0
  %4395 = vmatprep.subr.mxu0 0.0
  %4396 = vmatpush1.msra.mxu0 0.0
  %4397 = vmatprep.subr.mxu0 0.0
  %4398 = vmatpush1.msra.mxu0 0.0
  %4399 = vmatprep.subr.mxu0 0.0
  %4400 = vmatpush1.msra.mxu0 0.0
  %4401 = vmatprep.subr.mxu0 0.0
  %4402 = vmatpush1.msra.mxu0 0.0
  %4403 = vmatprep.subr.mxu0 0.0
  %4404 = vmatpush1.msra.mxu0 0.0
  %4405 = vmatprep.subr.mxu0 0.0
  %4406 = vmatpush1.msra.mxu0 0.0
  %4407 = vmatprep.subr.mxu0 0.0
  %4408 = vmatpush1.msra.mxu0 0.0
  %4409 = vmatprep.subr.mxu0 0.0
  %4410 = vmatpush1.msra.mxu0 0.0
  %4411 = vmatprep.subr.mxu0 0.0
  %4412 = vmatpush1.msra.mxu0 0.0
  %4413 = vmatprep.subr.mxu0 0.0
  %4414 = vmatpush1.msra.mxu0 0.0
  %4415 = vmatprep.subr.mxu0 0.0
  %4416 = vmatpush1.msra.mxu0 0.0
  %4417 = vmatprep.mubr.f32.mxu0 0.0
  %v4418 = vand.u32 %v4251, 4294901760
  %4419 = vmatmul.mubr.f32.gmra.mrb[0].mxu0 %v4418
  %v4420 = vpop.f32.mrb[0].mxu0
  %v4421 = vadd.f32 %v4330, %v4420
  %v4422 = vpop.f32.mrb[0].mxu0
  %4423 = vmatprep.mubr.f32.mxu0 0.0
  %v4424 = vand.u32 %v4254, 4294901760
  %4425 = vmatmul.mubr.f32.gmra.mrb[0].mxu0 %v4424
  %v4426 = vpop.f32.mrb[0].mxu0
  %v4427 = vadd.f32 %v4340, %v4426
  %v4428 = vpop.f32.mrb[0].mxu0
  %4429 = vdwg.mxu0
  %4430 = vmatprep.subr.mxu0 0.0
  %v4431 = vand.u32 %v4247, 4294901760
  %v4432 = vsub.f32 %v4247, %v4431
  %4433 = vmatpush1.msra.mxu0 %v4432
  %4434 = vmatprep.subr.mxu0 0.0
  %v4435 = vand.u32 %v4249, 4294901760
  %v4436 = vsub.f32 %v4249, %v4435
  %4437 = vmatpush1.msra.mxu0 %v4436
  %4438 = vmatprep.subr.mxu0 0.0
  %4439 = vmatpush1.msra.mxu0 0.0
  %4440 = vmatprep.subr.mxu0 0.0
  %4441 = vmatpush1.msra.mxu0 0.0
  %4442 = vmatprep.subr.mxu0 0.0
  %4443 = vmatpush1.msra.mxu0 0.0
  %4444 = vmatprep.subr.mxu0 0.0
  %4445 = vmatpush1.msra.mxu0 0.0
  %4446 = vmatprep.subr.mxu0 0.0
  %4447 = vmatpush1.msra.mxu0 0.0
  %4448 = vmatprep.subr.mxu0 0.0
  %4449 = vmatpush1.msra.mxu0 0.0
  %4450 = vmatprep.subr.mxu0 0.0
  %4451 = vmatpush1.msra.mxu0 0.0
  %4452 = vmatprep.subr.mxu0 0.0
  %4453 = vmatpush1.msra.mxu0 0.0
  %4454 = vmatprep.subr.mxu0 0.0
  %4455 = vmatpush1.msra.mxu0 0.0
  %4456 = vmatprep.subr.mxu0 0.0
  %4457 = vmatpush1.msra.mxu0 0.0
  %4458 = vmatprep.subr.mxu0 0.0
  %4459 = vmatpush1.msra.mxu0 0.0
  %4460 = vmatprep.subr.mxu0 0.0
  %4461 = vmatpush1.msra.mxu0 0.0
  %4462 = vmatprep.subr.mxu0 0.0
  %4463 = vmatpush1.msra.mxu0 0.0
  %4464 = vmatprep.subr.mxu0 0.0
  %4465 = vmatpush1.msra.mxu0 0.0
  %4466 = vmatprep.subr.mxu0 0.0
  %4467 = vmatpush1.msra.mxu0 0.0
  %4468 = vmatprep.subr.mxu0 0.0
  %4469 = vmatpush1.msra.mxu0 0.0
  %4470 = vmatprep.subr.mxu0 0.0
  %4471 = vmatpush1.msra.mxu0 0.0
  %4472 = vmatprep.subr.mxu0 0.0
  %4473 = vmatpush1.msra.mxu0 0.0
  %4474 = vmatprep.subr.mxu0 0.0
  %4475 = vmatpush1.msra.mxu0 0.0
  %4476 = vmatprep.subr.mxu0 0.0
  %4477 = vmatpush1.msra.mxu0 0.0
  %4478 = vmatprep.subr.mxu0 0.0
  %4479 = vmatpush1.msra.mxu0 0.0
  %4480 = vmatprep.subr.mxu0 0.0
  %4481 = vmatpush1.msra.mxu0 0.0
  %4482 = vmatprep.subr.mxu0 0.0
  %4483 = vmatpush1.msra.mxu0 0.0
  %4484 = vmatprep.subr.mxu0 0.0
  %4485 = vmatpush1.msra.mxu0 0.0
  %4486 = vmatprep.subr.mxu0 0.0
  %4487 = vmatpush1.msra.mxu0 0.0
  %4488 = vmatprep.subr.mxu0 0.0
  %4489 = vmatpush1.msra.mxu0 0.0
  %4490 = vmatprep.subr.mxu0 0.0
  %4491 = vmatpush1.msra.mxu0 0.0
  %4492 = vmatprep.subr.mxu0 0.0
  %4493 = vmatpush1.msra.mxu0 0.0
  %4494 = vmatprep.subr.mxu0 0.0
  %4495 = vmatpush1.msra.mxu0 0.0
  %4496 = vmatprep.subr.mxu0 0.0
  %4497 = vmatpush1.msra.mxu0 0.0
  %4498 = vmatprep.mubr.f32.mxu0 0.0
  %v4499 = vand.u32 %v4251, 4294901760
  %v4500 = vsub.f32 %v4251, %v4499
  %4501 = vmatmul.mubr.f32.gmra.mrb[0].mxu0 %v4500
  %v4502 = vpop.f32.mrb[0].mxu0
  %v4503 = vadd.f32 %v4421, %v4502
  %v4504 = vpop.f32.mrb[0].mxu0
  %4505 = vmatprep.mubr.f32.mxu0 0.0
  %v4506 = vand.u32 %v4254, 4294901760
  %v4507 = vsub.f32 %v4254, %v4506
  %4508 = vmatmul.mubr.f32.gmra.mrb[0].mxu0 %v4507
  %v4509 = vpop.f32.mrb[0].mxu0
  %v4510 = vadd.f32 %v4427, %v4509
  %v4511 = vpop.f32.mrb[0].mxu0
  %4512 = vdwg.mxu0
  %4513 = vmatprep.subr.mxu0 0.0
  %v4514 = vand.u32 %v4247, 4294901760
  %4515 = vmatpush1.msra.mxu0 %v4514
  %4516 = vmatprep.subr.mxu0 0.0
  %v4517 = vand.u32 %v4249, 4294901760
  %4518 = vmatpush1.msra.mxu0 %v4517
  %4519 = vmatprep.subr.mxu0 0.0
  %4520 = vmatpush1.msra.mxu0 0.0
  %4521 = vmatprep.subr.mxu0 0.0
  %4522 = vmatpush1.msra.mxu0 0.0
  %4523 = vmatprep.subr.mxu0 0.0
  %4524 = vmatpush1.msra.mxu0 0.0
  %4525 = vmatprep.subr.mxu0 0.0
  %4526 = vmatpush1.msra.mxu0 0.0
  %4527 = vmatprep.subr.mxu0 0.0
  %4528 = vmatpush1.msra.mxu0 0.0
  %4529 = vmatprep.subr.mxu0 0.0
  %4530 = vmatpush1.msra.mxu0 0.0
  %4531 = vmatprep.subr.mxu0 0.0
  %4532 = vmatpush1.msra.mxu0 0.0
  %4533 = vmatprep.subr.mxu0 0.0
  %4534 = vmatpush1.msra.mxu0 0.0
  %4535 = vmatprep.subr.mxu0 0.0
  %4536 = vmatpush1.msra.mxu0 0.0
  %4537 = vmatprep.subr.mxu0 0.0
  %4538 = vmatpush1.msra.mxu0 0.0
  %4539 = vmatprep.subr.mxu0 0.0
  %4540 = vmatpush1.msra.mxu0 0.0
  %4541 = vmatprep.subr.mxu0 0.0
  %4542 = vmatpush1.msra.mxu0 0.0
  %4543 = vmatprep.subr.mxu0 0.0
  %4544 = vmatpush1.msra.mxu0 0.0
  %4545 = vmatprep.subr.mxu0 0.0
  %4546 = vmatpush1.msra.mxu0 0.0
  %4547 = vmatprep.subr.mxu0 0.0
  %4548 = vmatpush1.msra.mxu0 0.0
  %4549 = vmatprep.subr.mxu0 0.0
  %4550 = vmatpush1.msra.mxu0 0.0
  %4551 = vmatprep.subr.mxu0 0.0
  %4552 = vmatpush1.msra.mxu0 0.0
  %4553 = vmatprep.subr.mxu0 0.0
  %4554 = vmatpush1.msra.mxu0 0.0
  %4555 = vmatprep.subr.mxu0 0.0
  %4556 = vmatpush1.msra.mxu0 0.0
  %4557 = vmatprep.subr.mxu0 0.0
  %4558 = vmatpush1.msra.mxu0 0.0
  %4559 = vmatprep.subr.mxu0 0.0
  %4560 = vmatpush1.msra.mxu0 0.0
  %4561 = vmatprep.subr.mxu0 0.0
  %4562 = vmatpush1.msra.mxu0 0.0
  %4563 = vmatprep.subr.mxu0 0.0
  %4564 = vmatpush1.msra.mxu0 0.0
  %4565 = vmatprep.subr.mxu0 0.0
  %4566 = vmatpush1.msra.mxu0 0.0
  %4567 = vmatprep.subr.mxu0 0.0
  %4568 = vmatpush1.msra.mxu0 0.0
  %4569 = vmatprep.subr.mxu0 0.0
  %4570 = vmatpush1.msra.mxu0 0.0
  %4571 = vmatprep.subr.mxu0 0.0
  %4572 = vmatpush1.msra.mxu0 0.0
  %4573 = vmatprep.subr.mxu0 0.0
  %4574 = vmatpush1.msra.mxu0 0.0
  %4575 = vmatprep.subr.mxu0 0.0
  %4576 = vmatpush1.msra.mxu0 0.0
  %4577 = vmatprep.subr.mxu0 0.0
  %4578 = vmatpush1.msra.mxu0 0.0
  %4579 = vmatprep.mubr.f32.mxu0 0.0
  %v4580 = vand.u32 %v4251, 4294901760
  %v4581 = vsub.f32 %v4251, %v4580
  %v4582 = vand.u32 %v4581, 4294901760
  %4583 = vmatmul.mubr.f32.gmra.mrb[0].mxu0 %v4582
  %v4584 = vpop.f32.mrb[0].mxu0
  %v4585 = vadd.f32 %v4503, %v4584
  %v4586 = vpop.f32.mrb[0].mxu0
  %4587 = vmatprep.mubr.f32.mxu0 0.0
  %v4588 = vand.u32 %v4254, 4294901760
  %v4589 = vsub.f32 %v4254, %v4588
  %v4590 = vand.u32 %v4589, 4294901760
  %4591 = vmatmul.mubr.f32.gmra.mrb[0].mxu0 %v4590
  %v4592 = vpop.f32.mrb[0].mxu0
  %v4593 = vadd.f32 %v4510, %v4592
  %v4594 = vpop.f32.mrb[0].mxu0
  %4595 = vdwg.mxu0
  %4596 = vmatprep.subr.mxu0 0.0
  %v4597 = vand.u32 %v4247, 4294901760
  %v4598 = vsub.f32 %v4247, %v4597
  %v4599 = vand.u32 %v4598, 4294901760
  %4600 = vmatpush1.msra.mxu0 %v4599
  %4601 = vmatprep.subr.mxu0 0.0
  %v4602 = vand.u32 %v4249, 4294901760
  %v4603 = vsub.f32 %v4249, %v4602
  %v4604 = vand.u32 %v4603, 4294901760
  %4605 = vmatpush1.msra.mxu0 %v4604
  %4606 = vmatprep.subr.mxu0 0.0
  %4607 = vmatpush1.msra.mxu0 0.0
  %4608 = vmatprep.subr.mxu0 0.0
  %4609 = vmatpush1.msra.mxu0 0.0
  %4610 = vmatprep.subr.mxu0 0.0
  %4611 = vmatpush1.msra.mxu0 0.0
  %4612 = vmatprep.subr.mxu0 0.0
  %4613 = vmatpush1.msra.mxu0 0.0
  %4614 = vmatprep.subr.mxu0 0.0
  %4615 = vmatpush1.msra.mxu0 0.0
  %4616 = vmatprep.subr.mxu0 0.0
  %4617 = vmatpush1.msra.mxu0 0.0
  %4618 = vmatprep.subr.mxu0 0.0
  %4619 = vmatpush1.msra.mxu0 0.0
  %4620 = vmatprep.subr.mxu0 0.0
  %4621 = vmatpush1.msra.mxu0 0.0
  %4622 = vmatprep.subr.mxu0 0.0
  %4623 = vmatpush1.msra.mxu0 0.0
  %4624 = vmatprep.subr.mxu0 0.0
  %4625 = vmatpush1.msra.mxu0 0.0
  %4626 = vmatprep.subr.mxu0 0.0
  %4627 = vmatpush1.msra.mxu0 0.0
  %4628 = vmatprep.subr.mxu0 0.0
  %4629 = vmatpush1.msra.mxu0 0.0
  %4630 = vmatprep.subr.mxu0 0.0
  %4631 = vmatpush1.msra.mxu0 0.0
  %4632 = vmatprep.subr.mxu0 0.0
  %4633 = vmatpush1.msra.mxu0 0.0
  %4634 = vmatprep.subr.mxu0 0.0
  %4635 = vmatpush1.msra.mxu0 0.0
  %4636 = vmatprep.subr.mxu0 0.0
  %4637 = vmatpush1.msra.mxu0 0.0
  %4638 = vmatprep.subr.mxu0 0.0
  %4639 = vmatpush1.msra.mxu0 0.0
  %4640 = vmatprep.subr.mxu0 0.0
  %4641 = vmatpush1.msra.mxu0 0.0
  %4642 = vmatprep.subr.mxu0 0.0
  %4643 = vmatpush1.msra.mxu0 0.0
  %4644 = vmatprep.subr.mxu0 0.0
  %4645 = vmatpush1.msra.mxu0 0.0
  %4646 = vmatprep.subr.mxu0 0.0
  %4647 = vmatpush1.msra.mxu0 0.0
  %4648 = vmatprep.subr.mxu0 0.0
  %4649 = vmatpush1.msra.mxu0 0.0
  %4650 = vmatprep.subr.mxu0 0.0
  %4651 = vmatpush1.msra.mxu0 0.0
  %4652 = vmatprep.subr.mxu0 0.0
  %4653 = vmatpush1.msra.mxu0 0.0
  %4654 = vmatprep.subr.mxu0 0.0
  %4655 = vmatpush1.msra.mxu0 0.0
  %4656 = vmatprep.subr.mxu0 0.0
  %4657 = vmatpush1.msra.mxu0 0.0
  %4658 = vmatprep.subr.mxu0 0.0
  %4659 = vmatpush1.msra.mxu0 0.0
  %4660 = vmatprep.subr.mxu0 0.0
  %4661 = vmatpush1.msra.mxu0 0.0
  %4662 = vmatprep.subr.mxu0 0.0
  %4663 = vmatpush1.msra.mxu0 0.0
  %4664 = vmatprep.subr.mxu0 0.0
  %4665 = vmatpush1.msra.mxu0 0.0
  %4666 = vmatprep.mubr.f32.mxu0 0.0
  %v4667 = vand.u32 %v4251, 4294901760
  %4668 = vmatmul.mubr.f32.gmra.mrb[0].mxu0 %v4667
  %v4669 = vpop.f32.mrb[0].mxu0
  %v4670 = vadd.f32 %v4585, %v4669
  %v4671 = vpop.f32.mrb[0].mxu0
  %4672 = vmatprep.mubr.f32.mxu0 0.0
  %v4673 = vand.u32 %v4254, 4294901760
  %4674 = vmatmul.mubr.f32.gmra.mrb[0].mxu0 %v4673
  %v4675 = vpop.f32.mrb[0].mxu0
  %v4676 = vadd.f32 %v4593, %v4675
  %v4677 = vpop.f32.mrb[0].mxu0
  %4678 = vdwg.mxu0
  %4679 = vmatprep.subr.mxu0 0.0
  %v4680 = vand.u32 %v4247, 4294901760
  %4681 = vmatpush1.msra.mxu0 %v4680
  %4682 = vmatprep.subr.mxu0 0.0
  %v4683 = vand.u32 %v4249, 4294901760
  %4684 = vmatpush1.msra.mxu0 %v4683
  %4685 = vmatprep.subr.mxu0 0.0
  %4686 = vmatpush1.msra.mxu0 0.0
  %4687 = vmatprep.subr.mxu0 0.0
  %4688 = vmatpush1.msra.mxu0 0.0
  %4689 = vmatprep.subr.mxu0 0.0
  %4690 = vmatpush1.msra.mxu0 0.0
  %4691 = vmatprep.subr.mxu0 0.0
  %4692 = vmatpush1.msra.mxu0 0.0
  %4693 = vmatprep.subr.mxu0 0.0
  %4694 = vmatpush1.msra.mxu0 0.0
  %4695 = vmatprep.subr.mxu0 0.0
  %4696 = vmatpush1.msra.mxu0 0.0
  %4697 = vmatprep.subr.mxu0 0.0
  %4698 = vmatpush1.msra.mxu0 0.0
  %4699 = vmatprep.subr.mxu0 0.0
  %4700 = vmatpush1.msra.mxu0 0.0
  %4701 = vmatprep.subr.mxu0 0.0
  %4702 = vmatpush1.msra.mxu0 0.0
  %4703 = vmatprep.subr.mxu0 0.0
  %4704 = vmatpush1.msra.mxu0 0.0
  %4705 = vmatprep.subr.mxu0 0.0
  %4706 = vmatpush1.msra.mxu0 0.0
  %4707 = vmatprep.subr.mxu0 0.0
  %4708 = vmatpush1.msra.mxu0 0.0
  %4709 = vmatprep.subr.mxu0 0.0
  %4710 = vmatpush1.msra.mxu0 0.0
  %4711 = vmatprep.subr.mxu0 0.0
  %4712 = vmatpush1.msra.mxu0 0.0
  %4713 = vmatprep.subr.mxu0 0.0
  %4714 = vmatpush1.msra.mxu0 0.0
  %4715 = vmatprep.subr.mxu0 0.0
  %4716 = vmatpush1.msra.mxu0 0.0
  %4717 = vmatprep.subr.mxu0 0.0
  %4718 = vmatpush1.msra.mxu0 0.0
  %4719 = vmatprep.subr.mxu0 0.0
  %4720 = vmatpush1.msra.mxu0 0.0
  %4721 = vmatprep.subr.mxu0 0.0
  %4722 = vmatpush1.msra.mxu0 0.0
  %4723 = vmatprep.subr.mxu0 0.0
  %4724 = vmatpush1.msra.mxu0 0.0
  %4725 = vmatprep.subr.mxu0 0.0
  %4726 = vmatpush1.msra.mxu0 0.0
  %4727 = vmatprep.subr.mxu0 0.0
  %4728 = vmatpush1.msra.mxu0 0.0
  %4729 = vmatprep.subr.mxu0 0.0
  %4730 = vmatpush1.msra.mxu0 0.0
  %4731 = vmatprep.subr.mxu0 0.0
  %4732 = vmatpush1.msra.mxu0 0.0
  %4733 = vmatprep.subr.mxu0 0.0
  %4734 = vmatpush1.msra.mxu0 0.0
  %4735 = vmatprep.subr.mxu0 0.0
  %4736 = vmatpush1.msra.mxu0 0.0
  %4737 = vmatprep.subr.mxu0 0.0
  %4738 = vmatpush1.msra.mxu0 0.0
  %4739 = vmatprep.subr.mxu0 0.0
  %4740 = vmatpush1.msra.mxu0 0.0
  %4741 = vmatprep.subr.mxu0 0.0
  %4742 = vmatpush1.msra.mxu0 0.0
  %4743 = vmatprep.subr.mxu0 0.0
  %4744 = vmatpush1.msra.mxu0 0.0
  %4745 = vmatprep.mubr.f32.mxu0 0.0
  %v4746 = vand.u32 %v4251, 4294901760
  %4747 = vmatmul.mubr.f32.gmra.mrb[0].mxu0 %v4746
  %v4748 = vpop.f32.mrb[0].mxu0
  %v4749 = vadd.f32 %v4670, %v4748
  %v4750 = vpop.f32.mrb[0].mxu0
  %4751 = vmatprep.mubr.f32.mxu0 0.0
  %v4752 = vand.u32 %v4254, 4294901760
  %4753 = vmatmul.mubr.f32.gmra.mrb[0].mxu0 %v4752
  %v4754 = vpop.f32.mrb[0].mxu0
  %v4755 = vadd.f32 %v4676, %v4754
  %v4756 = vpop.f32.mrb[0].mxu0
  %4757 = vdwg.mxu0
  %v4758 = vmax.f32 %v4749, 1e-38
  %v4759 = vmax.f32 %v4755, 1e-38
  %v4760 = vlog2.pop %v4758
  %v4761 = vmul.f32 %v4760, 0.6931472
  %v4762 = vlog2.pop %v4759
  %v4763 = vmul.f32 %v4762, 0.6931472
  %v4764 = vadd.f32 %v4761, %v4243
  %v4765 = vadd.f32 %v4763, %v4243
  %v4766 = vld [vmem:[%s3216] sm:$0xff]
  %v4767 = vld [vmem:[%s3216 + $0x8] sm:$0xff]
  %v4768 = vadd.f32 %v4766, %v4764
  %v4769 = vadd.f32 %v4767, %v4765
  %v4770 = vmax.f32 %v4768, %v4769
  %v4771 = vrot.slane %v4770, 4
  %v4772 = vmax.f32 %v4770, %v4771
  %v4773 = vrot.slane %v4772, 2
  %v4774 = vmax.f32 %v4772, %v4773
  %v4775 = vrot.slane %v4774, 1
  %v4776 = vmax.f32 %v4774, %v4775
  %v4777 = vsub.f32 %v4768, %v4776
  %v4778 = vsub.f32 %v4769, %v4776
  %v4779 = vmul.f32 %v4777, 1.442695
  %v4780 = vpow.pop %v4779
  %v4781 = vmul.f32 %v4778, 1.442695
  %v4782 = vpow.pop %v4781
  %4783 = vmatprep.subr.mxu0 0.0
  %v4784 = vand.u32 %v4780, 4294901760
  %4785 = vmatpush1.msra.mxu0 %v4784
  %4786 = vmatprep.subr.mxu0 0.0
  %v4787 = vand.u32 %v4782, 4294901760
  %4788 = vmatpush1.msra.mxu0 %v4787
  %4789 = vmatprep.subr.mxu0 0.0
  %4790 = vmatpush1.msra.mxu0 0.0
  %4791 = vmatprep.subr.mxu0 0.0
  %4792 = vmatpush1.msra.mxu0 0.0
  %4793 = vmatprep.subr.mxu0 0.0
  %4794 = vmatpush1.msra.mxu0 0.0
  %4795 = vmatprep.subr.mxu0 0.0
  %4796 = vmatpush1.msra.mxu0 0.0
  %4797 = vmatprep.subr.mxu0 0.0
  %4798 = vmatpush1.msra.mxu0 0.0
  %4799 = vmatprep.subr.mxu0 0.0
  %4800 = vmatpush1.msra.mxu0 0.0
  %4801 = vmatprep.subr.mxu0 0.0
  %4802 = vmatpush1.msra.mxu0 0.0
  %4803 = vmatprep.subr.mxu0 0.0
  %4804 = vmatpush1.msra.mxu0 0.0
  %4805 = vmatprep.subr.mxu0 0.0
  %4806 = vmatpush1.msra.mxu0 0.0
  %4807 = vmatprep.subr.mxu0 0.0
  %4808 = vmatpush1.msra.mxu0 0.0
  %4809 = vmatprep.subr.mxu0 0.0
  %4810 = vmatpush1.msra.mxu0 0.0
  %4811 = vmatprep.subr.mxu0 0.0
  %4812 = vmatpush1.msra.mxu0 0.0
  %4813 = vmatprep.subr.mxu0 0.0
  %4814 = vmatpush1.msra.mxu0 0.0
  %4815 = vmatprep.subr.mxu0 0.0
  %4816 = vmatpush1.msra.mxu0 0.0
  %4817 = vmatprep.subr.mxu0 0.0
  %4818 = vmatpush1.msra.mxu0 0.0
  %4819 = vmatprep.subr.mxu0 0.0
  %4820 = vmatpush1.msra.mxu0 0.0
  %4821 = vmatprep.subr.mxu0 0.0
  %4822 = vmatpush1.msra.mxu0 0.0
  %4823 = vmatprep.subr.mxu0 0.0
  %4824 = vmatpush1.msra.mxu0 0.0
  %4825 = vmatprep.subr.mxu0 0.0
  %4826 = vmatpush1.msra.mxu0 0.0
  %4827 = vmatprep.subr.mxu0 0.0
  %4828 = vmatpush1.msra.mxu0 0.0
  %4829 = vmatprep.subr.mxu0 0.0
  %4830 = vmatpush1.msra.mxu0 0.0
  %4831 = vmatprep.subr.mxu0 0.0
  %4832 = vmatpush1.msra.mxu0 0.0
  %4833 = vmatprep.subr.mxu0 0.0
  %4834 = vmatpush1.msra.mxu0 0.0
  %4835 = vmatprep.subr.mxu0 0.0
  %4836 = vmatpush1.msra.mxu0 0.0
  %4837 = vmatprep.subr.mxu0 0.0
  %4838 = vmatpush1.msra.mxu0 0.0
  %4839 = vmatprep.subr.mxu0 0.0
  %4840 = vmatpush1.msra.mxu0 0.0
  %4841 = vmatprep.subr.mxu0 0.0
  %4842 = vmatpush1.msra.mxu0 0.0
  %4843 = vmatprep.subr.mxu0 0.0
  %4844 = vmatpush1.msra.mxu0 0.0
  %4845 = vmatprep.subr.mxu0 0.0
  %4846 = vmatpush1.msra.mxu0 0.0
  %4847 = vmatprep.subr.mxu0 0.0
  %4848 = vmatpush1.msra.mxu0 0.0
  %4849 = vmatprep.mubr.f32.mxu0 0.0
  %v4850 = vand.u32 %v3764, 4294901760
  %v4851 = vsub.f32 %v3764, %v4850
  %v4852 = vand.u32 %v4851, 4294901760
  %v4853 = vsub.f32 %v4851, %v4852
  %v4854 = vand.u32 %v4853, 4294901760
  %4855 = vmatmul.mubr.f32.gmra.mrb[0].mxu0 %v4854
  %v4856 = vpop.f32.mrb[0].mxu0
  %v4857 = vadd.f32 0.0, %v4856
  %v4858 = vpop.f32.mrb[0].mxu0
  %4859 = vdwg.mxu0
  %4860 = vmatprep.subr.mxu0 0.0
  %v4861 = vand.u32 %v4780, 4294901760
  %v4862 = vsub.f32 %v4780, %v4861
  %v4863 = vand.u32 %v4862, 4294901760
  %v4864 = vsub.f32 %v4862, %v4863
  %v4865 = vand.u32 %v4864, 4294901760
  %4866 = vmatpush1.msra.mxu0 %v4865
  %4867 = vmatprep.subr.mxu0 0.0
  %v4868 = vand.u32 %v4782, 4294901760
  %v4869 = vsub.f32 %v4782, %v4868
  %v4870 = vand.u32 %v4869, 4294901760
  %v4871 = vsub.f32 %v4869, %v4870
  %v4872 = vand.u32 %v4871, 4294901760
  %4873 = vmatpush1.msra.mxu0 %v4872
  %4874 = vmatprep.subr.mxu0 0.0
  %4875 = vmatpush1.msra.mxu0 0.0
  %4876 = vmatprep.subr.mxu0 0.0
  %4877 = vmatpush1.msra.mxu0 0.0
  %4878 = vmatprep.subr.mxu0 0.0
  %4879 = vmatpush1.msra.mxu0 0.0
  %4880 = vmatprep.subr.mxu0 0.0
  %4881 = vmatpush1.msra.mxu0 0.0
  %4882 = vmatprep.subr.mxu0 0.0
  %4883 = vmatpush1.msra.mxu0 0.0
  %4884 = vmatprep.subr.mxu0 0.0
  %4885 = vmatpush1.msra.mxu0 0.0
  %4886 = vmatprep.subr.mxu0 0.0
  %4887 = vmatpush1.msra.mxu0 0.0
  %4888 = vmatprep.subr.mxu0 0.0
  %4889 = vmatpush1.msra.mxu0 0.0
  %4890 = vmatprep.subr.mxu0 0.0
  %4891 = vmatpush1.msra.mxu0 0.0
  %4892 = vmatprep.subr.mxu0 0.0
  %4893 = vmatpush1.msra.mxu0 0.0
  %4894 = vmatprep.subr.mxu0 0.0
  %4895 = vmatpush1.msra.mxu0 0.0
  %4896 = vmatprep.subr.mxu0 0.0
  %4897 = vmatpush1.msra.mxu0 0.0
  %4898 = vmatprep.subr.mxu0 0.0
  %4899 = vmatpush1.msra.mxu0 0.0
  %4900 = vmatprep.subr.mxu0 0.0
  %4901 = vmatpush1.msra.mxu0 0.0
  %4902 = vmatprep.subr.mxu0 0.0
  %4903 = vmatpush1.msra.mxu0 0.0
  %4904 = vmatprep.subr.mxu0 0.0
  %4905 = vmatpush1.msra.mxu0 0.0
  %4906 = vmatprep.subr.mxu0 0.0
  %4907 = vmatpush1.msra.mxu0 0.0
  %4908 = vmatprep.subr.mxu0 0.0
  %4909 = vmatpush1.msra.mxu0 0.0
  %4910 = vmatprep.subr.mxu0 0.0
  %4911 = vmatpush1.msra.mxu0 0.0
  %4912 = vmatprep.subr.mxu0 0.0
  %4913 = vmatpush1.msra.mxu0 0.0
  %4914 = vmatprep.subr.mxu0 0.0
  %4915 = vmatpush1.msra.mxu0 0.0
  %4916 = vmatprep.subr.mxu0 0.0
  %4917 = vmatpush1.msra.mxu0 0.0
  %4918 = vmatprep.subr.mxu0 0.0
  %4919 = vmatpush1.msra.mxu0 0.0
  %4920 = vmatprep.subr.mxu0 0.0
  %4921 = vmatpush1.msra.mxu0 0.0
  %4922 = vmatprep.subr.mxu0 0.0
  %4923 = vmatpush1.msra.mxu0 0.0
  %4924 = vmatprep.subr.mxu0 0.0
  %4925 = vmatpush1.msra.mxu0 0.0
  %4926 = vmatprep.subr.mxu0 0.0
  %4927 = vmatpush1.msra.mxu0 0.0
  %4928 = vmatprep.subr.mxu0 0.0
  %4929 = vmatpush1.msra.mxu0 0.0
  %4930 = vmatprep.subr.mxu0 0.0
  %4931 = vmatpush1.msra.mxu0 0.0
  %4932 = vmatprep.subr.mxu0 0.0
  %4933 = vmatpush1.msra.mxu0 0.0
  %4934 = vmatprep.mubr.f32.mxu0 0.0
  %v4935 = vand.u32 %v3764, 4294901760
  %4936 = vmatmul.mubr.f32.gmra.mrb[0].mxu0 %v4935
  %v4937 = vpop.f32.mrb[0].mxu0
  %v4938 = vadd.f32 %v4857, %v4937
  %v4939 = vpop.f32.mrb[0].mxu0
  %4940 = vdwg.mxu0
  %4941 = vmatprep.subr.mxu0 0.0
  %v4942 = vand.u32 %v4780, 4294901760
  %v4943 = vsub.f32 %v4780, %v4942
  %4944 = vmatpush1.msra.mxu0 %v4943
  %4945 = vmatprep.subr.mxu0 0.0
  %v4946 = vand.u32 %v4782, 4294901760
  %v4947 = vsub.f32 %v4782, %v4946
  %4948 = vmatpush1.msra.mxu0 %v4947
  %4949 = vmatprep.subr.mxu0 0.0
  %4950 = vmatpush1.msra.mxu0 0.0
  %4951 = vmatprep.subr.mxu0 0.0
  %4952 = vmatpush1.msra.mxu0 0.0
  %4953 = vmatprep.subr.mxu0 0.0
  %4954 = vmatpush1.msra.mxu0 0.0
  %4955 = vmatprep.subr.mxu0 0.0
  %4956 = vmatpush1.msra.mxu0 0.0
  %4957 = vmatprep.subr.mxu0 0.0
  %4958 = vmatpush1.msra.mxu0 0.0
  %4959 = vmatprep.subr.mxu0 0.0
  %4960 = vmatpush1.msra.mxu0 0.0
  %4961 = vmatprep.subr.mxu0 0.0
  %4962 = vmatpush1.msra.mxu0 0.0
  %4963 = vmatprep.subr.mxu0 0.0
  %4964 = vmatpush1.msra.mxu0 0.0
  %4965 = vmatprep.subr.mxu0 0.0
  %4966 = vmatpush1.msra.mxu0 0.0
  %4967 = vmatprep.subr.mxu0 0.0
  %4968 = vmatpush1.msra.mxu0 0.0
  %4969 = vmatprep.subr.mxu0 0.0
  %4970 = vmatpush1.msra.mxu0 0.0
  %4971 = vmatprep.subr.mxu0 0.0
  %4972 = vmatpush1.msra.mxu0 0.0
  %4973 = vmatprep.subr.mxu0 0.0
  %4974 = vmatpush1.msra.mxu0 0.0
  %4975 = vmatprep.subr.mxu0 0.0
  %4976 = vmatpush1.msra.mxu0 0.0
  %4977 = vmatprep.subr.mxu0 0.0
  %4978 = vmatpush1.msra.mxu0 0.0
  %4979 = vmatprep.subr.mxu0 0.0
  %4980 = vmatpush1.msra.mxu0 0.0
  %4981 = vmatprep.subr.mxu0 0.0
  %4982 = vmatpush1.msra.mxu0 0.0
  %4983 = vmatprep.subr.mxu0 0.0
  %4984 = vmatpush1.msra.mxu0 0.0
  %4985 = vmatprep.subr.mxu0 0.0
  %4986 = vmatpush1.msra.mxu0 0.0
  %4987 = vmatprep.subr.mxu0 0.0
  %4988 = vmatpush1.msra.mxu0 0.0
  %4989 = vmatprep.subr.mxu0 0.0
  %4990 = vmatpush1.msra.mxu0 0.0
  %4991 = vmatprep.subr.mxu0 0.0
  %4992 = vmatpush1.msra.mxu0 0.0
  %4993 = vmatprep.subr.mxu0 0.0
  %4994 = vmatpush1.msra.mxu0 0.0
  %4995 = vmatprep.subr.mxu0 0.0
  %4996 = vmatpush1.msra.mxu0 0.0
  %4997 = vmatprep.subr.mxu0 0.0
  %4998 = vmatpush1.msra.mxu0 0.0
  %4999 = vmatprep.subr.mxu0 0.0
  %5000 = vmatpush1.msra.mxu0 0.0
  %5001 = vmatprep.subr.mxu0 0.0
  %5002 = vmatpush1.msra.mxu0 0.0
  %5003 = vmatprep.subr.mxu0 0.0
  %5004 = vmatpush1.msra.mxu0 0.0
  %5005 = vmatprep.subr.mxu0 0.0
  %5006 = vmatpush1.msra.mxu0 0.0
  %5007 = vmatprep.subr.mxu0 0.0
  %5008 = vmatpush1.msra.mxu0 0.0
  %5009 = vmatprep.mubr.f32.mxu0 0.0
  %v5010 = vand.u32 %v3764, 4294901760
  %v5011 = vsub.f32 %v3764, %v5010
  %5012 = vmatmul.mubr.f32.gmra.mrb[0].mxu0 %v5011
  %v5013 = vpop.f32.mrb[0].mxu0
  %v5014 = vadd.f32 %v4938, %v5013
  %v5015 = vpop.f32.mrb[0].mxu0
  %5016 = vdwg.mxu0
  %5017 = vmatprep.subr.mxu0 0.0
  %v5018 = vand.u32 %v4780, 4294901760
  %5019 = vmatpush1.msra.mxu0 %v5018
  %5020 = vmatprep.subr.mxu0 0.0
  %v5021 = vand.u32 %v4782, 4294901760
  %5022 = vmatpush1.msra.mxu0 %v5021
  %5023 = vmatprep.subr.mxu0 0.0
  %5024 = vmatpush1.msra.mxu0 0.0
  %5025 = vmatprep.subr.mxu0 0.0
  %5026 = vmatpush1.msra.mxu0 0.0
  %5027 = vmatprep.subr.mxu0 0.0
  %5028 = vmatpush1.msra.mxu0 0.0
  %5029 = vmatprep.subr.mxu0 0.0
  %5030 = vmatpush1.msra.mxu0 0.0
  %5031 = vmatprep.subr.mxu0 0.0
  %5032 = vmatpush1.msra.mxu0 0.0
  %5033 = vmatprep.subr.mxu0 0.0
  %5034 = vmatpush1.msra.mxu0 0.0
  %5035 = vmatprep.subr.mxu0 0.0
  %5036 = vmatpush1.msra.mxu0 0.0
  %5037 = vmatprep.subr.mxu0 0.0
  %5038 = vmatpush1.msra.mxu0 0.0
  %5039 = vmatprep.subr.mxu0 0.0
  %5040 = vmatpush1.msra.mxu0 0.0
  %5041 = vmatprep.subr.mxu0 0.0
  %5042 = vmatpush1.msra.mxu0 0.0
  %5043 = vmatprep.subr.mxu0 0.0
  %5044 = vmatpush1.msra.mxu0 0.0
  %5045 = vmatprep.subr.mxu0 0.0
  %5046 = vmatpush1.msra.mxu0 0.0
  %5047 = vmatprep.subr.mxu0 0.0
  %5048 = vmatpush1.msra.mxu0 0.0
  %5049 = vmatprep.subr.mxu0 0.0
  %5050 = vmatpush1.msra.mxu0 0.0
  %5051 = vmatprep.subr.mxu0 0.0
  %5052 = vmatpush1.msra.mxu0 0.0
  %5053 = vmatprep.subr.mxu0 0.0
  %5054 = vmatpush1.msra.mxu0 0.0
  %5055 = vmatprep.subr.mxu0 0.0
  %5056 = vmatpush1.msra.mxu0 0.0
  %5057 = vmatprep.subr.mxu0 0.0
  %5058 = vmatpush1.msra.mxu0 0.0
  %5059 = vmatprep.subr.mxu0 0.0
  %5060 = vmatpush1.msra.mxu0 0.0
  %5061 = vmatprep.subr.mxu0 0.0
  %5062 = vmatpush1.msra.mxu0 0.0
  %5063 = vmatprep.subr.mxu0 0.0
  %5064 = vmatpush1.msra.mxu0 0.0
  %5065 = vmatprep.subr.mxu0 0.0
  %5066 = vmatpush1.msra.mxu0 0.0
  %5067 = vmatprep.subr.mxu0 0.0
  %5068 = vmatpush1.msra.mxu0 0.0
  %5069 = vmatprep.subr.mxu0 0.0
  %5070 = vmatpush1.msra.mxu0 0.0
  %5071 = vmatprep.subr.mxu0 0.0
  %5072 = vmatpush1.msra.mxu0 0.0
  %5073 = vmatprep.subr.mxu0 0.0
  %5074 = vmatpush1.msra.mxu0 0.0
  %5075 = vmatprep.subr.mxu0 0.0
  %5076 = vmatpush1.msra.mxu0 0.0
  %5077 = vmatprep.subr.mxu0 0.0
  %5078 = vmatpush1.msra.mxu0 0.0
  %5079 = vmatprep.subr.mxu0 0.0
  %5080 = vmatpush1.msra.mxu0 0.0
  %5081 = vmatprep.subr.mxu0 0.0
  %5082 = vmatpush1.msra.mxu0 0.0
  %5083 = vmatprep.mubr.f32.mxu0 0.0
  %v5084 = vand.u32 %v3764, 4294901760
  %v5085 = vsub.f32 %v3764, %v5084
  %v5086 = vand.u32 %v5085, 4294901760
  %5087 = vmatmul.mubr.f32.gmra.mrb[0].mxu0 %v5086
  %v5088 = vpop.f32.mrb[0].mxu0
  %v5089 = vadd.f32 %v5014, %v5088
  %v5090 = vpop.f32.mrb[0].mxu0
  %5091 = vdwg.mxu0
  %5092 = vmatprep.subr.mxu0 0.0
  %v5093 = vand.u32 %v4780, 4294901760
  %v5094 = vsub.f32 %v4780, %v5093
  %v5095 = vand.u32 %v5094, 4294901760
  %5096 = vmatpush1.msra.mxu0 %v5095
  %5097 = vmatprep.subr.mxu0 0.0
  %v5098 = vand.u32 %v4782, 4294901760
  %v5099 = vsub.f32 %v4782, %v5098
  %v5100 = vand.u32 %v5099, 4294901760
  %5101 = vmatpush1.msra.mxu0 %v5100
  %5102 = vmatprep.subr.mxu0 0.0
  %5103 = vmatpush1.msra.mxu0 0.0
  %5104 = vmatprep.subr.mxu0 0.0
  %5105 = vmatpush1.msra.mxu0 0.0
  %5106 = vmatprep.subr.mxu0 0.0
  %5107 = vmatpush1.msra.mxu0 0.0
  %5108 = vmatprep.subr.mxu0 0.0
  %5109 = vmatpush1.msra.mxu0 0.0
  %5110 = vmatprep.subr.mxu0 0.0
  %5111 = vmatpush1.msra.mxu0 0.0
  %5112 = vmatprep.subr.mxu0 0.0
  %5113 = vmatpush1.msra.mxu0 0.0
  %5114 = vmatprep.subr.mxu0 0.0
  %5115 = vmatpush1.msra.mxu0 0.0
  %5116 = vmatprep.subr.mxu0 0.0
  %5117 = vmatpush1.msra.mxu0 0.0
  %5118 = vmatprep.subr.mxu0 0.0
  %5119 = vmatpush1.msra.mxu0 0.0
  %5120 = vmatprep.subr.mxu0 0.0
  %5121 = vmatpush1.msra.mxu0 0.0
  %5122 = vmatprep.subr.mxu0 0.0
  %5123 = vmatpush1.msra.mxu0 0.0
  %5124 = vmatprep.subr.mxu0 0.0
  %5125 = vmatpush1.msra.mxu0 0.0
  %5126 = vmatprep.subr.mxu0 0.0
  %5127 = vmatpush1.msra.mxu0 0.0
  %5128 = vmatprep.subr.mxu0 0.0
  %5129 = vmatpush1.msra.mxu0 0.0
  %5130 = vmatprep.subr.mxu0 0.0
  %5131 = vmatpush1.msra.mxu0 0.0
  %5132 = vmatprep.subr.mxu0 0.0
  %5133 = vmatpush1.msra.mxu0 0.0
  %5134 = vmatprep.subr.mxu0 0.0
  %5135 = vmatpush1.msra.mxu0 0.0
  %5136 = vmatprep.subr.mxu0 0.0
  %5137 = vmatpush1.msra.mxu0 0.0
  %5138 = vmatprep.subr.mxu0 0.0
  %5139 = vmatpush1.msra.mxu0 0.0
  %5140 = vmatprep.subr.mxu0 0.0
  %5141 = vmatpush1.msra.mxu0 0.0
  %5142 = vmatprep.subr.mxu0 0.0
  %5143 = vmatpush1.msra.mxu0 0.0
  %5144 = vmatprep.subr.mxu0 0.0
  %5145 = vmatpush1.msra.mxu0 0.0
  %5146 = vmatprep.subr.mxu0 0.0
  %5147 = vmatpush1.msra.mxu0 0.0
  %5148 = vmatprep.subr.mxu0 0.0
  %5149 = vmatpush1.msra.mxu0 0.0
  %5150 = vmatprep.subr.mxu0 0.0
  %5151 = vmatpush1.msra.mxu0 0.0
  %5152 = vmatprep.subr.mxu0 0.0
  %5153 = vmatpush1.msra.mxu0 0.0
  %5154 = vmatprep.subr.mxu0 0.0
  %5155 = vmatpush1.msra.mxu0 0.0
  %5156 = vmatprep.subr.mxu0 0.0
  %5157 = vmatpush1.msra.mxu0 0.0
  %5158 = vmatprep.subr.mxu0 0.0
  %5159 = vmatpush1.msra.mxu0 0.0
  %5160 = vmatprep.subr.mxu0 0.0
  %5161 = vmatpush1.msra.mxu0 0.0
  %5162 = vmatprep.mubr.f32.mxu0 0.0
  %v5163 = vand.u32 %v3764, 4294901760
  %5164 = vmatmul.mubr.f32.gmra.mrb[0].mxu0 %v5163
  %v5165 = vpop.f32.mrb[0].mxu0
  %v5166 = vadd.f32 %v5089, %v5165
  %v5167 = vpop.f32.mrb[0].mxu0
  %5168 = vdwg.mxu0
  %5169 = vmatprep.subr.mxu0 0.0
  %v5170 = vand.u32 %v4780, 4294901760
  %5171 = vmatpush1.msra.mxu0 %v5170
  %5172 = vmatprep.subr.mxu0 0.0
  %v5173 = vand.u32 %v4782, 4294901760
  %5174 = vmatpush1.msra.mxu0 %v5173
  %5175 = vmatprep.subr.mxu0 0.0
  %5176 = vmatpush1.msra.mxu0 0.0
  %5177 = vmatprep.subr.mxu0 0.0
  %5178 = vmatpush1.msra.mxu0 0.0
  %5179 = vmatprep.subr.mxu0 0.0
  %5180 = vmatpush1.msra.mxu0 0.0
  %5181 = vmatprep.subr.mxu0 0.0
  %5182 = vmatpush1.msra.mxu0 0.0
  %5183 = vmatprep.subr.mxu0 0.0
  %5184 = vmatpush1.msra.mxu0 0.0
  %5185 = vmatprep.subr.mxu0 0.0
  %5186 = vmatpush1.msra.mxu0 0.0
  %5187 = vmatprep.subr.mxu0 0.0
  %5188 = vmatpush1.msra.mxu0 0.0
  %5189 = vmatprep.subr.mxu0 0.0
  %5190 = vmatpush1.msra.mxu0 0.0
  %5191 = vmatprep.subr.mxu0 0.0
  %5192 = vmatpush1.msra.mxu0 0.0
  %5193 = vmatprep.subr.mxu0 0.0
  %5194 = vmatpush1.msra.mxu0 0.0
  %5195 = vmatprep.subr.mxu0 0.0
  %5196 = vmatpush1.msra.mxu0 0.0
  %5197 = vmatprep.subr.mxu0 0.0
  %5198 = vmatpush1.msra.mxu0 0.0
  %5199 = vmatprep.subr.mxu0 0.0
  %5200 = vmatpush1.msra.mxu0 0.0
  %5201 = vmatprep.subr.mxu0 0.0
  %5202 = vmatpush1.msra.mxu0 0.0
  %5203 = vmatprep.subr.mxu0 0.0
  %5204 = vmatpush1.msra.mxu0 0.0
  %5205 = vmatprep.subr.mxu0 0.0
  %5206 = vmatpush1.msra.mxu0 0.0
  %5207 = vmatprep.subr.mxu0 0.0
  %5208 = vmatpush1.msra.mxu0 0.0
  %5209 = vmatprep.subr.mxu0 0.0
  %5210 = vmatpush1.msra.mxu0 0.0
  %5211 = vmatprep.subr.mxu0 0.0
  %5212 = vmatpush1.msra.mxu0 0.0
  %5213 = vmatprep.subr.mxu0 0.0
  %5214 = vmatpush1.msra.mxu0 0.0
  %5215 = vmatprep.subr.mxu0 0.0
  %5216 = vmatpush1.msra.mxu0 0.0
  %5217 = vmatprep.subr.mxu0 0.0
  %5218 = vmatpush1.msra.mxu0 0.0
  %5219 = vmatprep.subr.mxu0 0.0
  %5220 = vmatpush1.msra.mxu0 0.0
  %5221 = vmatprep.subr.mxu0 0.0
  %5222 = vmatpush1.msra.mxu0 0.0
  %5223 = vmatprep.subr.mxu0 0.0
  %5224 = vmatpush1.msra.mxu0 0.0
  %5225 = vmatprep.subr.mxu0 0.0
  %5226 = vmatpush1.msra.mxu0 0.0
  %5227 = vmatprep.subr.mxu0 0.0
  %5228 = vmatpush1.msra.mxu0 0.0
  %5229 = vmatprep.subr.mxu0 0.0
  %5230 = vmatpush1.msra.mxu0 0.0
  %5231 = vmatprep.subr.mxu0 0.0
  %5232 = vmatpush1.msra.mxu0 0.0
  %5233 = vmatprep.subr.mxu0 0.0
  %5234 = vmatpush1.msra.mxu0 0.0
  %5235 = vmatprep.mubr.f32.mxu0 0.0
  %v5236 = vand.u32 %v3764, 4294901760
  %5237 = vmatmul.mubr.f32.gmra.mrb[0].mxu0 %v5236
  %v5238 = vpop.f32.mrb[0].mxu0
  %v5239 = vadd.f32 %v5166, %v5238
  %v5240 = vpop.f32.mrb[0].mxu0
  %5241 = vdwg.mxu0
  %v5242 = vmax.f32 %v5239, 1e-38
  %v5243 = vlog2.pop %v5242
  %v5244 = vmul.f32 %v5243, 0.6931472
  %v5245 = vlaneseq
  %v5246 = vshrl.u32 %v5245, 7
  %v5247 = vsub.s32 5, %v5246
  %v5248 = vrot.slane %v5244, %v5247
  %v5249 = vsub.f32 %v5244, %v5248
  %s5250 = scalar_lea.vmem %s4, 48
  %5251 = vst [vmem:[%s5250] sm:$0x1f] %v5249
  %v5252 = vld [vmem:[%s3211] sm:$0xff]
  %v5253 = vld [vmem:[%s3211 + $0x8] sm:$0xff]
  %v5254 = vadd.f32 %v4764, %v5252
  %v5255 = vadd.f32 %v4765, %v5253
  %v5256 = vmax.f32 %v5254, %v5255
  %v5257 = vrot.slane %v5256, 4
  %v5258 = vmax.f32 %v5256, %v5257
  %v5259 = vrot.slane %v5258, 2
  %v5260 = vmax.f32 %v5258, %v5259
  %v5261 = vrot.slane %v5260, 1
  %v5262 = vmax.f32 %v5260, %v5261
  %v5263 = vsub.f32 %v5254, %v5262
  %v5264 = vsub.f32 %v5255, %v5262
  %v5265 = vmul.f32 %v5263, 1.442695
  %v5266 = vpow.pop %v5265
  %v5267 = vmul.f32 %v5264, 1.442695
  %v5268 = vpow.pop %v5267
  %5269 = vmatprep.subr.mxu0 0.0
  %v5270 = vand.u32 %v5266, 4294901760
  %5271 = vmatpush1.msra.mxu0 %v5270
  %5272 = vmatprep.subr.mxu0 0.0
  %v5273 = vand.u32 %v5268, 4294901760
  %5274 = vmatpush1.msra.mxu0 %v5273
  %5275 = vmatprep.subr.mxu0 0.0
  %5276 = vmatpush1.msra.mxu0 0.0
  %5277 = vmatprep.subr.mxu0 0.0
  %5278 = vmatpush1.msra.mxu0 0.0
  %5279 = vmatprep.subr.mxu0 0.0
  %5280 = vmatpush1.msra.mxu0 0.0
  %5281 = vmatprep.subr.mxu0 0.0
  %5282 = vmatpush1.msra.mxu0 0.0
  %5283 = vmatprep.subr.mxu0 0.0
  %5284 = vmatpush1.msra.mxu0 0.0
  %5285 = vmatprep.subr.mxu0 0.0
  %5286 = vmatpush1.msra.mxu0 0.0
  %5287 = vmatprep.subr.mxu0 0.0
  %5288 = vmatpush1.msra.mxu0 0.0
  %5289 = vmatprep.subr.mxu0 0.0
  %5290 = vmatpush1.msra.mxu0 0.0
  %5291 = vmatprep.subr.mxu0 0.0
  %5292 = vmatpush1.msra.mxu0 0.0
  %5293 = vmatprep.subr.mxu0 0.0
  %5294 = vmatpush1.msra.mxu0 0.0
  %5295 = vmatprep.subr.mxu0 0.0
  %5296 = vmatpush1.msra.mxu0 0.0
  %5297 = vmatprep.subr.mxu0 0.0
  %5298 = vmatpush1.msra.mxu0 0.0
  %5299 = vmatprep.subr.mxu0 0.0
  %5300 = vmatpush1.msra.mxu0 0.0
  %5301 = vmatprep.subr.mxu0 0.0
  %5302 = vmatpush1.msra.mxu0 0.0
  %5303 = vmatprep.subr.mxu0 0.0
  %5304 = vmatpush1.msra.mxu0 0.0
  %5305 = vmatprep.subr.mxu0 0.0
  %5306 = vmatpush1.msra.mxu0 0.0
  %5307 = vmatprep.subr.mxu0 0.0
  %5308 = vmatpush1.msra.mxu0 0.0
  %5309 = vmatprep.subr.mxu0 0.0
  %5310 = vmatpush1.msra.mxu0 0.0
  %5311 = vmatprep.subr.mxu0 0.0
  %5312 = vmatpush1.msra.mxu0 0.0
  %5313 = vmatprep.subr.mxu0 0.0
  %5314 = vmatpush1.msra.mxu0 0.0
  %5315 = vmatprep.subr.mxu0 0.0
  %5316 = vmatpush1.msra.mxu0 0.0
  %5317 = vmatprep.subr.mxu0 0.0
  %5318 = vmatpush1.msra.mxu0 0.0
  %5319 = vmatprep.subr.mxu0 0.0
  %5320 = vmatpush1.msra.mxu0 0.0
  %5321 = vmatprep.subr.mxu0 0.0
  %5322 = vmatpush1.msra.mxu0 0.0
  %5323 = vmatprep.subr.mxu0 0.0
  %5324 = vmatpush1.msra.mxu0 0.0
  %5325 = vmatprep.subr.mxu0 0.0
  %5326 = vmatpush1.msra.mxu0 0.0
  %5327 = vmatprep.subr.mxu0 0.0
  %5328 = vmatpush1.msra.mxu0 0.0
  %5329 = vmatprep.subr.mxu0 0.0
  %5330 = vmatpush1.msra.mxu0 0.0
  %5331 = vmatprep.subr.mxu0 0.0
  %5332 = vmatpush1.msra.mxu0 0.0
  %5333 = vmatprep.subr.mxu0 0.0
  %5334 = vmatpush1.msra.mxu0 0.0
  %5335 = vmatprep.mubr.f32.mxu0 0.0
  %v5336 = vand.u32 %v4251, 4294901760
  %v5337 = vsub.f32 %v4251, %v5336
  %v5338 = vand.u32 %v5337, 4294901760
  %v5339 = vsub.f32 %v5337, %v5338
  %v5340 = vand.u32 %v5339, 4294901760
  %5341 = vmatmul.mubr.f32.gmra.mrb[0].mxu0 %v5340
  %v5342 = vpop.f32.mrb[0].mxu0
  %v5343 = vadd.f32 0.0, %v5342
  %v5344 = vpop.f32.mrb[0].mxu0
  %5345 = vmatprep.mubr.f32.mxu0 0.0
  %v5346 = vand.u32 %v4254, 4294901760
  %v5347 = vsub.f32 %v4254, %v5346
  %v5348 = vand.u32 %v5347, 4294901760
  %v5349 = vsub.f32 %v5347, %v5348
  %v5350 = vand.u32 %v5349, 4294901760
  %5351 = vmatmul.mubr.f32.gmra.mrb[0].mxu0 %v5350
  %v5352 = vpop.f32.mrb[0].mxu0
  %v5353 = vadd.f32 0.0, %v5352
  %v5354 = vpop.f32.mrb[0].mxu0
  %5355 = vdwg.mxu0
  %5356 = vmatprep.subr.mxu0 0.0
  %v5357 = vand.u32 %v5266, 4294901760
  %v5358 = vsub.f32 %v5266, %v5357
  %v5359 = vand.u32 %v5358, 4294901760
  %v5360 = vsub.f32 %v5358, %v5359
  %v5361 = vand.u32 %v5360, 4294901760
  %5362 = vmatpush1.msra.mxu0 %v5361
  %5363 = vmatprep.subr.mxu0 0.0
  %v5364 = vand.u32 %v5268, 4294901760
  %v5365 = vsub.f32 %v5268, %v5364
  %v5366 = vand.u32 %v5365, 4294901760
  %v5367 = vsub.f32 %v5365, %v5366
  %v5368 = vand.u32 %v5367, 4294901760
  %5369 = vmatpush1.msra.mxu0 %v5368
  %5370 = vmatprep.subr.mxu0 0.0
  %5371 = vmatpush1.msra.mxu0 0.0
  %5372 = vmatprep.subr.mxu0 0.0
  %5373 = vmatpush1.msra.mxu0 0.0
  %5374 = vmatprep.subr.mxu0 0.0
  %5375 = vmatpush1.msra.mxu0 0.0
  %5376 = vmatprep.subr.mxu0 0.0
  %5377 = vmatpush1.msra.mxu0 0.0
  %5378 = vmatprep.subr.mxu0 0.0
  %5379 = vmatpush1.msra.mxu0 0.0
  %5380 = vmatprep.subr.mxu0 0.0
  %5381 = vmatpush1.msra.mxu0 0.0
  %5382 = vmatprep.subr.mxu0 0.0
  %5383 = vmatpush1.msra.mxu0 0.0
  %5384 = vmatprep.subr.mxu0 0.0
  %5385 = vmatpush1.msra.mxu0 0.0
  %5386 = vmatprep.subr.mxu0 0.0
  %5387 = vmatpush1.msra.mxu0 0.0
  %5388 = vmatprep.subr.mxu0 0.0
  %5389 = vmatpush1.msra.mxu0 0.0
  %5390 = vmatprep.subr.mxu0 0.0
  %5391 = vmatpush1.msra.mxu0 0.0
  %5392 = vmatprep.subr.mxu0 0.0
  %5393 = vmatpush1.msra.mxu0 0.0
  %5394 = vmatprep.subr.mxu0 0.0
  %5395 = vmatpush1.msra.mxu0 0.0
  %5396 = vmatprep.subr.mxu0 0.0
  %5397 = vmatpush1.msra.mxu0 0.0
  %5398 = vmatprep.subr.mxu0 0.0
  %5399 = vmatpush1.msra.mxu0 0.0
  %5400 = vmatprep.subr.mxu0 0.0
  %5401 = vmatpush1.msra.mxu0 0.0
  %5402 = vmatprep.subr.mxu0 0.0
  %5403 = vmatpush1.msra.mxu0 0.0
  %5404 = vmatprep.subr.mxu0 0.0
  %5405 = vmatpush1.msra.mxu0 0.0
  %5406 = vmatprep.subr.mxu0 0.0
  %5407 = vmatpush1.msra.mxu0 0.0
  %5408 = vmatprep.subr.mxu0 0.0
  %5409 = vmatpush1.msra.mxu0 0.0
  %5410 = vmatprep.subr.mxu0 0.0
  %5411 = vmatpush1.msra.mxu0 0.0
  %5412 = vmatprep.subr.mxu0 0.0
  %5413 = vmatpush1.msra.mxu0 0.0
  %5414 = vmatprep.subr.mxu0 0.0
  %5415 = vmatpush1.msra.mxu0 0.0
  %5416 = vmatprep.subr.mxu0 0.0
  %5417 = vmatpush1.msra.mxu0 0.0
  %5418 = vmatprep.subr.mxu0 0.0
  %5419 = vmatpush1.msra.mxu0 0.0
  %5420 = vmatprep.subr.mxu0 0.0
  %5421 = vmatpush1.msra.mxu0 0.0
  %5422 = vmatprep.subr.mxu0 0.0
  %5423 = vmatpush1.msra.mxu0 0.0
  %5424 = vmatprep.subr.mxu0 0.0
  %5425 = vmatpush1.msra.mxu0 0.0
  %5426 = vmatprep.subr.mxu0 0.0
  %5427 = vmatpush1.msra.mxu0 0.0
  %5428 = vmatprep.subr.mxu0 0.0
  %5429 = vmatpush1.msra.mxu0 0.0
  %5430 = vmatprep.mubr.f32.mxu0 0.0
  %v5431 = vand.u32 %v4251, 4294901760
  %5432 = vmatmul.mubr.f32.gmra.mrb[0].mxu0 %v5431
  %v5433 = vpop.f32.mrb[0].mxu0
  %v5434 = vadd.f32 %v5343, %v5433
  %v5435 = vpop.f32.mrb[0].mxu0
  %5436 = vmatprep.mubr.f32.mxu0 0.0
  %v5437 = vand.u32 %v4254, 4294901760
  %5438 = vmatmul.mubr.f32.gmra.mrb[0].mxu0 %v5437
  %v5439 = vpop.f32.mrb[0].mxu0
  %v5440 = vadd.f32 %v5353, %v5439
  %v5441 = vpop.f32.mrb[0].mxu0
  %5442 = vdwg.mxu0
  %5443 = vmatprep.subr.mxu0 0.0
  %v5444 = vand.u32 %v5266, 4294901760
  %v5445 = vsub.f32 %v5266, %v5444
  %5446 = vmatpush1.msra.mxu0 %v5445
  %5447 = vmatprep.subr.mxu0 0.0
  %v5448 = vand.u32 %v5268, 4294901760
  %v5449 = vsub.f32 %v5268, %v5448
  %5450 = vmatpush1.msra.mxu0 %v5449
  %5451 = vmatprep.subr.mxu0 0.0
  %5452 = vmatpush1.msra.mxu0 0.0
  %5453 = vmatprep.subr.mxu0 0.0
  %5454 = vmatpush1.msra.mxu0 0.0
  %5455 = vmatprep.subr.mxu0 0.0
  %5456 = vmatpush1.msra.mxu0 0.0
  %5457 = vmatprep.subr.mxu0 0.0
  %5458 = vmatpush1.msra.mxu0 0.0
  %5459 = vmatprep.subr.mxu0 0.0
  %5460 = vmatpush1.msra.mxu0 0.0
  %5461 = vmatprep.subr.mxu0 0.0
  %5462 = vmatpush1.msra.mxu0 0.0
  %5463 = vmatprep.subr.mxu0 0.0
  %5464 = vmatpush1.msra.mxu0 0.0
  %5465 = vmatprep.subr.mxu0 0.0
  %5466 = vmatpush1.msra.mxu0 0.0
  %5467 = vmatprep.subr.mxu0 0.0
  %5468 = vmatpush1.msra.mxu0 0.0
  %5469 = vmatprep.subr.mxu0 0.0
  %5470 = vmatpush1.msra.mxu0 0.0
  %5471 = vmatprep.subr.mxu0 0.0
  %5472 = vmatpush1.msra.mxu0 0.0
  %5473 = vmatprep.subr.mxu0 0.0
  %5474 = vmatpush1.msra.mxu0 0.0
  %5475 = vmatprep.subr.mxu0 0.0
  %5476 = vmatpush1.msra.mxu0 0.0
  %5477 = vmatprep.subr.mxu0 0.0
  %5478 = vmatpush1.msra.mxu0 0.0
  %5479 = vmatprep.subr.mxu0 0.0
  %5480 = vmatpush1.msra.mxu0 0.0
  %5481 = vmatprep.subr.mxu0 0.0
  %5482 = vmatpush1.msra.mxu0 0.0
  %5483 = vmatprep.subr.mxu0 0.0
  %5484 = vmatpush1.msra.mxu0 0.0
  %5485 = vmatprep.subr.mxu0 0.0
  %5486 = vmatpush1.msra.mxu0 0.0
  %5487 = vmatprep.subr.mxu0 0.0
  %5488 = vmatpush1.msra.mxu0 0.0
  %5489 = vmatprep.subr.mxu0 0.0
  %5490 = vmatpush1.msra.mxu0 0.0
  %5491 = vmatprep.subr.mxu0 0.0
  %5492 = vmatpush1.msra.mxu0 0.0
  %5493 = vmatprep.subr.mxu0 0.0
  %5494 = vmatpush1.msra.mxu0 0.0
  %5495 = vmatprep.subr.mxu0 0.0
  %5496 = vmatpush1.msra.mxu0 0.0
  %5497 = vmatprep.subr.mxu0 0.0
  %5498 = vmatpush1.msra.mxu0 0.0
  %5499 = vmatprep.subr.mxu0 0.0
  %5500 = vmatpush1.msra.mxu0 0.0
  %5501 = vmatprep.subr.mxu0 0.0
  %5502 = vmatpush1.msra.mxu0 0.0
  %5503 = vmatprep.subr.mxu0 0.0
  %5504 = vmatpush1.msra.mxu0 0.0
  %5505 = vmatprep.subr.mxu0 0.0
  %5506 = vmatpush1.msra.mxu0 0.0
  %5507 = vmatprep.subr.mxu0 0.0
  %5508 = vmatpush1.msra.mxu0 0.0
  %5509 = vmatprep.subr.mxu0 0.0
  %5510 = vmatpush1.msra.mxu0 0.0
  %5511 = vmatprep.mubr.f32.mxu0 0.0
  %v5512 = vand.u32 %v4251, 4294901760
  %v5513 = vsub.f32 %v4251, %v5512
  %5514 = vmatmul.mubr.f32.gmra.mrb[0].mxu0 %v5513
  %v5515 = vpop.f32.mrb[0].mxu0
  %v5516 = vadd.f32 %v5434, %v5515
  %v5517 = vpop.f32.mrb[0].mxu0
  %5518 = vmatprep.mubr.f32.mxu0 0.0
  %v5519 = vand.u32 %v4254, 4294901760
  %v5520 = vsub.f32 %v4254, %v5519
  %5521 = vmatmul.mubr.f32.gmra.mrb[0].mxu0 %v5520
  %v5522 = vpop.f32.mrb[0].mxu0
  %v5523 = vadd.f32 %v5440, %v5522
  %v5524 = vpop.f32.mrb[0].mxu0
  %5525 = vdwg.mxu0
  %5526 = vmatprep.subr.mxu0 0.0
  %v5527 = vand.u32 %v5266, 4294901760
  %5528 = vmatpush1.msra.mxu0 %v5527
  %5529 = vmatprep.subr.mxu0 0.0
  %v5530 = vand.u32 %v5268, 4294901760
  %5531 = vmatpush1.msra.mxu0 %v5530
  %5532 = vmatprep.subr.mxu0 0.0
  %5533 = vmatpush1.msra.mxu0 0.0
  %5534 = vmatprep.subr.mxu0 0.0
  %5535 = vmatpush1.msra.mxu0 0.0
  %5536 = vmatprep.subr.mxu0 0.0
  %5537 = vmatpush1.msra.mxu0 0.0
  %5538 = vmatprep.subr.mxu0 0.0
  %5539 = vmatpush1.msra.mxu0 0.0
  %5540 = vmatprep.subr.mxu0 0.0
  %5541 = vmatpush1.msra.mxu0 0.0
  %5542 = vmatprep.subr.mxu0 0.0
  %5543 = vmatpush1.msra.mxu0 0.0
  %5544 = vmatprep.subr.mxu0 0.0
  %5545 = vmatpush1.msra.mxu0 0.0
  %5546 = vmatprep.subr.mxu0 0.0
  %5547 = vmatpush1.msra.mxu0 0.0
  %5548 = vmatprep.subr.mxu0 0.0
  %5549 = vmatpush1.msra.mxu0 0.0
  %5550 = vmatprep.subr.mxu0 0.0
  %5551 = vmatpush1.msra.mxu0 0.0
  %5552 = vmatprep.subr.mxu0 0.0
  %5553 = vmatpush1.msra.mxu0 0.0
  %5554 = vmatprep.subr.mxu0 0.0
  %5555 = vmatpush1.msra.mxu0 0.0
  %5556 = vmatprep.subr.mxu0 0.0
  %5557 = vmatpush1.msra.mxu0 0.0
  %5558 = vmatprep.subr.mxu0 0.0
  %5559 = vmatpush1.msra.mxu0 0.0
  %5560 = vmatprep.subr.mxu0 0.0
  %5561 = vmatpush1.msra.mxu0 0.0
  %5562 = vmatprep.subr.mxu0 0.0
  %5563 = vmatpush1.msra.mxu0 0.0
  %5564 = vmatprep.subr.mxu0 0.0
  %5565 = vmatpush1.msra.mxu0 0.0
  %5566 = vmatprep.subr.mxu0 0.0
  %5567 = vmatpush1.msra.mxu0 0.0
  %5568 = vmatprep.subr.mxu0 0.0
  %5569 = vmatpush1.msra.mxu0 0.0
  %5570 = vmatprep.subr.mxu0 0.0
  %5571 = vmatpush1.msra.mxu0 0.0
  %5572 = vmatprep.subr.mxu0 0.0
  %5573 = vmatpush1.msra.mxu0 0.0
  %5574 = vmatprep.subr.mxu0 0.0
  %5575 = vmatpush1.msra.mxu0 0.0
  %5576 = vmatprep.subr.mxu0 0.0
  %5577 = vmatpush1.msra.mxu0 0.0
  %5578 = vmatprep.subr.mxu0 0.0
  %5579 = vmatpush1.msra.mxu0 0.0
  %5580 = vmatprep.subr.mxu0 0.0
  %5581 = vmatpush1.msra.mxu0 0.0
  %5582 = vmatprep.subr.mxu0 0.0
  %5583 = vmatpush1.msra.mxu0 0.0
  %5584 = vmatprep.subr.mxu0 0.0
  %5585 = vmatpush1.msra.mxu0 0.0
  %5586 = vmatprep.subr.mxu0 0.0
  %5587 = vmatpush1.msra.mxu0 0.0
  %5588 = vmatprep.subr.mxu0 0.0
  %5589 = vmatpush1.msra.mxu0 0.0
  %5590 = vmatprep.subr.mxu0 0.0
  %5591 = vmatpush1.msra.mxu0 0.0
  %5592 = vmatprep.mubr.f32.mxu0 0.0
  %v5593 = vand.u32 %v4251, 4294901760
  %v5594 = vsub.f32 %v4251, %v5593
  %v5595 = vand.u32 %v5594, 4294901760
  %5596 = vmatmul.mubr.f32.gmra.mrb[0].mxu0 %v5595
  %v5597 = vpop.f32.mrb[0].mxu0
  %v5598 = vadd.f32 %v5516, %v5597
  %v5599 = vpop.f32.mrb[0].mxu0
  %5600 = vmatprep.mubr.f32.mxu0 0.0
  %v5601 = vand.u32 %v4254, 4294901760
  %v5602 = vsub.f32 %v4254, %v5601
  %v5603 = vand.u32 %v5602, 4294901760
  %5604 = vmatmul.mubr.f32.gmra.mrb[0].mxu0 %v5603
  %v5605 = vpop.f32.mrb[0].mxu0
  %v5606 = vadd.f32 %v5523, %v5605
  %v5607 = vpop.f32.mrb[0].mxu0
  %5608 = vdwg.mxu0
  %5609 = vmatprep.subr.mxu0 0.0
  %v5610 = vand.u32 %v5266, 4294901760
  %v5611 = vsub.f32 %v5266, %v5610
  %v5612 = vand.u32 %v5611, 4294901760
  %5613 = vmatpush1.msra.mxu0 %v5612
  %5614 = vmatprep.subr.mxu0 0.0
  %v5615 = vand.u32 %v5268, 4294901760
  %v5616 = vsub.f32 %v5268, %v5615
  %v5617 = vand.u32 %v5616, 4294901760
  %5618 = vmatpush1.msra.mxu0 %v5617
  %5619 = vmatprep.subr.mxu0 0.0
  %5620 = vmatpush1.msra.mxu0 0.0
  %5621 = vmatprep.subr.mxu0 0.0
  %5622 = vmatpush1.msra.mxu0 0.0
  %5623 = vmatprep.subr.mxu0 0.0
  %5624 = vmatpush1.msra.mxu0 0.0
  %5625 = vmatprep.subr.mxu0 0.0
  %5626 = vmatpush1.msra.mxu0 0.0
  %5627 = vmatprep.subr.mxu0 0.0
  %5628 = vmatpush1.msra.mxu0 0.0
  %5629 = vmatprep.subr.mxu0 0.0
  %5630 = vmatpush1.msra.mxu0 0.0
  %5631 = vmatprep.subr.mxu0 0.0
  %5632 = vmatpush1.msra.mxu0 0.0
  %5633 = vmatprep.subr.mxu0 0.0
  %5634 = vmatpush1.msra.mxu0 0.0
  %5635 = vmatprep.subr.mxu0 0.0
  %5636 = vmatpush1.msra.mxu0 0.0
  %5637 = vmatprep.subr.mxu0 0.0
  %5638 = vmatpush1.msra.mxu0 0.0
  %5639 = vmatprep.subr.mxu0 0.0
  %5640 = vmatpush1.msra.mxu0 0.0
  %5641 = vmatprep.subr.mxu0 0.0
  %5642 = vmatpush1.msra.mxu0 0.0
  %5643 = vmatprep.subr.mxu0 0.0
  %5644 = vmatpush1.msra.mxu0 0.0
  %5645 = vmatprep.subr.mxu0 0.0
  %5646 = vmatpush1.msra.mxu0 0.0
  %5647 = vmatprep.subr.mxu0 0.0
  %5648 = vmatpush1.msra.mxu0 0.0
  %5649 = vmatprep.subr.mxu0 0.0
  %5650 = vmatpush1.msra.mxu0 0.0
  %5651 = vmatprep.subr.mxu0 0.0
  %5652 = vmatpush1.msra.mxu0 0.0
  %5653 = vmatprep.subr.mxu0 0.0
  %5654 = vmatpush1.msra.mxu0 0.0
  %5655 = vmatprep.subr.mxu0 0.0
  %5656 = vmatpush1.msra.mxu0 0.0
  %5657 = vmatprep.subr.mxu0 0.0
  %5658 = vmatpush1.msra.mxu0 0.0
  %5659 = vmatprep.subr.mxu0 0.0
  %5660 = vmatpush1.msra.mxu0 0.0
  %5661 = vmatprep.subr.mxu0 0.0
  %5662 = vmatpush1.msra.mxu0 0.0
  %5663 = vmatprep.subr.mxu0 0.0
  %5664 = vmatpush1.msra.mxu0 0.0
  %5665 = vmatprep.subr.mxu0 0.0
  %5666 = vmatpush1.msra.mxu0 0.0
  %5667 = vmatprep.subr.mxu0 0.0
  %5668 = vmatpush1.msra.mxu0 0.0
  %5669 = vmatprep.subr.mxu0 0.0
  %5670 = vmatpush1.msra.mxu0 0.0
  %5671 = vmatprep.subr.mxu0 0.0
  %5672 = vmatpush1.msra.mxu0 0.0
  %5673 = vmatprep.subr.mxu0 0.0
  %5674 = vmatpush1.msra.mxu0 0.0
  %5675 = vmatprep.subr.mxu0 0.0
  %5676 = vmatpush1.msra.mxu0 0.0
  %5677 = vmatprep.subr.mxu0 0.0
  %5678 = vmatpush1.msra.mxu0 0.0
  %5679 = vmatprep.mubr.f32.mxu0 0.0
  %v5680 = vand.u32 %v4251, 4294901760
  %5681 = vmatmul.mubr.f32.gmra.mrb[0].mxu0 %v5680
  %v5682 = vpop.f32.mrb[0].mxu0
  %v5683 = vadd.f32 %v5598, %v5682
  %v5684 = vpop.f32.mrb[0].mxu0
  %5685 = vmatprep.mubr.f32.mxu0 0.0
  %v5686 = vand.u32 %v4254, 4294901760
  %5687 = vmatmul.mubr.f32.gmra.mrb[0].mxu0 %v5686
  %v5688 = vpop.f32.mrb[0].mxu0
  %v5689 = vadd.f32 %v5606, %v5688
  %v5690 = vpop.f32.mrb[0].mxu0
  %5691 = vdwg.mxu0
  %5692 = vmatprep.subr.mxu0 0.0
  %v5693 = vand.u32 %v5266, 4294901760
  %5694 = vmatpush1.msra.mxu0 %v5693
  %5695 = vmatprep.subr.mxu0 0.0
  %v5696 = vand.u32 %v5268, 4294901760
  %5697 = vmatpush1.msra.mxu0 %v5696
  %5698 = vmatprep.subr.mxu0 0.0
  %5699 = vmatpush1.msra.mxu0 0.0
  %5700 = vmatprep.subr.mxu0 0.0
  %5701 = vmatpush1.msra.mxu0 0.0
  %5702 = vmatprep.subr.mxu0 0.0
  %5703 = vmatpush1.msra.mxu0 0.0
  %5704 = vmatprep.subr.mxu0 0.0
  %5705 = vmatpush1.msra.mxu0 0.0
  %5706 = vmatprep.subr.mxu0 0.0
  %5707 = vmatpush1.msra.mxu0 0.0
  %5708 = vmatprep.subr.mxu0 0.0
  %5709 = vmatpush1.msra.mxu0 0.0
  %5710 = vmatprep.subr.mxu0 0.0
  %5711 = vmatpush1.msra.mxu0 0.0
  %5712 = vmatprep.subr.mxu0 0.0
  %5713 = vmatpush1.msra.mxu0 0.0
  %5714 = vmatprep.subr.mxu0 0.0
  %5715 = vmatpush1.msra.mxu0 0.0
  %5716 = vmatprep.subr.mxu0 0.0
  %5717 = vmatpush1.msra.mxu0 0.0
  %5718 = vmatprep.subr.mxu0 0.0
  %5719 = vmatpush1.msra.mxu0 0.0
  %5720 = vmatprep.subr.mxu0 0.0
  %5721 = vmatpush1.msra.mxu0 0.0
  %5722 = vmatprep.subr.mxu0 0.0
  %5723 = vmatpush1.msra.mxu0 0.0
  %5724 = vmatprep.subr.mxu0 0.0
  %5725 = vmatpush1.msra.mxu0 0.0
  %5726 = vmatprep.subr.mxu0 0.0
  %5727 = vmatpush1.msra.mxu0 0.0
  %5728 = vmatprep.subr.mxu0 0.0
  %5729 = vmatpush1.msra.mxu0 0.0
  %5730 = vmatprep.subr.mxu0 0.0
  %5731 = vmatpush1.msra.mxu0 0.0
  %5732 = vmatprep.subr.mxu0 0.0
  %5733 = vmatpush1.msra.mxu0 0.0
  %5734 = vmatprep.subr.mxu0 0.0
  %5735 = vmatpush1.msra.mxu0 0.0
  %5736 = vmatprep.subr.mxu0 0.0
  %5737 = vmatpush1.msra.mxu0 0.0
  %5738 = vmatprep.subr.mxu0 0.0
  %5739 = vmatpush1.msra.mxu0 0.0
  %5740 = vmatprep.subr.mxu0 0.0
  %5741 = vmatpush1.msra.mxu0 0.0
  %5742 = vmatprep.subr.mxu0 0.0
  %5743 = vmatpush1.msra.mxu0 0.0
  %5744 = vmatprep.subr.mxu0 0.0
  %5745 = vmatpush1.msra.mxu0 0.0
  %5746 = vmatprep.subr.mxu0 0.0
  %5747 = vmatpush1.msra.mxu0 0.0
  %5748 = vmatprep.subr.mxu0 0.0
  %5749 = vmatpush1.msra.mxu0 0.0
  %5750 = vmatprep.subr.mxu0 0.0
  %5751 = vmatpush1.msra.mxu0 0.0
  %5752 = vmatprep.subr.mxu0 0.0
  %5753 = vmatpush1.msra.mxu0 0.0
  %5754 = vmatprep.subr.mxu0 0.0
  %5755 = vmatpush1.msra.mxu0 0.0
  %5756 = vmatprep.subr.mxu0 0.0
  %5757 = vmatpush1.msra.mxu0 0.0
  %5758 = vmatprep.mubr.f32.mxu0 0.0
  %v5759 = vand.u32 %v4251, 4294901760
  %5760 = vmatmul.mubr.f32.gmra.mrb[0].mxu0 %v5759
  %v5761 = vpop.f32.mrb[0].mxu0
  %v5762 = vadd.f32 %v5683, %v5761
  %v5763 = vpop.f32.mrb[0].mxu0
  %5764 = vmatprep.mubr.f32.mxu0 0.0
  %v5765 = vand.u32 %v4254, 4294901760
  %5766 = vmatmul.mubr.f32.gmra.mrb[0].mxu0 %v5765
  %v5767 = vpop.f32.mrb[0].mxu0
  %v5768 = vadd.f32 %v5689, %v5767
  %v5769 = vpop.f32.mrb[0].mxu0
  %5770 = vdwg.mxu0
  %v5771 = vmax.f32 %v5762, 1e-38
  %v5772 = vmax.f32 %v5768, 1e-38
  %v5773 = vlog2.pop %v5771
  %v5774 = vmul.f32 %v5773, 0.6931472
  %v5775 = vlog2.pop %v5772
  %v5776 = vmul.f32 %v5775, 0.6931472
  %v5777 = vadd.f32 %v5774, %v5262
  %v5778 = vadd.f32 %v5776, %v5262
  %v5779 = vld [vmem:[%s2685] sm:$0xff]
  %v5780 = vld [vmem:[%s2685 + $0x8] sm:$0xff]
  %v5781 = vadd.f32 %v5779, %v5777
  %v5782 = vadd.f32 %v5780, %v5778
  %v5783 = vmax.f32 %v5781, %v5782
  %v5784 = vrot.slane %v5783, 4
  %v5785 = vmax.f32 %v5783, %v5784
  %v5786 = vrot.slane %v5785, 2
  %v5787 = vmax.f32 %v5785, %v5786
  %v5788 = vrot.slane %v5787, 1
  %v5789 = vmax.f32 %v5787, %v5788
  %v5790 = vsub.f32 %v5781, %v5789
  %v5791 = vsub.f32 %v5782, %v5789
  %v5792 = vmul.f32 %v5790, 1.442695
  %v5793 = vpow.pop %v5792
  %v5794 = vmul.f32 %v5791, 1.442695
  %v5795 = vpow.pop %v5794
  %5796 = vmatprep.subr.mxu0 0.0
  %v5797 = vand.u32 %v5793, 4294901760
  %5798 = vmatpush1.msra.mxu0 %v5797
  %5799 = vmatprep.subr.mxu0 0.0
  %v5800 = vand.u32 %v5795, 4294901760
  %5801 = vmatpush1.msra.mxu0 %v5800
  %5802 = vmatprep.subr.mxu0 0.0
  %5803 = vmatpush1.msra.mxu0 0.0
  %5804 = vmatprep.subr.mxu0 0.0
  %5805 = vmatpush1.msra.mxu0 0.0
  %5806 = vmatprep.subr.mxu0 0.0
  %5807 = vmatpush1.msra.mxu0 0.0
  %5808 = vmatprep.subr.mxu0 0.0
  %5809 = vmatpush1.msra.mxu0 0.0
  %5810 = vmatprep.subr.mxu0 0.0
  %5811 = vmatpush1.msra.mxu0 0.0
  %5812 = vmatprep.subr.mxu0 0.0
  %5813 = vmatpush1.msra.mxu0 0.0
  %5814 = vmatprep.subr.mxu0 0.0
  %5815 = vmatpush1.msra.mxu0 0.0
  %5816 = vmatprep.subr.mxu0 0.0
  %5817 = vmatpush1.msra.mxu0 0.0
  %5818 = vmatprep.subr.mxu0 0.0
  %5819 = vmatpush1.msra.mxu0 0.0
  %5820 = vmatprep.subr.mxu0 0.0
  %5821 = vmatpush1.msra.mxu0 0.0
  %5822 = vmatprep.subr.mxu0 0.0
  %5823 = vmatpush1.msra.mxu0 0.0
  %5824 = vmatprep.subr.mxu0 0.0
  %5825 = vmatpush1.msra.mxu0 0.0
  %5826 = vmatprep.subr.mxu0 0.0
  %5827 = vmatpush1.msra.mxu0 0.0
  %5828 = vmatprep.subr.mxu0 0.0
  %5829 = vmatpush1.msra.mxu0 0.0
  %5830 = vmatprep.subr.mxu0 0.0
  %5831 = vmatpush1.msra.mxu0 0.0
  %5832 = vmatprep.subr.mxu0 0.0
  %5833 = vmatpush1.msra.mxu0 0.0
  %5834 = vmatprep.subr.mxu0 0.0
  %5835 = vmatpush1.msra.mxu0 0.0
  %5836 = vmatprep.subr.mxu0 0.0
  %5837 = vmatpush1.msra.mxu0 0.0
  %5838 = vmatprep.subr.mxu0 0.0
  %5839 = vmatpush1.msra.mxu0 0.0
  %5840 = vmatprep.subr.mxu0 0.0
  %5841 = vmatpush1.msra.mxu0 0.0
  %5842 = vmatprep.subr.mxu0 0.0
  %5843 = vmatpush1.msra.mxu0 0.0
  %5844 = vmatprep.subr.mxu0 0.0
  %5845 = vmatpush1.msra.mxu0 0.0
  %5846 = vmatprep.subr.mxu0 0.0
  %5847 = vmatpush1.msra.mxu0 0.0
  %5848 = vmatprep.subr.mxu0 0.0
  %5849 = vmatpush1.msra.mxu0 0.0
  %5850 = vmatprep.subr.mxu0 0.0
  %5851 = vmatpush1.msra.mxu0 0.0
  %5852 = vmatprep.subr.mxu0 0.0
  %5853 = vmatpush1.msra.mxu0 0.0
  %5854 = vmatprep.subr.mxu0 0.0
  %5855 = vmatpush1.msra.mxu0 0.0
  %5856 = vmatprep.subr.mxu0 0.0
  %5857 = vmatpush1.msra.mxu0 0.0
  %5858 = vmatprep.subr.mxu0 0.0
  %5859 = vmatpush1.msra.mxu0 0.0
  %5860 = vmatprep.subr.mxu0 0.0
  %5861 = vmatpush1.msra.mxu0 0.0
  %5862 = vmatprep.mubr.f32.mxu0 0.0
  %v5863 = vand.u32 %v3764, 4294901760
  %v5864 = vsub.f32 %v3764, %v5863
  %v5865 = vand.u32 %v5864, 4294901760
  %v5866 = vsub.f32 %v5864, %v5865
  %v5867 = vand.u32 %v5866, 4294901760
  %5868 = vmatmul.mubr.f32.gmra.mrb[0].mxu0 %v5867
  %v5869 = vpop.f32.mrb[0].mxu0
  %v5870 = vadd.f32 0.0, %v5869
  %v5871 = vpop.f32.mrb[0].mxu0
  %5872 = vdwg.mxu0
  %5873 = vmatprep.subr.mxu0 0.0
  %v5874 = vand.u32 %v5793, 4294901760
  %v5875 = vsub.f32 %v5793, %v5874
  %v5876 = vand.u32 %v5875, 4294901760
  %v5877 = vsub.f32 %v5875, %v5876
  %v5878 = vand.u32 %v5877, 4294901760
  %5879 = vmatpush1.msra.mxu0 %v5878
  %5880 = vmatprep.subr.mxu0 0.0
  %v5881 = vand.u32 %v5795, 4294901760
  %v5882 = vsub.f32 %v5795, %v5881
  %v5883 = vand.u32 %v5882, 4294901760
  %v5884 = vsub.f32 %v5882, %v5883
  %v5885 = vand.u32 %v5884, 4294901760
  %5886 = vmatpush1.msra.mxu0 %v5885
  %5887 = vmatprep.subr.mxu0 0.0
  %5888 = vmatpush1.msra.mxu0 0.0
  %5889 = vmatprep.subr.mxu0 0.0
  %5890 = vmatpush1.msra.mxu0 0.0
  %5891 = vmatprep.subr.mxu0 0.0
  %5892 = vmatpush1.msra.mxu0 0.0
  %5893 = vmatprep.subr.mxu0 0.0
  %5894 = vmatpush1.msra.mxu0 0.0
  %5895 = vmatprep.subr.mxu0 0.0
  %5896 = vmatpush1.msra.mxu0 0.0
  %5897 = vmatprep.subr.mxu0 0.0
  %5898 = vmatpush1.msra.mxu0 0.0
  %5899 = vmatprep.subr.mxu0 0.0
  %5900 = vmatpush1.msra.mxu0 0.0
  %5901 = vmatprep.subr.mxu0 0.0
  %5902 = vmatpush1.msra.mxu0 0.0
  %5903 = vmatprep.subr.mxu0 0.0
  %5904 = vmatpush1.msra.mxu0 0.0
  %5905 = vmatprep.subr.mxu0 0.0
  %5906 = vmatpush1.msra.mxu0 0.0
  %5907 = vmatprep.subr.mxu0 0.0
  %5908 = vmatpush1.msra.mxu0 0.0
  %5909 = vmatprep.subr.mxu0 0.0
  %5910 = vmatpush1.msra.mxu0 0.0
  %5911 = vmatprep.subr.mxu0 0.0
  %5912 = vmatpush1.msra.mxu0 0.0
  %5913 = vmatprep.subr.mxu0 0.0
  %5914 = vmatpush1.msra.mxu0 0.0
  %5915 = vmatprep.subr.mxu0 0.0
  %5916 = vmatpush1.msra.mxu0 0.0
  %5917 = vmatprep.subr.mxu0 0.0
  %5918 = vmatpush1.msra.mxu0 0.0
  %5919 = vmatprep.subr.mxu0 0.0
  %5920 = vmatpush1.msra.mxu0 0.0
  %5921 = vmatprep.subr.mxu0 0.0
  %5922 = vmatpush1.msra.mxu0 0.0
  %5923 = vmatprep.subr.mxu0 0.0
  %5924 = vmatpush1.msra.mxu0 0.0
  %5925 = vmatprep.subr.mxu0 0.0
  %5926 = vmatpush1.msra.mxu0 0.0
  %5927 = vmatprep.subr.mxu0 0.0
  %5928 = vmatpush1.msra.mxu0 0.0
  %5929 = vmatprep.subr.mxu0 0.0
  %5930 = vmatpush1.msra.mxu0 0.0
  %5931 = vmatprep.subr.mxu0 0.0
  %5932 = vmatpush1.msra.mxu0 0.0
  %5933 = vmatprep.subr.mxu0 0.0
  %5934 = vmatpush1.msra.mxu0 0.0
  %5935 = vmatprep.subr.mxu0 0.0
  %5936 = vmatpush1.msra.mxu0 0.0
  %5937 = vmatprep.subr.mxu0 0.0
  %5938 = vmatpush1.msra.mxu0 0.0
  %5939 = vmatprep.subr.mxu0 0.0
  %5940 = vmatpush1.msra.mxu0 0.0
  %5941 = vmatprep.subr.mxu0 0.0
  %5942 = vmatpush1.msra.mxu0 0.0
  %5943 = vmatprep.subr.mxu0 0.0
  %5944 = vmatpush1.msra.mxu0 0.0
  %5945 = vmatprep.subr.mxu0 0.0
  %5946 = vmatpush1.msra.mxu0 0.0
  %5947 = vmatprep.mubr.f32.mxu0 0.0
  %v5948 = vand.u32 %v3764, 4294901760
  %5949 = vmatmul.mubr.f32.gmra.mrb[0].mxu0 %v5948
  %v5950 = vpop.f32.mrb[0].mxu0
  %v5951 = vadd.f32 %v5870, %v5950
  %v5952 = vpop.f32.mrb[0].mxu0
  %5953 = vdwg.mxu0
  %5954 = vmatprep.subr.mxu0 0.0
  %v5955 = vand.u32 %v5793, 4294901760
  %v5956 = vsub.f32 %v5793, %v5955
  %5957 = vmatpush1.msra.mxu0 %v5956
  %5958 = vmatprep.subr.mxu0 0.0
  %v5959 = vand.u32 %v5795, 4294901760
  %v5960 = vsub.f32 %v5795, %v5959
  %5961 = vmatpush1.msra.mxu0 %v5960
  %5962 = vmatprep.subr.mxu0 0.0
  %5963 = vmatpush1.msra.mxu0 0.0
  %5964 = vmatprep.subr.mxu0 0.0
  %5965 = vmatpush1.msra.mxu0 0.0
  %5966 = vmatprep.subr.mxu0 0.0
  %5967 = vmatpush1.msra.mxu0 0.0
  %5968 = vmatprep.subr.mxu0 0.0
  %5969 = vmatpush1.msra.mxu0 0.0
  %5970 = vmatprep.subr.mxu0 0.0
  %5971 = vmatpush1.msra.mxu0 0.0
  %5972 = vmatprep.subr.mxu0 0.0
  %5973 = vmatpush1.msra.mxu0 0.0
  %5974 = vmatprep.subr.mxu0 0.0
  %5975 = vmatpush1.msra.mxu0 0.0
  %5976 = vmatprep.subr.mxu0 0.0
  %5977 = vmatpush1.msra.mxu0 0.0
  %5978 = vmatprep.subr.mxu0 0.0
  %5979 = vmatpush1.msra.mxu0 0.0
  %5980 = vmatprep.subr.mxu0 0.0
  %5981 = vmatpush1.msra.mxu0 0.0
  %5982 = vmatprep.subr.mxu0 0.0
  %5983 = vmatpush1.msra.mxu0 0.0
  %5984 = vmatprep.subr.mxu0 0.0
  %5985 = vmatpush1.msra.mxu0 0.0
  %5986 = vmatprep.subr.mxu0 0.0
  %5987 = vmatpush1.msra.mxu0 0.0
  %5988 = vmatprep.subr.mxu0 0.0
  %5989 = vmatpush1.msra.mxu0 0.0
  %5990 = vmatprep.subr.mxu0 0.0
  %5991 = vmatpush1.msra.mxu0 0.0
  %5992 = vmatprep.subr.mxu0 0.0
  %5993 = vmatpush1.msra.mxu0 0.0
  %5994 = vmatprep.subr.mxu0 0.0
  %5995 = vmatpush1.msra.mxu0 0.0
  %5996 = vmatprep.subr.mxu0 0.0
  %5997 = vmatpush1.msra.mxu0 0.0
  %5998 = vmatprep.subr.mxu0 0.0
  %5999 = vmatpush1.msra.mxu0 0.0
  %6000 = vmatprep.subr.mxu0 0.0
  %6001 = vmatpush1.msra.mxu0 0.0
  %6002 = vmatprep.subr.mxu0 0.0
  %6003 = vmatpush1.msra.mxu0 0.0
  %6004 = vmatprep.subr.mxu0 0.0
  %6005 = vmatpush1.msra.mxu0 0.0
  %6006 = vmatprep.subr.mxu0 0.0
  %6007 = vmatpush1.msra.mxu0 0.0
  %6008 = vmatprep.subr.mxu0 0.0
  %6009 = vmatpush1.msra.mxu0 0.0
  %6010 = vmatprep.subr.mxu0 0.0
  %6011 = vmatpush1.msra.mxu0 0.0
  %6012 = vmatprep.subr.mxu0 0.0
  %6013 = vmatpush1.msra.mxu0 0.0
  %6014 = vmatprep.subr.mxu0 0.0
  %6015 = vmatpush1.msra.mxu0 0.0
  %6016 = vmatprep.subr.mxu0 0.0
  %6017 = vmatpush1.msra.mxu0 0.0
  %6018 = vmatprep.subr.mxu0 0.0
  %6019 = vmatpush1.msra.mxu0 0.0
  %6020 = vmatprep.subr.mxu0 0.0
  %6021 = vmatpush1.msra.mxu0 0.0
  %6022 = vmatprep.mubr.f32.mxu0 0.0
  %v6023 = vand.u32 %v3764, 4294901760
  %v6024 = vsub.f32 %v3764, %v6023
  %6025 = vmatmul.mubr.f32.gmra.mrb[0].mxu0 %v6024
  %v6026 = vpop.f32.mrb[0].mxu0
  %v6027 = vadd.f32 %v5951, %v6026
  %v6028 = vpop.f32.mrb[0].mxu0
  %6029 = vdwg.mxu0
  %6030 = vmatprep.subr.mxu0 0.0
  %v6031 = vand.u32 %v5793, 4294901760
  %6032 = vmatpush1.msra.mxu0 %v6031
  %6033 = vmatprep.subr.mxu0 0.0
  %v6034 = vand.u32 %v5795, 4294901760
  %6035 = vmatpush1.msra.mxu0 %v6034
  %6036 = vmatprep.subr.mxu0 0.0
  %6037 = vmatpush1.msra.mxu0 0.0
  %6038 = vmatprep.subr.mxu0 0.0
  %6039 = vmatpush1.msra.mxu0 0.0
  %6040 = vmatprep.subr.mxu0 0.0
  %6041 = vmatpush1.msra.mxu0 0.0
  %6042 = vmatprep.subr.mxu0 0.0
  %6043 = vmatpush1.msra.mxu0 0.0
  %6044 = vmatprep.subr.mxu0 0.0
  %6045 = vmatpush1.msra.mxu0 0.0
  %6046 = vmatprep.subr.mxu0 0.0
  %6047 = vmatpush1.msra.mxu0 0.0
  %6048 = vmatprep.subr.mxu0 0.0
  %6049 = vmatpush1.msra.mxu0 0.0
  %6050 = vmatprep.subr.mxu0 0.0
  %6051 = vmatpush1.msra.mxu0 0.0
  %6052 = vmatprep.subr.mxu0 0.0
  %6053 = vmatpush1.msra.mxu0 0.0
  %6054 = vmatprep.subr.mxu0 0.0
  %6055 = vmatpush1.msra.mxu0 0.0
  %6056 = vmatprep.subr.mxu0 0.0
  %6057 = vmatpush1.msra.mxu0 0.0
  %6058 = vmatprep.subr.mxu0 0.0
  %6059 = vmatpush1.msra.mxu0 0.0
  %6060 = vmatprep.subr.mxu0 0.0
  %6061 = vmatpush1.msra.mxu0 0.0
  %6062 = vmatprep.subr.mxu0 0.0
  %6063 = vmatpush1.msra.mxu0 0.0
  %6064 = vmatprep.subr.mxu0 0.0
  %6065 = vmatpush1.msra.mxu0 0.0
  %6066 = vmatprep.subr.mxu0 0.0
  %6067 = vmatpush1.msra.mxu0 0.0
  %6068 = vmatprep.subr.mxu0 0.0
  %6069 = vmatpush1.msra.mxu0 0.0
  %6070 = vmatprep.subr.mxu0 0.0
  %6071 = vmatpush1.msra.mxu0 0.0
  %6072 = vmatprep.subr.mxu0 0.0
  %6073 = vmatpush1.msra.mxu0 0.0
  %6074 = vmatprep.subr.mxu0 0.0
  %6075 = vmatpush1.msra.mxu0 0.0
  %6076 = vmatprep.subr.mxu0 0.0
  %6077 = vmatpush1.msra.mxu0 0.0
  %6078 = vmatprep.subr.mxu0 0.0
  %6079 = vmatpush1.msra.mxu0 0.0
  %6080 = vmatprep.subr.mxu0 0.0
  %6081 = vmatpush1.msra.mxu0 0.0
  %6082 = vmatprep.subr.mxu0 0.0
  %6083 = vmatpush1.msra.mxu0 0.0
  %6084 = vmatprep.subr.mxu0 0.0
  %6085 = vmatpush1.msra.mxu0 0.0
  %6086 = vmatprep.subr.mxu0 0.0
  %6087 = vmatpush1.msra.mxu0 0.0
  %6088 = vmatprep.subr.mxu0 0.0
  %6089 = vmatpush1.msra.mxu0 0.0
  %6090 = vmatprep.subr.mxu0 0.0
  %6091 = vmatpush1.msra.mxu0 0.0
  %6092 = vmatprep.subr.mxu0 0.0
  %6093 = vmatpush1.msra.mxu0 0.0
  %6094 = vmatprep.subr.mxu0 0.0
  %6095 = vmatpush1.msra.mxu0 0.0
  %6096 = vmatprep.mubr.f32.mxu0 0.0
  %v6097 = vand.u32 %v3764, 4294901760
  %v6098 = vsub.f32 %v3764, %v6097
  %v6099 = vand.u32 %v6098, 4294901760
  %6100 = vmatmul.mubr.f32.gmra.mrb[0].mxu0 %v6099
  %v6101 = vpop.f32.mrb[0].mxu0
  %v6102 = vadd.f32 %v6027, %v6101
  %v6103 = vpop.f32.mrb[0].mxu0
  %6104 = vdwg.mxu0
  %6105 = vmatprep.subr.mxu0 0.0
  %v6106 = vand.u32 %v5793, 4294901760
  %v6107 = vsub.f32 %v5793, %v6106
  %v6108 = vand.u32 %v6107, 4294901760
  %6109 = vmatpush1.msra.mxu0 %v6108
  %6110 = vmatprep.subr.mxu0 0.0
  %v6111 = vand.u32 %v5795, 4294901760
  %v6112 = vsub.f32 %v5795, %v6111
  %v6113 = vand.u32 %v6112, 4294901760
  %6114 = vmatpush1.msra.mxu0 %v6113
  %6115 = vmatprep.subr.mxu0 0.0
  %6116 = vmatpush1.msra.mxu0 0.0
  %6117 = vmatprep.subr.mxu0 0.0
  %6118 = vmatpush1.msra.mxu0 0.0
  %6119 = vmatprep.subr.mxu0 0.0
  %6120 = vmatpush1.msra.mxu0 0.0
  %6121 = vmatprep.subr.mxu0 0.0
  %6122 = vmatpush1.msra.mxu0 0.0
  %6123 = vmatprep.subr.mxu0 0.0
  %6124 = vmatpush1.msra.mxu0 0.0
  %6125 = vmatprep.subr.mxu0 0.0
  %6126 = vmatpush1.msra.mxu0 0.0
  %6127 = vmatprep.subr.mxu0 0.0
  %6128 = vmatpush1.msra.mxu0 0.0
  %6129 = vmatprep.subr.mxu0 0.0
  %6130 = vmatpush1.msra.mxu0 0.0
  %6131 = vmatprep.subr.mxu0 0.0
  %6132 = vmatpush1.msra.mxu0 0.0
  %6133 = vmatprep.subr.mxu0 0.0
  %6134 = vmatpush1.msra.mxu0 0.0
  %6135 = vmatprep.subr.mxu0 0.0
  %6136 = vmatpush1.msra.mxu0 0.0
  %6137 = vmatprep.subr.mxu0 0.0
  %6138 = vmatpush1.msra.mxu0 0.0
  %6139 = vmatprep.subr.mxu0 0.0
  %6140 = vmatpush1.msra.mxu0 0.0
  %6141 = vmatprep.subr.mxu0 0.0
  %6142 = vmatpush1.msra.mxu0 0.0
  %6143 = vmatprep.subr.mxu0 0.0
  %6144 = vmatpush1.msra.mxu0 0.0
  %6145 = vmatprep.subr.mxu0 0.0
  %6146 = vmatpush1.msra.mxu0 0.0
  %6147 = vmatprep.subr.mxu0 0.0
  %6148 = vmatpush1.msra.mxu0 0.0
  %6149 = vmatprep.subr.mxu0 0.0
  %6150 = vmatpush1.msra.mxu0 0.0
  %6151 = vmatprep.subr.mxu0 0.0
  %6152 = vmatpush1.msra.mxu0 0.0
  %6153 = vmatprep.subr.mxu0 0.0
  %6154 = vmatpush1.msra.mxu0 0.0
  %6155 = vmatprep.subr.mxu0 0.0
  %6156 = vmatpush1.msra.mxu0 0.0
  %6157 = vmatprep.subr.mxu0 0.0
  %6158 = vmatpush1.msra.mxu0 0.0
  %6159 = vmatprep.subr.mxu0 0.0
  %6160 = vmatpush1.msra.mxu0 0.0
  %6161 = vmatprep.subr.mxu0 0.0
  %6162 = vmatpush1.msra.mxu0 0.0
  %6163 = vmatprep.subr.mxu0 0.0
  %6164 = vmatpush1.msra.mxu0 0.0
  %6165 = vmatprep.subr.mxu0 0.0
  %6166 = vmatpush1.msra.mxu0 0.0
  %6167 = vmatprep.subr.mxu0 0.0
  %6168 = vmatpush1.msra.mxu0 0.0
  %6169 = vmatprep.subr.mxu0 0.0
  %6170 = vmatpush1.msra.mxu0 0.0
  %6171 = vmatprep.subr.mxu0 0.0
  %6172 = vmatpush1.msra.mxu0 0.0
  %6173 = vmatprep.subr.mxu0 0.0
  %6174 = vmatpush1.msra.mxu0 0.0
  %6175 = vmatprep.mubr.f32.mxu0 0.0
  %v6176 = vand.u32 %v3764, 4294901760
  %6177 = vmatmul.mubr.f32.gmra.mrb[0].mxu0 %v6176
  %v6178 = vpop.f32.mrb[0].mxu0
  %v6179 = vadd.f32 %v6102, %v6178
  %v6180 = vpop.f32.mrb[0].mxu0
  %6181 = vdwg.mxu0
  %6182 = vmatprep.subr.mxu0 0.0
  %v6183 = vand.u32 %v5793, 4294901760
  %6184 = vmatpush1.msra.mxu0 %v6183
  %6185 = vmatprep.subr.mxu0 0.0
  %v6186 = vand.u32 %v5795, 4294901760
  %6187 = vmatpush1.msra.mxu0 %v6186
  %6188 = vmatprep.subr.mxu0 0.0
  %6189 = vmatpush1.msra.mxu0 0.0
  %6190 = vmatprep.subr.mxu0 0.0
  %6191 = vmatpush1.msra.mxu0 0.0
  %6192 = vmatprep.subr.mxu0 0.0
  %6193 = vmatpush1.msra.mxu0 0.0
  %6194 = vmatprep.subr.mxu0 0.0
  %6195 = vmatpush1.msra.mxu0 0.0
  %6196 = vmatprep.subr.mxu0 0.0
  %6197 = vmatpush1.msra.mxu0 0.0
  %6198 = vmatprep.subr.mxu0 0.0
  %6199 = vmatpush1.msra.mxu0 0.0
  %6200 = vmatprep.subr.mxu0 0.0
  %6201 = vmatpush1.msra.mxu0 0.0
  %6202 = vmatprep.subr.mxu0 0.0
  %6203 = vmatpush1.msra.mxu0 0.0
  %6204 = vmatprep.subr.mxu0 0.0
  %6205 = vmatpush1.msra.mxu0 0.0
  %6206 = vmatprep.subr.mxu0 0.0
  %6207 = vmatpush1.msra.mxu0 0.0
  %6208 = vmatprep.subr.mxu0 0.0
  %6209 = vmatpush1.msra.mxu0 0.0
  %6210 = vmatprep.subr.mxu0 0.0
  %6211 = vmatpush1.msra.mxu0 0.0
  %6212 = vmatprep.subr.mxu0 0.0
  %6213 = vmatpush1.msra.mxu0 0.0
  %6214 = vmatprep.subr.mxu0 0.0
  %6215 = vmatpush1.msra.mxu0 0.0
  %6216 = vmatprep.subr.mxu0 0.0
  %6217 = vmatpush1.msra.mxu0 0.0
  %6218 = vmatprep.subr.mxu0 0.0
  %6219 = vmatpush1.msra.mxu0 0.0
  %6220 = vmatprep.subr.mxu0 0.0
  %6221 = vmatpush1.msra.mxu0 0.0
  %6222 = vmatprep.subr.mxu0 0.0
  %6223 = vmatpush1.msra.mxu0 0.0
  %6224 = vmatprep.subr.mxu0 0.0
  %6225 = vmatpush1.msra.mxu0 0.0
  %6226 = vmatprep.subr.mxu0 0.0
  %6227 = vmatpush1.msra.mxu0 0.0
  %6228 = vmatprep.subr.mxu0 0.0
  %6229 = vmatpush1.msra.mxu0 0.0
  %6230 = vmatprep.subr.mxu0 0.0
  %6231 = vmatpush1.msra.mxu0 0.0
  %6232 = vmatprep.subr.mxu0 0.0
  %6233 = vmatpush1.msra.mxu0 0.0
  %6234 = vmatprep.subr.mxu0 0.0
  %6235 = vmatpush1.msra.mxu0 0.0
  %6236 = vmatprep.subr.mxu0 0.0
  %6237 = vmatpush1.msra.mxu0 0.0
  %6238 = vmatprep.subr.mxu0 0.0
  %6239 = vmatpush1.msra.mxu0 0.0
  %6240 = vmatprep.subr.mxu0 0.0
  %6241 = vmatpush1.msra.mxu0 0.0
  %6242 = vmatprep.subr.mxu0 0.0
  %6243 = vmatpush1.msra.mxu0 0.0
  %6244 = vmatprep.subr.mxu0 0.0
  %6245 = vmatpush1.msra.mxu0 0.0
  %6246 = vmatprep.subr.mxu0 0.0
  %6247 = vmatpush1.msra.mxu0 0.0
  %6248 = vmatprep.mubr.f32.mxu0 0.0
  %v6249 = vand.u32 %v3764, 4294901760
  %6250 = vmatmul.mubr.f32.gmra.mrb[0].mxu0 %v6249
  %v6251 = vpop.f32.mrb[0].mxu0
  %v6252 = vadd.f32 %v6179, %v6251
  %v6253 = vpop.f32.mrb[0].mxu0
  %6254 = vdwg.mxu0
  %v6255 = vmax.f32 %v6252, 1e-38
  %v6256 = vlog2.pop %v6255
  %v6257 = vmul.f32 %v6256, 0.6931472
  %v6258 = vlaneseq
  %v6259 = vshrl.u32 %v6258, 7
  %v6260 = vsub.s32 5, %v6259
  %v6261 = vrot.slane %v6257, %v6260
  %v6262 = vsub.f32 %v6257, %v6261
  %s6263 = scalar_lea.vmem %s4, 40
  %6264 = vst [vmem:[%s6263] sm:$0x1f] %v6262
  %v6265 = vld [vmem:[%s2680] sm:$0xff]
  %v6266 = vld [vmem:[%s2680 + $0x8] sm:$0xff]
  %v6267 = vadd.f32 %v5777, %v6265
  %v6268 = vadd.f32 %v5778, %v6266
  %v6269 = vmax.f32 %v6267, %v6268
  %v6270 = vrot.slane %v6269, 4
  %v6271 = vmax.f32 %v6269, %v6270
  %v6272 = vrot.slane %v6271, 2
  %v6273 = vmax.f32 %v6271, %v6272
  %v6274 = vrot.slane %v6273, 1
  %v6275 = vmax.f32 %v6273, %v6274
  %v6276 = vsub.f32 %v6267, %v6275
  %v6277 = vsub.f32 %v6268, %v6275
  %v6278 = vmul.f32 %v6276, 1.442695
  %v6279 = vpow.pop %v6278
  %v6280 = vmul.f32 %v6277, 1.442695
  %v6281 = vpow.pop %v6280
  %6282 = vmatprep.subr.mxu0 0.0
  %v6283 = vand.u32 %v6279, 4294901760
  %6284 = vmatpush1.msra.mxu0 %v6283
  %6285 = vmatprep.subr.mxu0 0.0
  %v6286 = vand.u32 %v6281, 4294901760
  %6287 = vmatpush1.msra.mxu0 %v6286
  %6288 = vmatprep.subr.mxu0 0.0
  %6289 = vmatpush1.msra.mxu0 0.0
  %6290 = vmatprep.subr.mxu0 0.0
  %6291 = vmatpush1.msra.mxu0 0.0
  %6292 = vmatprep.subr.mxu0 0.0
  %6293 = vmatpush1.msra.mxu0 0.0
  %6294 = vmatprep.subr.mxu0 0.0
  %6295 = vmatpush1.msra.mxu0 0.0
  %6296 = vmatprep.subr.mxu0 0.0
  %6297 = vmatpush1.msra.mxu0 0.0
  %6298 = vmatprep.subr.mxu0 0.0
  %6299 = vmatpush1.msra.mxu0 0.0
  %6300 = vmatprep.subr.mxu0 0.0
  %6301 = vmatpush1.msra.mxu0 0.0
  %6302 = vmatprep.subr.mxu0 0.0
  %6303 = vmatpush1.msra.mxu0 0.0
  %6304 = vmatprep.subr.mxu0 0.0
  %6305 = vmatpush1.msra.mxu0 0.0
  %6306 = vmatprep.subr.mxu0 0.0
  %6307 = vmatpush1.msra.mxu0 0.0
  %6308 = vmatprep.subr.mxu0 0.0
  %6309 = vmatpush1.msra.mxu0 0.0
  %6310 = vmatprep.subr.mxu0 0.0
  %6311 = vmatpush1.msra.mxu0 0.0
  %6312 = vmatprep.subr.mxu0 0.0
  %6313 = vmatpush1.msra.mxu0 0.0
  %6314 = vmatprep.subr.mxu0 0.0
  %6315 = vmatpush1.msra.mxu0 0.0
  %6316 = vmatprep.subr.mxu0 0.0
  %6317 = vmatpush1.msra.mxu0 0.0
  %6318 = vmatprep.subr.mxu0 0.0
  %6319 = vmatpush1.msra.mxu0 0.0
  %6320 = vmatprep.subr.mxu0 0.0
  %6321 = vmatpush1.msra.mxu0 0.0
  %6322 = vmatprep.subr.mxu0 0.0
  %6323 = vmatpush1.msra.mxu0 0.0
  %6324 = vmatprep.subr.mxu0 0.0
  %6325 = vmatpush1.msra.mxu0 0.0
  %6326 = vmatprep.subr.mxu0 0.0
  %6327 = vmatpush1.msra.mxu0 0.0
  %6328 = vmatprep.subr.mxu0 0.0
  %6329 = vmatpush1.msra.mxu0 0.0
  %6330 = vmatprep.subr.mxu0 0.0
  %6331 = vmatpush1.msra.mxu0 0.0
  %6332 = vmatprep.subr.mxu0 0.0
  %6333 = vmatpush1.msra.mxu0 0.0
  %6334 = vmatprep.subr.mxu0 0.0
  %6335 = vmatpush1.msra.mxu0 0.0
  %6336 = vmatprep.subr.mxu0 0.0
  %6337 = vmatpush1.msra.mxu0 0.0
  %6338 = vmatprep.subr.mxu0 0.0
  %6339 = vmatpush1.msra.mxu0 0.0
  %6340 = vmatprep.subr.mxu0 0.0
  %6341 = vmatpush1.msra.mxu0 0.0
  %6342 = vmatprep.subr.mxu0 0.0
  %6343 = vmatpush1.msra.mxu0 0.0
  %6344 = vmatprep.subr.mxu0 0.0
  %6345 = vmatpush1.msra.mxu0 0.0
  %6346 = vmatprep.subr.mxu0 0.0
  %6347 = vmatpush1.msra.mxu0 0.0
  %6348 = vmatprep.mubr.f32.mxu0 0.0
  %v6349 = vand.u32 %v4251, 4294901760
  %v6350 = vsub.f32 %v4251, %v6349
  %v6351 = vand.u32 %v6350, 4294901760
  %v6352 = vsub.f32 %v6350, %v6351
  %v6353 = vand.u32 %v6352, 4294901760
  %6354 = vmatmul.mubr.f32.gmra.mrb[0].mxu0 %v6353
  %v6355 = vpop.f32.mrb[0].mxu0
  %v6356 = vadd.f32 0.0, %v6355
  %v6357 = vpop.f32.mrb[0].mxu0
  %6358 = vmatprep.mubr.f32.mxu0 0.0
  %v6359 = vand.u32 %v4254, 4294901760
  %v6360 = vsub.f32 %v4254, %v6359
  %v6361 = vand.u32 %v6360, 4294901760
  %v6362 = vsub.f32 %v6360, %v6361
  %v6363 = vand.u32 %v6362, 4294901760
  %6364 = vmatmul.mubr.f32.gmra.mrb[0].mxu0 %v6363
  %v6365 = vpop.f32.mrb[0].mxu0
  %v6366 = vadd.f32 0.0, %v6365
  %v6367 = vpop.f32.mrb[0].mxu0
  %6368 = vdwg.mxu0
  %6369 = vmatprep.subr.mxu0 0.0
  %v6370 = vand.u32 %v6279, 4294901760
  %v6371 = vsub.f32 %v6279, %v6370
  %v6372 = vand.u32 %v6371, 4294901760
  %v6373 = vsub.f32 %v6371, %v6372
  %v6374 = vand.u32 %v6373, 4294901760
  %6375 = vmatpush1.msra.mxu0 %v6374
  %6376 = vmatprep.subr.mxu0 0.0
  %v6377 = vand.u32 %v6281, 4294901760
  %v6378 = vsub.f32 %v6281, %v6377
  %v6379 = vand.u32 %v6378, 4294901760
  %v6380 = vsub.f32 %v6378, %v6379
  %v6381 = vand.u32 %v6380, 4294901760
  %6382 = vmatpush1.msra.mxu0 %v6381
  %6383 = vmatprep.subr.mxu0 0.0
  %6384 = vmatpush1.msra.mxu0 0.0
  %6385 = vmatprep.subr.mxu0 0.0
  %6386 = vmatpush1.msra.mxu0 0.0
  %6387 = vmatprep.subr.mxu0 0.0
  %6388 = vmatpush1.msra.mxu0 0.0
  %6389 = vmatprep.subr.mxu0 0.0
  %6390 = vmatpush1.msra.mxu0 0.0
  %6391 = vmatprep.subr.mxu0 0.0
  %6392 = vmatpush1.msra.mxu0 0.0
  %6393 = vmatprep.subr.mxu0 0.0
  %6394 = vmatpush1.msra.mxu0 0.0
  %6395 = vmatprep.subr.mxu0 0.0
  %6396 = vmatpush1.msra.mxu0 0.0
  %6397 = vmatprep.subr.mxu0 0.0
  %6398 = vmatpush1.msra.mxu0 0.0
  %6399 = vmatprep.subr.mxu0 0.0
  %6400 = vmatpush1.msra.mxu0 0.0
  %6401 = vmatprep.subr.mxu0 0.0
  %6402 = vmatpush1.msra.mxu0 0.0
  %6403 = vmatprep.subr.mxu0 0.0
  %6404 = vmatpush1.msra.mxu0 0.0
  %6405 = vmatprep.subr.mxu0 0.0
  %6406 = vmatpush1.msra.mxu0 0.0
  %6407 = vmatprep.subr.mxu0 0.0
  %6408 = vmatpush1.msra.mxu0 0.0
  %6409 = vmatprep.subr.mxu0 0.0
  %6410 = vmatpush1.msra.mxu0 0.0
  %6411 = vmatprep.subr.mxu0 0.0
  %6412 = vmatpush1.msra.mxu0 0.0
  %6413 = vmatprep.subr.mxu0 0.0
  %6414 = vmatpush1.msra.mxu0 0.0
  %6415 = vmatprep.subr.mxu0 0.0
  %6416 = vmatpush1.msra.mxu0 0.0
  %6417 = vmatprep.subr.mxu0 0.0
  %6418 = vmatpush1.msra.mxu0 0.0
  %6419 = vmatprep.subr.mxu0 0.0
  %6420 = vmatpush1.msra.mxu0 0.0
  %6421 = vmatprep.subr.mxu0 0.0
  %6422 = vmatpush1.msra.mxu0 0.0
  %6423 = vmatprep.subr.mxu0 0.0
  %6424 = vmatpush1.msra.mxu0 0.0
  %6425 = vmatprep.subr.mxu0 0.0
  %6426 = vmatpush1.msra.mxu0 0.0
  %6427 = vmatprep.subr.mxu0 0.0
  %6428 = vmatpush1.msra.mxu0 0.0
  %6429 = vmatprep.subr.mxu0 0.0
  %6430 = vmatpush1.msra.mxu0 0.0
  %6431 = vmatprep.subr.mxu0 0.0
  %6432 = vmatpush1.msra.mxu0 0.0
  %6433 = vmatprep.subr.mxu0 0.0
  %6434 = vmatpush1.msra.mxu0 0.0
  %6435 = vmatprep.subr.mxu0 0.0
  %6436 = vmatpush1.msra.mxu0 0.0
  %6437 = vmatprep.subr.mxu0 0.0
  %6438 = vmatpush1.msra.mxu0 0.0
  %6439 = vmatprep.subr.mxu0 0.0
  %6440 = vmatpush1.msra.mxu0 0.0
  %6441 = vmatprep.subr.mxu0 0.0
  %6442 = vmatpush1.msra.mxu0 0.0
  %6443 = vmatprep.mubr.f32.mxu0 0.0
  %v6444 = vand.u32 %v4251, 4294901760
  %6445 = vmatmul.mubr.f32.gmra.mrb[0].mxu0 %v6444
  %v6446 = vpop.f32.mrb[0].mxu0
  %v6447 = vadd.f32 %v6356, %v6446
  %v6448 = vpop.f32.mrb[0].mxu0
  %6449 = vmatprep.mubr.f32.mxu0 0.0
  %v6450 = vand.u32 %v4254, 4294901760
  %6451 = vmatmul.mubr.f32.gmra.mrb[0].mxu0 %v6450
  %v6452 = vpop.f32.mrb[0].mxu0
  %v6453 = vadd.f32 %v6366, %v6452
  %v6454 = vpop.f32.mrb[0].mxu0
  %6455 = vdwg.mxu0
  %6456 = vmatprep.subr.mxu0 0.0
  %v6457 = vand.u32 %v6279, 4294901760
  %v6458 = vsub.f32 %v6279, %v6457
  %6459 = vmatpush1.msra.mxu0 %v6458
  %6460 = vmatprep.subr.mxu0 0.0
  %v6461 = vand.u32 %v6281, 4294901760
  %v6462 = vsub.f32 %v6281, %v6461
  %6463 = vmatpush1.msra.mxu0 %v6462
  %6464 = vmatprep.subr.mxu0 0.0
  %6465 = vmatpush1.msra.mxu0 0.0
  %6466 = vmatprep.subr.mxu0 0.0
  %6467 = vmatpush1.msra.mxu0 0.0
  %6468 = vmatprep.subr.mxu0 0.0
  %6469 = vmatpush1.msra.mxu0 0.0
  %6470 = vmatprep.subr.mxu0 0.0
  %6471 = vmatpush1.msra.mxu0 0.0
  %6472 = vmatprep.subr.mxu0 0.0
  %6473 = vmatpush1.msra.mxu0 0.0
  %6474 = vmatprep.subr.mxu0 0.0
  %6475 = vmatpush1.msra.mxu0 0.0
  %6476 = vmatprep.subr.mxu0 0.0
  %6477 = vmatpush1.msra.mxu0 0.0
  %6478 = vmatprep.subr.mxu0 0.0
  %6479 = vmatpush1.msra.mxu0 0.0
  %6480 = vmatprep.subr.mxu0 0.0
  %6481 = vmatpush1.msra.mxu0 0.0
  %6482 = vmatprep.subr.mxu0 0.0
  %6483 = vmatpush1.msra.mxu0 0.0
  %6484 = vmatprep.subr.mxu0 0.0
  %6485 = vmatpush1.msra.mxu0 0.0
  %6486 = vmatprep.subr.mxu0 0.0
  %6487 = vmatpush1.msra.mxu0 0.0
  %6488 = vmatprep.subr.mxu0 0.0
  %6489 = vmatpush1.msra.mxu0 0.0
  %6490 = vmatprep.subr.mxu0 0.0
  %6491 = vmatpush1.msra.mxu0 0.0
  %6492 = vmatprep.subr.mxu0 0.0
  %6493 = vmatpush1.msra.mxu0 0.0
  %6494 = vmatprep.subr.mxu0 0.0
  %6495 = vmatpush1.msra.mxu0 0.0
  %6496 = vmatprep.subr.mxu0 0.0
  %6497 = vmatpush1.msra.mxu0 0.0
  %6498 = vmatprep.subr.mxu0 0.0
  %6499 = vmatpush1.msra.mxu0 0.0
  %6500 = vmatprep.subr.mxu0 0.0
  %6501 = vmatpush1.msra.mxu0 0.0
  %6502 = vmatprep.subr.mxu0 0.0
  %6503 = vmatpush1.msra.mxu0 0.0
  %6504 = vmatprep.subr.mxu0 0.0
  %6505 = vmatpush1.msra.mxu0 0.0
  %6506 = vmatprep.subr.mxu0 0.0
  %6507 = vmatpush1.msra.mxu0 0.0
  %6508 = vmatprep.subr.mxu0 0.0
  %6509 = vmatpush1.msra.mxu0 0.0
  %6510 = vmatprep.subr.mxu0 0.0
  %6511 = vmatpush1.msra.mxu0 0.0
  %6512 = vmatprep.subr.mxu0 0.0
  %6513 = vmatpush1.msra.mxu0 0.0
  %6514 = vmatprep.subr.mxu0 0.0
  %6515 = vmatpush1.msra.mxu0 0.0
  %6516 = vmatprep.subr.mxu0 0.0
  %6517 = vmatpush1.msra.mxu0 0.0
  %6518 = vmatprep.subr.mxu0 0.0
  %6519 = vmatpush1.msra.mxu0 0.0
  %6520 = vmatprep.subr.mxu0 0.0
  %6521 = vmatpush1.msra.mxu0 0.0
  %6522 = vmatprep.subr.mxu0 0.0
  %6523 = vmatpush1.msra.mxu0 0.0
  %6524 = vmatprep.mubr.f32.mxu0 0.0
  %v6525 = vand.u32 %v4251, 4294901760
  %v6526 = vsub.f32 %v4251, %v6525
  %6527 = vmatmul.mubr.f32.gmra.mrb[0].mxu0 %v6526
  %v6528 = vpop.f32.mrb[0].mxu0
  %v6529 = vadd.f32 %v6447, %v6528
  %v6530 = vpop.f32.mrb[0].mxu0
  %6531 = vmatprep.mubr.f32.mxu0 0.0
  %v6532 = vand.u32 %v4254, 4294901760
  %v6533 = vsub.f32 %v4254, %v6532
  %6534 = vmatmul.mubr.f32.gmra.mrb[0].mxu0 %v6533
  %v6535 = vpop.f32.mrb[0].mxu0
  %v6536 = vadd.f32 %v6453, %v6535
  %v6537 = vpop.f32.mrb[0].mxu0
  %6538 = vdwg.mxu0
  %6539 = vmatprep.subr.mxu0 0.0
  %v6540 = vand.u32 %v6279, 4294901760
  %6541 = vmatpush1.msra.mxu0 %v6540
  %6542 = vmatprep.subr.mxu0 0.0
  %v6543 = vand.u32 %v6281, 4294901760
  %6544 = vmatpush1.msra.mxu0 %v6543
  %6545 = vmatprep.subr.mxu0 0.0
  %6546 = vmatpush1.msra.mxu0 0.0
  %6547 = vmatprep.subr.mxu0 0.0
  %6548 = vmatpush1.msra.mxu0 0.0
  %6549 = vmatprep.subr.mxu0 0.0
  %6550 = vmatpush1.msra.mxu0 0.0
  %6551 = vmatprep.subr.mxu0 0.0
  %6552 = vmatpush1.msra.mxu0 0.0
  %6553 = vmatprep.subr.mxu0 0.0
  %6554 = vmatpush1.msra.mxu0 0.0
  %6555 = vmatprep.subr.mxu0 0.0
  %6556 = vmatpush1.msra.mxu0 0.0
  %6557 = vmatprep.subr.mxu0 0.0
  %6558 = vmatpush1.msra.mxu0 0.0
  %6559 = vmatprep.subr.mxu0 0.0
  %6560 = vmatpush1.msra.mxu0 0.0
  %6561 = vmatprep.subr.mxu0 0.0
  %6562 = vmatpush1.msra.mxu0 0.0
  %6563 = vmatprep.subr.mxu0 0.0
  %6564 = vmatpush1.msra.mxu0 0.0
  %6565 = vmatprep.subr.mxu0 0.0
  %6566 = vmatpush1.msra.mxu0 0.0
  %6567 = vmatprep.subr.mxu0 0.0
  %6568 = vmatpush1.msra.mxu0 0.0
  %6569 = vmatprep.subr.mxu0 0.0
  %6570 = vmatpush1.msra.mxu0 0.0
  %6571 = vmatprep.subr.mxu0 0.0
  %6572 = vmatpush1.msra.mxu0 0.0
  %6573 = vmatprep.subr.mxu0 0.0
  %6574 = vmatpush1.msra.mxu0 0.0
  %6575 = vmatprep.subr.mxu0 0.0
  %6576 = vmatpush1.msra.mxu0 0.0
  %6577 = vmatprep.subr.mxu0 0.0
  %6578 = vmatpush1.msra.mxu0 0.0
  %6579 = vmatprep.subr.mxu0 0.0
  %6580 = vmatpush1.msra.mxu0 0.0
  %6581 = vmatprep.subr.mxu0 0.0
  %6582 = vmatpush1.msra.mxu0 0.0
  %6583 = vmatprep.subr.mxu0 0.0
  %6584 = vmatpush1.msra.mxu0 0.0
  %6585 = vmatprep.subr.mxu0 0.0
  %6586 = vmatpush1.msra.mxu0 0.0
  %6587 = vmatprep.subr.mxu0 0.0
  %6588 = vmatpush1.msra.mxu0 0.0
  %6589 = vmatprep.subr.mxu0 0.0
  %6590 = vmatpush1.msra.mxu0 0.0
  %6591 = vmatprep.subr.mxu0 0.0
  %6592 = vmatpush1.msra.mxu0 0.0
  %6593 = vmatprep.subr.mxu0 0.0
  %6594 = vmatpush1.msra.mxu0 0.0
  %6595 = vmatprep.subr.mxu0 0.0
  %6596 = vmatpush1.msra.mxu0 0.0
  %6597 = vmatprep.subr.mxu0 0.0
  %6598 = vmatpush1.msra.mxu0 0.0
  %6599 = vmatprep.subr.mxu0 0.0
  %6600 = vmatpush1.msra.mxu0 0.0
  %6601 = vmatprep.subr.mxu0 0.0
  %6602 = vmatpush1.msra.mxu0 0.0
  %6603 = vmatprep.subr.mxu0 0.0
  %6604 = vmatpush1.msra.mxu0 0.0
  %6605 = vmatprep.mubr.f32.mxu0 0.0
  %v6606 = vand.u32 %v4251, 4294901760
  %v6607 = vsub.f32 %v4251, %v6606
  %v6608 = vand.u32 %v6607, 4294901760
  %6609 = vmatmul.mubr.f32.gmra.mrb[0].mxu0 %v6608
  %v6610 = vpop.f32.mrb[0].mxu0
  %v6611 = vadd.f32 %v6529, %v6610
  %v6612 = vpop.f32.mrb[0].mxu0
  %6613 = vmatprep.mubr.f32.mxu0 0.0
  %v6614 = vand.u32 %v4254, 4294901760
  %v6615 = vsub.f32 %v4254, %v6614
  %v6616 = vand.u32 %v6615, 4294901760
  %6617 = vmatmul.mubr.f32.gmra.mrb[0].mxu0 %v6616
  %v6618 = vpop.f32.mrb[0].mxu0
  %v6619 = vadd.f32 %v6536, %v6618
  %v6620 = vpop.f32.mrb[0].mxu0
  %6621 = vdwg.mxu0
  %6622 = vmatprep.subr.mxu0 0.0
  %v6623 = vand.u32 %v6279, 4294901760
  %v6624 = vsub.f32 %v6279, %v6623
  %v6625 = vand.u32 %v6624, 4294901760
  %6626 = vmatpush1.msra.mxu0 %v6625
  %6627 = vmatprep.subr.mxu0 0.0
  %v6628 = vand.u32 %v6281, 4294901760
  %v6629 = vsub.f32 %v6281, %v6628
  %v6630 = vand.u32 %v6629, 4294901760
  %6631 = vmatpush1.msra.mxu0 %v6630
  %6632 = vmatprep.subr.mxu0 0.0
  %6633 = vmatpush1.msra.mxu0 0.0
  %6634 = vmatprep.subr.mxu0 0.0
  %6635 = vmatpush1.msra.mxu0 0.0
  %6636 = vmatprep.subr.mxu0 0.0
  %6637 = vmatpush1.msra.mxu0 0.0
  %6638 = vmatprep.subr.mxu0 0.0
  %6639 = vmatpush1.msra.mxu0 0.0
  %6640 = vmatprep.subr.mxu0 0.0
  %6641 = vmatpush1.msra.mxu0 0.0
  %6642 = vmatprep.subr.mxu0 0.0
  %6643 = vmatpush1.msra.mxu0 0.0
  %6644 = vmatprep.subr.mxu0 0.0
  %6645 = vmatpush1.msra.mxu0 0.0
  %6646 = vmatprep.subr.mxu0 0.0
  %6647 = vmatpush1.msra.mxu0 0.0
  %6648 = vmatprep.subr.mxu0 0.0
  %6649 = vmatpush1.msra.mxu0 0.0
  %6650 = vmatprep.subr.mxu0 0.0
  %6651 = vmatpush1.msra.mxu0 0.0
  %6652 = vmatprep.subr.mxu0 0.0
  %6653 = vmatpush1.msra.mxu0 0.0
  %6654 = vmatprep.subr.mxu0 0.0
  %6655 = vmatpush1.msra.mxu0 0.0
  %6656 = vmatprep.subr.mxu0 0.0
  %6657 = vmatpush1.msra.mxu0 0.0
  %6658 = vmatprep.subr.mxu0 0.0
  %6659 = vmatpush1.msra.mxu0 0.0
  %6660 = vmatprep.subr.mxu0 0.0
  %6661 = vmatpush1.msra.mxu0 0.0
  %6662 = vmatprep.subr.mxu0 0.0
  %6663 = vmatpush1.msra.mxu0 0.0
  %6664 = vmatprep.subr.mxu0 0.0
  %6665 = vmatpush1.msra.mxu0 0.0
  %6666 = vmatprep.subr.mxu0 0.0
  %6667 = vmatpush1.msra.mxu0 0.0
  %6668 = vmatprep.subr.mxu0 0.0
  %6669 = vmatpush1.msra.mxu0 0.0
  %6670 = vmatprep.subr.mxu0 0.0
  %6671 = vmatpush1.msra.mxu0 0.0
  %6672 = vmatprep.subr.mxu0 0.0
  %6673 = vmatpush1.msra.mxu0 0.0
  %6674 = vmatprep.subr.mxu0 0.0
  %6675 = vmatpush1.msra.mxu0 0.0
  %6676 = vmatprep.subr.mxu0 0.0
  %6677 = vmatpush1.msra.mxu0 0.0
  %6678 = vmatprep.subr.mxu0 0.0
  %6679 = vmatpush1.msra.mxu0 0.0
  %6680 = vmatprep.subr.mxu0 0.0
  %6681 = vmatpush1.msra.mxu0 0.0
  %6682 = vmatprep.subr.mxu0 0.0
  %6683 = vmatpush1.msra.mxu0 0.0
  %6684 = vmatprep.subr.mxu0 0.0
  %6685 = vmatpush1.msra.mxu0 0.0
  %6686 = vmatprep.subr.mxu0 0.0
  %6687 = vmatpush1.msra.mxu0 0.0
  %6688 = vmatprep.subr.mxu0 0.0
  %6689 = vmatpush1.msra.mxu0 0.0
  %6690 = vmatprep.subr.mxu0 0.0
  %6691 = vmatpush1.msra.mxu0 0.0
  %6692 = vmatprep.mubr.f32.mxu0 0.0
  %v6693 = vand.u32 %v4251, 4294901760
  %6694 = vmatmul.mubr.f32.gmra.mrb[0].mxu0 %v6693
  %v6695 = vpop.f32.mrb[0].mxu0
  %v6696 = vadd.f32 %v6611, %v6695
  %v6697 = vpop.f32.mrb[0].mxu0
  %6698 = vmatprep.mubr.f32.mxu0 0.0
  %v6699 = vand.u32 %v4254, 4294901760
  %6700 = vmatmul.mubr.f32.gmra.mrb[0].mxu0 %v6699
  %v6701 = vpop.f32.mrb[0].mxu0
  %v6702 = vadd.f32 %v6619, %v6701
  %v6703 = vpop.f32.mrb[0].mxu0
  %6704 = vdwg.mxu0
  %6705 = vmatprep.subr.mxu0 0.0
  %v6706 = vand.u32 %v6279, 4294901760
  %6707 = vmatpush1.msra.mxu0 %v6706
  %6708 = vmatprep.subr.mxu0 0.0
  %v6709 = vand.u32 %v6281, 4294901760
  %6710 = vmatpush1.msra.mxu0 %v6709
  %6711 = vmatprep.subr.mxu0 0.0
  %6712 = vmatpush1.msra.mxu0 0.0
  %6713 = vmatprep.subr.mxu0 0.0
  %6714 = vmatpush1.msra.mxu0 0.0
  %6715 = vmatprep.subr.mxu0 0.0
  %6716 = vmatpush1.msra.mxu0 0.0
  %6717 = vmatprep.subr.mxu0 0.0
  %6718 = vmatpush1.msra.mxu0 0.0
  %6719 = vmatprep.subr.mxu0 0.0
  %6720 = vmatpush1.msra.mxu0 0.0
  %6721 = vmatprep.subr.mxu0 0.0
  %6722 = vmatpush1.msra.mxu0 0.0
  %6723 = vmatprep.subr.mxu0 0.0
  %6724 = vmatpush1.msra.mxu0 0.0
  %6725 = vmatprep.subr.mxu0 0.0
  %6726 = vmatpush1.msra.mxu0 0.0
  %6727 = vmatprep.subr.mxu0 0.0
  %6728 = vmatpush1.msra.mxu0 0.0
  %6729 = vmatprep.subr.mxu0 0.0
  %6730 = vmatpush1.msra.mxu0 0.0
  %6731 = vmatprep.subr.mxu0 0.0
  %6732 = vmatpush1.msra.mxu0 0.0
  %6733 = vmatprep.subr.mxu0 0.0
  %6734 = vmatpush1.msra.mxu0 0.0
  %6735 = vmatprep.subr.mxu0 0.0
  %6736 = vmatpush1.msra.mxu0 0.0
  %6737 = vmatprep.subr.mxu0 0.0
  %6738 = vmatpush1.msra.mxu0 0.0
  %6739 = vmatprep.subr.mxu0 0.0
  %6740 = vmatpush1.msra.mxu0 0.0
  %6741 = vmatprep.subr.mxu0 0.0
  %6742 = vmatpush1.msra.mxu0 0.0
  %6743 = vmatprep.subr.mxu0 0.0
  %6744 = vmatpush1.msra.mxu0 0.0
  %6745 = vmatprep.subr.mxu0 0.0
  %6746 = vmatpush1.msra.mxu0 0.0
  %6747 = vmatprep.subr.mxu0 0.0
  %6748 = vmatpush1.msra.mxu0 0.0
  %6749 = vmatprep.subr.mxu0 0.0
  %6750 = vmatpush1.msra.mxu0 0.0
  %6751 = vmatprep.subr.mxu0 0.0
  %6752 = vmatpush1.msra.mxu0 0.0
  %6753 = vmatprep.subr.mxu0 0.0
  %6754 = vmatpush1.msra.mxu0 0.0
  %6755 = vmatprep.subr.mxu0 0.0
  %6756 = vmatpush1.msra.mxu0 0.0
  %6757 = vmatprep.subr.mxu0 0.0
  %6758 = vmatpush1.msra.mxu0 0.0
  %6759 = vmatprep.subr.mxu0 0.0
  %6760 = vmatpush1.msra.mxu0 0.0
  %6761 = vmatprep.subr.mxu0 0.0
  %6762 = vmatpush1.msra.mxu0 0.0
  %6763 = vmatprep.subr.mxu0 0.0
  %6764 = vmatpush1.msra.mxu0 0.0
  %6765 = vmatprep.subr.mxu0 0.0
  %6766 = vmatpush1.msra.mxu0 0.0
  %6767 = vmatprep.subr.mxu0 0.0
  %6768 = vmatpush1.msra.mxu0 0.0
  %6769 = vmatprep.subr.mxu0 0.0
  %6770 = vmatpush1.msra.mxu0 0.0
  %6771 = vmatprep.mubr.f32.mxu0 0.0
  %v6772 = vand.u32 %v4251, 4294901760
  %6773 = vmatmul.mubr.f32.gmra.mrb[0].mxu0 %v6772
  %v6774 = vpop.f32.mrb[0].mxu0
  %v6775 = vadd.f32 %v6696, %v6774
  %v6776 = vpop.f32.mrb[0].mxu0
  %6777 = vmatprep.mubr.f32.mxu0 0.0
  %v6778 = vand.u32 %v4254, 4294901760
  %6779 = vmatmul.mubr.f32.gmra.mrb[0].mxu0 %v6778
  %v6780 = vpop.f32.mrb[0].mxu0
  %v6781 = vadd.f32 %v6702, %v6780
  %v6782 = vpop.f32.mrb[0].mxu0
  %6783 = vdwg.mxu0
  %v6784 = vmax.f32 %v6775, 1e-38
  %v6785 = vmax.f32 %v6781, 1e-38
  %v6786 = vlog2.pop %v6784
  %v6787 = vmul.f32 %v6786, 0.6931472
  %v6788 = vlog2.pop %v6785
  %v6789 = vmul.f32 %v6788, 0.6931472
  %v6790 = vadd.f32 %v6787, %v6275
  %v6791 = vadd.f32 %v6789, %v6275
  %v6792 = vld [vmem:[%s2154] sm:$0xff]
  %v6793 = vld [vmem:[%s2154 + $0x8] sm:$0xff]
  %v6794 = vadd.f32 %v6792, %v6790
  %v6795 = vadd.f32 %v6793, %v6791
  %v6796 = vmax.f32 %v6794, %v6795
  %v6797 = vrot.slane %v6796, 4
  %v6798 = vmax.f32 %v6796, %v6797
  %v6799 = vrot.slane %v6798, 2
  %v6800 = vmax.f32 %v6798, %v6799
  %v6801 = vrot.slane %v6800, 1
  %v6802 = vmax.f32 %v6800, %v6801
  %v6803 = vsub.f32 %v6794, %v6802
  %v6804 = vsub.f32 %v6795, %v6802
  %v6805 = vmul.f32 %v6803, 1.442695
  %v6806 = vpow.pop %v6805
  %v6807 = vmul.f32 %v6804, 1.442695
  %v6808 = vpow.pop %v6807
  %6809 = vmatprep.subr.mxu0 0.0
  %v6810 = vand.u32 %v6806, 4294901760
  %6811 = vmatpush1.msra.mxu0 %v6810
  %6812 = vmatprep.subr.mxu0 0.0
  %v6813 = vand.u32 %v6808, 4294901760
  %6814 = vmatpush1.msra.mxu0 %v6813
  %6815 = vmatprep.subr.mxu0 0.0
  %6816 = vmatpush1.msra.mxu0 0.0
  %6817 = vmatprep.subr.mxu0 0.0
  %6818 = vmatpush1.msra.mxu0 0.0
  %6819 = vmatprep.subr.mxu0 0.0
  %6820 = vmatpush1.msra.mxu0 0.0
  %6821 = vmatprep.subr.mxu0 0.0
  %6822 = vmatpush1.msra.mxu0 0.0
  %6823 = vmatprep.subr.mxu0 0.0
  %6824 = vmatpush1.msra.mxu0 0.0
  %6825 = vmatprep.subr.mxu0 0.0
  %6826 = vmatpush1.msra.mxu0 0.0
  %6827 = vmatprep.subr.mxu0 0.0
  %6828 = vmatpush1.msra.mxu0 0.0
  %6829 = vmatprep.subr.mxu0 0.0
  %6830 = vmatpush1.msra.mxu0 0.0
  %6831 = vmatprep.subr.mxu0 0.0
  %6832 = vmatpush1.msra.mxu0 0.0
  %6833 = vmatprep.subr.mxu0 0.0
  %6834 = vmatpush1.msra.mxu0 0.0
  %6835 = vmatprep.subr.mxu0 0.0
  %6836 = vmatpush1.msra.mxu0 0.0
  %6837 = vmatprep.subr.mxu0 0.0
  %6838 = vmatpush1.msra.mxu0 0.0
  %6839 = vmatprep.subr.mxu0 0.0
  %6840 = vmatpush1.msra.mxu0 0.0
  %6841 = vmatprep.subr.mxu0 0.0
  %6842 = vmatpush1.msra.mxu0 0.0
  %6843 = vmatprep.subr.mxu0 0.0
  %6844 = vmatpush1.msra.mxu0 0.0
  %6845 = vmatprep.subr.mxu0 0.0
  %6846 = vmatpush1.msra.mxu0 0.0
  %6847 = vmatprep.subr.mxu0 0.0
  %6848 = vmatpush1.msra.mxu0 0.0
  %6849 = vmatprep.subr.mxu0 0.0
  %6850 = vmatpush1.msra.mxu0 0.0
  %6851 = vmatprep.subr.mxu0 0.0
  %6852 = vmatpush1.msra.mxu0 0.0
  %6853 = vmatprep.subr.mxu0 0.0
  %6854 = vmatpush1.msra.mxu0 0.0
  %6855 = vmatprep.subr.mxu0 0.0
  %6856 = vmatpush1.msra.mxu0 0.0
  %6857 = vmatprep.subr.mxu0 0.0
  %6858 = vmatpush1.msra.mxu0 0.0
  %6859 = vmatprep.subr.mxu0 0.0
  %6860 = vmatpush1.msra.mxu0 0.0
  %6861 = vmatprep.subr.mxu0 0.0
  %6862 = vmatpush1.msra.mxu0 0.0
  %6863 = vmatprep.subr.mxu0 0.0
  %6864 = vmatpush1.msra.mxu0 0.0
  %6865 = vmatprep.subr.mxu0 0.0
  %6866 = vmatpush1.msra.mxu0 0.0
  %6867 = vmatprep.subr.mxu0 0.0
  %6868 = vmatpush1.msra.mxu0 0.0
  %6869 = vmatprep.subr.mxu0 0.0
  %6870 = vmatpush1.msra.mxu0 0.0
  %6871 = vmatprep.subr.mxu0 0.0
  %6872 = vmatpush1.msra.mxu0 0.0
  %6873 = vmatprep.subr.mxu0 0.0
  %6874 = vmatpush1.msra.mxu0 0.0
  %6875 = vmatprep.mubr.f32.mxu0 0.0
  %v6876 = vand.u32 %v3764, 4294901760
  %v6877 = vsub.f32 %v3764, %v6876
  %v6878 = vand.u32 %v6877, 4294901760
  %v6879 = vsub.f32 %v6877, %v6878
  %v6880 = vand.u32 %v6879, 4294901760
  %6881 = vmatmul.mubr.f32.gmra.mrb[0].mxu0 %v6880
  %v6882 = vpop.f32.mrb[0].mxu0
  %v6883 = vadd.f32 0.0, %v6882
  %v6884 = vpop.f32.mrb[0].mxu0
  %6885 = vdwg.mxu0
  %6886 = vmatprep.subr.mxu0 0.0
  %v6887 = vand.u32 %v6806, 4294901760
  %v6888 = vsub.f32 %v6806, %v6887
  %v6889 = vand.u32 %v6888, 4294901760
  %v6890 = vsub.f32 %v6888, %v6889
  %v6891 = vand.u32 %v6890, 4294901760
  %6892 = vmatpush1.msra.mxu0 %v6891
  %6893 = vmatprep.subr.mxu0 0.0
  %v6894 = vand.u32 %v6808, 4294901760
  %v6895 = vsub.f32 %v6808, %v6894
  %v6896 = vand.u32 %v6895, 4294901760
  %v6897 = vsub.f32 %v6895, %v6896
  %v6898 = vand.u32 %v6897, 4294901760
  %6899 = vmatpush1.msra.mxu0 %v6898
  %6900 = vmatprep.subr.mxu0 0.0
  %6901 = vmatpush1.msra.mxu0 0.0
  %6902 = vmatprep.subr.mxu0 0.0
  %6903 = vmatpush1.msra.mxu0 0.0
  %6904 = vmatprep.subr.mxu0 0.0
  %6905 = vmatpush1.msra.mxu0 0.0
  %6906 = vmatprep.subr.mxu0 0.0
  %6907 = vmatpush1.msra.mxu0 0.0
  %6908 = vmatprep.subr.mxu0 0.0
  %6909 = vmatpush1.msra.mxu0 0.0
  %6910 = vmatprep.subr.mxu0 0.0
  %6911 = vmatpush1.msra.mxu0 0.0
  %6912 = vmatprep.subr.mxu0 0.0
  %6913 = vmatpush1.msra.mxu0 0.0
  %6914 = vmatprep.subr.mxu0 0.0
  %6915 = vmatpush1.msra.mxu0 0.0
  %6916 = vmatprep.subr.mxu0 0.0
  %6917 = vmatpush1.msra.mxu0 0.0
  %6918 = vmatprep.subr.mxu0 0.0
  %6919 = vmatpush1.msra.mxu0 0.0
  %6920 = vmatprep.subr.mxu0 0.0
  %6921 = vmatpush1.msra.mxu0 0.0
  %6922 = vmatprep.subr.mxu0 0.0
  %6923 = vmatpush1.msra.mxu0 0.0
  %6924 = vmatprep.subr.mxu0 0.0
  %6925 = vmatpush1.msra.mxu0 0.0
  %6926 = vmatprep.subr.mxu0 0.0
  %6927 = vmatpush1.msra.mxu0 0.0
  %6928 = vmatprep.subr.mxu0 0.0
  %6929 = vmatpush1.msra.mxu0 0.0
  %6930 = vmatprep.subr.mxu0 0.0
  %6931 = vmatpush1.msra.mxu0 0.0
  %6932 = vmatprep.subr.mxu0 0.0
  %6933 = vmatpush1.msra.mxu0 0.0
  %6934 = vmatprep.subr.mxu0 0.0
  %6935 = vmatpush1.msra.mxu0 0.0
  %6936 = vmatprep.subr.mxu0 0.0
  %6937 = vmatpush1.msra.mxu0 0.0
  %6938 = vmatprep.subr.mxu0 0.0
  %6939 = vmatpush1.msra.mxu0 0.0
  %6940 = vmatprep.subr.mxu0 0.0
  %6941 = vmatpush1.msra.mxu0 0.0
  %6942 = vmatprep.subr.mxu0 0.0
  %6943 = vmatpush1.msra.mxu0 0.0
  %6944 = vmatprep.subr.mxu0 0.0
  %6945 = vmatpush1.msra.mxu0 0.0
  %6946 = vmatprep.subr.mxu0 0.0
  %6947 = vmatpush1.msra.mxu0 0.0
  %6948 = vmatprep.subr.mxu0 0.0
  %6949 = vmatpush1.msra.mxu0 0.0
  %6950 = vmatprep.subr.mxu0 0.0
  %6951 = vmatpush1.msra.mxu0 0.0
  %6952 = vmatprep.subr.mxu0 0.0
  %6953 = vmatpush1.msra.mxu0 0.0
  %6954 = vmatprep.subr.mxu0 0.0
  %6955 = vmatpush1.msra.mxu0 0.0
  %6956 = vmatprep.subr.mxu0 0.0
  %6957 = vmatpush1.msra.mxu0 0.0
  %6958 = vmatprep.subr.mxu0 0.0
  %6959 = vmatpush1.msra.mxu0 0.0
  %6960 = vmatprep.mubr.f32.mxu0 0.0
  %v6961 = vand.u32 %v3764, 4294901760
  %6962 = vmatmul.mubr.f32.gmra.mrb[0].mxu0 %v6961
  %v6963 = vpop.f32.mrb[0].mxu0
  %v6964 = vadd.f32 %v6883, %v6963
  %v6965 = vpop.f32.mrb[0].mxu0
  %6966 = vdwg.mxu0
  %6967 = vmatprep.subr.mxu0 0.0
  %v6968 = vand.u32 %v6806, 4294901760
  %v6969 = vsub.f32 %v6806, %v6968
  %6970 = vmatpush1.msra.mxu0 %v6969
  %6971 = vmatprep.subr.mxu0 0.0
  %v6972 = vand.u32 %v6808, 4294901760
  %v6973 = vsub.f32 %v6808, %v6972
  %6974 = vmatpush1.msra.mxu0 %v6973
  %6975 = vmatprep.subr.mxu0 0.0
  %6976 = vmatpush1.msra.mxu0 0.0
  %6977 = vmatprep.subr.mxu0 0.0
  %6978 = vmatpush1.msra.mxu0 0.0
  %6979 = vmatprep.subr.mxu0 0.0
  %6980 = vmatpush1.msra.mxu0 0.0
  %6981 = vmatprep.subr.mxu0 0.0
  %6982 = vmatpush1.msra.mxu0 0.0
  %6983 = vmatprep.subr.mxu0 0.0
  %6984 = vmatpush1.msra.mxu0 0.0
  %6985 = vmatprep.subr.mxu0 0.0
  %6986 = vmatpush1.msra.mxu0 0.0
  %6987 = vmatprep.subr.mxu0 0.0
  %6988 = vmatpush1.msra.mxu0 0.0
  %6989 = vmatprep.subr.mxu0 0.0
  %6990 = vmatpush1.msra.mxu0 0.0
  %6991 = vmatprep.subr.mxu0 0.0
  %6992 = vmatpush1.msra.mxu0 0.0
  %6993 = vmatprep.subr.mxu0 0.0
  %6994 = vmatpush1.msra.mxu0 0.0
  %6995 = vmatprep.subr.mxu0 0.0
  %6996 = vmatpush1.msra.mxu0 0.0
  %6997 = vmatprep.subr.mxu0 0.0
  %6998 = vmatpush1.msra.mxu0 0.0
  %6999 = vmatprep.subr.mxu0 0.0
  %7000 = vmatpush1.msra.mxu0 0.0
  %7001 = vmatprep.subr.mxu0 0.0
  %7002 = vmatpush1.msra.mxu0 0.0
  %7003 = vmatprep.subr.mxu0 0.0
  %7004 = vmatpush1.msra.mxu0 0.0
  %7005 = vmatprep.subr.mxu0 0.0
  %7006 = vmatpush1.msra.mxu0 0.0
  %7007 = vmatprep.subr.mxu0 0.0
  %7008 = vmatpush1.msra.mxu0 0.0
  %7009 = vmatprep.subr.mxu0 0.0
  %7010 = vmatpush1.msra.mxu0 0.0
  %7011 = vmatprep.subr.mxu0 0.0
  %7012 = vmatpush1.msra.mxu0 0.0
  %7013 = vmatprep.subr.mxu0 0.0
  %7014 = vmatpush1.msra.mxu0 0.0
  %7015 = vmatprep.subr.mxu0 0.0
  %7016 = vmatpush1.msra.mxu0 0.0
  %7017 = vmatprep.subr.mxu0 0.0
  %7018 = vmatpush1.msra.mxu0 0.0
  %7019 = vmatprep.subr.mxu0 0.0
  %7020 = vmatpush1.msra.mxu0 0.0
  %7021 = vmatprep.subr.mxu0 0.0
  %7022 = vmatpush1.msra.mxu0 0.0
  %7023 = vmatprep.subr.mxu0 0.0
  %7024 = vmatpush1.msra.mxu0 0.0
  %7025 = vmatprep.subr.mxu0 0.0
  %7026 = vmatpush1.msra.mxu0 0.0
  %7027 = vmatprep.subr.mxu0 0.0
  %7028 = vmatpush1.msra.mxu0 0.0
  %7029 = vmatprep.subr.mxu0 0.0
  %7030 = vmatpush1.msra.mxu0 0.0
  %7031 = vmatprep.subr.mxu0 0.0
  %7032 = vmatpush1.msra.mxu0 0.0
  %7033 = vmatprep.subr.mxu0 0.0
  %7034 = vmatpush1.msra.mxu0 0.0
  %7035 = vmatprep.mubr.f32.mxu0 0.0
  %v7036 = vand.u32 %v3764, 4294901760
  %v7037 = vsub.f32 %v3764, %v7036
  %7038 = vmatmul.mubr.f32.gmra.mrb[0].mxu0 %v7037
  %v7039 = vpop.f32.mrb[0].mxu0
  %v7040 = vadd.f32 %v6964, %v7039
  %v7041 = vpop.f32.mrb[0].mxu0
  %7042 = vdwg.mxu0
  %7043 = vmatprep.subr.mxu0 0.0
  %v7044 = vand.u32 %v6806, 4294901760
  %7045 = vmatpush1.msra.mxu0 %v7044
  %7046 = vmatprep.subr.mxu0 0.0
  %v7047 = vand.u32 %v6808, 4294901760
  %7048 = vmatpush1.msra.mxu0 %v7047
  %7049 = vmatprep.subr.mxu0 0.0
  %7050 = vmatpush1.msra.mxu0 0.0
  %7051 = vmatprep.subr.mxu0 0.0
  %7052 = vmatpush1.msra.mxu0 0.0
  %7053 = vmatprep.subr.mxu0 0.0
  %7054 = vmatpush1.msra.mxu0 0.0
  %7055 = vmatprep.subr.mxu0 0.0
  %7056 = vmatpush1.msra.mxu0 0.0
  %7057 = vmatprep.subr.mxu0 0.0
  %7058 = vmatpush1.msra.mxu0 0.0
  %7059 = vmatprep.subr.mxu0 0.0
  %7060 = vmatpush1.msra.mxu0 0.0
  %7061 = vmatprep.subr.mxu0 0.0
  %7062 = vmatpush1.msra.mxu0 0.0
  %7063 = vmatprep.subr.mxu0 0.0
  %7064 = vmatpush1.msra.mxu0 0.0
  %7065 = vmatprep.subr.mxu0 0.0
  %7066 = vmatpush1.msra.mxu0 0.0
  %7067 = vmatprep.subr.mxu0 0.0
  %7068 = vmatpush1.msra.mxu0 0.0
  %7069 = vmatprep.subr.mxu0 0.0
  %7070 = vmatpush1.msra.mxu0 0.0
  %7071 = vmatprep.subr.mxu0 0.0
  %7072 = vmatpush1.msra.mxu0 0.0
  %7073 = vmatprep.subr.mxu0 0.0
  %7074 = vmatpush1.msra.mxu0 0.0
  %7075 = vmatprep.subr.mxu0 0.0
  %7076 = vmatpush1.msra.mxu0 0.0
  %7077 = vmatprep.subr.mxu0 0.0
  %7078 = vmatpush1.msra.mxu0 0.0
  %7079 = vmatprep.subr.mxu0 0.0
  %7080 = vmatpush1.msra.mxu0 0.0
  %7081 = vmatprep.subr.mxu0 0.0
  %7082 = vmatpush1.msra.mxu0 0.0
  %7083 = vmatprep.subr.mxu0 0.0
  %7084 = vmatpush1.msra.mxu0 0.0
  %7085 = vmatprep.subr.mxu0 0.0
  %7086 = vmatpush1.msra.mxu0 0.0
  %7087 = vmatprep.subr.mxu0 0.0
  %7088 = vmatpush1.msra.mxu0 0.0
  %7089 = vmatprep.subr.mxu0 0.0
  %7090 = vmatpush1.msra.mxu0 0.0
  %7091 = vmatprep.subr.mxu0 0.0
  %7092 = vmatpush1.msra.mxu0 0.0
  %7093 = vmatprep.subr.mxu0 0.0
  %7094 = vmatpush1.msra.mxu0 0.0
  %7095 = vmatprep.subr.mxu0 0.0
  %7096 = vmatpush1.msra.mxu0 0.0
  %7097 = vmatprep.subr.mxu0 0.0
  %7098 = vmatpush1.msra.mxu0 0.0
  %7099 = vmatprep.subr.mxu0 0.0
  %7100 = vmatpush1.msra.mxu0 0.0
  %7101 = vmatprep.subr.mxu0 0.0
  %7102 = vmatpush1.msra.mxu0 0.0
  %7103 = vmatprep.subr.mxu0 0.0
  %7104 = vmatpush1.msra.mxu0 0.0
  %7105 = vmatprep.subr.mxu0 0.0
  %7106 = vmatpush1.msra.mxu0 0.0
  %7107 = vmatprep.subr.mxu0 0.0
  %7108 = vmatpush1.msra.mxu0 0.0
  %7109 = vmatprep.mubr.f32.mxu0 0.0
  %v7110 = vand.u32 %v3764, 4294901760
  %v7111 = vsub.f32 %v3764, %v7110
  %v7112 = vand.u32 %v7111, 4294901760
  %7113 = vmatmul.mubr.f32.gmra.mrb[0].mxu0 %v7112
  %v7114 = vpop.f32.mrb[0].mxu0
  %v7115 = vadd.f32 %v7040, %v7114
  %v7116 = vpop.f32.mrb[0].mxu0
  %7117 = vdwg.mxu0
  %7118 = vmatprep.subr.mxu0 0.0
  %v7119 = vand.u32 %v6806, 4294901760
  %v7120 = vsub.f32 %v6806, %v7119
  %v7121 = vand.u32 %v7120, 4294901760
  %7122 = vmatpush1.msra.mxu0 %v7121
  %7123 = vmatprep.subr.mxu0 0.0
  %v7124 = vand.u32 %v6808, 4294901760
  %v7125 = vsub.f32 %v6808, %v7124
  %v7126 = vand.u32 %v7125, 4294901760
  %7127 = vmatpush1.msra.mxu0 %v7126
  %7128 = vmatprep.subr.mxu0 0.0
  %7129 = vmatpush1.msra.mxu0 0.0
  %7130 = vmatprep.subr.mxu0 0.0
  %7131 = vmatpush1.msra.mxu0 0.0
  %7132 = vmatprep.subr.mxu0 0.0
  %7133 = vmatpush1.msra.mxu0 0.0
  %7134 = vmatprep.subr.mxu0 0.0
  %7135 = vmatpush1.msra.mxu0 0.0
  %7136 = vmatprep.subr.mxu0 0.0
  %7137 = vmatpush1.msra.mxu0 0.0
  %7138 = vmatprep.subr.mxu0 0.0
  %7139 = vmatpush1.msra.mxu0 0.0
  %7140 = vmatprep.subr.mxu0 0.0
  %7141 = vmatpush1.msra.mxu0 0.0
  %7142 = vmatprep.subr.mxu0 0.0
  %7143 = vmatpush1.msra.mxu0 0.0
  %7144 = vmatprep.subr.mxu0 0.0
  %7145 = vmatpush1.msra.mxu0 0.0
  %7146 = vmatprep.subr.mxu0 0.0
  %7147 = vmatpush1.msra.mxu0 0.0
  %7148 = vmatprep.subr.mxu0 0.0
  %7149 = vmatpush1.msra.mxu0 0.0
  %7150 = vmatprep.subr.mxu0 0.0
  %7151 = vmatpush1.msra.mxu0 0.0
  %7152 = vmatprep.subr.mxu0 0.0
  %7153 = vmatpush1.msra.mxu0 0.0
  %7154 = vmatprep.subr.mxu0 0.0
  %7155 = vmatpush1.msra.mxu0 0.0
  %7156 = vmatprep.subr.mxu0 0.0
  %7157 = vmatpush1.msra.mxu0 0.0
  %7158 = vmatprep.subr.mxu0 0.0
  %7159 = vmatpush1.msra.mxu0 0.0
  %7160 = vmatprep.subr.mxu0 0.0
  %7161 = vmatpush1.msra.mxu0 0.0
  %7162 = vmatprep.subr.mxu0 0.0
  %7163 = vmatpush1.msra.mxu0 0.0
  %7164 = vmatprep.subr.mxu0 0.0
  %7165 = vmatpush1.msra.mxu0 0.0
  %7166 = vmatprep.subr.mxu0 0.0
  %7167 = vmatpush1.msra.mxu0 0.0
  %7168 = vmatprep.subr.mxu0 0.0
  %7169 = vmatpush1.msra.mxu0 0.0
  %7170 = vmatprep.subr.mxu0 0.0
  %7171 = vmatpush1.msra.mxu0 0.0
  %7172 = vmatprep.subr.mxu0 0.0
  %7173 = vmatpush1.msra.mxu0 0.0
  %7174 = vmatprep.subr.mxu0 0.0
  %7175 = vmatpush1.msra.mxu0 0.0
  %7176 = vmatprep.subr.mxu0 0.0
  %7177 = vmatpush1.msra.mxu0 0.0
  %7178 = vmatprep.subr.mxu0 0.0
  %7179 = vmatpush1.msra.mxu0 0.0
  %7180 = vmatprep.subr.mxu0 0.0
  %7181 = vmatpush1.msra.mxu0 0.0
  %7182 = vmatprep.subr.mxu0 0.0
  %7183 = vmatpush1.msra.mxu0 0.0
  %7184 = vmatprep.subr.mxu0 0.0
  %7185 = vmatpush1.msra.mxu0 0.0
  %7186 = vmatprep.subr.mxu0 0.0
  %7187 = vmatpush1.msra.mxu0 0.0
  %7188 = vmatprep.mubr.f32.mxu0 0.0
  %v7189 = vand.u32 %v3764, 4294901760
  %7190 = vmatmul.mubr.f32.gmra.mrb[0].mxu0 %v7189
  %v7191 = vpop.f32.mrb[0].mxu0
  %v7192 = vadd.f32 %v7115, %v7191
  %v7193 = vpop.f32.mrb[0].mxu0
  %7194 = vdwg.mxu0
  %7195 = vmatprep.subr.mxu0 0.0
  %v7196 = vand.u32 %v6806, 4294901760
  %7197 = vmatpush1.msra.mxu0 %v7196
  %7198 = vmatprep.subr.mxu0 0.0
  %v7199 = vand.u32 %v6808, 4294901760
  %7200 = vmatpush1.msra.mxu0 %v7199
  %7201 = vmatprep.subr.mxu0 0.0
  %7202 = vmatpush1.msra.mxu0 0.0
  %7203 = vmatprep.subr.mxu0 0.0
  %7204 = vmatpush1.msra.mxu0 0.0
  %7205 = vmatprep.subr.mxu0 0.0
  %7206 = vmatpush1.msra.mxu0 0.0
  %7207 = vmatprep.subr.mxu0 0.0
  %7208 = vmatpush1.msra.mxu0 0.0
  %7209 = vmatprep.subr.mxu0 0.0
  %7210 = vmatpush1.msra.mxu0 0.0
  %7211 = vmatprep.subr.mxu0 0.0
  %7212 = vmatpush1.msra.mxu0 0.0
  %7213 = vmatprep.subr.mxu0 0.0
  %7214 = vmatpush1.msra.mxu0 0.0
  %7215 = vmatprep.subr.mxu0 0.0
  %7216 = vmatpush1.msra.mxu0 0.0
  %7217 = vmatprep.subr.mxu0 0.0
  %7218 = vmatpush1.msra.mxu0 0.0
  %7219 = vmatprep.subr.mxu0 0.0
  %7220 = vmatpush1.msra.mxu0 0.0
  %7221 = vmatprep.subr.mxu0 0.0
  %7222 = vmatpush1.msra.mxu0 0.0
  %7223 = vmatprep.subr.mxu0 0.0
  %7224 = vmatpush1.msra.mxu0 0.0
  %7225 = vmatprep.subr.mxu0 0.0
  %7226 = vmatpush1.msra.mxu0 0.0
  %7227 = vmatprep.subr.mxu0 0.0
  %7228 = vmatpush1.msra.mxu0 0.0
  %7229 = vmatprep.subr.mxu0 0.0
  %7230 = vmatpush1.msra.mxu0 0.0
  %7231 = vmatprep.subr.mxu0 0.0
  %7232 = vmatpush1.msra.mxu0 0.0
  %7233 = vmatprep.subr.mxu0 0.0
  %7234 = vmatpush1.msra.mxu0 0.0
  %7235 = vmatprep.subr.mxu0 0.0
  %7236 = vmatpush1.msra.mxu0 0.0
  %7237 = vmatprep.subr.mxu0 0.0
  %7238 = vmatpush1.msra.mxu0 0.0
  %7239 = vmatprep.subr.mxu0 0.0
  %7240 = vmatpush1.msra.mxu0 0.0
  %7241 = vmatprep.subr.mxu0 0.0
  %7242 = vmatpush1.msra.mxu0 0.0
  %7243 = vmatprep.subr.mxu0 0.0
  %7244 = vmatpush1.msra.mxu0 0.0
  %7245 = vmatprep.subr.mxu0 0.0
  %7246 = vmatpush1.msra.mxu0 0.0
  %7247 = vmatprep.subr.mxu0 0.0
  %7248 = vmatpush1.msra.mxu0 0.0
  %7249 = vmatprep.subr.mxu0 0.0
  %7250 = vmatpush1.msra.mxu0 0.0
  %7251 = vmatprep.subr.mxu0 0.0
  %7252 = vmatpush1.msra.mxu0 0.0
  %7253 = vmatprep.subr.mxu0 0.0
  %7254 = vmatpush1.msra.mxu0 0.0
  %7255 = vmatprep.subr.mxu0 0.0
  %7256 = vmatpush1.msra.mxu0 0.0
  %7257 = vmatprep.subr.mxu0 0.0
  %7258 = vmatpush1.msra.mxu0 0.0
  %7259 = vmatprep.subr.mxu0 0.0
  %7260 = vmatpush1.msra.mxu0 0.0
  %7261 = vmatprep.mubr.f32.mxu0 0.0
  %v7262 = vand.u32 %v3764, 4294901760
  %7263 = vmatmul.mubr.f32.gmra.mrb[0].mxu0 %v7262
  %v7264 = vpop.f32.mrb[0].mxu0
  %v7265 = vadd.f32 %v7192, %v7264
  %v7266 = vpop.f32.mrb[0].mxu0
  %7267 = vdwg.mxu0
  %v7268 = vmax.f32 %v7265, 1e-38
  %v7269 = vlog2.pop %v7268
  %v7270 = vmul.f32 %v7269, 0.6931472
  %v7271 = vlaneseq
  %v7272 = vshrl.u32 %v7271, 7
  %v7273 = vsub.s32 5, %v7272
  %v7274 = vrot.slane %v7270, %v7273
  %v7275 = vsub.f32 %v7270, %v7274
  %s7276 = scalar_lea.vmem %s4, 32
  %7277 = vst [vmem:[%s7276] sm:$0x1f] %v7275
  %v7278 = vld [vmem:[%s2149] sm:$0xff]
  %v7279 = vld [vmem:[%s2149 + $0x8] sm:$0xff]
  %v7280 = vadd.f32 %v6790, %v7278
  %v7281 = vadd.f32 %v6791, %v7279
  %v7282 = vmax.f32 %v7280, %v7281
  %v7283 = vrot.slane %v7282, 4
  %v7284 = vmax.f32 %v7282, %v7283
  %v7285 = vrot.slane %v7284, 2
  %v7286 = vmax.f32 %v7284, %v7285
  %v7287 = vrot.slane %v7286, 1
  %v7288 = vmax.f32 %v7286, %v7287
  %v7289 = vsub.f32 %v7280, %v7288
  %v7290 = vsub.f32 %v7281, %v7288
  %v7291 = vmul.f32 %v7289, 1.442695
  %v7292 = vpow.pop %v7291
  %v7293 = vmul.f32 %v7290, 1.442695
  %v7294 = vpow.pop %v7293
  %7295 = vmatprep.subr.mxu0 0.0
  %v7296 = vand.u32 %v7292, 4294901760
  %7297 = vmatpush1.msra.mxu0 %v7296
  %7298 = vmatprep.subr.mxu0 0.0
  %v7299 = vand.u32 %v7294, 4294901760
  %7300 = vmatpush1.msra.mxu0 %v7299
  %7301 = vmatprep.subr.mxu0 0.0
  %7302 = vmatpush1.msra.mxu0 0.0
  %7303 = vmatprep.subr.mxu0 0.0
  %7304 = vmatpush1.msra.mxu0 0.0
  %7305 = vmatprep.subr.mxu0 0.0
  %7306 = vmatpush1.msra.mxu0 0.0
  %7307 = vmatprep.subr.mxu0 0.0
  %7308 = vmatpush1.msra.mxu0 0.0
  %7309 = vmatprep.subr.mxu0 0.0
  %7310 = vmatpush1.msra.mxu0 0.0
  %7311 = vmatprep.subr.mxu0 0.0
  %7312 = vmatpush1.msra.mxu0 0.0
  %7313 = vmatprep.subr.mxu0 0.0
  %7314 = vmatpush1.msra.mxu0 0.0
  %7315 = vmatprep.subr.mxu0 0.0
  %7316 = vmatpush1.msra.mxu0 0.0
  %7317 = vmatprep.subr.mxu0 0.0
  %7318 = vmatpush1.msra.mxu0 0.0
  %7319 = vmatprep.subr.mxu0 0.0
  %7320 = vmatpush1.msra.mxu0 0.0
  %7321 = vmatprep.subr.mxu0 0.0
  %7322 = vmatpush1.msra.mxu0 0.0
  %7323 = vmatprep.subr.mxu0 0.0
  %7324 = vmatpush1.msra.mxu0 0.0
  %7325 = vmatprep.subr.mxu0 0.0
  %7326 = vmatpush1.msra.mxu0 0.0
  %7327 = vmatprep.subr.mxu0 0.0
  %7328 = vmatpush1.msra.mxu0 0.0
  %7329 = vmatprep.subr.mxu0 0.0
  %7330 = vmatpush1.msra.mxu0 0.0
  %7331 = vmatprep.subr.mxu0 0.0
  %7332 = vmatpush1.msra.mxu0 0.0
  %7333 = vmatprep.subr.mxu0 0.0
  %7334 = vmatpush1.msra.mxu0 0.0
  %7335 = vmatprep.subr.mxu0 0.0
  %7336 = vmatpush1.msra.mxu0 0.0
  %7337 = vmatprep.subr.mxu0 0.0
  %7338 = vmatpush1.msra.mxu0 0.0
  %7339 = vmatprep.subr.mxu0 0.0
  %7340 = vmatpush1.msra.mxu0 0.0
  %7341 = vmatprep.subr.mxu0 0.0
  %7342 = vmatpush1.msra.mxu0 0.0
  %7343 = vmatprep.subr.mxu0 0.0
  %7344 = vmatpush1.msra.mxu0 0.0
  %7345 = vmatprep.subr.mxu0 0.0
  %7346 = vmatpush1.msra.mxu0 0.0
  %7347 = vmatprep.subr.mxu0 0.0
  %7348 = vmatpush1.msra.mxu0 0.0
  %7349 = vmatprep.subr.mxu0 0.0
  %7350 = vmatpush1.msra.mxu0 0.0
  %7351 = vmatprep.subr.mxu0 0.0
  %7352 = vmatpush1.msra.mxu0 0.0
  %7353 = vmatprep.subr.mxu0 0.0
  %7354 = vmatpush1.msra.mxu0 0.0
  %7355 = vmatprep.subr.mxu0 0.0
  %7356 = vmatpush1.msra.mxu0 0.0
  %7357 = vmatprep.subr.mxu0 0.0
  %7358 = vmatpush1.msra.mxu0 0.0
  %7359 = vmatprep.subr.mxu0 0.0
  %7360 = vmatpush1.msra.mxu0 0.0
  %7361 = vmatprep.mubr.f32.mxu0 0.0
  %v7362 = vand.u32 %v4251, 4294901760
  %v7363 = vsub.f32 %v4251, %v7362
  %v7364 = vand.u32 %v7363, 4294901760
  %v7365 = vsub.f32 %v7363, %v7364
  %v7366 = vand.u32 %v7365, 4294901760
  %7367 = vmatmul.mubr.f32.gmra.mrb[0].mxu0 %v7366
  %v7368 = vpop.f32.mrb[0].mxu0
  %v7369 = vadd.f32 0.0, %v7368
  %v7370 = vpop.f32.mrb[0].mxu0
  %7371 = vmatprep.mubr.f32.mxu0 0.0
  %v7372 = vand.u32 %v4254, 4294901760
  %v7373 = vsub.f32 %v4254, %v7372
  %v7374 = vand.u32 %v7373, 4294901760
  %v7375 = vsub.f32 %v7373, %v7374
  %v7376 = vand.u32 %v7375, 4294901760
  %7377 = vmatmul.mubr.f32.gmra.mrb[0].mxu0 %v7376
  %v7378 = vpop.f32.mrb[0].mxu0
  %v7379 = vadd.f32 0.0, %v7378
  %v7380 = vpop.f32.mrb[0].mxu0
  %7381 = vdwg.mxu0
  %7382 = vmatprep.subr.mxu0 0.0
  %v7383 = vand.u32 %v7292, 4294901760
  %v7384 = vsub.f32 %v7292, %v7383
  %v7385 = vand.u32 %v7384, 4294901760
  %v7386 = vsub.f32 %v7384, %v7385
  %v7387 = vand.u32 %v7386, 4294901760
  %7388 = vmatpush1.msra.mxu0 %v7387
  %7389 = vmatprep.subr.mxu0 0.0
  %v7390 = vand.u32 %v7294, 4294901760
  %v7391 = vsub.f32 %v7294, %v7390
  %v7392 = vand.u32 %v7391, 4294901760
  %v7393 = vsub.f32 %v7391, %v7392
  %v7394 = vand.u32 %v7393, 4294901760
  %7395 = vmatpush1.msra.mxu0 %v7394
  %7396 = vmatprep.subr.mxu0 0.0
  %7397 = vmatpush1.msra.mxu0 0.0
  %7398 = vmatprep.subr.mxu0 0.0
  %7399 = vmatpush1.msra.mxu0 0.0
  %7400 = vmatprep.subr.mxu0 0.0
  %7401 = vmatpush1.msra.mxu0 0.0
  %7402 = vmatprep.subr.mxu0 0.0
  %7403 = vmatpush1.msra.mxu0 0.0
  %7404 = vmatprep.subr.mxu0 0.0
  %7405 = vmatpush1.msra.mxu0 0.0
  %7406 = vmatprep.subr.mxu0 0.0
  %7407 = vmatpush1.msra.mxu0 0.0
  %7408 = vmatprep.subr.mxu0 0.0
  %7409 = vmatpush1.msra.mxu0 0.0
  %7410 = vmatprep.subr.mxu0 0.0
  %7411 = vmatpush1.msra.mxu0 0.0
  %7412 = vmatprep.subr.mxu0 0.0
  %7413 = vmatpush1.msra.mxu0 0.0
  %7414 = vmatprep.subr.mxu0 0.0
  %7415 = vmatpush1.msra.mxu0 0.0
  %7416 = vmatprep.subr.mxu0 0.0
  %7417 = vmatpush1.msra.mxu0 0.0
  %7418 = vmatprep.subr.mxu0 0.0
  %7419 = vmatpush1.msra.mxu0 0.0
  %7420 = vmatprep.subr.mxu0 0.0
  %7421 = vmatpush1.msra.mxu0 0.0
  %7422 = vmatprep.subr.mxu0 0.0
  %7423 = vmatpush1.msra.mxu0 0.0
  %7424 = vmatprep.subr.mxu0 0.0
  %7425 = vmatpush1.msra.mxu0 0.0
  %7426 = vmatprep.subr.mxu0 0.0
  %7427 = vmatpush1.msra.mxu0 0.0
  %7428 = vmatprep.subr.mxu0 0.0
  %7429 = vmatpush1.msra.mxu0 0.0
  %7430 = vmatprep.subr.mxu0 0.0
  %7431 = vmatpush1.msra.mxu0 0.0
  %7432 = vmatprep.subr.mxu0 0.0
  %7433 = vmatpush1.msra.mxu0 0.0
  %7434 = vmatprep.subr.mxu0 0.0
  %7435 = vmatpush1.msra.mxu0 0.0
  %7436 = vmatprep.subr.mxu0 0.0
  %7437 = vmatpush1.msra.mxu0 0.0
  %7438 = vmatprep.subr.mxu0 0.0
  %7439 = vmatpush1.msra.mxu0 0.0
  %7440 = vmatprep.subr.mxu0 0.0
  %7441 = vmatpush1.msra.mxu0 0.0
  %7442 = vmatprep.subr.mxu0 0.0
  %7443 = vmatpush1.msra.mxu0 0.0
  %7444 = vmatprep.subr.mxu0 0.0
  %7445 = vmatpush1.msra.mxu0 0.0
  %7446 = vmatprep.subr.mxu0 0.0
  %7447 = vmatpush1.msra.mxu0 0.0
  %7448 = vmatprep.subr.mxu0 0.0
  %7449 = vmatpush1.msra.mxu0 0.0
  %7450 = vmatprep.subr.mxu0 0.0
  %7451 = vmatpush1.msra.mxu0 0.0
  %7452 = vmatprep.subr.mxu0 0.0
  %7453 = vmatpush1.msra.mxu0 0.0
  %7454 = vmatprep.subr.mxu0 0.0
  %7455 = vmatpush1.msra.mxu0 0.0
  %7456 = vmatprep.mubr.f32.mxu0 0.0
  %v7457 = vand.u32 %v4251, 4294901760
  %7458 = vmatmul.mubr.f32.gmra.mrb[0].mxu0 %v7457
  %v7459 = vpop.f32.mrb[0].mxu0
  %v7460 = vadd.f32 %v7369, %v7459
  %v7461 = vpop.f32.mrb[0].mxu0
  %7462 = vmatprep.mubr.f32.mxu0 0.0
  %v7463 = vand.u32 %v4254, 4294901760
  %7464 = vmatmul.mubr.f32.gmra.mrb[0].mxu0 %v7463
  %v7465 = vpop.f32.mrb[0].mxu0
  %v7466 = vadd.f32 %v7379, %v7465
  %v7467 = vpop.f32.mrb[0].mxu0
  %7468 = vdwg.mxu0
  %7469 = vmatprep.subr.mxu0 0.0
  %v7470 = vand.u32 %v7292, 4294901760
  %v7471 = vsub.f32 %v7292, %v7470
  %7472 = vmatpush1.msra.mxu0 %v7471
  %7473 = vmatprep.subr.mxu0 0.0
  %v7474 = vand.u32 %v7294, 4294901760
  %v7475 = vsub.f32 %v7294, %v7474
  %7476 = vmatpush1.msra.mxu0 %v7475
  %7477 = vmatprep.subr.mxu0 0.0
  %7478 = vmatpush1.msra.mxu0 0.0
  %7479 = vmatprep.subr.mxu0 0.0
  %7480 = vmatpush1.msra.mxu0 0.0
  %7481 = vmatprep.subr.mxu0 0.0
  %7482 = vmatpush1.msra.mxu0 0.0
  %7483 = vmatprep.subr.mxu0 0.0
  %7484 = vmatpush1.msra.mxu0 0.0
  %7485 = vmatprep.subr.mxu0 0.0
  %7486 = vmatpush1.msra.mxu0 0.0
  %7487 = vmatprep.subr.mxu0 0.0
  %7488 = vmatpush1.msra.mxu0 0.0
  %7489 = vmatprep.subr.mxu0 0.0
  %7490 = vmatpush1.msra.mxu0 0.0
  %7491 = vmatprep.subr.mxu0 0.0
  %7492 = vmatpush1.msra.mxu0 0.0
  %7493 = vmatprep.subr.mxu0 0.0
  %7494 = vmatpush1.msra.mxu0 0.0
  %7495 = vmatprep.subr.mxu0 0.0
  %7496 = vmatpush1.msra.mxu0 0.0
  %7497 = vmatprep.subr.mxu0 0.0
  %7498 = vmatpush1.msra.mxu0 0.0
  %7499 = vmatprep.subr.mxu0 0.0
  %7500 = vmatpush1.msra.mxu0 0.0
  %7501 = vmatprep.subr.mxu0 0.0
  %7502 = vmatpush1.msra.mxu0 0.0
  %7503 = vmatprep.subr.mxu0 0.0
  %7504 = vmatpush1.msra.mxu0 0.0
  %7505 = vmatprep.subr.mxu0 0.0
  %7506 = vmatpush1.msra.mxu0 0.0
  %7507 = vmatprep.subr.mxu0 0.0
  %7508 = vmatpush1.msra.mxu0 0.0
  %7509 = vmatprep.subr.mxu0 0.0
  %7510 = vmatpush1.msra.mxu0 0.0
  %7511 = vmatprep.subr.mxu0 0.0
  %7512 = vmatpush1.msra.mxu0 0.0
  %7513 = vmatprep.subr.mxu0 0.0
  %7514 = vmatpush1.msra.mxu0 0.0
  %7515 = vmatprep.subr.mxu0 0.0
  %7516 = vmatpush1.msra.mxu0 0.0
  %7517 = vmatprep.subr.mxu0 0.0
  %7518 = vmatpush1.msra.mxu0 0.0
  %7519 = vmatprep.subr.mxu0 0.0
  %7520 = vmatpush1.msra.mxu0 0.0
  %7521 = vmatprep.subr.mxu0 0.0
  %7522 = vmatpush1.msra.mxu0 0.0
  %7523 = vmatprep.subr.mxu0 0.0
  %7524 = vmatpush1.msra.mxu0 0.0
  %7525 = vmatprep.subr.mxu0 0.0
  %7526 = vmatpush1.msra.mxu0 0.0
  %7527 = vmatprep.subr.mxu0 0.0
  %7528 = vmatpush1.msra.mxu0 0.0
  %7529 = vmatprep.subr.mxu0 0.0
  %7530 = vmatpush1.msra.mxu0 0.0
  %7531 = vmatprep.subr.mxu0 0.0
  %7532 = vmatpush1.msra.mxu0 0.0
  %7533 = vmatprep.subr.mxu0 0.0
  %7534 = vmatpush1.msra.mxu0 0.0
  %7535 = vmatprep.subr.mxu0 0.0
  %7536 = vmatpush1.msra.mxu0 0.0
  %7537 = vmatprep.mubr.f32.mxu0 0.0
  %v7538 = vand.u32 %v4251, 4294901760
  %v7539 = vsub.f32 %v4251, %v7538
  %7540 = vmatmul.mubr.f32.gmra.mrb[0].mxu0 %v7539
  %v7541 = vpop.f32.mrb[0].mxu0
  %v7542 = vadd.f32 %v7460, %v7541
  %v7543 = vpop.f32.mrb[0].mxu0
  %7544 = vmatprep.mubr.f32.mxu0 0.0
  %v7545 = vand.u32 %v4254, 4294901760
  %v7546 = vsub.f32 %v4254, %v7545
  %7547 = vmatmul.mubr.f32.gmra.mrb[0].mxu0 %v7546
  %v7548 = vpop.f32.mrb[0].mxu0
  %v7549 = vadd.f32 %v7466, %v7548
  %v7550 = vpop.f32.mrb[0].mxu0
  %7551 = vdwg.mxu0
  %7552 = vmatprep.subr.mxu0 0.0
  %v7553 = vand.u32 %v7292, 4294901760
  %7554 = vmatpush1.msra.mxu0 %v7553
  %7555 = vmatprep.subr.mxu0 0.0
  %v7556 = vand.u32 %v7294, 4294901760
  %7557 = vmatpush1.msra.mxu0 %v7556
  %7558 = vmatprep.subr.mxu0 0.0
  %7559 = vmatpush1.msra.mxu0 0.0
  %7560 = vmatprep.subr.mxu0 0.0
  %7561 = vmatpush1.msra.mxu0 0.0
  %7562 = vmatprep.subr.mxu0 0.0
  %7563 = vmatpush1.msra.mxu0 0.0
  %7564 = vmatprep.subr.mxu0 0.0
  %7565 = vmatpush1.msra.mxu0 0.0
  %7566 = vmatprep.subr.mxu0 0.0
  %7567 = vmatpush1.msra.mxu0 0.0
  %7568 = vmatprep.subr.mxu0 0.0
  %7569 = vmatpush1.msra.mxu0 0.0
  %7570 = vmatprep.subr.mxu0 0.0
  %7571 = vmatpush1.msra.mxu0 0.0
  %7572 = vmatprep.subr.mxu0 0.0
  %7573 = vmatpush1.msra.mxu0 0.0
  %7574 = vmatprep.subr.mxu0 0.0
  %7575 = vmatpush1.msra.mxu0 0.0
  %7576 = vmatprep.subr.mxu0 0.0
  %7577 = vmatpush1.msra.mxu0 0.0
  %7578 = vmatprep.subr.mxu0 0.0
  %7579 = vmatpush1.msra.mxu0 0.0
  %7580 = vmatprep.subr.mxu0 0.0
  %7581 = vmatpush1.msra.mxu0 0.0
  %7582 = vmatprep.subr.mxu0 0.0
  %7583 = vmatpush1.msra.mxu0 0.0
  %7584 = vmatprep.subr.mxu0 0.0
  %7585 = vmatpush1.msra.mxu0 0.0
  %7586 = vmatprep.subr.mxu0 0.0
  %7587 = vmatpush1.msra.mxu0 0.0
  %7588 = vmatprep.subr.mxu0 0.0
  %7589 = vmatpush1.msra.mxu0 0.0
  %7590 = vmatprep.subr.mxu0 0.0
  %7591 = vmatpush1.msra.mxu0 0.0
  %7592 = vmatprep.subr.mxu0 0.0
  %7593 = vmatpush1.msra.mxu0 0.0
  %7594 = vmatprep.subr.mxu0 0.0
  %7595 = vmatpush1.msra.mxu0 0.0
  %7596 = vmatprep.subr.mxu0 0.0
  %7597 = vmatpush1.msra.mxu0 0.0
  %7598 = vmatprep.subr.mxu0 0.0
  %7599 = vmatpush1.msra.mxu0 0.0
  %7600 = vmatprep.subr.mxu0 0.0
  %7601 = vmatpush1.msra.mxu0 0.0
  %7602 = vmatprep.subr.mxu0 0.0
  %7603 = vmatpush1.msra.mxu0 0.0
  %7604 = vmatprep.subr.mxu0 0.0
  %7605 = vmatpush1.msra.mxu0 0.0
  %7606 = vmatprep.subr.mxu0 0.0
  %7607 = vmatpush1.msra.mxu0 0.0
  %7608 = vmatprep.subr.mxu0 0.0
  %7609 = vmatpush1.msra.mxu0 0.0
  %7610 = vmatprep.subr.mxu0 0.0
  %7611 = vmatpush1.msra.mxu0 0.0
  %7612 = vmatprep.subr.mxu0 0.0
  %7613 = vmatpush1.msra.mxu0 0.0
  %7614 = vmatprep.subr.mxu0 0.0
  %7615 = vmatpush1.msra.mxu0 0.0
  %7616 = vmatprep.subr.mxu0 0.0
  %7617 = vmatpush1.msra.mxu0 0.0
  %7618 = vmatprep.mubr.f32.mxu0 0.0
  %v7619 = vand.u32 %v4251, 4294901760
  %v7620 = vsub.f32 %v4251, %v7619
  %v7621 = vand.u32 %v7620, 4294901760
  %7622 = vmatmul.mubr.f32.gmra.mrb[0].mxu0 %v7621
  %v7623 = vpop.f32.mrb[0].mxu0
  %v7624 = vadd.f32 %v7542, %v7623
  %v7625 = vpop.f32.mrb[0].mxu0
  %7626 = vmatprep.mubr.f32.mxu0 0.0
  %v7627 = vand.u32 %v4254, 4294901760
  %v7628 = vsub.f32 %v4254, %v7627
  %v7629 = vand.u32 %v7628, 4294901760
  %7630 = vmatmul.mubr.f32.gmra.mrb[0].mxu0 %v7629
  %v7631 = vpop.f32.mrb[0].mxu0
  %v7632 = vadd.f32 %v7549, %v7631
  %v7633 = vpop.f32.mrb[0].mxu0
  %7634 = vdwg.mxu0
  %7635 = vmatprep.subr.mxu0 0.0
  %v7636 = vand.u32 %v7292, 4294901760
  %v7637 = vsub.f32 %v7292, %v7636
  %v7638 = vand.u32 %v7637, 4294901760
  %7639 = vmatpush1.msra.mxu0 %v7638
  %7640 = vmatprep.subr.mxu0 0.0
  %v7641 = vand.u32 %v7294, 4294901760
  %v7642 = vsub.f32 %v7294, %v7641
  %v7643 = vand.u32 %v7642, 4294901760
  %7644 = vmatpush1.msra.mxu0 %v7643
  %7645 = vmatprep.subr.mxu0 0.0
  %7646 = vmatpush1.msra.mxu0 0.0
  %7647 = vmatprep.subr.mxu0 0.0
  %7648 = vmatpush1.msra.mxu0 0.0
  %7649 = vmatprep.subr.mxu0 0.0
  %7650 = vmatpush1.msra.mxu0 0.0
  %7651 = vmatprep.subr.mxu0 0.0
  %7652 = vmatpush1.msra.mxu0 0.0
  %7653 = vmatprep.subr.mxu0 0.0
  %7654 = vmatpush1.msra.mxu0 0.0
  %7655 = vmatprep.subr.mxu0 0.0
  %7656 = vmatpush1.msra.mxu0 0.0
  %7657 = vmatprep.subr.mxu0 0.0
  %7658 = vmatpush1.msra.mxu0 0.0
  %7659 = vmatprep.subr.mxu0 0.0
  %7660 = vmatpush1.msra.mxu0 0.0
  %7661 = vmatprep.subr.mxu0 0.0
  %7662 = vmatpush1.msra.mxu0 0.0
  %7663 = vmatprep.subr.mxu0 0.0
  %7664 = vmatpush1.msra.mxu0 0.0
  %7665 = vmatprep.subr.mxu0 0.0
  %7666 = vmatpush1.msra.mxu0 0.0
  %7667 = vmatprep.subr.mxu0 0.0
  %7668 = vmatpush1.msra.mxu0 0.0
  %7669 = vmatprep.subr.mxu0 0.0
  %7670 = vmatpush1.msra.mxu0 0.0
  %7671 = vmatprep.subr.mxu0 0.0
  %7672 = vmatpush1.msra.mxu0 0.0
  %7673 = vmatprep.subr.mxu0 0.0
  %7674 = vmatpush1.msra.mxu0 0.0
  %7675 = vmatprep.subr.mxu0 0.0
  %7676 = vmatpush1.msra.mxu0 0.0
  %7677 = vmatprep.subr.mxu0 0.0
  %7678 = vmatpush1.msra.mxu0 0.0
  %7679 = vmatprep.subr.mxu0 0.0
  %7680 = vmatpush1.msra.mxu0 0.0
  %7681 = vmatprep.subr.mxu0 0.0
  %7682 = vmatpush1.msra.mxu0 0.0
  %7683 = vmatprep.subr.mxu0 0.0
  %7684 = vmatpush1.msra.mxu0 0.0
  %7685 = vmatprep.subr.mxu0 0.0
  %7686 = vmatpush1.msra.mxu0 0.0
  %7687 = vmatprep.subr.mxu0 0.0
  %7688 = vmatpush1.msra.mxu0 0.0
  %7689 = vmatprep.subr.mxu0 0.0
  %7690 = vmatpush1.msra.mxu0 0.0
  %7691 = vmatprep.subr.mxu0 0.0
  %7692 = vmatpush1.msra.mxu0 0.0
  %7693 = vmatprep.subr.mxu0 0.0
  %7694 = vmatpush1.msra.mxu0 0.0
  %7695 = vmatprep.subr.mxu0 0.0
  %7696 = vmatpush1.msra.mxu0 0.0
  %7697 = vmatprep.subr.mxu0 0.0
  %7698 = vmatpush1.msra.mxu0 0.0
  %7699 = vmatprep.subr.mxu0 0.0
  %7700 = vmatpush1.msra.mxu0 0.0
  %7701 = vmatprep.subr.mxu0 0.0
  %7702 = vmatpush1.msra.mxu0 0.0
  %7703 = vmatprep.subr.mxu0 0.0
  %7704 = vmatpush1.msra.mxu0 0.0
  %7705 = vmatprep.mubr.f32.mxu0 0.0
  %v7706 = vand.u32 %v4251, 4294901760
  %7707 = vmatmul.mubr.f32.gmra.mrb[0].mxu0 %v7706
  %v7708 = vpop.f32.mrb[0].mxu0
  %v7709 = vadd.f32 %v7624, %v7708
  %v7710 = vpop.f32.mrb[0].mxu0
  %7711 = vmatprep.mubr.f32.mxu0 0.0
  %v7712 = vand.u32 %v4254, 4294901760
  %7713 = vmatmul.mubr.f32.gmra.mrb[0].mxu0 %v7712
  %v7714 = vpop.f32.mrb[0].mxu0
  %v7715 = vadd.f32 %v7632, %v7714
  %v7716 = vpop.f32.mrb[0].mxu0
  %7717 = vdwg.mxu0
  %7718 = vmatprep.subr.mxu0 0.0
  %v7719 = vand.u32 %v7292, 4294901760
  %7720 = vmatpush1.msra.mxu0 %v7719
  %7721 = vmatprep.subr.mxu0 0.0
  %v7722 = vand.u32 %v7294, 4294901760
  %7723 = vmatpush1.msra.mxu0 %v7722
  %7724 = vmatprep.subr.mxu0 0.0
  %7725 = vmatpush1.msra.mxu0 0.0
  %7726 = vmatprep.subr.mxu0 0.0
  %7727 = vmatpush1.msra.mxu0 0.0
  %7728 = vmatprep.subr.mxu0 0.0
  %7729 = vmatpush1.msra.mxu0 0.0
  %7730 = vmatprep.subr.mxu0 0.0
  %7731 = vmatpush1.msra.mxu0 0.0
  %7732 = vmatprep.subr.mxu0 0.0
  %7733 = vmatpush1.msra.mxu0 0.0
  %7734 = vmatprep.subr.mxu0 0.0
  %7735 = vmatpush1.msra.mxu0 0.0
  %7736 = vmatprep.subr.mxu0 0.0
  %7737 = vmatpush1.msra.mxu0 0.0
  %7738 = vmatprep.subr.mxu0 0.0
  %7739 = vmatpush1.msra.mxu0 0.0
  %7740 = vmatprep.subr.mxu0 0.0
  %7741 = vmatpush1.msra.mxu0 0.0
  %7742 = vmatprep.subr.mxu0 0.0
  %7743 = vmatpush1.msra.mxu0 0.0
  %7744 = vmatprep.subr.mxu0 0.0
  %7745 = vmatpush1.msra.mxu0 0.0
  %7746 = vmatprep.subr.mxu0 0.0
  %7747 = vmatpush1.msra.mxu0 0.0
  %7748 = vmatprep.subr.mxu0 0.0
  %7749 = vmatpush1.msra.mxu0 0.0
  %7750 = vmatprep.subr.mxu0 0.0
  %7751 = vmatpush1.msra.mxu0 0.0
  %7752 = vmatprep.subr.mxu0 0.0
  %7753 = vmatpush1.msra.mxu0 0.0
  %7754 = vmatprep.subr.mxu0 0.0
  %7755 = vmatpush1.msra.mxu0 0.0
  %7756 = vmatprep.subr.mxu0 0.0
  %7757 = vmatpush1.msra.mxu0 0.0
  %7758 = vmatprep.subr.mxu0 0.0
  %7759 = vmatpush1.msra.mxu0 0.0
  %7760 = vmatprep.subr.mxu0 0.0
  %7761 = vmatpush1.msra.mxu0 0.0
  %7762 = vmatprep.subr.mxu0 0.0
  %7763 = vmatpush1.msra.mxu0 0.0
  %7764 = vmatprep.subr.mxu0 0.0
  %7765 = vmatpush1.msra.mxu0 0.0
  %7766 = vmatprep.subr.mxu0 0.0
  %7767 = vmatpush1.msra.mxu0 0.0
  %7768 = vmatprep.subr.mxu0 0.0
  %7769 = vmatpush1.msra.mxu0 0.0
  %7770 = vmatprep.subr.mxu0 0.0
  %7771 = vmatpush1.msra.mxu0 0.0
  %7772 = vmatprep.subr.mxu0 0.0
  %7773 = vmatpush1.msra.mxu0 0.0
  %7774 = vmatprep.subr.mxu0 0.0
  %7775 = vmatpush1.msra.mxu0 0.0
  %7776 = vmatprep.subr.mxu0 0.0
  %7777 = vmatpush1.msra.mxu0 0.0
  %7778 = vmatprep.subr.mxu0 0.0
  %7779 = vmatpush1.msra.mxu0 0.0
  %7780 = vmatprep.subr.mxu0 0.0
  %7781 = vmatpush1.msra.mxu0 0.0
  %7782 = vmatprep.subr.mxu0 0.0
  %7783 = vmatpush1.msra.mxu0 0.0
  %7784 = vmatprep.mubr.f32.mxu0 0.0
  %v7785 = vand.u32 %v4251, 4294901760
  %7786 = vmatmul.mubr.f32.gmra.mrb[0].mxu0 %v7785
  %v7787 = vpop.f32.mrb[0].mxu0
  %v7788 = vadd.f32 %v7709, %v7787
  %v7789 = vpop.f32.mrb[0].mxu0
  %7790 = vmatprep.mubr.f32.mxu0 0.0
  %v7791 = vand.u32 %v4254, 4294901760
  %7792 = vmatmul.mubr.f32.gmra.mrb[0].mxu0 %v7791
  %v7793 = vpop.f32.mrb[0].mxu0
  %v7794 = vadd.f32 %v7715, %v7793
  %v7795 = vpop.f32.mrb[0].mxu0
  %7796 = vdwg.mxu0
  %v7797 = vmax.f32 %v7788, 1e-38
  %v7798 = vmax.f32 %v7794, 1e-38
  %v7799 = vlog2.pop %v7797
  %v7800 = vmul.f32 %v7799, 0.6931472
  %v7801 = vlog2.pop %v7798
  %v7802 = vmul.f32 %v7801, 0.6931472
  %v7803 = vadd.f32 %v7800, %v7288
  %v7804 = vadd.f32 %v7802, %v7288
  %v7805 = vld [vmem:[%s1623] sm:$0xff]
  %v7806 = vld [vmem:[%s1623 + $0x8] sm:$0xff]
  %v7807 = vadd.f32 %v7805, %v7803
  %v7808 = vadd.f32 %v7806, %v7804
  %v7809 = vmax.f32 %v7807, %v7808
  %v7810 = vrot.slane %v7809, 4
  %v7811 = vmax.f32 %v7809, %v7810
  %v7812 = vrot.slane %v7811, 2
  %v7813 = vmax.f32 %v7811, %v7812
  %v7814 = vrot.slane %v7813, 1
  %v7815 = vmax.f32 %v7813, %v7814
  %v7816 = vsub.f32 %v7807, %v7815
  %v7817 = vsub.f32 %v7808, %v7815
  %v7818 = vmul.f32 %v7816, 1.442695
  %v7819 = vpow.pop %v7818
  %v7820 = vmul.f32 %v7817, 1.442695
  %v7821 = vpow.pop %v7820
  %7822 = vmatprep.subr.mxu0 0.0
  %v7823 = vand.u32 %v7819, 4294901760
  %7824 = vmatpush1.msra.mxu0 %v7823
  %7825 = vmatprep.subr.mxu0 0.0
  %v7826 = vand.u32 %v7821, 4294901760
  %7827 = vmatpush1.msra.mxu0 %v7826
  %7828 = vmatprep.subr.mxu0 0.0
  %7829 = vmatpush1.msra.mxu0 0.0
  %7830 = vmatprep.subr.mxu0 0.0
  %7831 = vmatpush1.msra.mxu0 0.0
  %7832 = vmatprep.subr.mxu0 0.0
  %7833 = vmatpush1.msra.mxu0 0.0
  %7834 = vmatprep.subr.mxu0 0.0
  %7835 = vmatpush1.msra.mxu0 0.0
  %7836 = vmatprep.subr.mxu0 0.0
  %7837 = vmatpush1.msra.mxu0 0.0
  %7838 = vmatprep.subr.mxu0 0.0
  %7839 = vmatpush1.msra.mxu0 0.0
  %7840 = vmatprep.subr.mxu0 0.0
  %7841 = vmatpush1.msra.mxu0 0.0
  %7842 = vmatprep.subr.mxu0 0.0
  %7843 = vmatpush1.msra.mxu0 0.0
  %7844 = vmatprep.subr.mxu0 0.0
  %7845 = vmatpush1.msra.mxu0 0.0
  %7846 = vmatprep.subr.mxu0 0.0
  %7847 = vmatpush1.msra.mxu0 0.0
  %7848 = vmatprep.subr.mxu0 0.0
  %7849 = vmatpush1.msra.mxu0 0.0
  %7850 = vmatprep.subr.mxu0 0.0
  %7851 = vmatpush1.msra.mxu0 0.0
  %7852 = vmatprep.subr.mxu0 0.0
  %7853 = vmatpush1.msra.mxu0 0.0
  %7854 = vmatprep.subr.mxu0 0.0
  %7855 = vmatpush1.msra.mxu0 0.0
  %7856 = vmatprep.subr.mxu0 0.0
  %7857 = vmatpush1.msra.mxu0 0.0
  %7858 = vmatprep.subr.mxu0 0.0
  %7859 = vmatpush1.msra.mxu0 0.0
  %7860 = vmatprep.subr.mxu0 0.0
  %7861 = vmatpush1.msra.mxu0 0.0
  %7862 = vmatprep.subr.mxu0 0.0
  %7863 = vmatpush1.msra.mxu0 0.0
  %7864 = vmatprep.subr.mxu0 0.0
  %7865 = vmatpush1.msra.mxu0 0.0
  %7866 = vmatprep.subr.mxu0 0.0
  %7867 = vmatpush1.msra.mxu0 0.0
  %7868 = vmatprep.subr.mxu0 0.0
  %7869 = vmatpush1.msra.mxu0 0.0
  %7870 = vmatprep.subr.mxu0 0.0
  %7871 = vmatpush1.msra.mxu0 0.0
  %7872 = vmatprep.subr.mxu0 0.0
  %7873 = vmatpush1.msra.mxu0 0.0
  %7874 = vmatprep.subr.mxu0 0.0
  %7875 = vmatpush1.msra.mxu0 0.0
  %7876 = vmatprep.subr.mxu0 0.0
  %7877 = vmatpush1.msra.mxu0 0.0
  %7878 = vmatprep.subr.mxu0 0.0
  %7879 = vmatpush1.msra.mxu0 0.0
  %7880 = vmatprep.subr.mxu0 0.0
  %7881 = vmatpush1.msra.mxu0 0.0
  %7882 = vmatprep.subr.mxu0 0.0
  %7883 = vmatpush1.msra.mxu0 0.0
  %7884 = vmatprep.subr.mxu0 0.0
  %7885 = vmatpush1.msra.mxu0 0.0
  %7886 = vmatprep.subr.mxu0 0.0
  %7887 = vmatpush1.msra.mxu0 0.0
  %7888 = vmatprep.mubr.f32.mxu0 0.0
  %v7889 = vand.u32 %v3764, 4294901760
  %v7890 = vsub.f32 %v3764, %v7889
  %v7891 = vand.u32 %v7890, 4294901760
  %v7892 = vsub.f32 %v7890, %v7891
  %v7893 = vand.u32 %v7892, 4294901760
  %7894 = vmatmul.mubr.f32.gmra.mrb[0].mxu0 %v7893
  %v7895 = vpop.f32.mrb[0].mxu0
  %v7896 = vadd.f32 0.0, %v7895
  %v7897 = vpop.f32.mrb[0].mxu0
  %7898 = vdwg.mxu0
  %7899 = vmatprep.subr.mxu0 0.0
  %v7900 = vand.u32 %v7819, 4294901760
  %v7901 = vsub.f32 %v7819, %v7900
  %v7902 = vand.u32 %v7901, 4294901760
  %v7903 = vsub.f32 %v7901, %v7902
  %v7904 = vand.u32 %v7903, 4294901760
  %7905 = vmatpush1.msra.mxu0 %v7904
  %7906 = vmatprep.subr.mxu0 0.0
  %v7907 = vand.u32 %v7821, 4294901760
  %v7908 = vsub.f32 %v7821, %v7907
  %v7909 = vand.u32 %v7908, 4294901760
  %v7910 = vsub.f32 %v7908, %v7909
  %v7911 = vand.u32 %v7910, 4294901760
  %7912 = vmatpush1.msra.mxu0 %v7911
  %7913 = vmatprep.subr.mxu0 0.0
  %7914 = vmatpush1.msra.mxu0 0.0
  %7915 = vmatprep.subr.mxu0 0.0
  %7916 = vmatpush1.msra.mxu0 0.0
  %7917 = vmatprep.subr.mxu0 0.0
  %7918 = vmatpush1.msra.mxu0 0.0
  %7919 = vmatprep.subr.mxu0 0.0
  %7920 = vmatpush1.msra.mxu0 0.0
  %7921 = vmatprep.subr.mxu0 0.0
  %7922 = vmatpush1.msra.mxu0 0.0
  %7923 = vmatprep.subr.mxu0 0.0
  %7924 = vmatpush1.msra.mxu0 0.0
  %7925 = vmatprep.subr.mxu0 0.0
  %7926 = vmatpush1.msra.mxu0 0.0
  %7927 = vmatprep.subr.mxu0 0.0
  %7928 = vmatpush1.msra.mxu0 0.0
  %7929 = vmatprep.subr.mxu0 0.0
  %7930 = vmatpush1.msra.mxu0 0.0
  %7931 = vmatprep.subr.mxu0 0.0
  %7932 = vmatpush1.msra.mxu0 0.0
  %7933 = vmatprep.subr.mxu0 0.0
  %7934 = vmatpush1.msra.mxu0 0.0
  %7935 = vmatprep.subr.mxu0 0.0
  %7936 = vmatpush1.msra.mxu0 0.0
  %7937 = vmatprep.subr.mxu0 0.0
  %7938 = vmatpush1.msra.mxu0 0.0
  %7939 = vmatprep.subr.mxu0 0.0
  %7940 = vmatpush1.msra.mxu0 0.0
  %7941 = vmatprep.subr.mxu0 0.0
  %7942 = vmatpush1.msra.mxu0 0.0
  %7943 = vmatprep.subr.mxu0 0.0
  %7944 = vmatpush1.msra.mxu0 0.0
  %7945 = vmatprep.subr.mxu0 0.0
  %7946 = vmatpush1.msra.mxu0 0.0
  %7947 = vmatprep.subr.mxu0 0.0
  %7948 = vmatpush1.msra.mxu0 0.0
  %7949 = vmatprep.subr.mxu0 0.0
  %7950 = vmatpush1.msra.mxu0 0.0
  %7951 = vmatprep.subr.mxu0 0.0
  %7952 = vmatpush1.msra.mxu0 0.0
  %7953 = vmatprep.subr.mxu0 0.0
  %7954 = vmatpush1.msra.mxu0 0.0
  %7955 = vmatprep.subr.mxu0 0.0
  %7956 = vmatpush1.msra.mxu0 0.0
  %7957 = vmatprep.subr.mxu0 0.0
  %7958 = vmatpush1.msra.mxu0 0.0
  %7959 = vmatprep.subr.mxu0 0.0
  %7960 = vmatpush1.msra.mxu0 0.0
  %7961 = vmatprep.subr.mxu0 0.0
  %7962 = vmatpush1.msra.mxu0 0.0
  %7963 = vmatprep.subr.mxu0 0.0
  %7964 = vmatpush1.msra.mxu0 0.0
  %7965 = vmatprep.subr.mxu0 0.0
  %7966 = vmatpush1.msra.mxu0 0.0
  %7967 = vmatprep.subr.mxu0 0.0
  %7968 = vmatpush1.msra.mxu0 0.0
  %7969 = vmatprep.subr.mxu0 0.0
  %7970 = vmatpush1.msra.mxu0 0.0
  %7971 = vmatprep.subr.mxu0 0.0
  %7972 = vmatpush1.msra.mxu0 0.0
  %7973 = vmatprep.mubr.f32.mxu0 0.0
  %v7974 = vand.u32 %v3764, 4294901760
  %7975 = vmatmul.mubr.f32.gmra.mrb[0].mxu0 %v7974
  %v7976 = vpop.f32.mrb[0].mxu0
  %v7977 = vadd.f32 %v7896, %v7976
  %v7978 = vpop.f32.mrb[0].mxu0
  %7979 = vdwg.mxu0
  %7980 = vmatprep.subr.mxu0 0.0
  %v7981 = vand.u32 %v7819, 4294901760
  %v7982 = vsub.f32 %v7819, %v7981
  %7983 = vmatpush1.msra.mxu0 %v7982
  %7984 = vmatprep.subr.mxu0 0.0
  %v7985 = vand.u32 %v7821, 4294901760
  %v7986 = vsub.f32 %v7821, %v7985
  %7987 = vmatpush1.msra.mxu0 %v7986
  %7988 = vmatprep.subr.mxu0 0.0
  %7989 = vmatpush1.msra.mxu0 0.0
  %7990 = vmatprep.subr.mxu0 0.0
  %7991 = vmatpush1.msra.mxu0 0.0
  %7992 = vmatprep.subr.mxu0 0.0
  %7993 = vmatpush1.msra.mxu0 0.0
  %7994 = vmatprep.subr.mxu0 0.0
  %7995 = vmatpush1.msra.mxu0 0.0
  %7996 = vmatprep.subr.mxu0 0.0
  %7997 = vmatpush1.msra.mxu0 0.0
  %7998 = vmatprep.subr.mxu0 0.0
  %7999 = vmatpush1.msra.mxu0 0.0
  %8000 = vmatprep.subr.mxu0 0.0
  %8001 = vmatpush1.msra.mxu0 0.0
  %8002 = vmatprep.subr.mxu0 0.0
  %8003 = vmatpush1.msra.mxu0 0.0
  %8004 = vmatprep.subr.mxu0 0.0
  %8005 = vmatpush1.msra.mxu0 0.0
  %8006 = vmatprep.subr.mxu0 0.0
  %8007 = vmatpush1.msra.mxu0 0.0
  %8008 = vmatprep.subr.mxu0 0.0
  %8009 = vmatpush1.msra.mxu0 0.0
  %8010 = vmatprep.subr.mxu0 0.0
  %8011 = vmatpush1.msra.mxu0 0.0
  %8012 = vmatprep.subr.mxu0 0.0
  %8013 = vmatpush1.msra.mxu0 0.0
  %8014 = vmatprep.subr.mxu0 0.0
  %8015 = vmatpush1.msra.mxu0 0.0
  %8016 = vmatprep.subr.mxu0 0.0
  %8017 = vmatpush1.msra.mxu0 0.0
  %8018 = vmatprep.subr.mxu0 0.0
  %8019 = vmatpush1.msra.mxu0 0.0
  %8020 = vmatprep.subr.mxu0 0.0
  %8021 = vmatpush1.msra.mxu0 0.0
  %8022 = vmatprep.subr.mxu0 0.0
  %8023 = vmatpush1.msra.mxu0 0.0
  %8024 = vmatprep.subr.mxu0 0.0
  %8025 = vmatpush1.msra.mxu0 0.0
  %8026 = vmatprep.subr.mxu0 0.0
  %8027 = vmatpush1.msra.mxu0 0.0
  %8028 = vmatprep.subr.mxu0 0.0
  %8029 = vmatpush1.msra.mxu0 0.0
  %8030 = vmatprep.subr.mxu0 0.0
  %8031 = vmatpush1.msra.mxu0 0.0
  %8032 = vmatprep.subr.mxu0 0.0
  %8033 = vmatpush1.msra.mxu0 0.0
  %8034 = vmatprep.subr.mxu0 0.0
  %8035 = vmatpush1.msra.mxu0 0.0
  %8036 = vmatprep.subr.mxu0 0.0
  %8037 = vmatpush1.msra.mxu0 0.0
  %8038 = vmatprep.subr.mxu0 0.0
  %8039 = vmatpush1.msra.mxu0 0.0
  %8040 = vmatprep.subr.mxu0 0.0
  %8041 = vmatpush1.msra.mxu0 0.0
  %8042 = vmatprep.subr.mxu0 0.0
  %8043 = vmatpush1.msra.mxu0 0.0
  %8044 = vmatprep.subr.mxu0 0.0
  %8045 = vmatpush1.msra.mxu0 0.0
  %8046 = vmatprep.subr.mxu0 0.0
  %8047 = vmatpush1.msra.mxu0 0.0
  %8048 = vmatprep.mubr.f32.mxu0 0.0
  %v8049 = vand.u32 %v3764, 4294901760
  %v8050 = vsub.f32 %v3764, %v8049
  %8051 = vmatmul.mubr.f32.gmra.mrb[0].mxu0 %v8050
  %v8052 = vpop.f32.mrb[0].mxu0
  %v8053 = vadd.f32 %v7977, %v8052
  %v8054 = vpop.f32.mrb[0].mxu0
  %8055 = vdwg.mxu0
  %8056 = vmatprep.subr.mxu0 0.0
  %v8057 = vand.u32 %v7819, 4294901760
  %8058 = vmatpush1.msra.mxu0 %v8057
  %8059 = vmatprep.subr.mxu0 0.0
  %v8060 = vand.u32 %v7821, 4294901760
  %8061 = vmatpush1.msra.mxu0 %v8060
  %8062 = vmatprep.subr.mxu0 0.0
  %8063 = vmatpush1.msra.mxu0 0.0
  %8064 = vmatprep.subr.mxu0 0.0
  %8065 = vmatpush1.msra.mxu0 0.0
  %8066 = vmatprep.subr.mxu0 0.0
  %8067 = vmatpush1.msra.mxu0 0.0
  %8068 = vmatprep.subr.mxu0 0.0
  %8069 = vmatpush1.msra.mxu0 0.0
  %8070 = vmatprep.subr.mxu0 0.0
  %8071 = vmatpush1.msra.mxu0 0.0
  %8072 = vmatprep.subr.mxu0 0.0
  %8073 = vmatpush1.msra.mxu0 0.0
  %8074 = vmatprep.subr.mxu0 0.0
  %8075 = vmatpush1.msra.mxu0 0.0
  %8076 = vmatprep.subr.mxu0 0.0
  %8077 = vmatpush1.msra.mxu0 0.0
  %8078 = vmatprep.subr.mxu0 0.0
  %8079 = vmatpush1.msra.mxu0 0.0
  %8080 = vmatprep.subr.mxu0 0.0
  %8081 = vmatpush1.msra.mxu0 0.0
  %8082 = vmatprep.subr.mxu0 0.0
  %8083 = vmatpush1.msra.mxu0 0.0
  %8084 = vmatprep.subr.mxu0 0.0
  %8085 = vmatpush1.msra.mxu0 0.0
  %8086 = vmatprep.subr.mxu0 0.0
  %8087 = vmatpush1.msra.mxu0 0.0
  %8088 = vmatprep.subr.mxu0 0.0
  %8089 = vmatpush1.msra.mxu0 0.0
  %8090 = vmatprep.subr.mxu0 0.0
  %8091 = vmatpush1.msra.mxu0 0.0
  %8092 = vmatprep.subr.mxu0 0.0
  %8093 = vmatpush1.msra.mxu0 0.0
  %8094 = vmatprep.subr.mxu0 0.0
  %8095 = vmatpush1.msra.mxu0 0.0
  %8096 = vmatprep.subr.mxu0 0.0
  %8097 = vmatpush1.msra.mxu0 0.0
  %8098 = vmatprep.subr.mxu0 0.0
  %8099 = vmatpush1.msra.mxu0 0.0
  %8100 = vmatprep.subr.mxu0 0.0
  %8101 = vmatpush1.msra.mxu0 0.0
  %8102 = vmatprep.subr.mxu0 0.0
  %8103 = vmatpush1.msra.mxu0 0.0
  %8104 = vmatprep.subr.mxu0 0.0
  %8105 = vmatpush1.msra.mxu0 0.0
  %8106 = vmatprep.subr.mxu0 0.0
  %8107 = vmatpush1.msra.mxu0 0.0
  %8108 = vmatprep.subr.mxu0 0.0
  %8109 = vmatpush1.msra.mxu0 0.0
  %8110 = vmatprep.subr.mxu0 0.0
  %8111 = vmatpush1.msra.mxu0 0.0
  %8112 = vmatprep.subr.mxu0 0.0
  %8113 = vmatpush1.msra.mxu0 0.0
  %8114 = vmatprep.subr.mxu0 0.0
  %8115 = vmatpush1.msra.mxu0 0.0
  %8116 = vmatprep.subr.mxu0 0.0
  %8117 = vmatpush1.msra.mxu0 0.0
  %8118 = vmatprep.subr.mxu0 0.0
  %8119 = vmatpush1.msra.mxu0 0.0
  %8120 = vmatprep.subr.mxu0 0.0
  %8121 = vmatpush1.msra.mxu0 0.0
  %8122 = vmatprep.mubr.f32.mxu0 0.0
  %v8123 = vand.u32 %v3764, 4294901760
  %v8124 = vsub.f32 %v3764, %v8123
  %v8125 = vand.u32 %v8124, 4294901760
  %8126 = vmatmul.mubr.f32.gmra.mrb[0].mxu0 %v8125
  %v8127 = vpop.f32.mrb[0].mxu0
  %v8128 = vadd.f32 %v8053, %v8127
  %v8129 = vpop.f32.mrb[0].mxu0
  %8130 = vdwg.mxu0
  %8131 = vmatprep.subr.mxu0 0.0
  %v8132 = vand.u32 %v7819, 4294901760
  %v8133 = vsub.f32 %v7819, %v8132
  %v8134 = vand.u32 %v8133, 4294901760
  %8135 = vmatpush1.msra.mxu0 %v8134
  %8136 = vmatprep.subr.mxu0 0.0
  %v8137 = vand.u32 %v7821, 4294901760
  %v8138 = vsub.f32 %v7821, %v8137
  %v8139 = vand.u32 %v8138, 4294901760
  %8140 = vmatpush1.msra.mxu0 %v8139
  %8141 = vmatprep.subr.mxu0 0.0
  %8142 = vmatpush1.msra.mxu0 0.0
  %8143 = vmatprep.subr.mxu0 0.0
  %8144 = vmatpush1.msra.mxu0 0.0
  %8145 = vmatprep.subr.mxu0 0.0
  %8146 = vmatpush1.msra.mxu0 0.0
  %8147 = vmatprep.subr.mxu0 0.0
  %8148 = vmatpush1.msra.mxu0 0.0
  %8149 = vmatprep.subr.mxu0 0.0
  %8150 = vmatpush1.msra.mxu0 0.0
  %8151 = vmatprep.subr.mxu0 0.0
  %8152 = vmatpush1.msra.mxu0 0.0
  %8153 = vmatprep.subr.mxu0 0.0
  %8154 = vmatpush1.msra.mxu0 0.0
  %8155 = vmatprep.subr.mxu0 0.0
  %8156 = vmatpush1.msra.mxu0 0.0
  %8157 = vmatprep.subr.mxu0 0.0
  %8158 = vmatpush1.msra.mxu0 0.0
  %8159 = vmatprep.subr.mxu0 0.0
  %8160 = vmatpush1.msra.mxu0 0.0
  %8161 = vmatprep.subr.mxu0 0.0
  %8162 = vmatpush1.msra.mxu0 0.0
  %8163 = vmatprep.subr.mxu0 0.0
  %8164 = vmatpush1.msra.mxu0 0.0
  %8165 = vmatprep.subr.mxu0 0.0
  %8166 = vmatpush1.msra.mxu0 0.0
  %8167 = vmatprep.subr.mxu0 0.0
  %8168 = vmatpush1.msra.mxu0 0.0
  %8169 = vmatprep.subr.mxu0 0.0
  %8170 = vmatpush1.msra.mxu0 0.0
  %8171 = vmatprep.subr.mxu0 0.0
  %8172 = vmatpush1.msra.mxu0 0.0
  %8173 = vmatprep.subr.mxu0 0.0
  %8174 = vmatpush1.msra.mxu0 0.0
  %8175 = vmatprep.subr.mxu0 0.0
  %8176 = vmatpush1.msra.mxu0 0.0
  %8177 = vmatprep.subr.mxu0 0.0
  %8178 = vmatpush1.msra.mxu0 0.0
  %8179 = vmatprep.subr.mxu0 0.0
  %8180 = vmatpush1.msra.mxu0 0.0
  %8181 = vmatprep.subr.mxu0 0.0
  %8182 = vmatpush1.msra.mxu0 0.0
  %8183 = vmatprep.subr.mxu0 0.0
  %8184 = vmatpush1.msra.mxu0 0.0
  %8185 = vmatprep.subr.mxu0 0.0
  %8186 = vmatpush1.msra.mxu0 0.0
  %8187 = vmatprep.subr.mxu0 0.0
  %8188 = vmatpush1.msra.mxu0 0.0
  %8189 = vmatprep.subr.mxu0 0.0
  %8190 = vmatpush1.msra.mxu0 0.0
  %8191 = vmatprep.subr.mxu0 0.0
  %8192 = vmatpush1.msra.mxu0 0.0
  %8193 = vmatprep.subr.mxu0 0.0
  %8194 = vmatpush1.msra.mxu0 0.0
  %8195 = vmatprep.subr.mxu0 0.0
  %8196 = vmatpush1.msra.mxu0 0.0
  %8197 = vmatprep.subr.mxu0 0.0
  %8198 = vmatpush1.msra.mxu0 0.0
  %8199 = vmatprep.subr.mxu0 0.0
  %8200 = vmatpush1.msra.mxu0 0.0
  %8201 = vmatprep.mubr.f32.mxu0 0.0
  %v8202 = vand.u32 %v3764, 4294901760
  %8203 = vmatmul.mubr.f32.gmra.mrb[0].mxu0 %v8202
  %v8204 = vpop.f32.mrb[0].mxu0
  %v8205 = vadd.f32 %v8128, %v8204
  %v8206 = vpop.f32.mrb[0].mxu0
  %8207 = vdwg.mxu0
  %8208 = vmatprep.subr.mxu0 0.0
  %v8209 = vand.u32 %v7819, 4294901760
  %8210 = vmatpush1.msra.mxu0 %v8209
  %8211 = vmatprep.subr.mxu0 0.0
  %v8212 = vand.u32 %v7821, 4294901760
  %8213 = vmatpush1.msra.mxu0 %v8212
  %8214 = vmatprep.subr.mxu0 0.0
  %8215 = vmatpush1.msra.mxu0 0.0
  %8216 = vmatprep.subr.mxu0 0.0
  %8217 = vmatpush1.msra.mxu0 0.0
  %8218 = vmatprep.subr.mxu0 0.0
  %8219 = vmatpush1.msra.mxu0 0.0
  %8220 = vmatprep.subr.mxu0 0.0
  %8221 = vmatpush1.msra.mxu0 0.0
  %8222 = vmatprep.subr.mxu0 0.0
  %8223 = vmatpush1.msra.mxu0 0.0
  %8224 = vmatprep.subr.mxu0 0.0
  %8225 = vmatpush1.msra.mxu0 0.0
  %8226 = vmatprep.subr.mxu0 0.0
  %8227 = vmatpush1.msra.mxu0 0.0
  %8228 = vmatprep.subr.mxu0 0.0
  %8229 = vmatpush1.msra.mxu0 0.0
  %8230 = vmatprep.subr.mxu0 0.0
  %8231 = vmatpush1.msra.mxu0 0.0
  %8232 = vmatprep.subr.mxu0 0.0
  %8233 = vmatpush1.msra.mxu0 0.0
  %8234 = vmatprep.subr.mxu0 0.0
  %8235 = vmatpush1.msra.mxu0 0.0
  %8236 = vmatprep.subr.mxu0 0.0
  %8237 = vmatpush1.msra.mxu0 0.0
  %8238 = vmatprep.subr.mxu0 0.0
  %8239 = vmatpush1.msra.mxu0 0.0
  %8240 = vmatprep.subr.mxu0 0.0
  %8241 = vmatpush1.msra.mxu0 0.0
  %8242 = vmatprep.subr.mxu0 0.0
  %8243 = vmatpush1.msra.mxu0 0.0
  %8244 = vmatprep.subr.mxu0 0.0
  %8245 = vmatpush1.msra.mxu0 0.0
  %8246 = vmatprep.subr.mxu0 0.0
  %8247 = vmatpush1.msra.mxu0 0.0
  %8248 = vmatprep.subr.mxu0 0.0
  %8249 = vmatpush1.msra.mxu0 0.0
  %8250 = vmatprep.subr.mxu0 0.0
  %8251 = vmatpush1.msra.mxu0 0.0
  %8252 = vmatprep.subr.mxu0 0.0
  %8253 = vmatpush1.msra.mxu0 0.0
  %8254 = vmatprep.subr.mxu0 0.0
  %8255 = vmatpush1.msra.mxu0 0.0
  %8256 = vmatprep.subr.mxu0 0.0
  %8257 = vmatpush1.msra.mxu0 0.0
  %8258 = vmatprep.subr.mxu0 0.0
  %8259 = vmatpush1.msra.mxu0 0.0
  %8260 = vmatprep.subr.mxu0 0.0
  %8261 = vmatpush1.msra.mxu0 0.0
  %8262 = vmatprep.subr.mxu0 0.0
  %8263 = vmatpush1.msra.mxu0 0.0
  %8264 = vmatprep.subr.mxu0 0.0
  %8265 = vmatpush1.msra.mxu0 0.0
  %8266 = vmatprep.subr.mxu0 0.0
  %8267 = vmatpush1.msra.mxu0 0.0
  %8268 = vmatprep.subr.mxu0 0.0
  %8269 = vmatpush1.msra.mxu0 0.0
  %8270 = vmatprep.subr.mxu0 0.0
  %8271 = vmatpush1.msra.mxu0 0.0
  %8272 = vmatprep.subr.mxu0 0.0
  %8273 = vmatpush1.msra.mxu0 0.0
  %8274 = vmatprep.mubr.f32.mxu0 0.0
  %v8275 = vand.u32 %v3764, 4294901760
  %8276 = vmatmul.mubr.f32.gmra.mrb[0].mxu0 %v8275
  %v8277 = vpop.f32.mrb[0].mxu0
  %v8278 = vadd.f32 %v8205, %v8277
  %v8279 = vpop.f32.mrb[0].mxu0
  %8280 = vdwg.mxu0
  %v8281 = vmax.f32 %v8278, 1e-38
  %v8282 = vlog2.pop %v8281
  %v8283 = vmul.f32 %v8282, 0.6931472
  %v8284 = vlaneseq
  %v8285 = vshrl.u32 %v8284, 7
  %v8286 = vsub.s32 5, %v8285
  %v8287 = vrot.slane %v8283, %v8286
  %v8288 = vsub.f32 %v8283, %v8287
  %s8289 = scalar_lea.vmem %s4, 24
  %8290 = vst [vmem:[%s8289] sm:$0x1f] %v8288
  %v8291 = vld [vmem:[%s1618] sm:$0xff]
  %v8292 = vld [vmem:[%s1618 + $0x8] sm:$0xff]
  %v8293 = vadd.f32 %v7803, %v8291
  %v8294 = vadd.f32 %v7804, %v8292
  %v8295 = vmax.f32 %v8293, %v8294
  %v8296 = vrot.slane %v8295, 4
  %v8297 = vmax.f32 %v8295, %v8296
  %v8298 = vrot.slane %v8297, 2
  %v8299 = vmax.f32 %v8297, %v8298
  %v8300 = vrot.slane %v8299, 1
  %v8301 = vmax.f32 %v8299, %v8300
  %v8302 = vsub.f32 %v8293, %v8301
  %v8303 = vsub.f32 %v8294, %v8301
  %v8304 = vmul.f32 %v8302, 1.442695
  %v8305 = vpow.pop %v8304
  %v8306 = vmul.f32 %v8303, 1.442695
  %v8307 = vpow.pop %v8306
  %8308 = vmatprep.subr.mxu0 0.0
  %v8309 = vand.u32 %v8305, 4294901760
  %8310 = vmatpush1.msra.mxu0 %v8309
  %8311 = vmatprep.subr.mxu0 0.0
  %v8312 = vand.u32 %v8307, 4294901760
  %8313 = vmatpush1.msra.mxu0 %v8312
  %8314 = vmatprep.subr.mxu0 0.0
  %8315 = vmatpush1.msra.mxu0 0.0
  %8316 = vmatprep.subr.mxu0 0.0
  %8317 = vmatpush1.msra.mxu0 0.0
  %8318 = vmatprep.subr.mxu0 0.0
  %8319 = vmatpush1.msra.mxu0 0.0
  %8320 = vmatprep.subr.mxu0 0.0
  %8321 = vmatpush1.msra.mxu0 0.0
  %8322 = vmatprep.subr.mxu0 0.0
  %8323 = vmatpush1.msra.mxu0 0.0
  %8324 = vmatprep.subr.mxu0 0.0
  %8325 = vmatpush1.msra.mxu0 0.0
  %8326 = vmatprep.subr.mxu0 0.0
  %8327 = vmatpush1.msra.mxu0 0.0
  %8328 = vmatprep.subr.mxu0 0.0
  %8329 = vmatpush1.msra.mxu0 0.0
  %8330 = vmatprep.subr.mxu0 0.0
  %8331 = vmatpush1.msra.mxu0 0.0
  %8332 = vmatprep.subr.mxu0 0.0
  %8333 = vmatpush1.msra.mxu0 0.0
  %8334 = vmatprep.subr.mxu0 0.0
  %8335 = vmatpush1.msra.mxu0 0.0
  %8336 = vmatprep.subr.mxu0 0.0
  %8337 = vmatpush1.msra.mxu0 0.0
  %8338 = vmatprep.subr.mxu0 0.0
  %8339 = vmatpush1.msra.mxu0 0.0
  %8340 = vmatprep.subr.mxu0 0.0
  %8341 = vmatpush1.msra.mxu0 0.0
  %8342 = vmatprep.subr.mxu0 0.0
  %8343 = vmatpush1.msra.mxu0 0.0
  %8344 = vmatprep.subr.mxu0 0.0
  %8345 = vmatpush1.msra.mxu0 0.0
  %8346 = vmatprep.subr.mxu0 0.0
  %8347 = vmatpush1.msra.mxu0 0.0
  %8348 = vmatprep.subr.mxu0 0.0
  %8349 = vmatpush1.msra.mxu0 0.0
  %8350 = vmatprep.subr.mxu0 0.0
  %8351 = vmatpush1.msra.mxu0 0.0
  %8352 = vmatprep.subr.mxu0 0.0
  %8353 = vmatpush1.msra.mxu0 0.0
  %8354 = vmatprep.subr.mxu0 0.0
  %8355 = vmatpush1.msra.mxu0 0.0
  %8356 = vmatprep.subr.mxu0 0.0
  %8357 = vmatpush1.msra.mxu0 0.0
  %8358 = vmatprep.subr.mxu0 0.0
  %8359 = vmatpush1.msra.mxu0 0.0
  %8360 = vmatprep.subr.mxu0 0.0
  %8361 = vmatpush1.msra.mxu0 0.0
  %8362 = vmatprep.subr.mxu0 0.0
  %8363 = vmatpush1.msra.mxu0 0.0
  %8364 = vmatprep.subr.mxu0 0.0
  %8365 = vmatpush1.msra.mxu0 0.0
  %8366 = vmatprep.subr.mxu0 0.0
  %8367 = vmatpush1.msra.mxu0 0.0
  %8368 = vmatprep.subr.mxu0 0.0
  %8369 = vmatpush1.msra.mxu0 0.0
  %8370 = vmatprep.subr.mxu0 0.0
  %8371 = vmatpush1.msra.mxu0 0.0
  %8372 = vmatprep.subr.mxu0 0.0
  %8373 = vmatpush1.msra.mxu0 0.0
  %8374 = vmatprep.mubr.f32.mxu0 0.0
  %v8375 = vand.u32 %v4251, 4294901760
  %v8376 = vsub.f32 %v4251, %v8375
  %v8377 = vand.u32 %v8376, 4294901760
  %v8378 = vsub.f32 %v8376, %v8377
  %v8379 = vand.u32 %v8378, 4294901760
  %8380 = vmatmul.mubr.f32.gmra.mrb[0].mxu0 %v8379
  %v8381 = vpop.f32.mrb[0].mxu0
  %v8382 = vadd.f32 0.0, %v8381
  %v8383 = vpop.f32.mrb[0].mxu0
  %8384 = vmatprep.mubr.f32.mxu0 0.0
  %v8385 = vand.u32 %v4254, 4294901760
  %v8386 = vsub.f32 %v4254, %v8385
  %v8387 = vand.u32 %v8386, 4294901760
  %v8388 = vsub.f32 %v8386, %v8387
  %v8389 = vand.u32 %v8388, 4294901760
  %8390 = vmatmul.mubr.f32.gmra.mrb[0].mxu0 %v8389
  %v8391 = vpop.f32.mrb[0].mxu0
  %v8392 = vadd.f32 0.0, %v8391
  %v8393 = vpop.f32.mrb[0].mxu0
  %8394 = vdwg.mxu0
  %8395 = vmatprep.subr.mxu0 0.0
  %v8396 = vand.u32 %v8305, 4294901760
  %v8397 = vsub.f32 %v8305, %v8396
  %v8398 = vand.u32 %v8397, 4294901760
  %v8399 = vsub.f32 %v8397, %v8398
  %v8400 = vand.u32 %v8399, 4294901760
  %8401 = vmatpush1.msra.mxu0 %v8400
  %8402 = vmatprep.subr.mxu0 0.0
  %v8403 = vand.u32 %v8307, 4294901760
  %v8404 = vsub.f32 %v8307, %v8403
  %v8405 = vand.u32 %v8404, 4294901760
  %v8406 = vsub.f32 %v8404, %v8405
  %v8407 = vand.u32 %v8406, 4294901760
  %8408 = vmatpush1.msra.mxu0 %v8407
  %8409 = vmatprep.subr.mxu0 0.0
  %8410 = vmatpush1.msra.mxu0 0.0
  %8411 = vmatprep.subr.mxu0 0.0
  %8412 = vmatpush1.msra.mxu0 0.0
  %8413 = vmatprep.subr.mxu0 0.0
  %8414 = vmatpush1.msra.mxu0 0.0
  %8415 = vmatprep.subr.mxu0 0.0
  %8416 = vmatpush1.msra.mxu0 0.0
  %8417 = vmatprep.subr.mxu0 0.0
  %8418 = vmatpush1.msra.mxu0 0.0
  %8419 = vmatprep.subr.mxu0 0.0
  %8420 = vmatpush1.msra.mxu0 0.0
  %8421 = vmatprep.subr.mxu0 0.0
  %8422 = vmatpush1.msra.mxu0 0.0
  %8423 = vmatprep.subr.mxu0 0.0
  %8424 = vmatpush1.msra.mxu0 0.0
  %8425 = vmatprep.subr.mxu0 0.0
  %8426 = vmatpush1.msra.mxu0 0.0
  %8427 = vmatprep.subr.mxu0 0.0
  %8428 = vmatpush1.msra.mxu0 0.0
  %8429 = vmatprep.subr.mxu0 0.0
  %8430 = vmatpush1.msra.mxu0 0.0
  %8431 = vmatprep.subr.mxu0 0.0
  %8432 = vmatpush1.msra.mxu0 0.0
  %8433 = vmatprep.subr.mxu0 0.0
  %8434 = vmatpush1.msra.mxu0 0.0
  %8435 = vmatprep.subr.mxu0 0.0
  %8436 = vmatpush1.msra.mxu0 0.0
  %8437 = vmatprep.subr.mxu0 0.0
  %8438 = vmatpush1.msra.mxu0 0.0
  %8439 = vmatprep.subr.mxu0 0.0
  %8440 = vmatpush1.msra.mxu0 0.0
  %8441 = vmatprep.subr.mxu0 0.0
  %8442 = vmatpush1.msra.mxu0 0.0
  %8443 = vmatprep.subr.mxu0 0.0
  %8444 = vmatpush1.msra.mxu0 0.0
  %8445 = vmatprep.subr.mxu0 0.0
  %8446 = vmatpush1.msra.mxu0 0.0
  %8447 = vmatprep.subr.mxu0 0.0
  %8448 = vmatpush1.msra.mxu0 0.0
  %8449 = vmatprep.subr.mxu0 0.0
  %8450 = vmatpush1.msra.mxu0 0.0
  %8451 = vmatprep.subr.mxu0 0.0
  %8452 = vmatpush1.msra.mxu0 0.0
  %8453 = vmatprep.subr.mxu0 0.0
  %8454 = vmatpush1.msra.mxu0 0.0
  %8455 = vmatprep.subr.mxu0 0.0
  %8456 = vmatpush1.msra.mxu0 0.0
  %8457 = vmatprep.subr.mxu0 0.0
  %8458 = vmatpush1.msra.mxu0 0.0
  %8459 = vmatprep.subr.mxu0 0.0
  %8460 = vmatpush1.msra.mxu0 0.0
  %8461 = vmatprep.subr.mxu0 0.0
  %8462 = vmatpush1.msra.mxu0 0.0
  %8463 = vmatprep.subr.mxu0 0.0
  %8464 = vmatpush1.msra.mxu0 0.0
  %8465 = vmatprep.subr.mxu0 0.0
  %8466 = vmatpush1.msra.mxu0 0.0
  %8467 = vmatprep.subr.mxu0 0.0
  %8468 = vmatpush1.msra.mxu0 0.0
  %8469 = vmatprep.mubr.f32.mxu0 0.0
  %v8470 = vand.u32 %v4251, 4294901760
  %8471 = vmatmul.mubr.f32.gmra.mrb[0].mxu0 %v8470
  %v8472 = vpop.f32.mrb[0].mxu0
  %v8473 = vadd.f32 %v8382, %v8472
  %v8474 = vpop.f32.mrb[0].mxu0
  %8475 = vmatprep.mubr.f32.mxu0 0.0
  %v8476 = vand.u32 %v4254, 4294901760
  %8477 = vmatmul.mubr.f32.gmra.mrb[0].mxu0 %v8476
  %v8478 = vpop.f32.mrb[0].mxu0
  %v8479 = vadd.f32 %v8392, %v8478
  %v8480 = vpop.f32.mrb[0].mxu0
  %8481 = vdwg.mxu0
  %8482 = vmatprep.subr.mxu0 0.0
  %v8483 = vand.u32 %v8305, 4294901760
  %v8484 = vsub.f32 %v8305, %v8483
  %8485 = vmatpush1.msra.mxu0 %v8484
  %8486 = vmatprep.subr.mxu0 0.0
  %v8487 = vand.u32 %v8307, 4294901760
  %v8488 = vsub.f32 %v8307, %v8487
  %8489 = vmatpush1.msra.mxu0 %v8488
  %8490 = vmatprep.subr.mxu0 0.0
  %8491 = vmatpush1.msra.mxu0 0.0
  %8492 = vmatprep.subr.mxu0 0.0
  %8493 = vmatpush1.msra.mxu0 0.0
  %8494 = vmatprep.subr.mxu0 0.0
  %8495 = vmatpush1.msra.mxu0 0.0
  %8496 = vmatprep.subr.mxu0 0.0
  %8497 = vmatpush1.msra.mxu0 0.0
  %8498 = vmatprep.subr.mxu0 0.0
  %8499 = vmatpush1.msra.mxu0 0.0
  %8500 = vmatprep.subr.mxu0 0.0
  %8501 = vmatpush1.msra.mxu0 0.0
  %8502 = vmatprep.subr.mxu0 0.0
  %8503 = vmatpush1.msra.mxu0 0.0
  %8504 = vmatprep.subr.mxu0 0.0
  %8505 = vmatpush1.msra.mxu0 0.0
  %8506 = vmatprep.subr.mxu0 0.0
  %8507 = vmatpush1.msra.mxu0 0.0
  %8508 = vmatprep.subr.mxu0 0.0
  %8509 = vmatpush1.msra.mxu0 0.0
  %8510 = vmatprep.subr.mxu0 0.0
  %8511 = vmatpush1.msra.mxu0 0.0
  %8512 = vmatprep.subr.mxu0 0.0
  %8513 = vmatpush1.msra.mxu0 0.0
  %8514 = vmatprep.subr.mxu0 0.0
  %8515 = vmatpush1.msra.mxu0 0.0
  %8516 = vmatprep.subr.mxu0 0.0
  %8517 = vmatpush1.msra.mxu0 0.0
  %8518 = vmatprep.subr.mxu0 0.0
  %8519 = vmatpush1.msra.mxu0 0.0
  %8520 = vmatprep.subr.mxu0 0.0
  %8521 = vmatpush1.msra.mxu0 0.0
  %8522 = vmatprep.subr.mxu0 0.0
  %8523 = vmatpush1.msra.mxu0 0.0
  %8524 = vmatprep.subr.mxu0 0.0
  %8525 = vmatpush1.msra.mxu0 0.0
  %8526 = vmatprep.subr.mxu0 0.0
  %8527 = vmatpush1.msra.mxu0 0.0
  %8528 = vmatprep.subr.mxu0 0.0
  %8529 = vmatpush1.msra.mxu0 0.0
  %8530 = vmatprep.subr.mxu0 0.0
  %8531 = vmatpush1.msra.mxu0 0.0
  %8532 = vmatprep.subr.mxu0 0.0
  %8533 = vmatpush1.msra.mxu0 0.0
  %8534 = vmatprep.subr.mxu0 0.0
  %8535 = vmatpush1.msra.mxu0 0.0
  %8536 = vmatprep.subr.mxu0 0.0
  %8537 = vmatpush1.msra.mxu0 0.0
  %8538 = vmatprep.subr.mxu0 0.0
  %8539 = vmatpush1.msra.mxu0 0.0
  %8540 = vmatprep.subr.mxu0 0.0
  %8541 = vmatpush1.msra.mxu0 0.0
  %8542 = vmatprep.subr.mxu0 0.0
  %8543 = vmatpush1.msra.mxu0 0.0
  %8544 = vmatprep.subr.mxu0 0.0
  %8545 = vmatpush1.msra.mxu0 0.0
  %8546 = vmatprep.subr.mxu0 0.0
  %8547 = vmatpush1.msra.mxu0 0.0
  %8548 = vmatprep.subr.mxu0 0.0
  %8549 = vmatpush1.msra.mxu0 0.0
  %8550 = vmatprep.mubr.f32.mxu0 0.0
  %v8551 = vand.u32 %v4251, 4294901760
  %v8552 = vsub.f32 %v4251, %v8551
  %8553 = vmatmul.mubr.f32.gmra.mrb[0].mxu0 %v8552
  %v8554 = vpop.f32.mrb[0].mxu0
  %v8555 = vadd.f32 %v8473, %v8554
  %v8556 = vpop.f32.mrb[0].mxu0
  %8557 = vmatprep.mubr.f32.mxu0 0.0
  %v8558 = vand.u32 %v4254, 4294901760
  %v8559 = vsub.f32 %v4254, %v8558
  %8560 = vmatmul.mubr.f32.gmra.mrb[0].mxu0 %v8559
  %v8561 = vpop.f32.mrb[0].mxu0
  %v8562 = vadd.f32 %v8479, %v8561
  %v8563 = vpop.f32.mrb[0].mxu0
  %8564 = vdwg.mxu0
  %8565 = vmatprep.subr.mxu0 0.0
  %v8566 = vand.u32 %v8305, 4294901760
  %8567 = vmatpush1.msra.mxu0 %v8566
  %8568 = vmatprep.subr.mxu0 0.0
  %v8569 = vand.u32 %v8307, 4294901760
  %8570 = vmatpush1.msra.mxu0 %v8569
  %8571 = vmatprep.subr.mxu0 0.0
  %8572 = vmatpush1.msra.mxu0 0.0
  %8573 = vmatprep.subr.mxu0 0.0
  %8574 = vmatpush1.msra.mxu0 0.0
  %8575 = vmatprep.subr.mxu0 0.0
  %8576 = vmatpush1.msra.mxu0 0.0
  %8577 = vmatprep.subr.mxu0 0.0
  %8578 = vmatpush1.msra.mxu0 0.0
  %8579 = vmatprep.subr.mxu0 0.0
  %8580 = vmatpush1.msra.mxu0 0.0
  %8581 = vmatprep.subr.mxu0 0.0
  %8582 = vmatpush1.msra.mxu0 0.0
  %8583 = vmatprep.subr.mxu0 0.0
  %8584 = vmatpush1.msra.mxu0 0.0
  %8585 = vmatprep.subr.mxu0 0.0
  %8586 = vmatpush1.msra.mxu0 0.0
  %8587 = vmatprep.subr.mxu0 0.0
  %8588 = vmatpush1.msra.mxu0 0.0
  %8589 = vmatprep.subr.mxu0 0.0
  %8590 = vmatpush1.msra.mxu0 0.0
  %8591 = vmatprep.subr.mxu0 0.0
  %8592 = vmatpush1.msra.mxu0 0.0
  %8593 = vmatprep.subr.mxu0 0.0
  %8594 = vmatpush1.msra.mxu0 0.0
  %8595 = vmatprep.subr.mxu0 0.0
  %8596 = vmatpush1.msra.mxu0 0.0
  %8597 = vmatprep.subr.mxu0 0.0
  %8598 = vmatpush1.msra.mxu0 0.0
  %8599 = vmatprep.subr.mxu0 0.0
  %8600 = vmatpush1.msra.mxu0 0.0
  %8601 = vmatprep.subr.mxu0 0.0
  %8602 = vmatpush1.msra.mxu0 0.0
  %8603 = vmatprep.subr.mxu0 0.0
  %8604 = vmatpush1.msra.mxu0 0.0
  %8605 = vmatprep.subr.mxu0 0.0
  %8606 = vmatpush1.msra.mxu0 0.0
  %8607 = vmatprep.subr.mxu0 0.0
  %8608 = vmatpush1.msra.mxu0 0.0
  %8609 = vmatprep.subr.mxu0 0.0
  %8610 = vmatpush1.msra.mxu0 0.0
  %8611 = vmatprep.subr.mxu0 0.0
  %8612 = vmatpush1.msra.mxu0 0.0
  %8613 = vmatprep.subr.mxu0 0.0
  %8614 = vmatpush1.msra.mxu0 0.0
  %8615 = vmatprep.subr.mxu0 0.0
  %8616 = vmatpush1.msra.mxu0 0.0
  %8617 = vmatprep.subr.mxu0 0.0
  %8618 = vmatpush1.msra.mxu0 0.0
  %8619 = vmatprep.subr.mxu0 0.0
  %8620 = vmatpush1.msra.mxu0 0.0
  %8621 = vmatprep.subr.mxu0 0.0
  %8622 = vmatpush1.msra.mxu0 0.0
  %8623 = vmatprep.subr.mxu0 0.0
  %8624 = vmatpush1.msra.mxu0 0.0
  %8625 = vmatprep.subr.mxu0 0.0
  %8626 = vmatpush1.msra.mxu0 0.0
  %8627 = vmatprep.subr.mxu0 0.0
  %8628 = vmatpush1.msra.mxu0 0.0
  %8629 = vmatprep.subr.mxu0 0.0
  %8630 = vmatpush1.msra.mxu0 0.0
  %8631 = vmatprep.mubr.f32.mxu0 0.0
  %v8632 = vand.u32 %v4251, 4294901760
  %v8633 = vsub.f32 %v4251, %v8632
  %v8634 = vand.u32 %v8633, 4294901760
  %8635 = vmatmul.mubr.f32.gmra.mrb[0].mxu0 %v8634
  %v8636 = vpop.f32.mrb[0].mxu0
  %v8637 = vadd.f32 %v8555, %v8636
  %v8638 = vpop.f32.mrb[0].mxu0
  %8639 = vmatprep.mubr.f32.mxu0 0.0
  %v8640 = vand.u32 %v4254, 4294901760
  %v8641 = vsub.f32 %v4254, %v8640
  %v8642 = vand.u32 %v8641, 4294901760
  %8643 = vmatmul.mubr.f32.gmra.mrb[0].mxu0 %v8642
  %v8644 = vpop.f32.mrb[0].mxu0
  %v8645 = vadd.f32 %v8562, %v8644
  %v8646 = vpop.f32.mrb[0].mxu0
  %8647 = vdwg.mxu0
  %8648 = vmatprep.subr.mxu0 0.0
  %v8649 = vand.u32 %v8305, 4294901760
  %v8650 = vsub.f32 %v8305, %v8649
  %v8651 = vand.u32 %v8650, 4294901760
  %8652 = vmatpush1.msra.mxu0 %v8651
  %8653 = vmatprep.subr.mxu0 0.0
  %v8654 = vand.u32 %v8307, 4294901760
  %v8655 = vsub.f32 %v8307, %v8654
  %v8656 = vand.u32 %v8655, 4294901760
  %8657 = vmatpush1.msra.mxu0 %v8656
  %8658 = vmatprep.subr.mxu0 0.0
  %8659 = vmatpush1.msra.mxu0 0.0
  %8660 = vmatprep.subr.mxu0 0.0
  %8661 = vmatpush1.msra.mxu0 0.0
  %8662 = vmatprep.subr.mxu0 0.0
  %8663 = vmatpush1.msra.mxu0 0.0
  %8664 = vmatprep.subr.mxu0 0.0
  %8665 = vmatpush1.msra.mxu0 0.0
  %8666 = vmatprep.subr.mxu0 0.0
  %8667 = vmatpush1.msra.mxu0 0.0
  %8668 = vmatprep.subr.mxu0 0.0
  %8669 = vmatpush1.msra.mxu0 0.0
  %8670 = vmatprep.subr.mxu0 0.0
  %8671 = vmatpush1.msra.mxu0 0.0
  %8672 = vmatprep.subr.mxu0 0.0
  %8673 = vmatpush1.msra.mxu0 0.0
  %8674 = vmatprep.subr.mxu0 0.0
  %8675 = vmatpush1.msra.mxu0 0.0
  %8676 = vmatprep.subr.mxu0 0.0
  %8677 = vmatpush1.msra.mxu0 0.0
  %8678 = vmatprep.subr.mxu0 0.0
  %8679 = vmatpush1.msra.mxu0 0.0
  %8680 = vmatprep.subr.mxu0 0.0
  %8681 = vmatpush1.msra.mxu0 0.0
  %8682 = vmatprep.subr.mxu0 0.0
  %8683 = vmatpush1.msra.mxu0 0.0
  %8684 = vmatprep.subr.mxu0 0.0
  %8685 = vmatpush1.msra.mxu0 0.0
  %8686 = vmatprep.subr.mxu0 0.0
  %8687 = vmatpush1.msra.mxu0 0.0
  %8688 = vmatprep.subr.mxu0 0.0
  %8689 = vmatpush1.msra.mxu0 0.0
  %8690 = vmatprep.subr.mxu0 0.0
  %8691 = vmatpush1.msra.mxu0 0.0
  %8692 = vmatprep.subr.mxu0 0.0
  %8693 = vmatpush1.msra.mxu0 0.0
  %8694 = vmatprep.subr.mxu0 0.0
  %8695 = vmatpush1.msra.mxu0 0.0
  %8696 = vmatprep.subr.mxu0 0.0
  %8697 = vmatpush1.msra.mxu0 0.0
  %8698 = vmatprep.subr.mxu0 0.0
  %8699 = vmatpush1.msra.mxu0 0.0
  %8700 = vmatprep.subr.mxu0 0.0
  %8701 = vmatpush1.msra.mxu0 0.0
  %8702 = vmatprep.subr.mxu0 0.0
  %8703 = vmatpush1.msra.mxu0 0.0
  %8704 = vmatprep.subr.mxu0 0.0
  %8705 = vmatpush1.msra.mxu0 0.0
  %8706 = vmatprep.subr.mxu0 0.0
  %8707 = vmatpush1.msra.mxu0 0.0
  %8708 = vmatprep.subr.mxu0 0.0
  %8709 = vmatpush1.msra.mxu0 0.0
  %8710 = vmatprep.subr.mxu0 0.0
  %8711 = vmatpush1.msra.mxu0 0.0
  %8712 = vmatprep.subr.mxu0 0.0
  %8713 = vmatpush1.msra.mxu0 0.0
  %8714 = vmatprep.subr.mxu0 0.0
  %8715 = vmatpush1.msra.mxu0 0.0
  %8716 = vmatprep.subr.mxu0 0.0
  %8717 = vmatpush1.msra.mxu0 0.0
  %8718 = vmatprep.mubr.f32.mxu0 0.0
  %v8719 = vand.u32 %v4251, 4294901760
  %8720 = vmatmul.mubr.f32.gmra.mrb[0].mxu0 %v8719
  %v8721 = vpop.f32.mrb[0].mxu0
  %v8722 = vadd.f32 %v8637, %v8721
  %v8723 = vpop.f32.mrb[0].mxu0
  %8724 = vmatprep.mubr.f32.mxu0 0.0
  %v8725 = vand.u32 %v4254, 4294901760
  %8726 = vmatmul.mubr.f32.gmra.mrb[0].mxu0 %v8725
  %v8727 = vpop.f32.mrb[0].mxu0
  %v8728 = vadd.f32 %v8645, %v8727
  %v8729 = vpop.f32.mrb[0].mxu0
  %8730 = vdwg.mxu0
  %8731 = vmatprep.subr.mxu0 0.0
  %v8732 = vand.u32 %v8305, 4294901760
  %8733 = vmatpush1.msra.mxu0 %v8732
  %8734 = vmatprep.subr.mxu0 0.0
  %v8735 = vand.u32 %v8307, 4294901760
  %8736 = vmatpush1.msra.mxu0 %v8735
  %8737 = vmatprep.subr.mxu0 0.0
  %8738 = vmatpush1.msra.mxu0 0.0
  %8739 = vmatprep.subr.mxu0 0.0
  %8740 = vmatpush1.msra.mxu0 0.0
  %8741 = vmatprep.subr.mxu0 0.0
  %8742 = vmatpush1.msra.mxu0 0.0
  %8743 = vmatprep.subr.mxu0 0.0
  %8744 = vmatpush1.msra.mxu0 0.0
  %8745 = vmatprep.subr.mxu0 0.0
  %8746 = vmatpush1.msra.mxu0 0.0
  %8747 = vmatprep.subr.mxu0 0.0
  %8748 = vmatpush1.msra.mxu0 0.0
  %8749 = vmatprep.subr.mxu0 0.0
  %8750 = vmatpush1.msra.mxu0 0.0
  %8751 = vmatprep.subr.mxu0 0.0
  %8752 = vmatpush1.msra.mxu0 0.0
  %8753 = vmatprep.subr.mxu0 0.0
  %8754 = vmatpush1.msra.mxu0 0.0
  %8755 = vmatprep.subr.mxu0 0.0
  %8756 = vmatpush1.msra.mxu0 0.0
  %8757 = vmatprep.subr.mxu0 0.0
  %8758 = vmatpush1.msra.mxu0 0.0
  %8759 = vmatprep.subr.mxu0 0.0
  %8760 = vmatpush1.msra.mxu0 0.0
  %8761 = vmatprep.subr.mxu0 0.0
  %8762 = vmatpush1.msra.mxu0 0.0
  %8763 = vmatprep.subr.mxu0 0.0
  %8764 = vmatpush1.msra.mxu0 0.0
  %8765 = vmatprep.subr.mxu0 0.0
  %8766 = vmatpush1.msra.mxu0 0.0
  %8767 = vmatprep.subr.mxu0 0.0
  %8768 = vmatpush1.msra.mxu0 0.0
  %8769 = vmatprep.subr.mxu0 0.0
  %8770 = vmatpush1.msra.mxu0 0.0
  %8771 = vmatprep.subr.mxu0 0.0
  %8772 = vmatpush1.msra.mxu0 0.0
  %8773 = vmatprep.subr.mxu0 0.0
  %8774 = vmatpush1.msra.mxu0 0.0
  %8775 = vmatprep.subr.mxu0 0.0
  %8776 = vmatpush1.msra.mxu0 0.0
  %8777 = vmatprep.subr.mxu0 0.0
  %8778 = vmatpush1.msra.mxu0 0.0
  %8779 = vmatprep.subr.mxu0 0.0
  %8780 = vmatpush1.msra.mxu0 0.0
  %8781 = vmatprep.subr.mxu0 0.0
  %8782 = vmatpush1.msra.mxu0 0.0
  %8783 = vmatprep.subr.mxu0 0.0
  %8784 = vmatpush1.msra.mxu0 0.0
  %8785 = vmatprep.subr.mxu0 0.0
  %8786 = vmatpush1.msra.mxu0 0.0
  %8787 = vmatprep.subr.mxu0 0.0
  %8788 = vmatpush1.msra.mxu0 0.0
  %8789 = vmatprep.subr.mxu0 0.0
  %8790 = vmatpush1.msra.mxu0 0.0
  %8791 = vmatprep.subr.mxu0 0.0
  %8792 = vmatpush1.msra.mxu0 0.0
  %8793 = vmatprep.subr.mxu0 0.0
  %8794 = vmatpush1.msra.mxu0 0.0
  %8795 = vmatprep.subr.mxu0 0.0
  %8796 = vmatpush1.msra.mxu0 0.0
  %8797 = vmatprep.mubr.f32.mxu0 0.0
  %v8798 = vand.u32 %v4251, 4294901760
  %8799 = vmatmul.mubr.f32.gmra.mrb[0].mxu0 %v8798
  %v8800 = vpop.f32.mrb[0].mxu0
  %v8801 = vadd.f32 %v8722, %v8800
  %v8802 = vpop.f32.mrb[0].mxu0
  %8803 = vmatprep.mubr.f32.mxu0 0.0
  %v8804 = vand.u32 %v4254, 4294901760
  %8805 = vmatmul.mubr.f32.gmra.mrb[0].mxu0 %v8804
  %v8806 = vpop.f32.mrb[0].mxu0
  %v8807 = vadd.f32 %v8728, %v8806
  %v8808 = vpop.f32.mrb[0].mxu0
  %8809 = vdwg.mxu0
  %v8810 = vmax.f32 %v8801, 1e-38
  %v8811 = vmax.f32 %v8807, 1e-38
  %v8812 = vlog2.pop %v8810
  %v8813 = vmul.f32 %v8812, 0.6931472
  %v8814 = vlog2.pop %v8811
  %v8815 = vmul.f32 %v8814, 0.6931472
  %v8816 = vadd.f32 %v8813, %v8301
  %v8817 = vadd.f32 %v8815, %v8301
  %v8818 = vld [vmem:[%s1092] sm:$0xff]
  %v8819 = vld [vmem:[%s1092 + $0x8] sm:$0xff]
  %v8820 = vadd.f32 %v8818, %v8816
  %v8821 = vadd.f32 %v8819, %v8817
  %v8822 = vmax.f32 %v8820, %v8821
  %v8823 = vrot.slane %v8822, 4
  %v8824 = vmax.f32 %v8822, %v8823
  %v8825 = vrot.slane %v8824, 2
  %v8826 = vmax.f32 %v8824, %v8825
  %v8827 = vrot.slane %v8826, 1
  %v8828 = vmax.f32 %v8826, %v8827
  %v8829 = vsub.f32 %v8820, %v8828
  %v8830 = vsub.f32 %v8821, %v8828
  %v8831 = vmul.f32 %v8829, 1.442695
  %v8832 = vpow.pop %v8831
  %v8833 = vmul.f32 %v8830, 1.442695
  %v8834 = vpow.pop %v8833
  %8835 = vmatprep.subr.mxu0 0.0
  %v8836 = vand.u32 %v8832, 4294901760
  %8837 = vmatpush1.msra.mxu0 %v8836
  %8838 = vmatprep.subr.mxu0 0.0
  %v8839 = vand.u32 %v8834, 4294901760
  %8840 = vmatpush1.msra.mxu0 %v8839
  %8841 = vmatprep.subr.mxu0 0.0
  %8842 = vmatpush1.msra.mxu0 0.0
  %8843 = vmatprep.subr.mxu0 0.0
  %8844 = vmatpush1.msra.mxu0 0.0
  %8845 = vmatprep.subr.mxu0 0.0
  %8846 = vmatpush1.msra.mxu0 0.0
  %8847 = vmatprep.subr.mxu0 0.0
  %8848 = vmatpush1.msra.mxu0 0.0
  %8849 = vmatprep.subr.mxu0 0.0
  %8850 = vmatpush1.msra.mxu0 0.0
  %8851 = vmatprep.subr.mxu0 0.0
  %8852 = vmatpush1.msra.mxu0 0.0
  %8853 = vmatprep.subr.mxu0 0.0
  %8854 = vmatpush1.msra.mxu0 0.0
  %8855 = vmatprep.subr.mxu0 0.0
  %8856 = vmatpush1.msra.mxu0 0.0
  %8857 = vmatprep.subr.mxu0 0.0
  %8858 = vmatpush1.msra.mxu0 0.0
  %8859 = vmatprep.subr.mxu0 0.0
  %8860 = vmatpush1.msra.mxu0 0.0
  %8861 = vmatprep.subr.mxu0 0.0
  %8862 = vmatpush1.msra.mxu0 0.0
  %8863 = vmatprep.subr.mxu0 0.0
  %8864 = vmatpush1.msra.mxu0 0.0
  %8865 = vmatprep.subr.mxu0 0.0
  %8866 = vmatpush1.msra.mxu0 0.0
  %8867 = vmatprep.subr.mxu0 0.0
  %8868 = vmatpush1.msra.mxu0 0.0
  %8869 = vmatprep.subr.mxu0 0.0
  %8870 = vmatpush1.msra.mxu0 0.0
  %8871 = vmatprep.subr.mxu0 0.0
  %8872 = vmatpush1.msra.mxu0 0.0
  %8873 = vmatprep.subr.mxu0 0.0
  %8874 = vmatpush1.msra.mxu0 0.0
  %8875 = vmatprep.subr.mxu0 0.0
  %8876 = vmatpush1.msra.mxu0 0.0
  %8877 = vmatprep.subr.mxu0 0.0
  %8878 = vmatpush1.msra.mxu0 0.0
  %8879 = vmatprep.subr.mxu0 0.0
  %8880 = vmatpush1.msra.mxu0 0.0
  %8881 = vmatprep.subr.mxu0 0.0
  %8882 = vmatpush1.msra.mxu0 0.0
  %8883 = vmatprep.subr.mxu0 0.0
  %8884 = vmatpush1.msra.mxu0 0.0
  %8885 = vmatprep.subr.mxu0 0.0
  %8886 = vmatpush1.msra.mxu0 0.0
  %8887 = vmatprep.subr.mxu0 0.0
  %8888 = vmatpush1.msra.mxu0 0.0
  %8889 = vmatprep.subr.mxu0 0.0
  %8890 = vmatpush1.msra.mxu0 0.0
  %8891 = vmatprep.subr.mxu0 0.0
  %8892 = vmatpush1.msra.mxu0 0.0
  %8893 = vmatprep.subr.mxu0 0.0
  %8894 = vmatpush1.msra.mxu0 0.0
  %8895 = vmatprep.subr.mxu0 0.0
  %8896 = vmatpush1.msra.mxu0 0.0
  %8897 = vmatprep.subr.mxu0 0.0
  %8898 = vmatpush1.msra.mxu0 0.0
  %8899 = vmatprep.subr.mxu0 0.0
  %8900 = vmatpush1.msra.mxu0 0.0
  %8901 = vmatprep.mubr.f32.mxu0 0.0
  %v8902 = vand.u32 %v3764, 4294901760
  %v8903 = vsub.f32 %v3764, %v8902
  %v8904 = vand.u32 %v8903, 4294901760
  %v8905 = vsub.f32 %v8903, %v8904
  %v8906 = vand.u32 %v8905, 4294901760
  %8907 = vmatmul.mubr.f32.gmra.mrb[0].mxu0 %v8906
  %v8908 = vpop.f32.mrb[0].mxu0
  %v8909 = vadd.f32 0.0, %v8908
  %v8910 = vpop.f32.mrb[0].mxu0
  %8911 = vdwg.mxu0
  %8912 = vmatprep.subr.mxu0 0.0
  %v8913 = vand.u32 %v8832, 4294901760
  %v8914 = vsub.f32 %v8832, %v8913
  %v8915 = vand.u32 %v8914, 4294901760
  %v8916 = vsub.f32 %v8914, %v8915
  %v8917 = vand.u32 %v8916, 4294901760
  %8918 = vmatpush1.msra.mxu0 %v8917
  %8919 = vmatprep.subr.mxu0 0.0
  %v8920 = vand.u32 %v8834, 4294901760
  %v8921 = vsub.f32 %v8834, %v8920
  %v8922 = vand.u32 %v8921, 4294901760
  %v8923 = vsub.f32 %v8921, %v8922
  %v8924 = vand.u32 %v8923, 4294901760
  %8925 = vmatpush1.msra.mxu0 %v8924
  %8926 = vmatprep.subr.mxu0 0.0
  %8927 = vmatpush1.msra.mxu0 0.0
  %8928 = vmatprep.subr.mxu0 0.0
  %8929 = vmatpush1.msra.mxu0 0.0
  %8930 = vmatprep.subr.mxu0 0.0
  %8931 = vmatpush1.msra.mxu0 0.0
  %8932 = vmatprep.subr.mxu0 0.0
  %8933 = vmatpush1.msra.mxu0 0.0
  %8934 = vmatprep.subr.mxu0 0.0
  %8935 = vmatpush1.msra.mxu0 0.0
  %8936 = vmatprep.subr.mxu0 0.0
  %8937 = vmatpush1.msra.mxu0 0.0
  %8938 = vmatprep.subr.mxu0 0.0
  %8939 = vmatpush1.msra.mxu0 0.0
  %8940 = vmatprep.subr.mxu0 0.0
  %8941 = vmatpush1.msra.mxu0 0.0
  %8942 = vmatprep.subr.mxu0 0.0
  %8943 = vmatpush1.msra.mxu0 0.0
  %8944 = vmatprep.subr.mxu0 0.0
  %8945 = vmatpush1.msra.mxu0 0.0
  %8946 = vmatprep.subr.mxu0 0.0
  %8947 = vmatpush1.msra.mxu0 0.0
  %8948 = vmatprep.subr.mxu0 0.0
  %8949 = vmatpush1.msra.mxu0 0.0
  %8950 = vmatprep.subr.mxu0 0.0
  %8951 = vmatpush1.msra.mxu0 0.0
  %8952 = vmatprep.subr.mxu0 0.0
  %8953 = vmatpush1.msra.mxu0 0.0
  %8954 = vmatprep.subr.mxu0 0.0
  %8955 = vmatpush1.msra.mxu0 0.0
  %8956 = vmatprep.subr.mxu0 0.0
  %8957 = vmatpush1.msra.mxu0 0.0
  %8958 = vmatprep.subr.mxu0 0.0
  %8959 = vmatpush1.msra.mxu0 0.0
  %8960 = vmatprep.subr.mxu0 0.0
  %8961 = vmatpush1.msra.mxu0 0.0
  %8962 = vmatprep.subr.mxu0 0.0
  %8963 = vmatpush1.msra.mxu0 0.0
  %8964 = vmatprep.subr.mxu0 0.0
  %8965 = vmatpush1.msra.mxu0 0.0
  %8966 = vmatprep.subr.mxu0 0.0
  %8967 = vmatpush1.msra.mxu0 0.0
  %8968 = vmatprep.subr.mxu0 0.0
  %8969 = vmatpush1.msra.mxu0 0.0
  %8970 = vmatprep.subr.mxu0 0.0
  %8971 = vmatpush1.msra.mxu0 0.0
  %8972 = vmatprep.subr.mxu0 0.0
  %8973 = vmatpush1.msra.mxu0 0.0
  %8974 = vmatprep.subr.mxu0 0.0
  %8975 = vmatpush1.msra.mxu0 0.0
  %8976 = vmatprep.subr.mxu0 0.0
  %8977 = vmatpush1.msra.mxu0 0.0
  %8978 = vmatprep.subr.mxu0 0.0
  %8979 = vmatpush1.msra.mxu0 0.0
  %8980 = vmatprep.subr.mxu0 0.0
  %8981 = vmatpush1.msra.mxu0 0.0
  %8982 = vmatprep.subr.mxu0 0.0
  %8983 = vmatpush1.msra.mxu0 0.0
  %8984 = vmatprep.subr.mxu0 0.0
  %8985 = vmatpush1.msra.mxu0 0.0
  %8986 = vmatprep.mubr.f32.mxu0 0.0
  %v8987 = vand.u32 %v3764, 4294901760
  %8988 = vmatmul.mubr.f32.gmra.mrb[0].mxu0 %v8987
  %v8989 = vpop.f32.mrb[0].mxu0
  %v8990 = vadd.f32 %v8909, %v8989
  %v8991 = vpop.f32.mrb[0].mxu0
  %8992 = vdwg.mxu0
  %8993 = vmatprep.subr.mxu0 0.0
  %v8994 = vand.u32 %v8832, 4294901760
  %v8995 = vsub.f32 %v8832, %v8994
  %8996 = vmatpush1.msra.mxu0 %v8995
  %8997 = vmatprep.subr.mxu0 0.0
  %v8998 = vand.u32 %v8834, 4294901760
  %v8999 = vsub.f32 %v8834, %v8998
  %9000 = vmatpush1.msra.mxu0 %v8999
  %9001 = vmatprep.subr.mxu0 0.0
  %9002 = vmatpush1.msra.mxu0 0.0
  %9003 = vmatprep.subr.mxu0 0.0
  %9004 = vmatpush1.msra.mxu0 0.0
  %9005 = vmatprep.subr.mxu0 0.0
  %9006 = vmatpush1.msra.mxu0 0.0
  %9007 = vmatprep.subr.mxu0 0.0
  %9008 = vmatpush1.msra.mxu0 0.0
  %9009 = vmatprep.subr.mxu0 0.0
  %9010 = vmatpush1.msra.mxu0 0.0
  %9011 = vmatprep.subr.mxu0 0.0
  %9012 = vmatpush1.msra.mxu0 0.0
  %9013 = vmatprep.subr.mxu0 0.0
  %9014 = vmatpush1.msra.mxu0 0.0
  %9015 = vmatprep.subr.mxu0 0.0
  %9016 = vmatpush1.msra.mxu0 0.0
  %9017 = vmatprep.subr.mxu0 0.0
  %9018 = vmatpush1.msra.mxu0 0.0
  %9019 = vmatprep.subr.mxu0 0.0
  %9020 = vmatpush1.msra.mxu0 0.0
  %9021 = vmatprep.subr.mxu0 0.0
  %9022 = vmatpush1.msra.mxu0 0.0
  %9023 = vmatprep.subr.mxu0 0.0
  %9024 = vmatpush1.msra.mxu0 0.0
  %9025 = vmatprep.subr.mxu0 0.0
  %9026 = vmatpush1.msra.mxu0 0.0
  %9027 = vmatprep.subr.mxu0 0.0
  %9028 = vmatpush1.msra.mxu0 0.0
  %9029 = vmatprep.subr.mxu0 0.0
  %9030 = vmatpush1.msra.mxu0 0.0
  %9031 = vmatprep.subr.mxu0 0.0
  %9032 = vmatpush1.msra.mxu0 0.0
  %9033 = vmatprep.subr.mxu0 0.0
  %9034 = vmatpush1.msra.mxu0 0.0
  %9035 = vmatprep.subr.mxu0 0.0
  %9036 = vmatpush1.msra.mxu0 0.0
  %9037 = vmatprep.subr.mxu0 0.0
  %9038 = vmatpush1.msra.mxu0 0.0
  %9039 = vmatprep.subr.mxu0 0.0
  %9040 = vmatpush1.msra.mxu0 0.0
  %9041 = vmatprep.subr.mxu0 0.0
  %9042 = vmatpush1.msra.mxu0 0.0
  %9043 = vmatprep.subr.mxu0 0.0
  %9044 = vmatpush1.msra.mxu0 0.0
  %9045 = vmatprep.subr.mxu0 0.0
  %9046 = vmatpush1.msra.mxu0 0.0
  %9047 = vmatprep.subr.mxu0 0.0
  %9048 = vmatpush1.msra.mxu0 0.0
  %9049 = vmatprep.subr.mxu0 0.0
  %9050 = vmatpush1.msra.mxu0 0.0
  %9051 = vmatprep.subr.mxu0 0.0
  %9052 = vmatpush1.msra.mxu0 0.0
  %9053 = vmatprep.subr.mxu0 0.0
  %9054 = vmatpush1.msra.mxu0 0.0
  %9055 = vmatprep.subr.mxu0 0.0
  %9056 = vmatpush1.msra.mxu0 0.0
  %9057 = vmatprep.subr.mxu0 0.0
  %9058 = vmatpush1.msra.mxu0 0.0
  %9059 = vmatprep.subr.mxu0 0.0
  %9060 = vmatpush1.msra.mxu0 0.0
  %9061 = vmatprep.mubr.f32.mxu0 0.0
  %v9062 = vand.u32 %v3764, 4294901760
  %v9063 = vsub.f32 %v3764, %v9062
  %9064 = vmatmul.mubr.f32.gmra.mrb[0].mxu0 %v9063
  %v9065 = vpop.f32.mrb[0].mxu0
  %v9066 = vadd.f32 %v8990, %v9065
  %v9067 = vpop.f32.mrb[0].mxu0
  %9068 = vdwg.mxu0
  %9069 = vmatprep.subr.mxu0 0.0
  %v9070 = vand.u32 %v8832, 4294901760
  %9071 = vmatpush1.msra.mxu0 %v9070
  %9072 = vmatprep.subr.mxu0 0.0
  %v9073 = vand.u32 %v8834, 4294901760
  %9074 = vmatpush1.msra.mxu0 %v9073
  %9075 = vmatprep.subr.mxu0 0.0
  %9076 = vmatpush1.msra.mxu0 0.0
  %9077 = vmatprep.subr.mxu0 0.0
  %9078 = vmatpush1.msra.mxu0 0.0
  %9079 = vmatprep.subr.mxu0 0.0
  %9080 = vmatpush1.msra.mxu0 0.0
  %9081 = vmatprep.subr.mxu0 0.0
  %9082 = vmatpush1.msra.mxu0 0.0
  %9083 = vmatprep.subr.mxu0 0.0
  %9084 = vmatpush1.msra.mxu0 0.0
  %9085 = vmatprep.subr.mxu0 0.0
  %9086 = vmatpush1.msra.mxu0 0.0
  %9087 = vmatprep.subr.mxu0 0.0
  %9088 = vmatpush1.msra.mxu0 0.0
  %9089 = vmatprep.subr.mxu0 0.0
  %9090 = vmatpush1.msra.mxu0 0.0
  %9091 = vmatprep.subr.mxu0 0.0
  %9092 = vmatpush1.msra.mxu0 0.0
  %9093 = vmatprep.subr.mxu0 0.0
  %9094 = vmatpush1.msra.mxu0 0.0
  %9095 = vmatprep.subr.mxu0 0.0
  %9096 = vmatpush1.msra.mxu0 0.0
  %9097 = vmatprep.subr.mxu0 0.0
  %9098 = vmatpush1.msra.mxu0 0.0
  %9099 = vmatprep.subr.mxu0 0.0
  %9100 = vmatpush1.msra.mxu0 0.0
  %9101 = vmatprep.subr.mxu0 0.0
  %9102 = vmatpush1.msra.mxu0 0.0
  %9103 = vmatprep.subr.mxu0 0.0
  %9104 = vmatpush1.msra.mxu0 0.0
  %9105 = vmatprep.subr.mxu0 0.0
  %9106 = vmatpush1.msra.mxu0 0.0
  %9107 = vmatprep.subr.mxu0 0.0
  %9108 = vmatpush1.msra.mxu0 0.0
  %9109 = vmatprep.subr.mxu0 0.0
  %9110 = vmatpush1.msra.mxu0 0.0
  %9111 = vmatprep.subr.mxu0 0.0
  %9112 = vmatpush1.msra.mxu0 0.0
  %9113 = vmatprep.subr.mxu0 0.0
  %9114 = vmatpush1.msra.mxu0 0.0
  %9115 = vmatprep.subr.mxu0 0.0
  %9116 = vmatpush1.msra.mxu0 0.0
  %9117 = vmatprep.subr.mxu0 0.0
  %9118 = vmatpush1.msra.mxu0 0.0
  %9119 = vmatprep.subr.mxu0 0.0
  %9120 = vmatpush1.msra.mxu0 0.0
  %9121 = vmatprep.subr.mxu0 0.0
  %9122 = vmatpush1.msra.mxu0 0.0
  %9123 = vmatprep.subr.mxu0 0.0
  %9124 = vmatpush1.msra.mxu0 0.0
  %9125 = vmatprep.subr.mxu0 0.0
  %9126 = vmatpush1.msra.mxu0 0.0
  %9127 = vmatprep.subr.mxu0 0.0
  %9128 = vmatpush1.msra.mxu0 0.0
  %9129 = vmatprep.subr.mxu0 0.0
  %9130 = vmatpush1.msra.mxu0 0.0
  %9131 = vmatprep.subr.mxu0 0.0
  %9132 = vmatpush1.msra.mxu0 0.0
  %9133 = vmatprep.subr.mxu0 0.0
  %9134 = vmatpush1.msra.mxu0 0.0
  %9135 = vmatprep.mubr.f32.mxu0 0.0
  %v9136 = vand.u32 %v3764, 4294901760
  %v9137 = vsub.f32 %v3764, %v9136
  %v9138 = vand.u32 %v9137, 4294901760
  %9139 = vmatmul.mubr.f32.gmra.mrb[0].mxu0 %v9138
  %v9140 = vpop.f32.mrb[0].mxu0
  %v9141 = vadd.f32 %v9066, %v9140
  %v9142 = vpop.f32.mrb[0].mxu0
  %9143 = vdwg.mxu0
  %9144 = vmatprep.subr.mxu0 0.0
  %v9145 = vand.u32 %v8832, 4294901760
  %v9146 = vsub.f32 %v8832, %v9145
  %v9147 = vand.u32 %v9146, 4294901760
  %9148 = vmatpush1.msra.mxu0 %v9147
  %9149 = vmatprep.subr.mxu0 0.0
  %v9150 = vand.u32 %v8834, 4294901760
  %v9151 = vsub.f32 %v8834, %v9150
  %v9152 = vand.u32 %v9151, 4294901760
  %9153 = vmatpush1.msra.mxu0 %v9152
  %9154 = vmatprep.subr.mxu0 0.0
  %9155 = vmatpush1.msra.mxu0 0.0
  %9156 = vmatprep.subr.mxu0 0.0
  %9157 = vmatpush1.msra.mxu0 0.0
  %9158 = vmatprep.subr.mxu0 0.0
  %9159 = vmatpush1.msra.mxu0 0.0
  %9160 = vmatprep.subr.mxu0 0.0
  %9161 = vmatpush1.msra.mxu0 0.0
  %9162 = vmatprep.subr.mxu0 0.0
  %9163 = vmatpush1.msra.mxu0 0.0
  %9164 = vmatprep.subr.mxu0 0.0
  %9165 = vmatpush1.msra.mxu0 0.0
  %9166 = vmatprep.subr.mxu0 0.0
  %9167 = vmatpush1.msra.mxu0 0.0
  %9168 = vmatprep.subr.mxu0 0.0
  %9169 = vmatpush1.msra.mxu0 0.0
  %9170 = vmatprep.subr.mxu0 0.0
  %9171 = vmatpush1.msra.mxu0 0.0
  %9172 = vmatprep.subr.mxu0 0.0
  %9173 = vmatpush1.msra.mxu0 0.0
  %9174 = vmatprep.subr.mxu0 0.0
  %9175 = vmatpush1.msra.mxu0 0.0
  %9176 = vmatprep.subr.mxu0 0.0
  %9177 = vmatpush1.msra.mxu0 0.0
  %9178 = vmatprep.subr.mxu0 0.0
  %9179 = vmatpush1.msra.mxu0 0.0
  %9180 = vmatprep.subr.mxu0 0.0
  %9181 = vmatpush1.msra.mxu0 0.0
  %9182 = vmatprep.subr.mxu0 0.0
  %9183 = vmatpush1.msra.mxu0 0.0
  %9184 = vmatprep.subr.mxu0 0.0
  %9185 = vmatpush1.msra.mxu0 0.0
  %9186 = vmatprep.subr.mxu0 0.0
  %9187 = vmatpush1.msra.mxu0 0.0
  %9188 = vmatprep.subr.mxu0 0.0
  %9189 = vmatpush1.msra.mxu0 0.0
  %9190 = vmatprep.subr.mxu0 0.0
  %9191 = vmatpush1.msra.mxu0 0.0
  %9192 = vmatprep.subr.mxu0 0.0
  %9193 = vmatpush1.msra.mxu0 0.0
  %9194 = vmatprep.subr.mxu0 0.0
  %9195 = vmatpush1.msra.mxu0 0.0
  %9196 = vmatprep.subr.mxu0 0.0
  %9197 = vmatpush1.msra.mxu0 0.0
  %9198 = vmatprep.subr.mxu0 0.0
  %9199 = vmatpush1.msra.mxu0 0.0
  %9200 = vmatprep.subr.mxu0 0.0
  %9201 = vmatpush1.msra.mxu0 0.0
  %9202 = vmatprep.subr.mxu0 0.0
  %9203 = vmatpush1.msra.mxu0 0.0
  %9204 = vmatprep.subr.mxu0 0.0
  %9205 = vmatpush1.msra.mxu0 0.0
  %9206 = vmatprep.subr.mxu0 0.0
  %9207 = vmatpush1.msra.mxu0 0.0
  %9208 = vmatprep.subr.mxu0 0.0
  %9209 = vmatpush1.msra.mxu0 0.0
  %9210 = vmatprep.subr.mxu0 0.0
  %9211 = vmatpush1.msra.mxu0 0.0
  %9212 = vmatprep.subr.mxu0 0.0
  %9213 = vmatpush1.msra.mxu0 0.0
  %9214 = vmatprep.mubr.f32.mxu0 0.0
  %v9215 = vand.u32 %v3764, 4294901760
  %9216 = vmatmul.mubr.f32.gmra.mrb[0].mxu0 %v9215
  %v9217 = vpop.f32.mrb[0].mxu0
  %v9218 = vadd.f32 %v9141, %v9217
  %v9219 = vpop.f32.mrb[0].mxu0
  %9220 = vdwg.mxu0
  %9221 = vmatprep.subr.mxu0 0.0
  %v9222 = vand.u32 %v8832, 4294901760
  %9223 = vmatpush1.msra.mxu0 %v9222
  %9224 = vmatprep.subr.mxu0 0.0
  %v9225 = vand.u32 %v8834, 4294901760
  %9226 = vmatpush1.msra.mxu0 %v9225
  %9227 = vmatprep.subr.mxu0 0.0
  %9228 = vmatpush1.msra.mxu0 0.0
  %9229 = vmatprep.subr.mxu0 0.0
  %9230 = vmatpush1.msra.mxu0 0.0
  %9231 = vmatprep.subr.mxu0 0.0
  %9232 = vmatpush1.msra.mxu0 0.0
  %9233 = vmatprep.subr.mxu0 0.0
  %9234 = vmatpush1.msra.mxu0 0.0
  %9235 = vmatprep.subr.mxu0 0.0
  %9236 = vmatpush1.msra.mxu0 0.0
  %9237 = vmatprep.subr.mxu0 0.0
  %9238 = vmatpush1.msra.mxu0 0.0
  %9239 = vmatprep.subr.mxu0 0.0
  %9240 = vmatpush1.msra.mxu0 0.0
  %9241 = vmatprep.subr.mxu0 0.0
  %9242 = vmatpush1.msra.mxu0 0.0
  %9243 = vmatprep.subr.mxu0 0.0
  %9244 = vmatpush1.msra.mxu0 0.0
  %9245 = vmatprep.subr.mxu0 0.0
  %9246 = vmatpush1.msra.mxu0 0.0
  %9247 = vmatprep.subr.mxu0 0.0
  %9248 = vmatpush1.msra.mxu0 0.0
  %9249 = vmatprep.subr.mxu0 0.0
  %9250 = vmatpush1.msra.mxu0 0.0
  %9251 = vmatprep.subr.mxu0 0.0
  %9252 = vmatpush1.msra.mxu0 0.0
  %9253 = vmatprep.subr.mxu0 0.0
  %9254 = vmatpush1.msra.mxu0 0.0
  %9255 = vmatprep.subr.mxu0 0.0
  %9256 = vmatpush1.msra.mxu0 0.0
  %9257 = vmatprep.subr.mxu0 0.0
  %9258 = vmatpush1.msra.mxu0 0.0
  %9259 = vmatprep.subr.mxu0 0.0
  %9260 = vmatpush1.msra.mxu0 0.0
  %9261 = vmatprep.subr.mxu0 0.0
  %9262 = vmatpush1.msra.mxu0 0.0
  %9263 = vmatprep.subr.mxu0 0.0
  %9264 = vmatpush1.msra.mxu0 0.0
  %9265 = vmatprep.subr.mxu0 0.0
  %9266 = vmatpush1.msra.mxu0 0.0
  %9267 = vmatprep.subr.mxu0 0.0
  %9268 = vmatpush1.msra.mxu0 0.0
  %9269 = vmatprep.subr.mxu0 0.0
  %9270 = vmatpush1.msra.mxu0 0.0
  %9271 = vmatprep.subr.mxu0 0.0
  %9272 = vmatpush1.msra.mxu0 0.0
  %9273 = vmatprep.subr.mxu0 0.0
  %9274 = vmatpush1.msra.mxu0 0.0
  %9275 = vmatprep.subr.mxu0 0.0
  %9276 = vmatpush1.msra.mxu0 0.0
  %9277 = vmatprep.subr.mxu0 0.0
  %9278 = vmatpush1.msra.mxu0 0.0
  %9279 = vmatprep.subr.mxu0 0.0
  %9280 = vmatpush1.msra.mxu0 0.0
  %9281 = vmatprep.subr.mxu0 0.0
  %9282 = vmatpush1.msra.mxu0 0.0
  %9283 = vmatprep.subr.mxu0 0.0
  %9284 = vmatpush1.msra.mxu0 0.0
  %9285 = vmatprep.subr.mxu0 0.0
  %9286 = vmatpush1.msra.mxu0 0.0
  %9287 = vmatprep.mubr.f32.mxu0 0.0
  %v9288 = vand.u32 %v3764, 4294901760
  %9289 = vmatmul.mubr.f32.gmra.mrb[0].mxu0 %v9288
  %v9290 = vpop.f32.mrb[0].mxu0
  %v9291 = vadd.f32 %v9218, %v9290
  %v9292 = vpop.f32.mrb[0].mxu0
  %9293 = vdwg.mxu0
  %v9294 = vmax.f32 %v9291, 1e-38
  %v9295 = vlog2.pop %v9294
  %v9296 = vmul.f32 %v9295, 0.6931472
  %v9297 = vlaneseq
  %v9298 = vshrl.u32 %v9297, 7
  %v9299 = vsub.s32 5, %v9298
  %v9300 = vrot.slane %v9296, %v9299
  %v9301 = vsub.f32 %v9296, %v9300
  %s9302 = scalar_lea.vmem %s4, 16
  %9303 = vst [vmem:[%s9302] sm:$0x1f] %v9301
  %v9304 = vld [vmem:[%s1087] sm:$0xff]
  %v9305 = vld [vmem:[%s1087 + $0x8] sm:$0xff]
  %v9306 = vadd.f32 %v8816, %v9304
  %v9307 = vadd.f32 %v8817, %v9305
  %v9308 = vmax.f32 %v9306, %v9307
  %v9309 = vrot.slane %v9308, 4
  %v9310 = vmax.f32 %v9308, %v9309
  %v9311 = vrot.slane %v9310, 2
  %v9312 = vmax.f32 %v9310, %v9311
  %v9313 = vrot.slane %v9312, 1
  %v9314 = vmax.f32 %v9312, %v9313
  %v9315 = vsub.f32 %v9306, %v9314
  %v9316 = vsub.f32 %v9307, %v9314
  %v9317 = vmul.f32 %v9315, 1.442695
  %v9318 = vpow.pop %v9317
  %v9319 = vmul.f32 %v9316, 1.442695
  %v9320 = vpow.pop %v9319
  %9321 = vmatprep.subr.mxu0 0.0
  %v9322 = vand.u32 %v9318, 4294901760
  %9323 = vmatpush1.msra.mxu0 %v9322
  %9324 = vmatprep.subr.mxu0 0.0
  %v9325 = vand.u32 %v9320, 4294901760
  %9326 = vmatpush1.msra.mxu0 %v9325
  %9327 = vmatprep.subr.mxu0 0.0
  %9328 = vmatpush1.msra.mxu0 0.0
  %9329 = vmatprep.subr.mxu0 0.0
  %9330 = vmatpush1.msra.mxu0 0.0
  %9331 = vmatprep.subr.mxu0 0.0
  %9332 = vmatpush1.msra.mxu0 0.0
  %9333 = vmatprep.subr.mxu0 0.0
  %9334 = vmatpush1.msra.mxu0 0.0
  %9335 = vmatprep.subr.mxu0 0.0
  %9336 = vmatpush1.msra.mxu0 0.0
  %9337 = vmatprep.subr.mxu0 0.0
  %9338 = vmatpush1.msra.mxu0 0.0
  %9339 = vmatprep.subr.mxu0 0.0
  %9340 = vmatpush1.msra.mxu0 0.0
  %9341 = vmatprep.subr.mxu0 0.0
  %9342 = vmatpush1.msra.mxu0 0.0
  %9343 = vmatprep.subr.mxu0 0.0
  %9344 = vmatpush1.msra.mxu0 0.0
  %9345 = vmatprep.subr.mxu0 0.0
  %9346 = vmatpush1.msra.mxu0 0.0
  %9347 = vmatprep.subr.mxu0 0.0
  %9348 = vmatpush1.msra.mxu0 0.0
  %9349 = vmatprep.subr.mxu0 0.0
  %9350 = vmatpush1.msra.mxu0 0.0
  %9351 = vmatprep.subr.mxu0 0.0
  %9352 = vmatpush1.msra.mxu0 0.0
  %9353 = vmatprep.subr.mxu0 0.0
  %9354 = vmatpush1.msra.mxu0 0.0
  %9355 = vmatprep.subr.mxu0 0.0
  %9356 = vmatpush1.msra.mxu0 0.0
  %9357 = vmatprep.subr.mxu0 0.0
  %9358 = vmatpush1.msra.mxu0 0.0
  %9359 = vmatprep.subr.mxu0 0.0
  %9360 = vmatpush1.msra.mxu0 0.0
  %9361 = vmatprep.subr.mxu0 0.0
  %9362 = vmatpush1.msra.mxu0 0.0
  %9363 = vmatprep.subr.mxu0 0.0
  %9364 = vmatpush1.msra.mxu0 0.0
  %9365 = vmatprep.subr.mxu0 0.0
  %9366 = vmatpush1.msra.mxu0 0.0
  %9367 = vmatprep.subr.mxu0 0.0
  %9368 = vmatpush1.msra.mxu0 0.0
  %9369 = vmatprep.subr.mxu0 0.0
  %9370 = vmatpush1.msra.mxu0 0.0
  %9371 = vmatprep.subr.mxu0 0.0
  %9372 = vmatpush1.msra.mxu0 0.0
  %9373 = vmatprep.subr.mxu0 0.0
  %9374 = vmatpush1.msra.mxu0 0.0
  %9375 = vmatprep.subr.mxu0 0.0
  %9376 = vmatpush1.msra.mxu0 0.0
  %9377 = vmatprep.subr.mxu0 0.0
  %9378 = vmatpush1.msra.mxu0 0.0
  %9379 = vmatprep.subr.mxu0 0.0
  %9380 = vmatpush1.msra.mxu0 0.0
  %9381 = vmatprep.subr.mxu0 0.0
  %9382 = vmatpush1.msra.mxu0 0.0
  %9383 = vmatprep.subr.mxu0 0.0
  %9384 = vmatpush1.msra.mxu0 0.0
  %9385 = vmatprep.subr.mxu0 0.0
  %9386 = vmatpush1.msra.mxu0 0.0
  %9387 = vmatprep.mubr.f32.mxu0 0.0
  %v9388 = vand.u32 %v4251, 4294901760
  %v9389 = vsub.f32 %v4251, %v9388
  %v9390 = vand.u32 %v9389, 4294901760
  %v9391 = vsub.f32 %v9389, %v9390
  %v9392 = vand.u32 %v9391, 4294901760
  %9393 = vmatmul.mubr.f32.gmra.mrb[0].mxu0 %v9392
  %v9394 = vpop.f32.mrb[0].mxu0
  %v9395 = vadd.f32 0.0, %v9394
  %v9396 = vpop.f32.mrb[0].mxu0
  %9397 = vmatprep.mubr.f32.mxu0 0.0
  %v9398 = vand.u32 %v4254, 4294901760
  %v9399 = vsub.f32 %v4254, %v9398
  %v9400 = vand.u32 %v9399, 4294901760
  %v9401 = vsub.f32 %v9399, %v9400
  %v9402 = vand.u32 %v9401, 4294901760
  %9403 = vmatmul.mubr.f32.gmra.mrb[0].mxu0 %v9402
  %v9404 = vpop.f32.mrb[0].mxu0
  %v9405 = vadd.f32 0.0, %v9404
  %v9406 = vpop.f32.mrb[0].mxu0
  %9407 = vdwg.mxu0
  %9408 = vmatprep.subr.mxu0 0.0
  %v9409 = vand.u32 %v9318, 4294901760
  %v9410 = vsub.f32 %v9318, %v9409
  %v9411 = vand.u32 %v9410, 4294901760
  %v9412 = vsub.f32 %v9410, %v9411
  %v9413 = vand.u32 %v9412, 4294901760
  %9414 = vmatpush1.msra.mxu0 %v9413
  %9415 = vmatprep.subr.mxu0 0.0
  %v9416 = vand.u32 %v9320, 4294901760
  %v9417 = vsub.f32 %v9320, %v9416
  %v9418 = vand.u32 %v9417, 4294901760
  %v9419 = vsub.f32 %v9417, %v9418
  %v9420 = vand.u32 %v9419, 4294901760
  %9421 = vmatpush1.msra.mxu0 %v9420
  %9422 = vmatprep.subr.mxu0 0.0
  %9423 = vmatpush1.msra.mxu0 0.0
  %9424 = vmatprep.subr.mxu0 0.0
  %9425 = vmatpush1.msra.mxu0 0.0
  %9426 = vmatprep.subr.mxu0 0.0
  %9427 = vmatpush1.msra.mxu0 0.0
  %9428 = vmatprep.subr.mxu0 0.0
  %9429 = vmatpush1.msra.mxu0 0.0
  %9430 = vmatprep.subr.mxu0 0.0
  %9431 = vmatpush1.msra.mxu0 0.0
  %9432 = vmatprep.subr.mxu0 0.0
  %9433 = vmatpush1.msra.mxu0 0.0
  %9434 = vmatprep.subr.mxu0 0.0
  %9435 = vmatpush1.msra.mxu0 0.0
  %9436 = vmatprep.subr.mxu0 0.0
  %9437 = vmatpush1.msra.mxu0 0.0
  %9438 = vmatprep.subr.mxu0 0.0
  %9439 = vmatpush1.msra.mxu0 0.0
  %9440 = vmatprep.subr.mxu0 0.0
  %9441 = vmatpush1.msra.mxu0 0.0
  %9442 = vmatprep.subr.mxu0 0.0
  %9443 = vmatpush1.msra.mxu0 0.0
  %9444 = vmatprep.subr.mxu0 0.0
  %9445 = vmatpush1.msra.mxu0 0.0
  %9446 = vmatprep.subr.mxu0 0.0
  %9447 = vmatpush1.msra.mxu0 0.0
  %9448 = vmatprep.subr.mxu0 0.0
  %9449 = vmatpush1.msra.mxu0 0.0
  %9450 = vmatprep.subr.mxu0 0.0
  %9451 = vmatpush1.msra.mxu0 0.0
  %9452 = vmatprep.subr.mxu0 0.0
  %9453 = vmatpush1.msra.mxu0 0.0
  %9454 = vmatprep.subr.mxu0 0.0
  %9455 = vmatpush1.msra.mxu0 0.0
  %9456 = vmatprep.subr.mxu0 0.0
  %9457 = vmatpush1.msra.mxu0 0.0
  %9458 = vmatprep.subr.mxu0 0.0
  %9459 = vmatpush1.msra.mxu0 0.0
  %9460 = vmatprep.subr.mxu0 0.0
  %9461 = vmatpush1.msra.mxu0 0.0
  %9462 = vmatprep.subr.mxu0 0.0
  %9463 = vmatpush1.msra.mxu0 0.0
  %9464 = vmatprep.subr.mxu0 0.0
  %9465 = vmatpush1.msra.mxu0 0.0
  %9466 = vmatprep.subr.mxu0 0.0
  %9467 = vmatpush1.msra.mxu0 0.0
  %9468 = vmatprep.subr.mxu0 0.0
  %9469 = vmatpush1.msra.mxu0 0.0
  %9470 = vmatprep.subr.mxu0 0.0
  %9471 = vmatpush1.msra.mxu0 0.0
  %9472 = vmatprep.subr.mxu0 0.0
  %9473 = vmatpush1.msra.mxu0 0.0
  %9474 = vmatprep.subr.mxu0 0.0
  %9475 = vmatpush1.msra.mxu0 0.0
  %9476 = vmatprep.subr.mxu0 0.0
  %9477 = vmatpush1.msra.mxu0 0.0
  %9478 = vmatprep.subr.mxu0 0.0
  %9479 = vmatpush1.msra.mxu0 0.0
  %9480 = vmatprep.subr.mxu0 0.0
  %9481 = vmatpush1.msra.mxu0 0.0
  %9482 = vmatprep.mubr.f32.mxu0 0.0
  %v9483 = vand.u32 %v4251, 4294901760
  %9484 = vmatmul.mubr.f32.gmra.mrb[0].mxu0 %v9483
  %v9485 = vpop.f32.mrb[0].mxu0
  %v9486 = vadd.f32 %v9395, %v9485
  %v9487 = vpop.f32.mrb[0].mxu0
  %9488 = vmatprep.mubr.f32.mxu0 0.0
  %v9489 = vand.u32 %v4254, 4294901760
  %9490 = vmatmul.mubr.f32.gmra.mrb[0].mxu0 %v9489
  %v9491 = vpop.f32.mrb[0].mxu0
  %v9492 = vadd.f32 %v9405, %v9491
  %v9493 = vpop.f32.mrb[0].mxu0
  %9494 = vdwg.mxu0
  %9495 = vmatprep.subr.mxu0 0.0
  %v9496 = vand.u32 %v9318, 4294901760
  %v9497 = vsub.f32 %v9318, %v9496
  %9498 = vmatpush1.msra.mxu0 %v9497
  %9499 = vmatprep.subr.mxu0 0.0
  %v9500 = vand.u32 %v9320, 4294901760
  %v9501 = vsub.f32 %v9320, %v9500
  %9502 = vmatpush1.msra.mxu0 %v9501
  %9503 = vmatprep.subr.mxu0 0.0
  %9504 = vmatpush1.msra.mxu0 0.0
  %9505 = vmatprep.subr.mxu0 0.0
  %9506 = vmatpush1.msra.mxu0 0.0
  %9507 = vmatprep.subr.mxu0 0.0
  %9508 = vmatpush1.msra.mxu0 0.0
  %9509 = vmatprep.subr.mxu0 0.0
  %9510 = vmatpush1.msra.mxu0 0.0
  %9511 = vmatprep.subr.mxu0 0.0
  %9512 = vmatpush1.msra.mxu0 0.0
  %9513 = vmatprep.subr.mxu0 0.0
  %9514 = vmatpush1.msra.mxu0 0.0
  %9515 = vmatprep.subr.mxu0 0.0
  %9516 = vmatpush1.msra.mxu0 0.0
  %9517 = vmatprep.subr.mxu0 0.0
  %9518 = vmatpush1.msra.mxu0 0.0
  %9519 = vmatprep.subr.mxu0 0.0
  %9520 = vmatpush1.msra.mxu0 0.0
  %9521 = vmatprep.subr.mxu0 0.0
  %9522 = vmatpush1.msra.mxu0 0.0
  %9523 = vmatprep.subr.mxu0 0.0
  %9524 = vmatpush1.msra.mxu0 0.0
  %9525 = vmatprep.subr.mxu0 0.0
  %9526 = vmatpush1.msra.mxu0 0.0
  %9527 = vmatprep.subr.mxu0 0.0
  %9528 = vmatpush1.msra.mxu0 0.0
  %9529 = vmatprep.subr.mxu0 0.0
  %9530 = vmatpush1.msra.mxu0 0.0
  %9531 = vmatprep.subr.mxu0 0.0
  %9532 = vmatpush1.msra.mxu0 0.0
  %9533 = vmatprep.subr.mxu0 0.0
  %9534 = vmatpush1.msra.mxu0 0.0
  %9535 = vmatprep.subr.mxu0 0.0
  %9536 = vmatpush1.msra.mxu0 0.0
  %9537 = vmatprep.subr.mxu0 0.0
  %9538 = vmatpush1.msra.mxu0 0.0
  %9539 = vmatprep.subr.mxu0 0.0
  %9540 = vmatpush1.msra.mxu0 0.0
  %9541 = vmatprep.subr.mxu0 0.0
  %9542 = vmatpush1.msra.mxu0 0.0
  %9543 = vmatprep.subr.mxu0 0.0
  %9544 = vmatpush1.msra.mxu0 0.0
  %9545 = vmatprep.subr.mxu0 0.0
  %9546 = vmatpush1.msra.mxu0 0.0
  %9547 = vmatprep.subr.mxu0 0.0
  %9548 = vmatpush1.msra.mxu0 0.0
  %9549 = vmatprep.subr.mxu0 0.0
  %9550 = vmatpush1.msra.mxu0 0.0
  %9551 = vmatprep.subr.mxu0 0.0
  %9552 = vmatpush1.msra.mxu0 0.0
  %9553 = vmatprep.subr.mxu0 0.0
  %9554 = vmatpush1.msra.mxu0 0.0
  %9555 = vmatprep.subr.mxu0 0.0
  %9556 = vmatpush1.msra.mxu0 0.0
  %9557 = vmatprep.subr.mxu0 0.0
  %9558 = vmatpush1.msra.mxu0 0.0
  %9559 = vmatprep.subr.mxu0 0.0
  %9560 = vmatpush1.msra.mxu0 0.0
  %9561 = vmatprep.subr.mxu0 0.0
  %9562 = vmatpush1.msra.mxu0 0.0
  %9563 = vmatprep.mubr.f32.mxu0 0.0
  %v9564 = vand.u32 %v4251, 4294901760
  %v9565 = vsub.f32 %v4251, %v9564
  %9566 = vmatmul.mubr.f32.gmra.mrb[0].mxu0 %v9565
  %v9567 = vpop.f32.mrb[0].mxu0
  %v9568 = vadd.f32 %v9486, %v9567
  %v9569 = vpop.f32.mrb[0].mxu0
  %9570 = vmatprep.mubr.f32.mxu0 0.0
  %v9571 = vand.u32 %v4254, 4294901760
  %v9572 = vsub.f32 %v4254, %v9571
  %9573 = vmatmul.mubr.f32.gmra.mrb[0].mxu0 %v9572
  %v9574 = vpop.f32.mrb[0].mxu0
  %v9575 = vadd.f32 %v9492, %v9574
  %v9576 = vpop.f32.mrb[0].mxu0
  %9577 = vdwg.mxu0
  %9578 = vmatprep.subr.mxu0 0.0
  %v9579 = vand.u32 %v9318, 4294901760
  %9580 = vmatpush1.msra.mxu0 %v9579
  %9581 = vmatprep.subr.mxu0 0.0
  %v9582 = vand.u32 %v9320, 4294901760
  %9583 = vmatpush1.msra.mxu0 %v9582
  %9584 = vmatprep.subr.mxu0 0.0
  %9585 = vmatpush1.msra.mxu0 0.0
  %9586 = vmatprep.subr.mxu0 0.0
  %9587 = vmatpush1.msra.mxu0 0.0
  %9588 = vmatprep.subr.mxu0 0.0
  %9589 = vmatpush1.msra.mxu0 0.0
  %9590 = vmatprep.subr.mxu0 0.0
  %9591 = vmatpush1.msra.mxu0 0.0
  %9592 = vmatprep.subr.mxu0 0.0
  %9593 = vmatpush1.msra.mxu0 0.0
  %9594 = vmatprep.subr.mxu0 0.0
  %9595 = vmatpush1.msra.mxu0 0.0
  %9596 = vmatprep.subr.mxu0 0.0
  %9597 = vmatpush1.msra.mxu0 0.0
  %9598 = vmatprep.subr.mxu0 0.0
  %9599 = vmatpush1.msra.mxu0 0.0
  %9600 = vmatprep.subr.mxu0 0.0
  %9601 = vmatpush1.msra.mxu0 0.0
  %9602 = vmatprep.subr.mxu0 0.0
  %9603 = vmatpush1.msra.mxu0 0.0
  %9604 = vmatprep.subr.mxu0 0.0
  %9605 = vmatpush1.msra.mxu0 0.0
  %9606 = vmatprep.subr.mxu0 0.0
  %9607 = vmatpush1.msra.mxu0 0.0
  %9608 = vmatprep.subr.mxu0 0.0
  %9609 = vmatpush1.msra.mxu0 0.0
  %9610 = vmatprep.subr.mxu0 0.0
  %9611 = vmatpush1.msra.mxu0 0.0
  %9612 = vmatprep.subr.mxu0 0.0
  %9613 = vmatpush1.msra.mxu0 0.0
  %9614 = vmatprep.subr.mxu0 0.0
  %9615 = vmatpush1.msra.mxu0 0.0
  %9616 = vmatprep.subr.mxu0 0.0
  %9617 = vmatpush1.msra.mxu0 0.0
  %9618 = vmatprep.subr.mxu0 0.0
  %9619 = vmatpush1.msra.mxu0 0.0
  %9620 = vmatprep.subr.mxu0 0.0
  %9621 = vmatpush1.msra.mxu0 0.0
  %9622 = vmatprep.subr.mxu0 0.0
  %9623 = vmatpush1.msra.mxu0 0.0
  %9624 = vmatprep.subr.mxu0 0.0
  %9625 = vmatpush1.msra.mxu0 0.0
  %9626 = vmatprep.subr.mxu0 0.0
  %9627 = vmatpush1.msra.mxu0 0.0
  %9628 = vmatprep.subr.mxu0 0.0
  %9629 = vmatpush1.msra.mxu0 0.0
  %9630 = vmatprep.subr.mxu0 0.0
  %9631 = vmatpush1.msra.mxu0 0.0
  %9632 = vmatprep.subr.mxu0 0.0
  %9633 = vmatpush1.msra.mxu0 0.0
  %9634 = vmatprep.subr.mxu0 0.0
  %9635 = vmatpush1.msra.mxu0 0.0
  %9636 = vmatprep.subr.mxu0 0.0
  %9637 = vmatpush1.msra.mxu0 0.0
  %9638 = vmatprep.subr.mxu0 0.0
  %9639 = vmatpush1.msra.mxu0 0.0
  %9640 = vmatprep.subr.mxu0 0.0
  %9641 = vmatpush1.msra.mxu0 0.0
  %9642 = vmatprep.subr.mxu0 0.0
  %9643 = vmatpush1.msra.mxu0 0.0
  %9644 = vmatprep.mubr.f32.mxu0 0.0
  %v9645 = vand.u32 %v4251, 4294901760
  %v9646 = vsub.f32 %v4251, %v9645
  %v9647 = vand.u32 %v9646, 4294901760
  %9648 = vmatmul.mubr.f32.gmra.mrb[0].mxu0 %v9647
  %v9649 = vpop.f32.mrb[0].mxu0
  %v9650 = vadd.f32 %v9568, %v9649
  %v9651 = vpop.f32.mrb[0].mxu0
  %9652 = vmatprep.mubr.f32.mxu0 0.0
  %v9653 = vand.u32 %v4254, 4294901760
  %v9654 = vsub.f32 %v4254, %v9653
  %v9655 = vand.u32 %v9654, 4294901760
  %9656 = vmatmul.mubr.f32.gmra.mrb[0].mxu0 %v9655
  %v9657 = vpop.f32.mrb[0].mxu0
  %v9658 = vadd.f32 %v9575, %v9657
  %v9659 = vpop.f32.mrb[0].mxu0
  %9660 = vdwg.mxu0
  %9661 = vmatprep.subr.mxu0 0.0
  %v9662 = vand.u32 %v9318, 4294901760
  %v9663 = vsub.f32 %v9318, %v9662
  %v9664 = vand.u32 %v9663, 4294901760
  %9665 = vmatpush1.msra.mxu0 %v9664
  %9666 = vmatprep.subr.mxu0 0.0
  %v9667 = vand.u32 %v9320, 4294901760
  %v9668 = vsub.f32 %v9320, %v9667
  %v9669 = vand.u32 %v9668, 4294901760
  %9670 = vmatpush1.msra.mxu0 %v9669
  %9671 = vmatprep.subr.mxu0 0.0
  %9672 = vmatpush1.msra.mxu0 0.0
  %9673 = vmatprep.subr.mxu0 0.0
  %9674 = vmatpush1.msra.mxu0 0.0
  %9675 = vmatprep.subr.mxu0 0.0
  %9676 = vmatpush1.msra.mxu0 0.0
  %9677 = vmatprep.subr.mxu0 0.0
  %9678 = vmatpush1.msra.mxu0 0.0
  %9679 = vmatprep.subr.mxu0 0.0
  %9680 = vmatpush1.msra.mxu0 0.0
  %9681 = vmatprep.subr.mxu0 0.0
  %9682 = vmatpush1.msra.mxu0 0.0
  %9683 = vmatprep.subr.mxu0 0.0
  %9684 = vmatpush1.msra.mxu0 0.0
  %9685 = vmatprep.subr.mxu0 0.0
  %9686 = vmatpush1.msra.mxu0 0.0
  %9687 = vmatprep.subr.mxu0 0.0
  %9688 = vmatpush1.msra.mxu0 0.0
  %9689 = vmatprep.subr.mxu0 0.0
  %9690 = vmatpush1.msra.mxu0 0.0
  %9691 = vmatprep.subr.mxu0 0.0
  %9692 = vmatpush1.msra.mxu0 0.0
  %9693 = vmatprep.subr.mxu0 0.0
  %9694 = vmatpush1.msra.mxu0 0.0
  %9695 = vmatprep.subr.mxu0 0.0
  %9696 = vmatpush1.msra.mxu0 0.0
  %9697 = vmatprep.subr.mxu0 0.0
  %9698 = vmatpush1.msra.mxu0 0.0
  %9699 = vmatprep.subr.mxu0 0.0
  %9700 = vmatpush1.msra.mxu0 0.0
  %9701 = vmatprep.subr.mxu0 0.0
  %9702 = vmatpush1.msra.mxu0 0.0
  %9703 = vmatprep.subr.mxu0 0.0
  %9704 = vmatpush1.msra.mxu0 0.0
  %9705 = vmatprep.subr.mxu0 0.0
  %9706 = vmatpush1.msra.mxu0 0.0
  %9707 = vmatprep.subr.mxu0 0.0
  %9708 = vmatpush1.msra.mxu0 0.0
  %9709 = vmatprep.subr.mxu0 0.0
  %9710 = vmatpush1.msra.mxu0 0.0
  %9711 = vmatprep.subr.mxu0 0.0
  %9712 = vmatpush1.msra.mxu0 0.0
  %9713 = vmatprep.subr.mxu0 0.0
  %9714 = vmatpush1.msra.mxu0 0.0
  %9715 = vmatprep.subr.mxu0 0.0
  %9716 = vmatpush1.msra.mxu0 0.0
  %9717 = vmatprep.subr.mxu0 0.0
  %9718 = vmatpush1.msra.mxu0 0.0
  %9719 = vmatprep.subr.mxu0 0.0
  %9720 = vmatpush1.msra.mxu0 0.0
  %9721 = vmatprep.subr.mxu0 0.0
  %9722 = vmatpush1.msra.mxu0 0.0
  %9723 = vmatprep.subr.mxu0 0.0
  %9724 = vmatpush1.msra.mxu0 0.0
  %9725 = vmatprep.subr.mxu0 0.0
  %9726 = vmatpush1.msra.mxu0 0.0
  %9727 = vmatprep.subr.mxu0 0.0
  %9728 = vmatpush1.msra.mxu0 0.0
  %9729 = vmatprep.subr.mxu0 0.0
  %9730 = vmatpush1.msra.mxu0 0.0
  %9731 = vmatprep.mubr.f32.mxu0 0.0
  %v9732 = vand.u32 %v4251, 4294901760
  %9733 = vmatmul.mubr.f32.gmra.mrb[0].mxu0 %v9732
  %v9734 = vpop.f32.mrb[0].mxu0
  %v9735 = vadd.f32 %v9650, %v9734
  %v9736 = vpop.f32.mrb[0].mxu0
  %9737 = vmatprep.mubr.f32.mxu0 0.0
  %v9738 = vand.u32 %v4254, 4294901760
  %9739 = vmatmul.mubr.f32.gmra.mrb[0].mxu0 %v9738
  %v9740 = vpop.f32.mrb[0].mxu0
  %v9741 = vadd.f32 %v9658, %v9740
  %v9742 = vpop.f32.mrb[0].mxu0
  %9743 = vdwg.mxu0
  %9744 = vmatprep.subr.mxu0 0.0
  %v9745 = vand.u32 %v9318, 4294901760
  %9746 = vmatpush1.msra.mxu0 %v9745
  %9747 = vmatprep.subr.mxu0 0.0
  %v9748 = vand.u32 %v9320, 4294901760
  %9749 = vmatpush1.msra.mxu0 %v9748
  %9750 = vmatprep.subr.mxu0 0.0
  %9751 = vmatpush1.msra.mxu0 0.0
  %9752 = vmatprep.subr.mxu0 0.0
  %9753 = vmatpush1.msra.mxu0 0.0
  %9754 = vmatprep.subr.mxu0 0.0
  %9755 = vmatpush1.msra.mxu0 0.0
  %9756 = vmatprep.subr.mxu0 0.0
  %9757 = vmatpush1.msra.mxu0 0.0
  %9758 = vmatprep.subr.mxu0 0.0
  %9759 = vmatpush1.msra.mxu0 0.0
  %9760 = vmatprep.subr.mxu0 0.0
  %9761 = vmatpush1.msra.mxu0 0.0
  %9762 = vmatprep.subr.mxu0 0.0
  %9763 = vmatpush1.msra.mxu0 0.0
  %9764 = vmatprep.subr.mxu0 0.0
  %9765 = vmatpush1.msra.mxu0 0.0
  %9766 = vmatprep.subr.mxu0 0.0
  %9767 = vmatpush1.msra.mxu0 0.0
  %9768 = vmatprep.subr.mxu0 0.0
  %9769 = vmatpush1.msra.mxu0 0.0
  %9770 = vmatprep.subr.mxu0 0.0
  %9771 = vmatpush1.msra.mxu0 0.0
  %9772 = vmatprep.subr.mxu0 0.0
  %9773 = vmatpush1.msra.mxu0 0.0
  %9774 = vmatprep.subr.mxu0 0.0
  %9775 = vmatpush1.msra.mxu0 0.0
  %9776 = vmatprep.subr.mxu0 0.0
  %9777 = vmatpush1.msra.mxu0 0.0
  %9778 = vmatprep.subr.mxu0 0.0
  %9779 = vmatpush1.msra.mxu0 0.0
  %9780 = vmatprep.subr.mxu0 0.0
  %9781 = vmatpush1.msra.mxu0 0.0
  %9782 = vmatprep.subr.mxu0 0.0
  %9783 = vmatpush1.msra.mxu0 0.0
  %9784 = vmatprep.subr.mxu0 0.0
  %9785 = vmatpush1.msra.mxu0 0.0
  %9786 = vmatprep.subr.mxu0 0.0
  %9787 = vmatpush1.msra.mxu0 0.0
  %9788 = vmatprep.subr.mxu0 0.0
  %9789 = vmatpush1.msra.mxu0 0.0
  %9790 = vmatprep.subr.mxu0 0.0
  %9791 = vmatpush1.msra.mxu0 0.0
  %9792 = vmatprep.subr.mxu0 0.0
  %9793 = vmatpush1.msra.mxu0 0.0
  %9794 = vmatprep.subr.mxu0 0.0
  %9795 = vmatpush1.msra.mxu0 0.0
  %9796 = vmatprep.subr.mxu0 0.0
  %9797 = vmatpush1.msra.mxu0 0.0
  %9798 = vmatprep.subr.mxu0 0.0
  %9799 = vmatpush1.msra.mxu0 0.0
  %9800 = vmatprep.subr.mxu0 0.0
  %9801 = vmatpush1.msra.mxu0 0.0
  %9802 = vmatprep.subr.mxu0 0.0
  %9803 = vmatpush1.msra.mxu0 0.0
  %9804 = vmatprep.subr.mxu0 0.0
  %9805 = vmatpush1.msra.mxu0 0.0
  %9806 = vmatprep.subr.mxu0 0.0
  %9807 = vmatpush1.msra.mxu0 0.0
  %9808 = vmatprep.subr.mxu0 0.0
  %9809 = vmatpush1.msra.mxu0 0.0
  %9810 = vmatprep.mubr.f32.mxu0 0.0
  %v9811 = vand.u32 %v4251, 4294901760
  %9812 = vmatmul.mubr.f32.gmra.mrb[0].mxu0 %v9811
  %v9813 = vpop.f32.mrb[0].mxu0
  %v9814 = vadd.f32 %v9735, %v9813
  %v9815 = vpop.f32.mrb[0].mxu0
  %9816 = vmatprep.mubr.f32.mxu0 0.0
  %v9817 = vand.u32 %v4254, 4294901760
  %9818 = vmatmul.mubr.f32.gmra.mrb[0].mxu0 %v9817
  %v9819 = vpop.f32.mrb[0].mxu0
  %v9820 = vadd.f32 %v9741, %v9819
  %v9821 = vpop.f32.mrb[0].mxu0
  %9822 = vdwg.mxu0
  %v9823 = vmax.f32 %v9814, 1e-38
  %v9824 = vmax.f32 %v9820, 1e-38
  %v9825 = vlog2.pop %v9823
  %v9826 = vmul.f32 %v9825, 0.6931472
  %v9827 = vlog2.pop %v9824
  %v9828 = vmul.f32 %v9827, 0.6931472
  %v9829 = vadd.f32 %v9826, %v9314
  %v9830 = vadd.f32 %v9828, %v9314
  %v9831 = vld [vmem:[%s561] sm:$0xff]
  %v9832 = vld [vmem:[%s561 + $0x8] sm:$0xff]
  %v9833 = vadd.f32 %v9831, %v9829
  %v9834 = vadd.f32 %v9832, %v9830
  %v9835 = vmax.f32 %v9833, %v9834
  %v9836 = vrot.slane %v9835, 4
  %v9837 = vmax.f32 %v9835, %v9836
  %v9838 = vrot.slane %v9837, 2
  %v9839 = vmax.f32 %v9837, %v9838
  %v9840 = vrot.slane %v9839, 1
  %v9841 = vmax.f32 %v9839, %v9840
  %v9842 = vsub.f32 %v9833, %v9841
  %v9843 = vsub.f32 %v9834, %v9841
  %v9844 = vmul.f32 %v9842, 1.442695
  %v9845 = vpow.pop %v9844
  %v9846 = vmul.f32 %v9843, 1.442695
  %v9847 = vpow.pop %v9846
  %9848 = vmatprep.subr.mxu0 0.0
  %v9849 = vand.u32 %v9845, 4294901760
  %9850 = vmatpush1.msra.mxu0 %v9849
  %9851 = vmatprep.subr.mxu0 0.0
  %v9852 = vand.u32 %v9847, 4294901760
  %9853 = vmatpush1.msra.mxu0 %v9852
  %9854 = vmatprep.subr.mxu0 0.0
  %9855 = vmatpush1.msra.mxu0 0.0
  %9856 = vmatprep.subr.mxu0 0.0
  %9857 = vmatpush1.msra.mxu0 0.0
  %9858 = vmatprep.subr.mxu0 0.0
  %9859 = vmatpush1.msra.mxu0 0.0
  %9860 = vmatprep.subr.mxu0 0.0
  %9861 = vmatpush1.msra.mxu0 0.0
  %9862 = vmatprep.subr.mxu0 0.0
  %9863 = vmatpush1.msra.mxu0 0.0
  %9864 = vmatprep.subr.mxu0 0.0
  %9865 = vmatpush1.msra.mxu0 0.0
  %9866 = vmatprep.subr.mxu0 0.0
  %9867 = vmatpush1.msra.mxu0 0.0
  %9868 = vmatprep.subr.mxu0 0.0
  %9869 = vmatpush1.msra.mxu0 0.0
  %9870 = vmatprep.subr.mxu0 0.0
  %9871 = vmatpush1.msra.mxu0 0.0
  %9872 = vmatprep.subr.mxu0 0.0
  %9873 = vmatpush1.msra.mxu0 0.0
  %9874 = vmatprep.subr.mxu0 0.0
  %9875 = vmatpush1.msra.mxu0 0.0
  %9876 = vmatprep.subr.mxu0 0.0
  %9877 = vmatpush1.msra.mxu0 0.0
  %9878 = vmatprep.subr.mxu0 0.0
  %9879 = vmatpush1.msra.mxu0 0.0
  %9880 = vmatprep.subr.mxu0 0.0
  %9881 = vmatpush1.msra.mxu0 0.0
  %9882 = vmatprep.subr.mxu0 0.0
  %9883 = vmatpush1.msra.mxu0 0.0
  %9884 = vmatprep.subr.mxu0 0.0
  %9885 = vmatpush1.msra.mxu0 0.0
  %9886 = vmatprep.subr.mxu0 0.0
  %9887 = vmatpush1.msra.mxu0 0.0
  %9888 = vmatprep.subr.mxu0 0.0
  %9889 = vmatpush1.msra.mxu0 0.0
  %9890 = vmatprep.subr.mxu0 0.0
  %9891 = vmatpush1.msra.mxu0 0.0
  %9892 = vmatprep.subr.mxu0 0.0
  %9893 = vmatpush1.msra.mxu0 0.0
  %9894 = vmatprep.subr.mxu0 0.0
  %9895 = vmatpush1.msra.mxu0 0.0
  %9896 = vmatprep.subr.mxu0 0.0
  %9897 = vmatpush1.msra.mxu0 0.0
  %9898 = vmatprep.subr.mxu0 0.0
  %9899 = vmatpush1.msra.mxu0 0.0
  %9900 = vmatprep.subr.mxu0 0.0
  %9901 = vmatpush1.msra.mxu0 0.0
  %9902 = vmatprep.subr.mxu0 0.0
  %9903 = vmatpush1.msra.mxu0 0.0
  %9904 = vmatprep.subr.mxu0 0.0
  %9905 = vmatpush1.msra.mxu0 0.0
  %9906 = vmatprep.subr.mxu0 0.0
  %9907 = vmatpush1.msra.mxu0 0.0
  %9908 = vmatprep.subr.mxu0 0.0
  %9909 = vmatpush1.msra.mxu0 0.0
  %9910 = vmatprep.subr.mxu0 0.0
  %9911 = vmatpush1.msra.mxu0 0.0
  %9912 = vmatprep.subr.mxu0 0.0
  %9913 = vmatpush1.msra.mxu0 0.0
  %9914 = vmatprep.mubr.f32.mxu0 0.0
  %v9915 = vand.u32 %v3764, 4294901760
  %v9916 = vsub.f32 %v3764, %v9915
  %v9917 = vand.u32 %v9916, 4294901760
  %v9918 = vsub.f32 %v9916, %v9917
  %v9919 = vand.u32 %v9918, 4294901760
  %9920 = vmatmul.mubr.f32.gmra.mrb[0].mxu0 %v9919
  %v9921 = vpop.f32.mrb[0].mxu0
  %v9922 = vadd.f32 0.0, %v9921
  %v9923 = vpop.f32.mrb[0].mxu0
  %9924 = vdwg.mxu0
  %9925 = vmatprep.subr.mxu0 0.0
  %v9926 = vand.u32 %v9845, 4294901760
  %v9927 = vsub.f32 %v9845, %v9926
  %v9928 = vand.u32 %v9927, 4294901760
  %v9929 = vsub.f32 %v9927, %v9928
  %v9930 = vand.u32 %v9929, 4294901760
  %9931 = vmatpush1.msra.mxu0 %v9930
  %9932 = vmatprep.subr.mxu0 0.0
  %v9933 = vand.u32 %v9847, 4294901760
  %v9934 = vsub.f32 %v9847, %v9933
  %v9935 = vand.u32 %v9934, 4294901760
  %v9936 = vsub.f32 %v9934, %v9935
  %v9937 = vand.u32 %v9936, 4294901760
  %9938 = vmatpush1.msra.mxu0 %v9937
  %9939 = vmatprep.subr.mxu0 0.0
  %9940 = vmatpush1.msra.mxu0 0.0
  %9941 = vmatprep.subr.mxu0 0.0
  %9942 = vmatpush1.msra.mxu0 0.0
  %9943 = vmatprep.subr.mxu0 0.0
  %9944 = vmatpush1.msra.mxu0 0.0
  %9945 = vmatprep.subr.mxu0 0.0
  %9946 = vmatpush1.msra.mxu0 0.0
  %9947 = vmatprep.subr.mxu0 0.0
  %9948 = vmatpush1.msra.mxu0 0.0
  %9949 = vmatprep.subr.mxu0 0.0
  %9950 = vmatpush1.msra.mxu0 0.0
  %9951 = vmatprep.subr.mxu0 0.0
  %9952 = vmatpush1.msra.mxu0 0.0
  %9953 = vmatprep.subr.mxu0 0.0
  %9954 = vmatpush1.msra.mxu0 0.0
  %9955 = vmatprep.subr.mxu0 0.0
  %9956 = vmatpush1.msra.mxu0 0.0
  %9957 = vmatprep.subr.mxu0 0.0
  %9958 = vmatpush1.msra.mxu0 0.0
  %9959 = vmatprep.subr.mxu0 0.0
  %9960 = vmatpush1.msra.mxu0 0.0
  %9961 = vmatprep.subr.mxu0 0.0
  %9962 = vmatpush1.msra.mxu0 0.0
  %9963 = vmatprep.subr.mxu0 0.0
  %9964 = vmatpush1.msra.mxu0 0.0
  %9965 = vmatprep.subr.mxu0 0.0
  %9966 = vmatpush1.msra.mxu0 0.0
  %9967 = vmatprep.subr.mxu0 0.0
  %9968 = vmatpush1.msra.mxu0 0.0
  %9969 = vmatprep.subr.mxu0 0.0
  %9970 = vmatpush1.msra.mxu0 0.0
  %9971 = vmatprep.subr.mxu0 0.0
  %9972 = vmatpush1.msra.mxu0 0.0
  %9973 = vmatprep.subr.mxu0 0.0
  %9974 = vmatpush1.msra.mxu0 0.0
  %9975 = vmatprep.subr.mxu0 0.0
  %9976 = vmatpush1.msra.mxu0 0.0
  %9977 = vmatprep.subr.mxu0 0.0
  %9978 = vmatpush1.msra.mxu0 0.0
  %9979 = vmatprep.subr.mxu0 0.0
  %9980 = vmatpush1.msra.mxu0 0.0
  %9981 = vmatprep.subr.mxu0 0.0
  %9982 = vmatpush1.msra.mxu0 0.0
  %9983 = vmatprep.subr.mxu0 0.0
  %9984 = vmatpush1.msra.mxu0 0.0
  %9985 = vmatprep.subr.mxu0 0.0
  %9986 = vmatpush1.msra.mxu0 0.0
  %9987 = vmatprep.subr.mxu0 0.0
  %9988 = vmatpush1.msra.mxu0 0.0
  %9989 = vmatprep.subr.mxu0 0.0
  %9990 = vmatpush1.msra.mxu0 0.0
  %9991 = vmatprep.subr.mxu0 0.0
  %9992 = vmatpush1.msra.mxu0 0.0
  %9993 = vmatprep.subr.mxu0 0.0
  %9994 = vmatpush1.msra.mxu0 0.0
  %9995 = vmatprep.subr.mxu0 0.0
  %9996 = vmatpush1.msra.mxu0 0.0
  %9997 = vmatprep.subr.mxu0 0.0
  %9998 = vmatpush1.msra.mxu0 0.0
  %9999 = vmatprep.mubr.f32.mxu0 0.0
  %v10000 = vand.u32 %v3764, 4294901760
  %10001 = vmatmul.mubr.f32.gmra.mrb[0].mxu0 %v10000
  %v10002 = vpop.f32.mrb[0].mxu0
  %v10003 = vadd.f32 %v9922, %v10002
  %v10004 = vpop.f32.mrb[0].mxu0
  %10005 = vdwg.mxu0
  %10006 = vmatprep.subr.mxu0 0.0
  %v10007 = vand.u32 %v9845, 4294901760
  %v10008 = vsub.f32 %v9845, %v10007
  %10009 = vmatpush1.msra.mxu0 %v10008
  %10010 = vmatprep.subr.mxu0 0.0
  %v10011 = vand.u32 %v9847, 4294901760
  %v10012 = vsub.f32 %v9847, %v10011
  %10013 = vmatpush1.msra.mxu0 %v10012
  %10014 = vmatprep.subr.mxu0 0.0
  %10015 = vmatpush1.msra.mxu0 0.0
  %10016 = vmatprep.subr.mxu0 0.0
  %10017 = vmatpush1.msra.mxu0 0.0
  %10018 = vmatprep.subr.mxu0 0.0
  %10019 = vmatpush1.msra.mxu0 0.0
  %10020 = vmatprep.subr.mxu0 0.0
  %10021 = vmatpush1.msra.mxu0 0.0
  %10022 = vmatprep.subr.mxu0 0.0
  %10023 = vmatpush1.msra.mxu0 0.0
  %10024 = vmatprep.subr.mxu0 0.0
  %10025 = vmatpush1.msra.mxu0 0.0
  %10026 = vmatprep.subr.mxu0 0.0
  %10027 = vmatpush1.msra.mxu0 0.0
  %10028 = vmatprep.subr.mxu0 0.0
  %10029 = vmatpush1.msra.mxu0 0.0
  %10030 = vmatprep.subr.mxu0 0.0
  %10031 = vmatpush1.msra.mxu0 0.0
  %10032 = vmatprep.subr.mxu0 0.0
  %10033 = vmatpush1.msra.mxu0 0.0
  %10034 = vmatprep.subr.mxu0 0.0
  %10035 = vmatpush1.msra.mxu0 0.0
  %10036 = vmatprep.subr.mxu0 0.0
  %10037 = vmatpush1.msra.mxu0 0.0
  %10038 = vmatprep.subr.mxu0 0.0
  %10039 = vmatpush1.msra.mxu0 0.0
  %10040 = vmatprep.subr.mxu0 0.0
  %10041 = vmatpush1.msra.mxu0 0.0
  %10042 = vmatprep.subr.mxu0 0.0
  %10043 = vmatpush1.msra.mxu0 0.0
  %10044 = vmatprep.subr.mxu0 0.0
  %10045 = vmatpush1.msra.mxu0 0.0
  %10046 = vmatprep.subr.mxu0 0.0
  %10047 = vmatpush1.msra.mxu0 0.0
  %10048 = vmatprep.subr.mxu0 0.0
  %10049 = vmatpush1.msra.mxu0 0.0
  %10050 = vmatprep.subr.mxu0 0.0
  %10051 = vmatpush1.msra.mxu0 0.0
  %10052 = vmatprep.subr.mxu0 0.0
  %10053 = vmatpush1.msra.mxu0 0.0
  %10054 = vmatprep.subr.mxu0 0.0
  %10055 = vmatpush1.msra.mxu0 0.0
  %10056 = vmatprep.subr.mxu0 0.0
  %10057 = vmatpush1.msra.mxu0 0.0
  %10058 = vmatprep.subr.mxu0 0.0
  %10059 = vmatpush1.msra.mxu0 0.0
  %10060 = vmatprep.subr.mxu0 0.0
  %10061 = vmatpush1.msra.mxu0 0.0
  %10062 = vmatprep.subr.mxu0 0.0
  %10063 = vmatpush1.msra.mxu0 0.0
  %10064 = vmatprep.subr.mxu0 0.0
  %10065 = vmatpush1.msra.mxu0 0.0
  %10066 = vmatprep.subr.mxu0 0.0
  %10067 = vmatpush1.msra.mxu0 0.0
  %10068 = vmatprep.subr.mxu0 0.0
  %10069 = vmatpush1.msra.mxu0 0.0
  %10070 = vmatprep.subr.mxu0 0.0
  %10071 = vmatpush1.msra.mxu0 0.0
  %10072 = vmatprep.subr.mxu0 0.0
  %10073 = vmatpush1.msra.mxu0 0.0
  %10074 = vmatprep.mubr.f32.mxu0 0.0
  %v10075 = vand.u32 %v3764, 4294901760
  %v10076 = vsub.f32 %v3764, %v10075
  %10077 = vmatmul.mubr.f32.gmra.mrb[0].mxu0 %v10076
  %v10078 = vpop.f32.mrb[0].mxu0
  %v10079 = vadd.f32 %v10003, %v10078
  %v10080 = vpop.f32.mrb[0].mxu0
  %10081 = vdwg.mxu0
  %10082 = vmatprep.subr.mxu0 0.0
  %v10083 = vand.u32 %v9845, 4294901760
  %10084 = vmatpush1.msra.mxu0 %v10083
  %10085 = vmatprep.subr.mxu0 0.0
  %v10086 = vand.u32 %v9847, 4294901760
  %10087 = vmatpush1.msra.mxu0 %v10086
  %10088 = vmatprep.subr.mxu0 0.0
  %10089 = vmatpush1.msra.mxu0 0.0
  %10090 = vmatprep.subr.mxu0 0.0
  %10091 = vmatpush1.msra.mxu0 0.0
  %10092 = vmatprep.subr.mxu0 0.0
  %10093 = vmatpush1.msra.mxu0 0.0
  %10094 = vmatprep.subr.mxu0 0.0
  %10095 = vmatpush1.msra.mxu0 0.0
  %10096 = vmatprep.subr.mxu0 0.0
  %10097 = vmatpush1.msra.mxu0 0.0
  %10098 = vmatprep.subr.mxu0 0.0
  %10099 = vmatpush1.msra.mxu0 0.0
  %10100 = vmatprep.subr.mxu0 0.0
  %10101 = vmatpush1.msra.mxu0 0.0
  %10102 = vmatprep.subr.mxu0 0.0
  %10103 = vmatpush1.msra.mxu0 0.0
  %10104 = vmatprep.subr.mxu0 0.0
  %10105 = vmatpush1.msra.mxu0 0.0
  %10106 = vmatprep.subr.mxu0 0.0
  %10107 = vmatpush1.msra.mxu0 0.0
  %10108 = vmatprep.subr.mxu0 0.0
  %10109 = vmatpush1.msra.mxu0 0.0
  %10110 = vmatprep.subr.mxu0 0.0
  %10111 = vmatpush1.msra.mxu0 0.0
  %10112 = vmatprep.subr.mxu0 0.0
  %10113 = vmatpush1.msra.mxu0 0.0
  %10114 = vmatprep.subr.mxu0 0.0
  %10115 = vmatpush1.msra.mxu0 0.0
  %10116 = vmatprep.subr.mxu0 0.0
  %10117 = vmatpush1.msra.mxu0 0.0
  %10118 = vmatprep.subr.mxu0 0.0
  %10119 = vmatpush1.msra.mxu0 0.0
  %10120 = vmatprep.subr.mxu0 0.0
  %10121 = vmatpush1.msra.mxu0 0.0
  %10122 = vmatprep.subr.mxu0 0.0
  %10123 = vmatpush1.msra.mxu0 0.0
  %10124 = vmatprep.subr.mxu0 0.0
  %10125 = vmatpush1.msra.mxu0 0.0
  %10126 = vmatprep.subr.mxu0 0.0
  %10127 = vmatpush1.msra.mxu0 0.0
  %10128 = vmatprep.subr.mxu0 0.0
  %10129 = vmatpush1.msra.mxu0 0.0
  %10130 = vmatprep.subr.mxu0 0.0
  %10131 = vmatpush1.msra.mxu0 0.0
  %10132 = vmatprep.subr.mxu0 0.0
  %10133 = vmatpush1.msra.mxu0 0.0
  %10134 = vmatprep.subr.mxu0 0.0
  %10135 = vmatpush1.msra.mxu0 0.0
  %10136 = vmatprep.subr.mxu0 0.0
  %10137 = vmatpush1.msra.mxu0 0.0
  %10138 = vmatprep.subr.mxu0 0.0
  %10139 = vmatpush1.msra.mxu0 0.0
  %10140 = vmatprep.subr.mxu0 0.0
  %10141 = vmatpush1.msra.mxu0 0.0
  %10142 = vmatprep.subr.mxu0 0.0
  %10143 = vmatpush1.msra.mxu0 0.0
  %10144 = vmatprep.subr.mxu0 0.0
  %10145 = vmatpush1.msra.mxu0 0.0
  %10146 = vmatprep.subr.mxu0 0.0
  %10147 = vmatpush1.msra.mxu0 0.0
  %10148 = vmatprep.mubr.f32.mxu0 0.0
  %v10149 = vand.u32 %v3764, 4294901760
  %v10150 = vsub.f32 %v3764, %v10149
  %v10151 = vand.u32 %v10150, 4294901760
  %10152 = vmatmul.mubr.f32.gmra.mrb[0].mxu0 %v10151
  %v10153 = vpop.f32.mrb[0].mxu0
  %v10154 = vadd.f32 %v10079, %v10153
  %v10155 = vpop.f32.mrb[0].mxu0
  %10156 = vdwg.mxu0
  %10157 = vmatprep.subr.mxu0 0.0
  %v10158 = vand.u32 %v9845, 4294901760
  %v10159 = vsub.f32 %v9845, %v10158
  %v10160 = vand.u32 %v10159, 4294901760
  %10161 = vmatpush1.msra.mxu0 %v10160
  %10162 = vmatprep.subr.mxu0 0.0
  %v10163 = vand.u32 %v9847, 4294901760
  %v10164 = vsub.f32 %v9847, %v10163
  %v10165 = vand.u32 %v10164, 4294901760
  %10166 = vmatpush1.msra.mxu0 %v10165
  %10167 = vmatprep.subr.mxu0 0.0
  %10168 = vmatpush1.msra.mxu0 0.0
  %10169 = vmatprep.subr.mxu0 0.0
  %10170 = vmatpush1.msra.mxu0 0.0
  %10171 = vmatprep.subr.mxu0 0.0
  %10172 = vmatpush1.msra.mxu0 0.0
  %10173 = vmatprep.subr.mxu0 0.0
  %10174 = vmatpush1.msra.mxu0 0.0
  %10175 = vmatprep.subr.mxu0 0.0
  %10176 = vmatpush1.msra.mxu0 0.0
  %10177 = vmatprep.subr.mxu0 0.0
  %10178 = vmatpush1.msra.mxu0 0.0
  %10179 = vmatprep.subr.mxu0 0.0
  %10180 = vmatpush1.msra.mxu0 0.0
  %10181 = vmatprep.subr.mxu0 0.0
  %10182 = vmatpush1.msra.mxu0 0.0
  %10183 = vmatprep.subr.mxu0 0.0
  %10184 = vmatpush1.msra.mxu0 0.0
  %10185 = vmatprep.subr.mxu0 0.0
  %10186 = vmatpush1.msra.mxu0 0.0
  %10187 = vmatprep.subr.mxu0 0.0
  %10188 = vmatpush1.msra.mxu0 0.0
  %10189 = vmatprep.subr.mxu0 0.0
  %10190 = vmatpush1.msra.mxu0 0.0
  %10191 = vmatprep.subr.mxu0 0.0
  %10192 = vmatpush1.msra.mxu0 0.0
  %10193 = vmatprep.subr.mxu0 0.0
  %10194 = vmatpush1.msra.mxu0 0.0
  %10195 = vmatprep.subr.mxu0 0.0
  %10196 = vmatpush1.msra.mxu0 0.0
  %10197 = vmatprep.subr.mxu0 0.0
  %10198 = vmatpush1.msra.mxu0 0.0
  %10199 = vmatprep.subr.mxu0 0.0
  %10200 = vmatpush1.msra.mxu0 0.0
  %10201 = vmatprep.subr.mxu0 0.0
  %10202 = vmatpush1.msra.mxu0 0.0
  %10203 = vmatprep.subr.mxu0 0.0
  %10204 = vmatpush1.msra.mxu0 0.0
  %10205 = vmatprep.subr.mxu0 0.0
  %10206 = vmatpush1.msra.mxu0 0.0
  %10207 = vmatprep.subr.mxu0 0.0
  %10208 = vmatpush1.msra.mxu0 0.0
  %10209 = vmatprep.subr.mxu0 0.0
  %10210 = vmatpush1.msra.mxu0 0.0
  %10211 = vmatprep.subr.mxu0 0.0
  %10212 = vmatpush1.msra.mxu0 0.0
  %10213 = vmatprep.subr.mxu0 0.0
  %10214 = vmatpush1.msra.mxu0 0.0
  %10215 = vmatprep.subr.mxu0 0.0
  %10216 = vmatpush1.msra.mxu0 0.0
  %10217 = vmatprep.subr.mxu0 0.0
  %10218 = vmatpush1.msra.mxu0 0.0
  %10219 = vmatprep.subr.mxu0 0.0
  %10220 = vmatpush1.msra.mxu0 0.0
  %10221 = vmatprep.subr.mxu0 0.0
  %10222 = vmatpush1.msra.mxu0 0.0
  %10223 = vmatprep.subr.mxu0 0.0
  %10224 = vmatpush1.msra.mxu0 0.0
  %10225 = vmatprep.subr.mxu0 0.0
  %10226 = vmatpush1.msra.mxu0 0.0
  %10227 = vmatprep.mubr.f32.mxu0 0.0
  %v10228 = vand.u32 %v3764, 4294901760
  %10229 = vmatmul.mubr.f32.gmra.mrb[0].mxu0 %v10228
  %v10230 = vpop.f32.mrb[0].mxu0
  %v10231 = vadd.f32 %v10154, %v10230
  %v10232 = vpop.f32.mrb[0].mxu0
  %10233 = vdwg.mxu0
  %10234 = vmatprep.subr.mxu0 0.0
  %v10235 = vand.u32 %v9845, 4294901760
  %10236 = vmatpush1.msra.mxu0 %v10235
  %10237 = vmatprep.subr.mxu0 0.0
  %v10238 = vand.u32 %v9847, 4294901760
  %10239 = vmatpush1.msra.mxu0 %v10238
  %10240 = vmatprep.subr.mxu0 0.0
  %10241 = vmatpush1.msra.mxu0 0.0
  %10242 = vmatprep.subr.mxu0 0.0
  %10243 = vmatpush1.msra.mxu0 0.0
  %10244 = vmatprep.subr.mxu0 0.0
  %10245 = vmatpush1.msra.mxu0 0.0
  %10246 = vmatprep.subr.mxu0 0.0
  %10247 = vmatpush1.msra.mxu0 0.0
  %10248 = vmatprep.subr.mxu0 0.0
  %10249 = vmatpush1.msra.mxu0 0.0
  %10250 = vmatprep.subr.mxu0 0.0
  %10251 = vmatpush1.msra.mxu0 0.0
  %10252 = vmatprep.subr.mxu0 0.0
  %10253 = vmatpush1.msra.mxu0 0.0
  %10254 = vmatprep.subr.mxu0 0.0
  %10255 = vmatpush1.msra.mxu0 0.0
  %10256 = vmatprep.subr.mxu0 0.0
  %10257 = vmatpush1.msra.mxu0 0.0
  %10258 = vmatprep.subr.mxu0 0.0
  %10259 = vmatpush1.msra.mxu0 0.0
  %10260 = vmatprep.subr.mxu0 0.0
  %10261 = vmatpush1.msra.mxu0 0.0
  %10262 = vmatprep.subr.mxu0 0.0
  %10263 = vmatpush1.msra.mxu0 0.0
  %10264 = vmatprep.subr.mxu0 0.0
  %10265 = vmatpush1.msra.mxu0 0.0
  %10266 = vmatprep.subr.mxu0 0.0
  %10267 = vmatpush1.msra.mxu0 0.0
  %10268 = vmatprep.subr.mxu0 0.0
  %10269 = vmatpush1.msra.mxu0 0.0
  %10270 = vmatprep.subr.mxu0 0.0
  %10271 = vmatpush1.msra.mxu0 0.0
  %10272 = vmatprep.subr.mxu0 0.0
  %10273 = vmatpush1.msra.mxu0 0.0
  %10274 = vmatprep.subr.mxu0 0.0
  %10275 = vmatpush1.msra.mxu0 0.0
  %10276 = vmatprep.subr.mxu0 0.0
  %10277 = vmatpush1.msra.mxu0 0.0
  %10278 = vmatprep.subr.mxu0 0.0
  %10279 = vmatpush1.msra.mxu0 0.0
  %10280 = vmatprep.subr.mxu0 0.0
  %10281 = vmatpush1.msra.mxu0 0.0
  %10282 = vmatprep.subr.mxu0 0.0
  %10283 = vmatpush1.msra.mxu0 0.0
  %10284 = vmatprep.subr.mxu0 0.0
  %10285 = vmatpush1.msra.mxu0 0.0
  %10286 = vmatprep.subr.mxu0 0.0
  %10287 = vmatpush1.msra.mxu0 0.0
  %10288 = vmatprep.subr.mxu0 0.0
  %10289 = vmatpush1.msra.mxu0 0.0
  %10290 = vmatprep.subr.mxu0 0.0
  %10291 = vmatpush1.msra.mxu0 0.0
  %10292 = vmatprep.subr.mxu0 0.0
  %10293 = vmatpush1.msra.mxu0 0.0
  %10294 = vmatprep.subr.mxu0 0.0
  %10295 = vmatpush1.msra.mxu0 0.0
  %10296 = vmatprep.subr.mxu0 0.0
  %10297 = vmatpush1.msra.mxu0 0.0
  %10298 = vmatprep.subr.mxu0 0.0
  %10299 = vmatpush1.msra.mxu0 0.0
  %10300 = vmatprep.mubr.f32.mxu0 0.0
  %v10301 = vand.u32 %v3764, 4294901760
  %10302 = vmatmul.mubr.f32.gmra.mrb[0].mxu0 %v10301
  %v10303 = vpop.f32.mrb[0].mxu0
  %v10304 = vadd.f32 %v10231, %v10303
  %v10305 = vpop.f32.mrb[0].mxu0
  %10306 = vdwg.mxu0
  %v10307 = vmax.f32 %v10304, 1e-38
  %v10308 = vlog2.pop %v10307
  %v10309 = vmul.f32 %v10308, 0.6931472
  %v10310 = vlaneseq
  %v10311 = vshrl.u32 %v10310, 7
  %v10312 = vsub.s32 5, %v10311
  %v10313 = vrot.slane %v10309, %v10312
  %v10314 = vsub.f32 %v10309, %v10313
  %s10315 = scalar_lea.vmem %s4, 8
  %10316 = vst [vmem:[%s10315] sm:$0x1f] %v10314
  %v10317 = vld [vmem:[%s556] sm:$0xff]
  %v10318 = vld [vmem:[%s556 + $0x8] sm:$0xff]
  %v10319 = vadd.f32 %v9829, %v10317
  %v10320 = vadd.f32 %v9830, %v10318
  %v10321 = vmax.f32 %v10319, %v10320
  %v10322 = vrot.slane %v10321, 4
  %v10323 = vmax.f32 %v10321, %v10322
  %v10324 = vrot.slane %v10323, 2
  %v10325 = vmax.f32 %v10323, %v10324
  %v10326 = vrot.slane %v10325, 1
  %v10327 = vmax.f32 %v10325, %v10326
  %v10328 = vsub.f32 %v10319, %v10327
  %v10329 = vsub.f32 %v10320, %v10327
  %v10330 = vmul.f32 %v10328, 1.442695
  %v10331 = vpow.pop %v10330
  %v10332 = vmul.f32 %v10329, 1.442695
  %v10333 = vpow.pop %v10332
  %10334 = vmatprep.subr.mxu0 0.0
  %v10335 = vand.u32 %v10331, 4294901760
  %10336 = vmatpush1.msra.mxu0 %v10335
  %10337 = vmatprep.subr.mxu0 0.0
  %v10338 = vand.u32 %v10333, 4294901760
  %10339 = vmatpush1.msra.mxu0 %v10338
  %10340 = vmatprep.subr.mxu0 0.0
  %10341 = vmatpush1.msra.mxu0 0.0
  %10342 = vmatprep.subr.mxu0 0.0
  %10343 = vmatpush1.msra.mxu0 0.0
  %10344 = vmatprep.subr.mxu0 0.0
  %10345 = vmatpush1.msra.mxu0 0.0
  %10346 = vmatprep.subr.mxu0 0.0
  %10347 = vmatpush1.msra.mxu0 0.0
  %10348 = vmatprep.subr.mxu0 0.0
  %10349 = vmatpush1.msra.mxu0 0.0
  %10350 = vmatprep.subr.mxu0 0.0
  %10351 = vmatpush1.msra.mxu0 0.0
  %10352 = vmatprep.subr.mxu0 0.0
  %10353 = vmatpush1.msra.mxu0 0.0
  %10354 = vmatprep.subr.mxu0 0.0
  %10355 = vmatpush1.msra.mxu0 0.0
  %10356 = vmatprep.subr.mxu0 0.0
  %10357 = vmatpush1.msra.mxu0 0.0
  %10358 = vmatprep.subr.mxu0 0.0
  %10359 = vmatpush1.msra.mxu0 0.0
  %10360 = vmatprep.subr.mxu0 0.0
  %10361 = vmatpush1.msra.mxu0 0.0
  %10362 = vmatprep.subr.mxu0 0.0
  %10363 = vmatpush1.msra.mxu0 0.0
  %10364 = vmatprep.subr.mxu0 0.0
  %10365 = vmatpush1.msra.mxu0 0.0
  %10366 = vmatprep.subr.mxu0 0.0
  %10367 = vmatpush1.msra.mxu0 0.0
  %10368 = vmatprep.subr.mxu0 0.0
  %10369 = vmatpush1.msra.mxu0 0.0
  %10370 = vmatprep.subr.mxu0 0.0
  %10371 = vmatpush1.msra.mxu0 0.0
  %10372 = vmatprep.subr.mxu0 0.0
  %10373 = vmatpush1.msra.mxu0 0.0
  %10374 = vmatprep.subr.mxu0 0.0
  %10375 = vmatpush1.msra.mxu0 0.0
  %10376 = vmatprep.subr.mxu0 0.0
  %10377 = vmatpush1.msra.mxu0 0.0
  %10378 = vmatprep.subr.mxu0 0.0
  %10379 = vmatpush1.msra.mxu0 0.0
  %10380 = vmatprep.subr.mxu0 0.0
  %10381 = vmatpush1.msra.mxu0 0.0
  %10382 = vmatprep.subr.mxu0 0.0
  %10383 = vmatpush1.msra.mxu0 0.0
  %10384 = vmatprep.subr.mxu0 0.0
  %10385 = vmatpush1.msra.mxu0 0.0
  %10386 = vmatprep.subr.mxu0 0.0
  %10387 = vmatpush1.msra.mxu0 0.0
  %10388 = vmatprep.subr.mxu0 0.0
  %10389 = vmatpush1.msra.mxu0 0.0
  %10390 = vmatprep.subr.mxu0 0.0
  %10391 = vmatpush1.msra.mxu0 0.0
  %10392 = vmatprep.subr.mxu0 0.0
  %10393 = vmatpush1.msra.mxu0 0.0
  %10394 = vmatprep.subr.mxu0 0.0
  %10395 = vmatpush1.msra.mxu0 0.0
  %10396 = vmatprep.subr.mxu0 0.0
  %10397 = vmatpush1.msra.mxu0 0.0
  %10398 = vmatprep.subr.mxu0 0.0
  %10399 = vmatpush1.msra.mxu0 0.0
  %10400 = vmatprep.mubr.f32.mxu0 0.0
  %v10401 = vand.u32 %v4251, 4294901760
  %v10402 = vsub.f32 %v4251, %v10401
  %v10403 = vand.u32 %v10402, 4294901760
  %v10404 = vsub.f32 %v10402, %v10403
  %v10405 = vand.u32 %v10404, 4294901760
  %10406 = vmatmul.mubr.f32.gmra.mrb[0].mxu0 %v10405
  %v10407 = vpop.f32.mrb[0].mxu0
  %v10408 = vadd.f32 0.0, %v10407
  %v10409 = vpop.f32.mrb[0].mxu0
  %10410 = vmatprep.mubr.f32.mxu0 0.0
  %v10411 = vand.u32 %v4254, 4294901760
  %v10412 = vsub.f32 %v4254, %v10411
  %v10413 = vand.u32 %v10412, 4294901760
  %v10414 = vsub.f32 %v10412, %v10413
  %v10415 = vand.u32 %v10414, 4294901760
  %10416 = vmatmul.mubr.f32.gmra.mrb[0].mxu0 %v10415
  %v10417 = vpop.f32.mrb[0].mxu0
  %v10418 = vadd.f32 0.0, %v10417
  %v10419 = vpop.f32.mrb[0].mxu0
  %10420 = vdwg.mxu0
  %10421 = vmatprep.subr.mxu0 0.0
  %v10422 = vand.u32 %v10331, 4294901760
  %v10423 = vsub.f32 %v10331, %v10422
  %v10424 = vand.u32 %v10423, 4294901760
  %v10425 = vsub.f32 %v10423, %v10424
  %v10426 = vand.u32 %v10425, 4294901760
  %10427 = vmatpush1.msra.mxu0 %v10426
  %10428 = vmatprep.subr.mxu0 0.0
  %v10429 = vand.u32 %v10333, 4294901760
  %v10430 = vsub.f32 %v10333, %v10429
  %v10431 = vand.u32 %v10430, 4294901760
  %v10432 = vsub.f32 %v10430, %v10431
  %v10433 = vand.u32 %v10432, 4294901760
  %10434 = vmatpush1.msra.mxu0 %v10433
  %10435 = vmatprep.subr.mxu0 0.0
  %10436 = vmatpush1.msra.mxu0 0.0
  %10437 = vmatprep.subr.mxu0 0.0
  %10438 = vmatpush1.msra.mxu0 0.0
  %10439 = vmatprep.subr.mxu0 0.0
  %10440 = vmatpush1.msra.mxu0 0.0
  %10441 = vmatprep.subr.mxu0 0.0
  %10442 = vmatpush1.msra.mxu0 0.0
  %10443 = vmatprep.subr.mxu0 0.0
  %10444 = vmatpush1.msra.mxu0 0.0
  %10445 = vmatprep.subr.mxu0 0.0
  %10446 = vmatpush1.msra.mxu0 0.0
  %10447 = vmatprep.subr.mxu0 0.0
  %10448 = vmatpush1.msra.mxu0 0.0
  %10449 = vmatprep.subr.mxu0 0.0
  %10450 = vmatpush1.msra.mxu0 0.0
  %10451 = vmatprep.subr.mxu0 0.0
  %10452 = vmatpush1.msra.mxu0 0.0
  %10453 = vmatprep.subr.mxu0 0.0
  %10454 = vmatpush1.msra.mxu0 0.0
  %10455 = vmatprep.subr.mxu0 0.0
  %10456 = vmatpush1.msra.mxu0 0.0
  %10457 = vmatprep.subr.mxu0 0.0
  %10458 = vmatpush1.msra.mxu0 0.0
  %10459 = vmatprep.subr.mxu0 0.0
  %10460 = vmatpush1.msra.mxu0 0.0
  %10461 = vmatprep.subr.mxu0 0.0
  %10462 = vmatpush1.msra.mxu0 0.0
  %10463 = vmatprep.subr.mxu0 0.0
  %10464 = vmatpush1.msra.mxu0 0.0
  %10465 = vmatprep.subr.mxu0 0.0
  %10466 = vmatpush1.msra.mxu0 0.0
  %10467 = vmatprep.subr.mxu0 0.0
  %10468 = vmatpush1.msra.mxu0 0.0
  %10469 = vmatprep.subr.mxu0 0.0
  %10470 = vmatpush1.msra.mxu0 0.0
  %10471 = vmatprep.subr.mxu0 0.0
  %10472 = vmatpush1.msra.mxu0 0.0
  %10473 = vmatprep.subr.mxu0 0.0
  %10474 = vmatpush1.msra.mxu0 0.0
  %10475 = vmatprep.subr.mxu0 0.0
  %10476 = vmatpush1.msra.mxu0 0.0
  %10477 = vmatprep.subr.mxu0 0.0
  %10478 = vmatpush1.msra.mxu0 0.0
  %10479 = vmatprep.subr.mxu0 0.0
  %10480 = vmatpush1.msra.mxu0 0.0
  %10481 = vmatprep.subr.mxu0 0.0
  %10482 = vmatpush1.msra.mxu0 0.0
  %10483 = vmatprep.subr.mxu0 0.0
  %10484 = vmatpush1.msra.mxu0 0.0
  %10485 = vmatprep.subr.mxu0 0.0
  %10486 = vmatpush1.msra.mxu0 0.0
  %10487 = vmatprep.subr.mxu0 0.0
  %10488 = vmatpush1.msra.mxu0 0.0
  %10489 = vmatprep.subr.mxu0 0.0
  %10490 = vmatpush1.msra.mxu0 0.0
  %10491 = vmatprep.subr.mxu0 0.0
  %10492 = vmatpush1.msra.mxu0 0.0
  %10493 = vmatprep.subr.mxu0 0.0
  %10494 = vmatpush1.msra.mxu0 0.0
  %10495 = vmatprep.mubr.f32.mxu0 0.0
  %v10496 = vand.u32 %v4251, 4294901760
  %10497 = vmatmul.mubr.f32.gmra.mrb[0].mxu0 %v10496
  %v10498 = vpop.f32.mrb[0].mxu0
  %v10499 = vadd.f32 %v10408, %v10498
  %v10500 = vpop.f32.mrb[0].mxu0
  %10501 = vmatprep.mubr.f32.mxu0 0.0
  %v10502 = vand.u32 %v4254, 4294901760
  %10503 = vmatmul.mubr.f32.gmra.mrb[0].mxu0 %v10502
  %v10504 = vpop.f32.mrb[0].mxu0
  %v10505 = vadd.f32 %v10418, %v10504
  %v10506 = vpop.f32.mrb[0].mxu0
  %10507 = vdwg.mxu0
  %10508 = vmatprep.subr.mxu0 0.0
  %v10509 = vand.u32 %v10331, 4294901760
  %v10510 = vsub.f32 %v10331, %v10509
  %10511 = vmatpush1.msra.mxu0 %v10510
  %10512 = vmatprep.subr.mxu0 0.0
  %v10513 = vand.u32 %v10333, 4294901760
  %v10514 = vsub.f32 %v10333, %v10513
  %10515 = vmatpush1.msra.mxu0 %v10514
  %10516 = vmatprep.subr.mxu0 0.0
  %10517 = vmatpush1.msra.mxu0 0.0
  %10518 = vmatprep.subr.mxu0 0.0
  %10519 = vmatpush1.msra.mxu0 0.0
  %10520 = vmatprep.subr.mxu0 0.0
  %10521 = vmatpush1.msra.mxu0 0.0
  %10522 = vmatprep.subr.mxu0 0.0
  %10523 = vmatpush1.msra.mxu0 0.0
  %10524 = vmatprep.subr.mxu0 0.0
  %10525 = vmatpush1.msra.mxu0 0.0
  %10526 = vmatprep.subr.mxu0 0.0
  %10527 = vmatpush1.msra.mxu0 0.0
  %10528 = vmatprep.subr.mxu0 0.0
  %10529 = vmatpush1.msra.mxu0 0.0
  %10530 = vmatprep.subr.mxu0 0.0
  %10531 = vmatpush1.msra.mxu0 0.0
  %10532 = vmatprep.subr.mxu0 0.0
  %10533 = vmatpush1.msra.mxu0 0.0
  %10534 = vmatprep.subr.mxu0 0.0
  %10535 = vmatpush1.msra.mxu0 0.0
  %10536 = vmatprep.subr.mxu0 0.0
  %10537 = vmatpush1.msra.mxu0 0.0
  %10538 = vmatprep.subr.mxu0 0.0
  %10539 = vmatpush1.msra.mxu0 0.0
  %10540 = vmatprep.subr.mxu0 0.0
  %10541 = vmatpush1.msra.mxu0 0.0
  %10542 = vmatprep.subr.mxu0 0.0
  %10543 = vmatpush1.msra.mxu0 0.0
  %10544 = vmatprep.subr.mxu0 0.0
  %10545 = vmatpush1.msra.mxu0 0.0
  %10546 = vmatprep.subr.mxu0 0.0
  %10547 = vmatpush1.msra.mxu0 0.0
  %10548 = vmatprep.subr.mxu0 0.0
  %10549 = vmatpush1.msra.mxu0 0.0
  %10550 = vmatprep.subr.mxu0 0.0
  %10551 = vmatpush1.msra.mxu0 0.0
  %10552 = vmatprep.subr.mxu0 0.0
  %10553 = vmatpush1.msra.mxu0 0.0
  %10554 = vmatprep.subr.mxu0 0.0
  %10555 = vmatpush1.msra.mxu0 0.0
  %10556 = vmatprep.subr.mxu0 0.0
  %10557 = vmatpush1.msra.mxu0 0.0
  %10558 = vmatprep.subr.mxu0 0.0
  %10559 = vmatpush1.msra.mxu0 0.0
  %10560 = vmatprep.subr.mxu0 0.0
  %10561 = vmatpush1.msra.mxu0 0.0
  %10562 = vmatprep.subr.mxu0 0.0
  %10563 = vmatpush1.msra.mxu0 0.0
  %10564 = vmatprep.subr.mxu0 0.0
  %10565 = vmatpush1.msra.mxu0 0.0
  %10566 = vmatprep.subr.mxu0 0.0
  %10567 = vmatpush1.msra.mxu0 0.0
  %10568 = vmatprep.subr.mxu0 0.0
  %10569 = vmatpush1.msra.mxu0 0.0
  %10570 = vmatprep.subr.mxu0 0.0
  %10571 = vmatpush1.msra.mxu0 0.0
  %10572 = vmatprep.subr.mxu0 0.0
  %10573 = vmatpush1.msra.mxu0 0.0
  %10574 = vmatprep.subr.mxu0 0.0
  %10575 = vmatpush1.msra.mxu0 0.0
  %10576 = vmatprep.mubr.f32.mxu0 0.0
  %v10577 = vand.u32 %v4251, 4294901760
  %v10578 = vsub.f32 %v4251, %v10577
  %10579 = vmatmul.mubr.f32.gmra.mrb[0].mxu0 %v10578
  %v10580 = vpop.f32.mrb[0].mxu0
  %v10581 = vadd.f32 %v10499, %v10580
  %v10582 = vpop.f32.mrb[0].mxu0
  %10583 = vmatprep.mubr.f32.mxu0 0.0
  %v10584 = vand.u32 %v4254, 4294901760
  %v10585 = vsub.f32 %v4254, %v10584
  %10586 = vmatmul.mubr.f32.gmra.mrb[0].mxu0 %v10585
  %v10587 = vpop.f32.mrb[0].mxu0
  %v10588 = vadd.f32 %v10505, %v10587
  %v10589 = vpop.f32.mrb[0].mxu0
  %10590 = vdwg.mxu0
  %10591 = vmatprep.subr.mxu0 0.0
  %v10592 = vand.u32 %v10331, 4294901760
  %10593 = vmatpush1.msra.mxu0 %v10592
  %10594 = vmatprep.subr.mxu0 0.0
  %v10595 = vand.u32 %v10333, 4294901760
  %10596 = vmatpush1.msra.mxu0 %v10595
  %10597 = vmatprep.subr.mxu0 0.0
  %10598 = vmatpush1.msra.mxu0 0.0
  %10599 = vmatprep.subr.mxu0 0.0
  %10600 = vmatpush1.msra.mxu0 0.0
  %10601 = vmatprep.subr.mxu0 0.0
  %10602 = vmatpush1.msra.mxu0 0.0
  %10603 = vmatprep.subr.mxu0 0.0
  %10604 = vmatpush1.msra.mxu0 0.0
  %10605 = vmatprep.subr.mxu0 0.0
  %10606 = vmatpush1.msra.mxu0 0.0
  %10607 = vmatprep.subr.mxu0 0.0
  %10608 = vmatpush1.msra.mxu0 0.0
  %10609 = vmatprep.subr.mxu0 0.0
  %10610 = vmatpush1.msra.mxu0 0.0
  %10611 = vmatprep.subr.mxu0 0.0
  %10612 = vmatpush1.msra.mxu0 0.0
  %10613 = vmatprep.subr.mxu0 0.0
  %10614 = vmatpush1.msra.mxu0 0.0
  %10615 = vmatprep.subr.mxu0 0.0
  %10616 = vmatpush1.msra.mxu0 0.0
  %10617 = vmatprep.subr.mxu0 0.0
  %10618 = vmatpush1.msra.mxu0 0.0
  %10619 = vmatprep.subr.mxu0 0.0
  %10620 = vmatpush1.msra.mxu0 0.0
  %10621 = vmatprep.subr.mxu0 0.0
  %10622 = vmatpush1.msra.mxu0 0.0
  %10623 = vmatprep.subr.mxu0 0.0
  %10624 = vmatpush1.msra.mxu0 0.0
  %10625 = vmatprep.subr.mxu0 0.0
  %10626 = vmatpush1.msra.mxu0 0.0
  %10627 = vmatprep.subr.mxu0 0.0
  %10628 = vmatpush1.msra.mxu0 0.0
  %10629 = vmatprep.subr.mxu0 0.0
  %10630 = vmatpush1.msra.mxu0 0.0
  %10631 = vmatprep.subr.mxu0 0.0
  %10632 = vmatpush1.msra.mxu0 0.0
  %10633 = vmatprep.subr.mxu0 0.0
  %10634 = vmatpush1.msra.mxu0 0.0
  %10635 = vmatprep.subr.mxu0 0.0
  %10636 = vmatpush1.msra.mxu0 0.0
  %10637 = vmatprep.subr.mxu0 0.0
  %10638 = vmatpush1.msra.mxu0 0.0
  %10639 = vmatprep.subr.mxu0 0.0
  %10640 = vmatpush1.msra.mxu0 0.0
  %10641 = vmatprep.subr.mxu0 0.0
  %10642 = vmatpush1.msra.mxu0 0.0
  %10643 = vmatprep.subr.mxu0 0.0
  %10644 = vmatpush1.msra.mxu0 0.0
  %10645 = vmatprep.subr.mxu0 0.0
  %10646 = vmatpush1.msra.mxu0 0.0
  %10647 = vmatprep.subr.mxu0 0.0
  %10648 = vmatpush1.msra.mxu0 0.0
  %10649 = vmatprep.subr.mxu0 0.0
  %10650 = vmatpush1.msra.mxu0 0.0
  %10651 = vmatprep.subr.mxu0 0.0
  %10652 = vmatpush1.msra.mxu0 0.0
  %10653 = vmatprep.subr.mxu0 0.0
  %10654 = vmatpush1.msra.mxu0 0.0
  %10655 = vmatprep.subr.mxu0 0.0
  %10656 = vmatpush1.msra.mxu0 0.0
  %10657 = vmatprep.mubr.f32.mxu0 0.0
  %v10658 = vand.u32 %v4251, 4294901760
  %v10659 = vsub.f32 %v4251, %v10658
  %v10660 = vand.u32 %v10659, 4294901760
  %10661 = vmatmul.mubr.f32.gmra.mrb[0].mxu0 %v10660
  %v10662 = vpop.f32.mrb[0].mxu0
  %v10663 = vadd.f32 %v10581, %v10662
  %v10664 = vpop.f32.mrb[0].mxu0
  %10665 = vmatprep.mubr.f32.mxu0 0.0
  %v10666 = vand.u32 %v4254, 4294901760
  %v10667 = vsub.f32 %v4254, %v10666
  %v10668 = vand.u32 %v10667, 4294901760
  %10669 = vmatmul.mubr.f32.gmra.mrb[0].mxu0 %v10668
  %v10670 = vpop.f32.mrb[0].mxu0
  %v10671 = vadd.f32 %v10588, %v10670
  %v10672 = vpop.f32.mrb[0].mxu0
  %10673 = vdwg.mxu0
  %10674 = vmatprep.subr.mxu0 0.0
  %v10675 = vand.u32 %v10331, 4294901760
  %v10676 = vsub.f32 %v10331, %v10675
  %v10677 = vand.u32 %v10676, 4294901760
  %10678 = vmatpush1.msra.mxu0 %v10677
  %10679 = vmatprep.subr.mxu0 0.0
  %v10680 = vand.u32 %v10333, 4294901760
  %v10681 = vsub.f32 %v10333, %v10680
  %v10682 = vand.u32 %v10681, 4294901760
  %10683 = vmatpush1.msra.mxu0 %v10682
  %10684 = vmatprep.subr.mxu0 0.0
  %10685 = vmatpush1.msra.mxu0 0.0
  %10686 = vmatprep.subr.mxu0 0.0
  %10687 = vmatpush1.msra.mxu0 0.0
  %10688 = vmatprep.subr.mxu0 0.0
  %10689 = vmatpush1.msra.mxu0 0.0
  %10690 = vmatprep.subr.mxu0 0.0
  %10691 = vmatpush1.msra.mxu0 0.0
  %10692 = vmatprep.subr.mxu0 0.0
  %10693 = vmatpush1.msra.mxu0 0.0
  %10694 = vmatprep.subr.mxu0 0.0
  %10695 = vmatpush1.msra.mxu0 0.0
  %10696 = vmatprep.subr.mxu0 0.0
  %10697 = vmatpush1.msra.mxu0 0.0
  %10698 = vmatprep.subr.mxu0 0.0
  %10699 = vmatpush1.msra.mxu0 0.0
  %10700 = vmatprep.subr.mxu0 0.0
  %10701 = vmatpush1.msra.mxu0 0.0
  %10702 = vmatprep.subr.mxu0 0.0
  %10703 = vmatpush1.msra.mxu0 0.0
  %10704 = vmatprep.subr.mxu0 0.0
  %10705 = vmatpush1.msra.mxu0 0.0
  %10706 = vmatprep.subr.mxu0 0.0
  %10707 = vmatpush1.msra.mxu0 0.0
  %10708 = vmatprep.subr.mxu0 0.0
  %10709 = vmatpush1.msra.mxu0 0.0
  %10710 = vmatprep.subr.mxu0 0.0
  %10711 = vmatpush1.msra.mxu0 0.0
  %10712 = vmatprep.subr.mxu0 0.0
  %10713 = vmatpush1.msra.mxu0 0.0
  %10714 = vmatprep.subr.mxu0 0.0
  %10715 = vmatpush1.msra.mxu0 0.0
  %10716 = vmatprep.subr.mxu0 0.0
  %10717 = vmatpush1.msra.mxu0 0.0
  %10718 = vmatprep.subr.mxu0 0.0
  %10719 = vmatpush1.msra.mxu0 0.0
  %10720 = vmatprep.subr.mxu0 0.0
  %10721 = vmatpush1.msra.mxu0 0.0
  %10722 = vmatprep.subr.mxu0 0.0
  %10723 = vmatpush1.msra.mxu0 0.0
  %10724 = vmatprep.subr.mxu0 0.0
  %10725 = vmatpush1.msra.mxu0 0.0
  %10726 = vmatprep.subr.mxu0 0.0
  %10727 = vmatpush1.msra.mxu0 0.0
  %10728 = vmatprep.subr.mxu0 0.0
  %10729 = vmatpush1.msra.mxu0 0.0
  %10730 = vmatprep.subr.mxu0 0.0
  %10731 = vmatpush1.msra.mxu0 0.0
  %10732 = vmatprep.subr.mxu0 0.0
  %10733 = vmatpush1.msra.mxu0 0.0
  %10734 = vmatprep.subr.mxu0 0.0
  %10735 = vmatpush1.msra.mxu0 0.0
  %10736 = vmatprep.subr.mxu0 0.0
  %10737 = vmatpush1.msra.mxu0 0.0
  %10738 = vmatprep.subr.mxu0 0.0
  %10739 = vmatpush1.msra.mxu0 0.0
  %10740 = vmatprep.subr.mxu0 0.0
  %10741 = vmatpush1.msra.mxu0 0.0
  %10742 = vmatprep.subr.mxu0 0.0
  %10743 = vmatpush1.msra.mxu0 0.0
  %10744 = vmatprep.mubr.f32.mxu0 0.0
  %v10745 = vand.u32 %v4251, 4294901760
  %10746 = vmatmul.mubr.f32.gmra.mrb[0].mxu0 %v10745
  %v10747 = vpop.f32.mrb[0].mxu0
  %v10748 = vadd.f32 %v10663, %v10747
  %v10749 = vpop.f32.mrb[0].mxu0
  %10750 = vmatprep.mubr.f32.mxu0 0.0
  %v10751 = vand.u32 %v4254, 4294901760
  %10752 = vmatmul.mubr.f32.gmra.mrb[0].mxu0 %v10751
  %v10753 = vpop.f32.mrb[0].mxu0
  %v10754 = vadd.f32 %v10671, %v10753
  %v10755 = vpop.f32.mrb[0].mxu0
  %10756 = vdwg.mxu0
  %10757 = vmatprep.subr.mxu0 0.0
  %v10758 = vand.u32 %v10331, 4294901760
  %10759 = vmatpush1.msra.mxu0 %v10758
  %10760 = vmatprep.subr.mxu0 0.0
  %v10761 = vand.u32 %v10333, 4294901760
  %10762 = vmatpush1.msra.mxu0 %v10761
  %10763 = vmatprep.subr.mxu0 0.0
  %10764 = vmatpush1.msra.mxu0 0.0
  %10765 = vmatprep.subr.mxu0 0.0
  %10766 = vmatpush1.msra.mxu0 0.0
  %10767 = vmatprep.subr.mxu0 0.0
  %10768 = vmatpush1.msra.mxu0 0.0
  %10769 = vmatprep.subr.mxu0 0.0
  %10770 = vmatpush1.msra.mxu0 0.0
  %10771 = vmatprep.subr.mxu0 0.0
  %10772 = vmatpush1.msra.mxu0 0.0
  %10773 = vmatprep.subr.mxu0 0.0
  %10774 = vmatpush1.msra.mxu0 0.0
  %10775 = vmatprep.subr.mxu0 0.0
  %10776 = vmatpush1.msra.mxu0 0.0
  %10777 = vmatprep.subr.mxu0 0.0
  %10778 = vmatpush1.msra.mxu0 0.0
  %10779 = vmatprep.subr.mxu0 0.0
  %10780 = vmatpush1.msra.mxu0 0.0
  %10781 = vmatprep.subr.mxu0 0.0
  %10782 = vmatpush1.msra.mxu0 0.0
  %10783 = vmatprep.subr.mxu0 0.0
  %10784 = vmatpush1.msra.mxu0 0.0
  %10785 = vmatprep.subr.mxu0 0.0
  %10786 = vmatpush1.msra.mxu0 0.0
  %10787 = vmatprep.subr.mxu0 0.0
  %10788 = vmatpush1.msra.mxu0 0.0
  %10789 = vmatprep.subr.mxu0 0.0
  %10790 = vmatpush1.msra.mxu0 0.0
  %10791 = vmatprep.subr.mxu0 0.0
  %10792 = vmatpush1.msra.mxu0 0.0
  %10793 = vmatprep.subr.mxu0 0.0
  %10794 = vmatpush1.msra.mxu0 0.0
  %10795 = vmatprep.subr.mxu0 0.0
  %10796 = vmatpush1.msra.mxu0 0.0
  %10797 = vmatprep.subr.mxu0 0.0
  %10798 = vmatpush1.msra.mxu0 0.0
  %10799 = vmatprep.subr.mxu0 0.0
  %10800 = vmatpush1.msra.mxu0 0.0
  %10801 = vmatprep.subr.mxu0 0.0
  %10802 = vmatpush1.msra.mxu0 0.0
  %10803 = vmatprep.subr.mxu0 0.0
  %10804 = vmatpush1.msra.mxu0 0.0
  %10805 = vmatprep.subr.mxu0 0.0
  %10806 = vmatpush1.msra.mxu0 0.0
  %10807 = vmatprep.subr.mxu0 0.0
  %10808 = vmatpush1.msra.mxu0 0.0
  %10809 = vmatprep.subr.mxu0 0.0
  %10810 = vmatpush1.msra.mxu0 0.0
  %10811 = vmatprep.subr.mxu0 0.0
  %10812 = vmatpush1.msra.mxu0 0.0
  %10813 = vmatprep.subr.mxu0 0.0
  %10814 = vmatpush1.msra.mxu0 0.0
  %10815 = vmatprep.subr.mxu0 0.0
  %10816 = vmatpush1.msra.mxu0 0.0
  %10817 = vmatprep.subr.mxu0 0.0
  %10818 = vmatpush1.msra.mxu0 0.0
  %10819 = vmatprep.subr.mxu0 0.0
  %10820 = vmatpush1.msra.mxu0 0.0
  %10821 = vmatprep.subr.mxu0 0.0
  %10822 = vmatpush1.msra.mxu0 0.0
  %10823 = vmatprep.mubr.f32.mxu0 0.0
  %v10824 = vand.u32 %v4251, 4294901760
  %10825 = vmatmul.mubr.f32.gmra.mrb[0].mxu0 %v10824
  %v10826 = vpop.f32.mrb[0].mxu0
  %v10827 = vadd.f32 %v10748, %v10826
  %v10828 = vpop.f32.mrb[0].mxu0
  %10829 = vmatprep.mubr.f32.mxu0 0.0
  %v10830 = vand.u32 %v4254, 4294901760
  %10831 = vmatmul.mubr.f32.gmra.mrb[0].mxu0 %v10830
  %v10832 = vpop.f32.mrb[0].mxu0
  %v10833 = vadd.f32 %v10754, %v10832
  %v10834 = vpop.f32.mrb[0].mxu0
  %10835 = vdwg.mxu0
  %v10836 = vmax.f32 %v10827, 1e-38
  %v10837 = vmax.f32 %v10833, 1e-38
  %v10838 = vlog2.pop %v10836
  %v10839 = vmul.f32 %v10838, 0.6931472
  %v10840 = vlog2.pop %v10837
  %v10841 = vmul.f32 %v10840, 0.6931472
  %v10842 = vadd.f32 %v10839, %v10327
  %v10843 = vadd.f32 %v10841, %v10327
  %v10844 = vld [vmem:[#allocation2] sm:$0xff]
  %v10845 = vld [vmem:[#allocation2 + $0x8] sm:$0xff]
  %v10846 = vadd.f32 %v10844, %v10842
  %v10847 = vadd.f32 %v10845, %v10843
  %v10848 = vmax.f32 %v10846, %v10847
  %v10849 = vrot.slane %v10848, 4
  %v10850 = vmax.f32 %v10848, %v10849
  %v10851 = vrot.slane %v10850, 2
  %v10852 = vmax.f32 %v10850, %v10851
  %v10853 = vrot.slane %v10852, 1
  %v10854 = vmax.f32 %v10852, %v10853
  %v10855 = vsub.f32 %v10846, %v10854
  %v10856 = vsub.f32 %v10847, %v10854
  %v10857 = vmul.f32 %v10855, 1.442695
  %v10858 = vpow.pop %v10857
  %v10859 = vmul.f32 %v10856, 1.442695
  %v10860 = vpow.pop %v10859
  %10861 = vmatprep.subr.mxu0 0.0
  %v10862 = vand.u32 %v10858, 4294901760
  %10863 = vmatpush1.msra.mxu0 %v10862
  %10864 = vmatprep.subr.mxu0 0.0
  %v10865 = vand.u32 %v10860, 4294901760
  %10866 = vmatpush1.msra.mxu0 %v10865
  %10867 = vmatprep.subr.mxu0 0.0
  %10868 = vmatpush1.msra.mxu0 0.0
  %10869 = vmatprep.subr.mxu0 0.0
  %10870 = vmatpush1.msra.mxu0 0.0
  %10871 = vmatprep.subr.mxu0 0.0
  %10872 = vmatpush1.msra.mxu0 0.0
  %10873 = vmatprep.subr.mxu0 0.0
  %10874 = vmatpush1.msra.mxu0 0.0
  %10875 = vmatprep.subr.mxu0 0.0
  %10876 = vmatpush1.msra.mxu0 0.0
  %10877 = vmatprep.subr.mxu0 0.0
  %10878 = vmatpush1.msra.mxu0 0.0
  %10879 = vmatprep.subr.mxu0 0.0
  %10880 = vmatpush1.msra.mxu0 0.0
  %10881 = vmatprep.subr.mxu0 0.0
  %10882 = vmatpush1.msra.mxu0 0.0
  %10883 = vmatprep.subr.mxu0 0.0
  %10884 = vmatpush1.msra.mxu0 0.0
  %10885 = vmatprep.subr.mxu0 0.0
  %10886 = vmatpush1.msra.mxu0 0.0
  %10887 = vmatprep.subr.mxu0 0.0
  %10888 = vmatpush1.msra.mxu0 0.0
  %10889 = vmatprep.subr.mxu0 0.0
  %10890 = vmatpush1.msra.mxu0 0.0
  %10891 = vmatprep.subr.mxu0 0.0
  %10892 = vmatpush1.msra.mxu0 0.0
  %10893 = vmatprep.subr.mxu0 0.0
  %10894 = vmatpush1.msra.mxu0 0.0
  %10895 = vmatprep.subr.mxu0 0.0
  %10896 = vmatpush1.msra.mxu0 0.0
  %10897 = vmatprep.subr.mxu0 0.0
  %10898 = vmatpush1.msra.mxu0 0.0
  %10899 = vmatprep.subr.mxu0 0.0
  %10900 = vmatpush1.msra.mxu0 0.0
  %10901 = vmatprep.subr.mxu0 0.0
  %10902 = vmatpush1.msra.mxu0 0.0
  %10903 = vmatprep.subr.mxu0 0.0
  %10904 = vmatpush1.msra.mxu0 0.0
  %10905 = vmatprep.subr.mxu0 0.0
  %10906 = vmatpush1.msra.mxu0 0.0
  %10907 = vmatprep.subr.mxu0 0.0
  %10908 = vmatpush1.msra.mxu0 0.0
  %10909 = vmatprep.subr.mxu0 0.0
  %10910 = vmatpush1.msra.mxu0 0.0
  %10911 = vmatprep.subr.mxu0 0.0
  %10912 = vmatpush1.msra.mxu0 0.0
  %10913 = vmatprep.subr.mxu0 0.0
  %10914 = vmatpush1.msra.mxu0 0.0
  %10915 = vmatprep.subr.mxu0 0.0
  %10916 = vmatpush1.msra.mxu0 0.0
  %10917 = vmatprep.subr.mxu0 0.0
  %10918 = vmatpush1.msra.mxu0 0.0
  %10919 = vmatprep.subr.mxu0 0.0
  %10920 = vmatpush1.msra.mxu0 0.0
  %10921 = vmatprep.subr.mxu0 0.0
  %10922 = vmatpush1.msra.mxu0 0.0
  %10923 = vmatprep.subr.mxu0 0.0
  %10924 = vmatpush1.msra.mxu0 0.0
  %10925 = vmatprep.subr.mxu0 0.0
  %10926 = vmatpush1.msra.mxu0 0.0
  %10927 = vmatprep.mubr.f32.mxu0 0.0
  %v10928 = vand.u32 %v3764, 4294901760
  %v10929 = vsub.f32 %v3764, %v10928
  %v10930 = vand.u32 %v10929, 4294901760
  %v10931 = vsub.f32 %v10929, %v10930
  %v10932 = vand.u32 %v10931, 4294901760
  %10933 = vmatmul.mubr.f32.gmra.mrb[0].mxu0 %v10932
  %v10934 = vpop.f32.mrb[0].mxu0
  %v10935 = vadd.f32 0.0, %v10934
  %v10936 = vpop.f32.mrb[0].mxu0
  %10937 = vdwg.mxu0
  %10938 = vmatprep.subr.mxu0 0.0
  %v10939 = vand.u32 %v10858, 4294901760
  %v10940 = vsub.f32 %v10858, %v10939
  %v10941 = vand.u32 %v10940, 4294901760
  %v10942 = vsub.f32 %v10940, %v10941
  %v10943 = vand.u32 %v10942, 4294901760
  %10944 = vmatpush1.msra.mxu0 %v10943
  %10945 = vmatprep.subr.mxu0 0.0
  %v10946 = vand.u32 %v10860, 4294901760
  %v10947 = vsub.f32 %v10860, %v10946
  %v10948 = vand.u32 %v10947, 4294901760
  %v10949 = vsub.f32 %v10947, %v10948
  %v10950 = vand.u32 %v10949, 4294901760
  %10951 = vmatpush1.msra.mxu0 %v10950
  %10952 = vmatprep.subr.mxu0 0.0
  %10953 = vmatpush1.msra.mxu0 0.0
  %10954 = vmatprep.subr.mxu0 0.0
  %10955 = vmatpush1.msra.mxu0 0.0
  %10956 = vmatprep.subr.mxu0 0.0
  %10957 = vmatpush1.msra.mxu0 0.0
  %10958 = vmatprep.subr.mxu0 0.0
  %10959 = vmatpush1.msra.mxu0 0.0
  %10960 = vmatprep.subr.mxu0 0.0
  %10961 = vmatpush1.msra.mxu0 0.0
  %10962 = vmatprep.subr.mxu0 0.0
  %10963 = vmatpush1.msra.mxu0 0.0
  %10964 = vmatprep.subr.mxu0 0.0
  %10965 = vmatpush1.msra.mxu0 0.0
  %10966 = vmatprep.subr.mxu0 0.0
  %10967 = vmatpush1.msra.mxu0 0.0
  %10968 = vmatprep.subr.mxu0 0.0
  %10969 = vmatpush1.msra.mxu0 0.0
  %10970 = vmatprep.subr.mxu0 0.0
  %10971 = vmatpush1.msra.mxu0 0.0
  %10972 = vmatprep.subr.mxu0 0.0
  %10973 = vmatpush1.msra.mxu0 0.0
  %10974 = vmatprep.subr.mxu0 0.0
  %10975 = vmatpush1.msra.mxu0 0.0
  %10976 = vmatprep.subr.mxu0 0.0
  %10977 = vmatpush1.msra.mxu0 0.0
  %10978 = vmatprep.subr.mxu0 0.0
  %10979 = vmatpush1.msra.mxu0 0.0
  %10980 = vmatprep.subr.mxu0 0.0
  %10981 = vmatpush1.msra.mxu0 0.0
  %10982 = vmatprep.subr.mxu0 0.0
  %10983 = vmatpush1.msra.mxu0 0.0
  %10984 = vmatprep.subr.mxu0 0.0
  %10985 = vmatpush1.msra.mxu0 0.0
  %10986 = vmatprep.subr.mxu0 0.0
  %10987 = vmatpush1.msra.mxu0 0.0
  %10988 = vmatprep.subr.mxu0 0.0
  %10989 = vmatpush1.msra.mxu0 0.0
  %10990 = vmatprep.subr.mxu0 0.0
  %10991 = vmatpush1.msra.mxu0 0.0
  %10992 = vmatprep.subr.mxu0 0.0
  %10993 = vmatpush1.msra.mxu0 0.0
  %10994 = vmatprep.subr.mxu0 0.0
  %10995 = vmatpush1.msra.mxu0 0.0
  %10996 = vmatprep.subr.mxu0 0.0
  %10997 = vmatpush1.msra.mxu0 0.0
  %10998 = vmatprep.subr.mxu0 0.0
  %10999 = vmatpush1.msra.mxu0 0.0
  %11000 = vmatprep.subr.mxu0 0.0
  %11001 = vmatpush1.msra.mxu0 0.0
  %11002 = vmatprep.subr.mxu0 0.0
  %11003 = vmatpush1.msra.mxu0 0.0
  %11004 = vmatprep.subr.mxu0 0.0
  %11005 = vmatpush1.msra.mxu0 0.0
  %11006 = vmatprep.subr.mxu0 0.0
  %11007 = vmatpush1.msra.mxu0 0.0
  %11008 = vmatprep.subr.mxu0 0.0
  %11009 = vmatpush1.msra.mxu0 0.0
  %11010 = vmatprep.subr.mxu0 0.0
  %11011 = vmatpush1.msra.mxu0 0.0
  %11012 = vmatprep.mubr.f32.mxu0 0.0
  %v11013 = vand.u32 %v3764, 4294901760
  %11014 = vmatmul.mubr.f32.gmra.mrb[0].mxu0 %v11013
  %v11015 = vpop.f32.mrb[0].mxu0
  %v11016 = vadd.f32 %v10935, %v11015
  %v11017 = vpop.f32.mrb[0].mxu0
  %11018 = vdwg.mxu0
  %11019 = vmatprep.subr.mxu0 0.0
  %v11020 = vand.u32 %v10858, 4294901760
  %v11021 = vsub.f32 %v10858, %v11020
  %11022 = vmatpush1.msra.mxu0 %v11021
  %11023 = vmatprep.subr.mxu0 0.0
  %v11024 = vand.u32 %v10860, 4294901760
  %v11025 = vsub.f32 %v10860, %v11024
  %11026 = vmatpush1.msra.mxu0 %v11025
  %11027 = vmatprep.subr.mxu0 0.0
  %11028 = vmatpush1.msra.mxu0 0.0
  %11029 = vmatprep.subr.mxu0 0.0
  %11030 = vmatpush1.msra.mxu0 0.0
  %11031 = vmatprep.subr.mxu0 0.0
  %11032 = vmatpush1.msra.mxu0 0.0
  %11033 = vmatprep.subr.mxu0 0.0
  %11034 = vmatpush1.msra.mxu0 0.0
  %11035 = vmatprep.subr.mxu0 0.0
  %11036 = vmatpush1.msra.mxu0 0.0
  %11037 = vmatprep.subr.mxu0 0.0
  %11038 = vmatpush1.msra.mxu0 0.0
  %11039 = vmatprep.subr.mxu0 0.0
  %11040 = vmatpush1.msra.mxu0 0.0
  %11041 = vmatprep.subr.mxu0 0.0
  %11042 = vmatpush1.msra.mxu0 0.0
  %11043 = vmatprep.subr.mxu0 0.0
  %11044 = vmatpush1.msra.mxu0 0.0
  %11045 = vmatprep.subr.mxu0 0.0
  %11046 = vmatpush1.msra.mxu0 0.0
  %11047 = vmatprep.subr.mxu0 0.0
  %11048 = vmatpush1.msra.mxu0 0.0
  %11049 = vmatprep.subr.mxu0 0.0
  %11050 = vmatpush1.msra.mxu0 0.0
  %11051 = vmatprep.subr.mxu0 0.0
  %11052 = vmatpush1.msra.mxu0 0.0
  %11053 = vmatprep.subr.mxu0 0.0
  %11054 = vmatpush1.msra.mxu0 0.0
  %11055 = vmatprep.subr.mxu0 0.0
  %11056 = vmatpush1.msra.mxu0 0.0
  %11057 = vmatprep.subr.mxu0 0.0
  %11058 = vmatpush1.msra.mxu0 0.0
  %11059 = vmatprep.subr.mxu0 0.0
  %11060 = vmatpush1.msra.mxu0 0.0
  %11061 = vmatprep.subr.mxu0 0.0
  %11062 = vmatpush1.msra.mxu0 0.0
  %11063 = vmatprep.subr.mxu0 0.0
  %11064 = vmatpush1.msra.mxu0 0.0
  %11065 = vmatprep.subr.mxu0 0.0
  %11066 = vmatpush1.msra.mxu0 0.0
  %11067 = vmatprep.subr.mxu0 0.0
  %11068 = vmatpush1.msra.mxu0 0.0
  %11069 = vmatprep.subr.mxu0 0.0
  %11070 = vmatpush1.msra.mxu0 0.0
  %11071 = vmatprep.subr.mxu0 0.0
  %11072 = vmatpush1.msra.mxu0 0.0
  %11073 = vmatprep.subr.mxu0 0.0
  %11074 = vmatpush1.msra.mxu0 0.0
  %11075 = vmatprep.subr.mxu0 0.0
  %11076 = vmatpush1.msra.mxu0 0.0
  %11077 = vmatprep.subr.mxu0 0.0
  %11078 = vmatpush1.msra.mxu0 0.0
  %11079 = vmatprep.subr.mxu0 0.0
  %11080 = vmatpush1.msra.mxu0 0.0
  %11081 = vmatprep.subr.mxu0 0.0
  %11082 = vmatpush1.msra.mxu0 0.0
  %11083 = vmatprep.subr.mxu0 0.0
  %11084 = vmatpush1.msra.mxu0 0.0
  %11085 = vmatprep.subr.mxu0 0.0
  %11086 = vmatpush1.msra.mxu0 0.0
  %11087 = vmatprep.mubr.f32.mxu0 0.0
  %v11088 = vand.u32 %v3764, 4294901760
  %v11089 = vsub.f32 %v3764, %v11088
  %11090 = vmatmul.mubr.f32.gmra.mrb[0].mxu0 %v11089
  %v11091 = vpop.f32.mrb[0].mxu0
  %v11092 = vadd.f32 %v11016, %v11091
  %v11093 = vpop.f32.mrb[0].mxu0
  %11094 = vdwg.mxu0
  %11095 = vmatprep.subr.mxu0 0.0
  %v11096 = vand.u32 %v10858, 4294901760
  %11097 = vmatpush1.msra.mxu0 %v11096
  %11098 = vmatprep.subr.mxu0 0.0
  %v11099 = vand.u32 %v10860, 4294901760
  %11100 = vmatpush1.msra.mxu0 %v11099
  %11101 = vmatprep.subr.mxu0 0.0
  %11102 = vmatpush1.msra.mxu0 0.0
  %11103 = vmatprep.subr.mxu0 0.0
  %11104 = vmatpush1.msra.mxu0 0.0
  %11105 = vmatprep.subr.mxu0 0.0
  %11106 = vmatpush1.msra.mxu0 0.0
  %11107 = vmatprep.subr.mxu0 0.0
  %11108 = vmatpush1.msra.mxu0 0.0
  %11109 = vmatprep.subr.mxu0 0.0
  %11110 = vmatpush1.msra.mxu0 0.0
  %11111 = vmatprep.subr.mxu0 0.0
  %11112 = vmatpush1.msra.mxu0 0.0
  %11113 = vmatprep.subr.mxu0 0.0
  %11114 = vmatpush1.msra.mxu0 0.0
  %11115 = vmatprep.subr.mxu0 0.0
  %11116 = vmatpush1.msra.mxu0 0.0
  %11117 = vmatprep.subr.mxu0 0.0
  %11118 = vmatpush1.msra.mxu0 0.0
  %11119 = vmatprep.subr.mxu0 0.0
  %11120 = vmatpush1.msra.mxu0 0.0
  %11121 = vmatprep.subr.mxu0 0.0
  %11122 = vmatpush1.msra.mxu0 0.0
  %11123 = vmatprep.subr.mxu0 0.0
  %11124 = vmatpush1.msra.mxu0 0.0
  %11125 = vmatprep.subr.mxu0 0.0
  %11126 = vmatpush1.msra.mxu0 0.0
  %11127 = vmatprep.subr.mxu0 0.0
  %11128 = vmatpush1.msra.mxu0 0.0
  %11129 = vmatprep.subr.mxu0 0.0
  %11130 = vmatpush1.msra.mxu0 0.0
  %11131 = vmatprep.subr.mxu0 0.0
  %11132 = vmatpush1.msra.mxu0 0.0
  %11133 = vmatprep.subr.mxu0 0.0
  %11134 = vmatpush1.msra.mxu0 0.0
  %11135 = vmatprep.subr.mxu0 0.0
  %11136 = vmatpush1.msra.mxu0 0.0
  %11137 = vmatprep.subr.mxu0 0.0
  %11138 = vmatpush1.msra.mxu0 0.0
  %11139 = vmatprep.subr.mxu0 0.0
  %11140 = vmatpush1.msra.mxu0 0.0
  %11141 = vmatprep.subr.mxu0 0.0
  %11142 = vmatpush1.msra.mxu0 0.0
  %11143 = vmatprep.subr.mxu0 0.0
  %11144 = vmatpush1.msra.mxu0 0.0
  %11145 = vmatprep.subr.mxu0 0.0
  %11146 = vmatpush1.msra.mxu0 0.0
  %11147 = vmatprep.subr.mxu0 0.0
  %11148 = vmatpush1.msra.mxu0 0.0
  %11149 = vmatprep.subr.mxu0 0.0
  %11150 = vmatpush1.msra.mxu0 0.0
  %11151 = vmatprep.subr.mxu0 0.0
  %11152 = vmatpush1.msra.mxu0 0.0
  %11153 = vmatprep.subr.mxu0 0.0
  %11154 = vmatpush1.msra.mxu0 0.0
  %11155 = vmatprep.subr.mxu0 0.0
  %11156 = vmatpush1.msra.mxu0 0.0
  %11157 = vmatprep.subr.mxu0 0.0
  %11158 = vmatpush1.msra.mxu0 0.0
  %11159 = vmatprep.subr.mxu0 0.0
  %11160 = vmatpush1.msra.mxu0 0.0
  %11161 = vmatprep.mubr.f32.mxu0 0.0
  %v11162 = vand.u32 %v3764, 4294901760
  %v11163 = vsub.f32 %v3764, %v11162
  %v11164 = vand.u32 %v11163, 4294901760
  %11165 = vmatmul.mubr.f32.gmra.mrb[0].mxu0 %v11164
  %v11166 = vpop.f32.mrb[0].mxu0
  %v11167 = vadd.f32 %v11092, %v11166
  %v11168 = vpop.f32.mrb[0].mxu0
  %11169 = vdwg.mxu0
  %11170 = vmatprep.subr.mxu0 0.0
  %v11171 = vand.u32 %v10858, 4294901760
  %v11172 = vsub.f32 %v10858, %v11171
  %v11173 = vand.u32 %v11172, 4294901760
  %11174 = vmatpush1.msra.mxu0 %v11173
  %11175 = vmatprep.subr.mxu0 0.0
  %v11176 = vand.u32 %v10860, 4294901760
  %v11177 = vsub.f32 %v10860, %v11176
  %v11178 = vand.u32 %v11177, 4294901760
  %11179 = vmatpush1.msra.mxu0 %v11178
  %11180 = vmatprep.subr.mxu0 0.0
  %11181 = vmatpush1.msra.mxu0 0.0
  %11182 = vmatprep.subr.mxu0 0.0
  %11183 = vmatpush1.msra.mxu0 0.0
  %11184 = vmatprep.subr.mxu0 0.0
  %11185 = vmatpush1.msra.mxu0 0.0
  %11186 = vmatprep.subr.mxu0 0.0
  %11187 = vmatpush1.msra.mxu0 0.0
  %11188 = vmatprep.subr.mxu0 0.0
  %11189 = vmatpush1.msra.mxu0 0.0
  %11190 = vmatprep.subr.mxu0 0.0
  %11191 = vmatpush1.msra.mxu0 0.0
  %11192 = vmatprep.subr.mxu0 0.0
  %11193 = vmatpush1.msra.mxu0 0.0
  %11194 = vmatprep.subr.mxu0 0.0
  %11195 = vmatpush1.msra.mxu0 0.0
  %11196 = vmatprep.subr.mxu0 0.0
  %11197 = vmatpush1.msra.mxu0 0.0
  %11198 = vmatprep.subr.mxu0 0.0
  %11199 = vmatpush1.msra.mxu0 0.0
  %11200 = vmatprep.subr.mxu0 0.0
  %11201 = vmatpush1.msra.mxu0 0.0
  %11202 = vmatprep.subr.mxu0 0.0
  %11203 = vmatpush1.msra.mxu0 0.0
  %11204 = vmatprep.subr.mxu0 0.0
  %11205 = vmatpush1.msra.mxu0 0.0
  %11206 = vmatprep.subr.mxu0 0.0
  %11207 = vmatpush1.msra.mxu0 0.0
  %11208 = vmatprep.subr.mxu0 0.0
  %11209 = vmatpush1.msra.mxu0 0.0
  %11210 = vmatprep.subr.mxu0 0.0
  %11211 = vmatpush1.msra.mxu0 0.0
  %11212 = vmatprep.subr.mxu0 0.0
  %11213 = vmatpush1.msra.mxu0 0.0
  %11214 = vmatprep.subr.mxu0 0.0
  %11215 = vmatpush1.msra.mxu0 0.0
  %11216 = vmatprep.subr.mxu0 0.0
  %11217 = vmatpush1.msra.mxu0 0.0
  %11218 = vmatprep.subr.mxu0 0.0
  %11219 = vmatpush1.msra.mxu0 0.0
  %11220 = vmatprep.subr.mxu0 0.0
  %11221 = vmatpush1.msra.mxu0 0.0
  %11222 = vmatprep.subr.mxu0 0.0
  %11223 = vmatpush1.msra.mxu0 0.0
  %11224 = vmatprep.subr.mxu0 0.0
  %11225 = vmatpush1.msra.mxu0 0.0
  %11226 = vmatprep.subr.mxu0 0.0
  %11227 = vmatpush1.msra.mxu0 0.0
  %11228 = vmatprep.subr.mxu0 0.0
  %11229 = vmatpush1.msra.mxu0 0.0
  %11230 = vmatprep.subr.mxu0 0.0
  %11231 = vmatpush1.msra.mxu0 0.0
  %11232 = vmatprep.subr.mxu0 0.0
  %11233 = vmatpush1.msra.mxu0 0.0
  %11234 = vmatprep.subr.mxu0 0.0
  %11235 = vmatpush1.msra.mxu0 0.0
  %11236 = vmatprep.subr.mxu0 0.0
  %11237 = vmatpush1.msra.mxu0 0.0
  %11238 = vmatprep.subr.mxu0 0.0
  %11239 = vmatpush1.msra.mxu0 0.0
  %11240 = vmatprep.mubr.f32.mxu0 0.0
  %v11241 = vand.u32 %v3764, 4294901760
  %11242 = vmatmul.mubr.f32.gmra.mrb[0].mxu0 %v11241
  %v11243 = vpop.f32.mrb[0].mxu0
  %v11244 = vadd.f32 %v11167, %v11243
  %v11245 = vpop.f32.mrb[0].mxu0
  %11246 = vdwg.mxu0
  %11247 = vmatprep.subr.mxu0 0.0
  %v11248 = vand.u32 %v10858, 4294901760
  %11249 = vmatpush1.msra.mxu0 %v11248
  %11250 = vmatprep.subr.mxu0 0.0
  %v11251 = vand.u32 %v10860, 4294901760
  %11252 = vmatpush1.msra.mxu0 %v11251
  %11253 = vmatprep.subr.mxu0 0.0
  %11254 = vmatpush1.msra.mxu0 0.0
  %11255 = vmatprep.subr.mxu0 0.0
  %11256 = vmatpush1.msra.mxu0 0.0
  %11257 = vmatprep.subr.mxu0 0.0
  %11258 = vmatpush1.msra.mxu0 0.0
  %11259 = vmatprep.subr.mxu0 0.0
  %11260 = vmatpush1.msra.mxu0 0.0
  %11261 = vmatprep.subr.mxu0 0.0
  %11262 = vmatpush1.msra.mxu0 0.0
  %11263 = vmatprep.subr.mxu0 0.0
  %11264 = vmatpush1.msra.mxu0 0.0
  %11265 = vmatprep.subr.mxu0 0.0
  %11266 = vmatpush1.msra.mxu0 0.0
  %11267 = vmatprep.subr.mxu0 0.0
  %11268 = vmatpush1.msra.mxu0 0.0
  %11269 = vmatprep.subr.mxu0 0.0
  %11270 = vmatpush1.msra.mxu0 0.0
  %11271 = vmatprep.subr.mxu0 0.0
  %11272 = vmatpush1.msra.mxu0 0.0
  %11273 = vmatprep.subr.mxu0 0.0
  %11274 = vmatpush1.msra.mxu0 0.0
  %11275 = vmatprep.subr.mxu0 0.0
  %11276 = vmatpush1.msra.mxu0 0.0
  %11277 = vmatprep.subr.mxu0 0.0
  %11278 = vmatpush1.msra.mxu0 0.0
  %11279 = vmatprep.subr.mxu0 0.0
  %11280 = vmatpush1.msra.mxu0 0.0
  %11281 = vmatprep.subr.mxu0 0.0
  %11282 = vmatpush1.msra.mxu0 0.0
  %11283 = vmatprep.subr.mxu0 0.0
  %11284 = vmatpush1.msra.mxu0 0.0
  %11285 = vmatprep.subr.mxu0 0.0
  %11286 = vmatpush1.msra.mxu0 0.0
  %11287 = vmatprep.subr.mxu0 0.0
  %11288 = vmatpush1.msra.mxu0 0.0
  %11289 = vmatprep.subr.mxu0 0.0
  %11290 = vmatpush1.msra.mxu0 0.0
  %11291 = vmatprep.subr.mxu0 0.0
  %11292 = vmatpush1.msra.mxu0 0.0
  %11293 = vmatprep.subr.mxu0 0.0
  %11294 = vmatpush1.msra.mxu0 0.0
  %11295 = vmatprep.subr.mxu0 0.0
  %11296 = vmatpush1.msra.mxu0 0.0
  %11297 = vmatprep.subr.mxu0 0.0
  %11298 = vmatpush1.msra.mxu0 0.0
  %11299 = vmatprep.subr.mxu0 0.0
  %11300 = vmatpush1.msra.mxu0 0.0
  %11301 = vmatprep.subr.mxu0 0.0
  %11302 = vmatpush1.msra.mxu0 0.0
  %11303 = vmatprep.subr.mxu0 0.0
  %11304 = vmatpush1.msra.mxu0 0.0
  %11305 = vmatprep.subr.mxu0 0.0
  %11306 = vmatpush1.msra.mxu0 0.0
  %11307 = vmatprep.subr.mxu0 0.0
  %11308 = vmatpush1.msra.mxu0 0.0
  %11309 = vmatprep.subr.mxu0 0.0
  %11310 = vmatpush1.msra.mxu0 0.0
  %11311 = vmatprep.subr.mxu0 0.0
  %11312 = vmatpush1.msra.mxu0 0.0
  %11313 = vmatprep.mubr.f32.mxu0 0.0
  %v11314 = vand.u32 %v3764, 4294901760
  %11315 = vmatmul.mubr.f32.gmra.mrb[0].mxu0 %v11314
  %v11316 = vpop.f32.mrb[0].mxu0
  %v11317 = vadd.f32 %v11244, %v11316
  %v11318 = vpop.f32.mrb[0].mxu0
  %11319 = vdwg.mxu0
  %v11320 = vmax.f32 %v11317, 1e-38
  %v11321 = vlog2.pop %v11320
  %v11322 = vmul.f32 %v11321, 0.6931472
  %v11323 = vlaneseq
  %v11324 = vshrl.u32 %v11323, 7
  %v11325 = vsub.s32 5, %v11324
  %v11326 = vrot.slane %v11322, %v11325
  %v11327 = vsub.f32 %v11322, %v11326
  %11328 = vst [vmem:[%s4] sm:$0x1f] %v11327
  // Predicated region
  $region18: #{weight_iohmm_forward.1} parent=0 // pred_check
    _
  $region19: #{weight_iohmm_forward.1} parent=0 // pred_check_branch
    %11330 = sbr.rel (0) target = $region21
  $region20: #{weight_iohmm_forward.1} parent=0 // pred_region
    _
  $region21: #{weight_iohmm_forward.1} parent=0 // pred_fallthru
    _
  // Predicated region
  $region22: #{weight_iohmm_forward.1} parent=0 // pred_check
    _
  $region23: #{weight_iohmm_forward.1} parent=0 // pred_check_branch
    %11332 = sbr.rel (0) target = $region25
  $region24: #{weight_iohmm_forward.1} parent=0 // pred_region
    _
  $region25: #{weight_iohmm_forward.1} parent=0 // pred_fallthru
    _

</llo_original>
